<compile_context>
chip_gen: v7x
topology: tpu7x:2x2x1
jax: 0.10.0
libtpu: 0.0.40
codegen_flags: <defaults>
</compile_context>

<pallas_src>
import functools
from types import SimpleNamespace

import numpy as np
import jax
import jax.numpy as jnp
from jax.experimental import pallas as pl
from jax.experimental.pallas import tpu as pltpu

_DOT_DTYPE = jnp.float32   # operand dtype of the per-layer K-stacked matmuls
_OUT_CHUNK = 1408          # lane chunk width for the last (largest) layer
_LANE = 128


def _geom(cin, cout, k, s, pad, h, w):
    """Static geometry of one ConvTranspose2d layer, expressed as an ordinary
    conv over the zero-dilated + edge-padded input flattened to one lane axis
    (row stride Wp, guard lanes so every tap read stays in bounds)."""
    assert 0 <= pad <= k - 1, "padding must be <= kernel_size - 1"
    plo = k - 1 - pad                          # low/high edge padding
    hd, wd = (h - 1) * s + 1, (w - 1) * s + 1  # dilated ("zero-stuffed") size
    hp, wp = hd + 2 * plo, wd + 2 * plo        # padded size
    oh, ow = hp - k + 1, wp - k + 1            # = (h-1)*s + k - 2*pad
    mout = oh * wp                             # flattened output (stride wp)
    moutp = ((mout + _LANE - 1) // _LANE) * _LANE
    taps = tuple(kh * wp + kw for kh in range(k) for kw in range(k))
    lp = taps[-1] + moutp                      # prep length incl. guard lanes
    in_bases = tuple((plo + iy * s) * wp + plo for iy in range(h))
    assert in_bases[-1] + wd <= lp             # scatter stays in bounds
    return SimpleNamespace(Cin=cin, Cout=cout, K=k, s=s, H=h, W=w, Wd=wd,
                           Hp=hp, Wp=wp, OH=oh, OW=ow, mout=mout,
                           moutp=moutp, taps=taps, Lp=lp, in_bases=in_bases)


def _dilation_matrix(n, s, dtype):
    """(n, (n-1)*s+1) 0/1 matrix with E[j, j*s] = 1 (row width-dilation)."""
    wd = (n - 1) * s + 1
    rows = jnp.arange(n, dtype=jnp.int32)[:, None] * s
    cols = jnp.arange(wd, dtype=jnp.int32)[None, :]
    return (rows == cols).astype(dtype)


def _stack_weights(w_pt, coutp, dtype):
    """PyTorch ConvTranspose2d weight (Cin, Cout, KH, KW) -> (Coutp, KH*KW*Cin)
    spatially flipped and stacked so that column t*Cin + c matches tap
    t = kh*KW + kw of the equivalent conv on the dilated+padded input."""
    cin, cout, kh, kw = w_pt.shape
    wf = w_pt[:, :, ::-1, ::-1]                                  # flip
    ws = jnp.transpose(wf, (1, 2, 3, 0)).reshape(cout, kh * kw * cin)
    if coutp != cout:
        ws = jnp.pad(ws, ((0, coutp - cout), (0, 0)))
    return ws.astype(dtype)


def _decoder_kernel(x_ref, w1_ref, b1_ref, w2_ref, b2_ref, e2_ref,
                    w3_ref, b3_ref, e3_ref, o_ref,
                    p1, p2, p3, slab1, slab2, slab3, *, g1, g2, g3):
    """One batch image per grid step; all intermediates stay in VMEM."""
    f32 = jnp.float32

    # Prep scratches persist across grid steps -> re-zero every image
    # (cheap: ~40 vector stores total).
    p1[...] = jnp.zeros_like(p1)
    p2[...] = jnp.zeros_like(p2)
    p3[...] = jnp.zeros_like(p3)

    def scatter_rows(row_fn, n_rows, e_ref_, p_ref, g):
        """Width-dilate each compact activation row (one tiny matmul against
        the 0/1 matrix E) and store it at its static offset inside the zeroed
        flattened dilated+padded image of the next layer."""
        e = e_ref_[...]
        for oy in range(n_rows):
            drow = jnp.dot(row_fn(oy), e, preferred_element_type=f32)
            b = g.in_bases[oy]
            p_ref[:, b:b + g.Wd] = drow.astype(p_ref.dtype)

    def tap_matmul(p_ref, slab_ref, w, g, c0):
        """K-stacked conv: copy every tap slice into the slab and contract all
        taps x channels with a single MXU matmul -> (Coutp, chunk) f32."""
        width = slab_ref.shape[1]
        for t, off in enumerate(g.taps):
            slab_ref[t * g.Cin:(t + 1) * g.Cin, :] = (
                p_ref[:, off + c0:off + c0 + width].astype(slab_ref.dtype))
        return jnp.dot(w, slab_ref[...], preferred_element_type=f32)

    # ---- layer-1 input: zero-dilate + pad the raw (Cin,H,W) image into p1 --
    for iy in range(g1.H):
        base = g1.in_bases[iy]
        for ix in range(g1.W):
            p1[:, base + ix * g1.s:base + ix * g1.s + 1] = (
                x_ref[0, :, iy * g1.W + ix:iy * g1.W + ix + 1])

    # ---- layer 1: ConvT(8->16, 3x3, s=2) + ReLU, scattered into p2 ---------
    a1 = tap_matmul(p1, slab1, w1_ref[...], g1, 0)               # (16, 128)
    a1 = jnp.maximum(a1 + b1_ref[...], 0.0)
    scatter_rows(lambda oy: a1[:, oy * g1.Wp:oy * g1.Wp + g1.OW],
                 g1.OH, e2_ref, p2, g2)

    # ---- layer 2: ConvT(16->8, 5x5, s=3, p=1) + ReLU, scattered into p3 ----
    a2 = tap_matmul(p2, slab2, w2_ref[...], g2, 0)               # (8, 896)
    a2 = jnp.maximum(a2 + b2_ref[...], 0.0)
    scatter_rows(lambda oy: a2[:, oy * g2.Wp:oy * g2.Wp + g2.OW],
                 g2.OH, e3_ref, p3, g3)

    # ---- layer 3: ConvT(8->1, 2x2, s=2, p=1); bias+tanh+store on the single
    # ---- real channel only, in lane-dense chunks ---------------------------
    w3 = w3_ref[...]
    b3 = b3_ref[...]                                             # (1, 1)
    chunk = slab3.shape[1]
    for c0 in range(0, g3.moutp, chunk):
        acc = tap_matmul(p3, slab3, w3, g3, c0)                  # (8, chunk)
        o_ref[0, :, c0:c0 + chunk] = jnp.tanh(acc[0:1, :] + b3
                                              ).astype(o_ref.dtype)


def decoder1_forward(x_nchw, params):
    """Forward pass of Decoder1 (NCHW in / NCHW out), fully fused."""
    N, cin, H, W = x_nchw.shape
    f32 = jnp.float32

    g1 = _geom(cin, params["w1"].shape[1], params["w1"].shape[2], 2, 0, H, W)
    g2 = _geom(g1.Cout, params["w2"].shape[1], params["w2"].shape[2], 3, 1,
               g1.OH, g1.OW)
    g3 = _geom(g2.Cout, params["w3"].shape[1], params["w3"].shape[2], 2, 1,
               g2.OH, g2.OW)
    assert g2.W == g1.OW and g3.W == g2.OW
    coutp3 = max(8, ((g3.Cout + 7) // 8) * 8)

    w1s = _stack_weights(params["w1"], g1.Cout, _DOT_DTYPE)      # (16, 72)
    w2s = _stack_weights(params["w2"], g2.Cout, _DOT_DTYPE)      # (8, 400)
    w3s = _stack_weights(params["w3"], coutp3, _DOT_DTYPE)       # (8, 32)
    b1 = params["b1"].reshape(g1.Cout, 1).astype(f32)
    b2 = params["b2"].reshape(g2.Cout, 1).astype(f32)
    b3 = params["b3"].reshape(g3.Cout, 1).astype(f32)            # (1, 1)
    e2 = _dilation_matrix(g2.W, g2.s, f32)                       # (9, 25)
    e3 = _dilation_matrix(g3.W, g3.s, f32)                       # (27, 53)

    x2 = x_nchw.reshape(N, cin, H * W).astype(f32)               # free reshape

    out_chunk = min(_OUT_CHUNK, g3.moutp)
    assert g3.moutp % out_chunk == 0

    kernel = functools.partial(_decoder_kernel, g1=g1, g2=g2, g3=g3)

    flops = 2 * N * (g1.moutp * len(g1.taps) * g1.Cin * g1.Cout
                     + g2.moutp * len(g2.taps) * g2.Cin * g2.Cout
                     + g3.moutp * len(g3.taps) * g3.Cin * coutp3)
    cost = pl.CostEstimate(
        flops=flops, transcendentals=N * g3.moutp,
        bytes_accessed=4 * (x2.size + N * g3.moutp + w1s.size + w2s.size
                            + w3s.size + e2.size + e3.size))

    def _full(arr):  # whole-array resident block (2-D)
        return pl.BlockSpec(arr.shape, lambda n: (0, 0))

    y = pl.pallas_call(
        kernel,
        out_shape=jax.ShapeDtypeStruct((N, 1, g3.moutp), f32),
        grid_spec=pltpu.PrefetchScalarGridSpec(
            num_scalar_prefetch=0,
            grid=(N,),
            in_specs=[
                pl.BlockSpec((1, cin, H * W), lambda n: (n, 0, 0)),
                _full(w1s), _full(b1),
                _full(w2s), _full(b2), _full(e2),
                _full(w3s), _full(b3), _full(e3),
            ],
            out_specs=pl.BlockSpec((1, 1, g3.moutp), lambda n: (n, 0, 0)),
            scratch_shapes=[
                pltpu.VMEM((g1.Cin, g1.Lp), f32),                    # p1
                pltpu.VMEM((g2.Cin, g2.Lp), f32),                    # p2
                pltpu.VMEM((g3.Cin, g3.Lp), f32),                    # p3
                pltpu.VMEM((len(g1.taps) * g1.Cin, g1.moutp), _DOT_DTYPE),
                pltpu.VMEM((len(g2.taps) * g2.Cin, g2.moutp), _DOT_DTYPE),
                pltpu.VMEM((len(g3.taps) * g3.Cin, out_chunk), _DOT_DTYPE),
            ]),
        compiler_params=pltpu.CompilerParams(
            dimension_semantics=("parallel",)),
        cost_estimate=cost,
    )(x2, w1s, b1, w2s, b2, e2, w3s, b3, e3)

    # Drop the lane padding and the per-row wrap columns -> (N, 1, OH, OW).
    y = y[:, :, :g3.mout].reshape(N, 1, g3.OH, g3.Wp)[:, :, :, :g3.OW]
    return y


def init_params(key):
    ks = jax.random.split(key, 6)

    def init(k, shape):
        return jax.random.normal(k, shape, jnp.float32) * 0.1

    # PyTorch ConvTranspose2d weight layout: (in_channels, out_channels, KH, KW)
    return {
        "w1": init(ks[0], (8, 16, 3, 3)), "b1": init(ks[1], (16,)),
        "w2": init(ks[2], (16, 8, 5, 5)), "b2": init(ks[3], (8,)),
        "w3": init(ks[4], (8, 1, 2, 2)),  "b3": init(ks[5], (1,)),
    }


# ----------------------- numpy reference (self-check) -----------------------
def _convt_ref(x, w, b, stride, padding):
    x = np.asarray(x, np.float64)
    w = np.asarray(w, np.float64)
    N, Cin, H, W = x.shape
    _, Cout, KH, KW = w.shape
    OHf, OWf = (H - 1) * stride + KH, (W - 1) * stride + KW
    y = np.zeros((N, Cout, OHf, OWf), np.float64)
    for n in range(N):
        for iy in range(H):
            for ix in range(W):
                y[n, :, iy * stride:iy * stride + KH,
                        ix * stride:ix * stride + KW] += np.einsum(
                    "c,cokl->okl", x[n, :, iy, ix], w)
    y = y[:, :, padding:OHf - padding, padding:OWf - padding]
    return y + np.asarray(b, np.float64).reshape(1, Cout, 1, 1)


def _decoder1_ref(x, params):
    y = np.maximum(_convt_ref(x, params["w1"], params["b1"], 2, 0), 0.0)
    y = np.maximum(_convt_ref(y, params["w2"], params["b2"], 3, 1), 0.0)
    return np.tanh(_convt_ref(y, params["w3"], params["b3"], 2, 1))


if __name__ == "__main__":
    key = jax.random.PRNGKey(0)
    pkey, xkey = jax.random.split(key)
    params = init_params(pkey)
    # Input like the PyTorch module: NCHW, 8 channels.
    x = jax.random.normal(xkey, (2, 8, 4, 4), jnp.float32)
    y = jax.jit(decoder1_forward)(x, params)
    y = jax.block_until_ready(y)
    # Spatial 4 -> 9 -> 27 -> 52, single output channel.
    assert y.shape == (2, 1, 52, 52), y.shape
    y_np = np.asarray(y)
    assert np.all(np.isfinite(y_np))
    ref = _decoder1_ref(np.asarray(x),
                        {k: np.asarray(v) for k, v in params.items()})
    err = float(np.max(np.abs(y_np - ref)))
    assert np.allclose(y_np, ref, atol=2e-2, rtol=2e-2), err
    print("KERNEL_OK")
</pallas_src>

<mosaic_0001>
module attributes {stable_mosaic.version = 11 : i64} {
  func.func @_decoder_kernel(%arg0: i32, %arg1: memref<1x8x16xf32, #tpu.memory_space<vmem>>, %arg2: memref<16x72xf32, #tpu.memory_space<vmem>>, %arg3: memref<16x1xf32, #tpu.memory_space<vmem>>, %arg4: memref<8x400xf32, #tpu.memory_space<vmem>>, %arg5: memref<8x1xf32, #tpu.memory_space<vmem>>, %arg6: memref<9x25xf32, #tpu.memory_space<vmem>>, %arg7: memref<8x32xf32, #tpu.memory_space<vmem>>, %arg8: memref<1x1xf32, #tpu.memory_space<vmem>>, %arg9: memref<27x53xf32, #tpu.memory_space<vmem>>, %arg10: memref<1x1x2816xf32, #tpu.memory_space<vmem>>, %arg11: memref<8x152xf32, #tpu.memory_space<vmem>>, %arg12: memref<16x1024xf32, #tpu.memory_space<vmem>>, %arg13: memref<8x2870xf32, #tpu.memory_space<vmem>>, %arg14: memref<72x128xf32, #tpu.memory_space<vmem>>, %arg15: memref<400x896xf32, #tpu.memory_space<vmem>>, %arg16: memref<32x1408xf32, #tpu.memory_space<vmem>>) attributes {dimension_semantics = [#tpu.dimension_semantics<parallel>], iteration_bounds = array<i64: 2>, scalar_prefetch = 0 : i64, scratch_operands = 6 : i64, tpu.core_type = #tpu.core_type<tc>, window_params = [{transform_indices = @transform_0, window_bounds = array<i64: 1, 8, 16>}, {pipeline_mode = #tpu.pipeline_mode<synchronous>, transform_indices = @transform_1, window_bounds = array<i64: 16, 72>}, {pipeline_mode = #tpu.pipeline_mode<synchronous>, transform_indices = @transform_2, window_bounds = array<i64: 16, 1>}, {pipeline_mode = #tpu.pipeline_mode<synchronous>, transform_indices = @transform_3, window_bounds = array<i64: 8, 400>}, {pipeline_mode = #tpu.pipeline_mode<synchronous>, transform_indices = @transform_4, window_bounds = array<i64: 8, 1>}, {pipeline_mode = #tpu.pipeline_mode<synchronous>, transform_indices = @transform_5, window_bounds = array<i64: 9, 25>}, {pipeline_mode = #tpu.pipeline_mode<synchronous>, transform_indices = @transform_6, window_bounds = array<i64: 8, 32>}, {pipeline_mode = #tpu.pipeline_mode<synchronous>, transform_indices = @transform_7, window_bounds = array<i64: 1, 1>}, {pipeline_mode = #tpu.pipeline_mode<synchronous>, transform_indices = @transform_8, window_bounds = array<i64: 27, 53>}, {transform_indices = @transform_9, window_bounds = array<i64: 1, 1, 2816>}]} {
    %cst = arith.constant 0.000000e+00 : f32
    %0 = vector.broadcast %cst : f32 to vector<8x152xf32>
    %c0 = arith.constant 0 : index
    %c0_0 = arith.constant 0 : index
    %1 = vector.load %arg11[%c0, %c0_0] : memref<8x152xf32, #tpu.memory_space<vmem>>, vector<8x152xf32>
    tpu.vector_store %arg11[%c0, %c0_0], %0 {strides = array<i32>} : memref<8x152xf32, #tpu.memory_space<vmem>>, vector<8x152xf32>,
    %cst_1 = arith.constant 0.000000e+00 : f32
    %2 = vector.broadcast %cst_1 : f32 to vector<16x1024xf32>
    %c0_2 = arith.constant 0 : index
    %c0_3 = arith.constant 0 : index
    %3 = vector.load %arg12[%c0_2, %c0_3] : memref<16x1024xf32, #tpu.memory_space<vmem>>, vector<16x1024xf32>
    tpu.vector_store %arg12[%c0_2, %c0_3], %2 {strides = array<i32>} : memref<16x1024xf32, #tpu.memory_space<vmem>>, vector<16x1024xf32>,
    %cst_4 = arith.constant 0.000000e+00 : f32
    %4 = vector.broadcast %cst_4 : f32 to vector<8x2870xf32>
    %c0_5 = arith.constant 0 : index
    %c0_6 = arith.constant 0 : index
    %5 = vector.load %arg13[%c0_5, %c0_6] : memref<8x2870xf32, #tpu.memory_space<vmem>>, vector<8x2870xf32>
    tpu.vector_store %arg13[%c0_5, %c0_6], %4 {strides = array<i32>} : memref<8x2870xf32, #tpu.memory_space<vmem>>, vector<8x2870xf32>,
    %c0_7 = arith.constant 0 : index
    %c0_8 = arith.constant 0 : index
    %c0_9 = arith.constant 0 : index
    %6 = vector.load %arg1[%c0_7, %c0_8, %c0_9] : memref<1x8x16xf32, #tpu.memory_space<vmem>>, vector<1x8x1xf32>
    %7 = vector.shape_cast %6 : vector<1x8x1xf32> to vector<8x1xf32>
    %c0_10 = arith.constant 0 : index
    %c24 = arith.constant 24 : index
    %8 = vector.load %arg11[%c0_10, %c24] : memref<8x152xf32, #tpu.memory_space<vmem>>, vector<8x1xf32>
    tpu.vector_store %arg11[%c0_10, %c24], %7 {strides = array<i32>} : memref<8x152xf32, #tpu.memory_space<vmem>>, vector<8x1xf32>,
    %c0_11 = arith.constant 0 : index
    %c0_12 = arith.constant 0 : index
    %c1 = arith.constant 1 : index
    %9 = vector.load %arg1[%c0_11, %c0_12, %c1] : memref<1x8x16xf32, #tpu.memory_space<vmem>>, vector<1x8x1xf32>
    %10 = vector.shape_cast %9 : vector<1x8x1xf32> to vector<8x1xf32>
    %c0_13 = arith.constant 0 : index
    %c26 = arith.constant 26 : index
    %11 = vector.load %arg11[%c0_13, %c26] : memref<8x152xf32, #tpu.memory_space<vmem>>, vector<8x1xf32>
    tpu.vector_store %arg11[%c0_13, %c26], %10 {strides = array<i32>} : memref<8x152xf32, #tpu.memory_space<vmem>>, vector<8x1xf32>,
    %c0_14 = arith.constant 0 : index
    %c0_15 = arith.constant 0 : index
    %c2 = arith.constant 2 : index
    %12 = vector.load %arg1[%c0_14, %c0_15, %c2] : memref<1x8x16xf32, #tpu.memory_space<vmem>>, vector<1x8x1xf32>
    %13 = vector.shape_cast %12 : vector<1x8x1xf32> to vector<8x1xf32>
    %c0_16 = arith.constant 0 : index
    %c28 = arith.constant 28 : index
    %14 = vector.load %arg11[%c0_16, %c28] : memref<8x152xf32, #tpu.memory_space<vmem>>, vector<8x1xf32>
    tpu.vector_store %arg11[%c0_16, %c28], %13 {strides = array<i32>} : memref<8x152xf32, #tpu.memory_space<vmem>>, vector<8x1xf32>,
    %c0_17 = arith.constant 0 : index
    %c0_18 = arith.constant 0 : index
    %c3 = arith.constant 3 : index
    %15 = vector.load %arg1[%c0_17, %c0_18, %c3] : memref<1x8x16xf32, #tpu.memory_space<vmem>>, vector<1x8x1xf32>
    %16 = vector.shape_cast %15 : vector<1x8x1xf32> to vector<8x1xf32>
    %c0_19 = arith.constant 0 : index
    %c30 = arith.constant 30 : index
    %17 = vector.load %arg11[%c0_19, %c30] : memref<8x152xf32, #tpu.memory_space<vmem>>, vector<8x1xf32>
    tpu.vector_store %arg11[%c0_19, %c30], %16 {strides = array<i32>} : memref<8x152xf32, #tpu.memory_space<vmem>>, vector<8x1xf32>,
    %c0_20 = arith.constant 0 : index
    %c0_21 = arith.constant 0 : index
    %c4 = arith.constant 4 : index
    %18 = vector.load %arg1[%c0_20, %c0_21, %c4] : memref<1x8x16xf32, #tpu.memory_space<vmem>>, vector<1x8x1xf32>
    %19 = vector.shape_cast %18 : vector<1x8x1xf32> to vector<8x1xf32>
    %c0_22 = arith.constant 0 : index
    %c46 = arith.constant 46 : index
    %20 = vector.load %arg11[%c0_22, %c46] : memref<8x152xf32, #tpu.memory_space<vmem>>, vector<8x1xf32>
    tpu.vector_store %arg11[%c0_22, %c46], %19 {strides = array<i32>} : memref<8x152xf32, #tpu.memory_space<vmem>>, vector<8x1xf32>,
    %c0_23 = arith.constant 0 : index
    %c0_24 = arith.constant 0 : index
    %c5 = arith.constant 5 : index
    %21 = vector.load %arg1[%c0_23, %c0_24, %c5] : memref<1x8x16xf32, #tpu.memory_space<vmem>>, vector<1x8x1xf32>
    %22 = vector.shape_cast %21 : vector<1x8x1xf32> to vector<8x1xf32>
    %c0_25 = arith.constant 0 : index
    %c48 = arith.constant 48 : index
    %23 = vector.load %arg11[%c0_25, %c48] : memref<8x152xf32, #tpu.memory_space<vmem>>, vector<8x1xf32>
    tpu.vector_store %arg11[%c0_25, %c48], %22 {strides = array<i32>} : memref<8x152xf32, #tpu.memory_space<vmem>>, vector<8x1xf32>,
    %c0_26 = arith.constant 0 : index
    %c0_27 = arith.constant 0 : index
    %c6 = arith.constant 6 : index
    %24 = vector.load %arg1[%c0_26, %c0_27, %c6] : memref<1x8x16xf32, #tpu.memory_space<vmem>>, vector<1x8x1xf32>
    %25 = vector.shape_cast %24 : vector<1x8x1xf32> to vector<8x1xf32>
    %c0_28 = arith.constant 0 : index
    %c50 = arith.constant 50 : index
    %26 = vector.load %arg11[%c0_28, %c50] : memref<8x152xf32, #tpu.memory_space<vmem>>, vector<8x1xf32>
    tpu.vector_store %arg11[%c0_28, %c50], %25 {strides = array<i32>} : memref<8x152xf32, #tpu.memory_space<vmem>>, vector<8x1xf32>,
    %c0_29 = arith.constant 0 : index
    %c0_30 = arith.constant 0 : index
    %c7 = arith.constant 7 : index
    %27 = vector.load %arg1[%c0_29, %c0_30, %c7] : memref<1x8x16xf32, #tpu.memory_space<vmem>>, vector<1x8x1xf32>
    %28 = vector.shape_cast %27 : vector<1x8x1xf32> to vector<8x1xf32>
    %c0_31 = arith.constant 0 : index
    %c52 = arith.constant 52 : index
    %29 = vector.load %arg11[%c0_31, %c52] : memref<8x152xf32, #tpu.memory_space<vmem>>, vector<8x1xf32>
    tpu.vector_store %arg11[%c0_31, %c52], %28 {strides = array<i32>} : memref<8x152xf32, #tpu.memory_space<vmem>>, vector<8x1xf32>,
    %c0_32 = arith.constant 0 : index
    %c0_33 = arith.constant 0 : index
    %c8 = arith.constant 8 : index
    %30 = vector.load %arg1[%c0_32, %c0_33, %c8] : memref<1x8x16xf32, #tpu.memory_space<vmem>>, vector<1x8x1xf32>
    %31 = vector.shape_cast %30 : vector<1x8x1xf32> to vector<8x1xf32>
    %c0_34 = arith.constant 0 : index
    %c68 = arith.constant 68 : index
    %32 = vector.load %arg11[%c0_34, %c68] : memref<8x152xf32, #tpu.memory_space<vmem>>, vector<8x1xf32>
    tpu.vector_store %arg11[%c0_34, %c68], %31 {strides = array<i32>} : memref<8x152xf32, #tpu.memory_space<vmem>>, vector<8x1xf32>,
    %c0_35 = arith.constant 0 : index
    %c0_36 = arith.constant 0 : index
    %c9 = arith.constant 9 : index
    %33 = vector.load %arg1[%c0_35, %c0_36, %c9] : memref<1x8x16xf32, #tpu.memory_space<vmem>>, vector<1x8x1xf32>
    %34 = vector.shape_cast %33 : vector<1x8x1xf32> to vector<8x1xf32>
    %c0_37 = arith.constant 0 : index
    %c70 = arith.constant 70 : index
    %35 = vector.load %arg11[%c0_37, %c70] : memref<8x152xf32, #tpu.memory_space<vmem>>, vector<8x1xf32>
    tpu.vector_store %arg11[%c0_37, %c70], %34 {strides = array<i32>} : memref<8x152xf32, #tpu.memory_space<vmem>>, vector<8x1xf32>,
    %c0_38 = arith.constant 0 : index
    %c0_39 = arith.constant 0 : index
    %c10 = arith.constant 10 : index
    %36 = vector.load %arg1[%c0_38, %c0_39, %c10] : memref<1x8x16xf32, #tpu.memory_space<vmem>>, vector<1x8x1xf32>
    %37 = vector.shape_cast %36 : vector<1x8x1xf32> to vector<8x1xf32>
    %c0_40 = arith.constant 0 : index
    %c72 = arith.constant 72 : index
    %38 = vector.load %arg11[%c0_40, %c72] : memref<8x152xf32, #tpu.memory_space<vmem>>, vector<8x1xf32>
    tpu.vector_store %arg11[%c0_40, %c72], %37 {strides = array<i32>} : memref<8x152xf32, #tpu.memory_space<vmem>>, vector<8x1xf32>,
    %c0_41 = arith.constant 0 : index
    %c0_42 = arith.constant 0 : index
    %c11 = arith.constant 11 : index
    %39 = vector.load %arg1[%c0_41, %c0_42, %c11] : memref<1x8x16xf32, #tpu.memory_space<vmem>>, vector<1x8x1xf32>
    %40 = vector.shape_cast %39 : vector<1x8x1xf32> to vector<8x1xf32>
    %c0_43 = arith.constant 0 : index
    %c74 = arith.constant 74 : index
    %41 = vector.load %arg11[%c0_43, %c74] : memref<8x152xf32, #tpu.memory_space<vmem>>, vector<8x1xf32>
    tpu.vector_store %arg11[%c0_43, %c74], %40 {strides = array<i32>} : memref<8x152xf32, #tpu.memory_space<vmem>>, vector<8x1xf32>,
    %c0_44 = arith.constant 0 : index
    %c0_45 = arith.constant 0 : index
    %c12 = arith.constant 12 : index
    %42 = vector.load %arg1[%c0_44, %c0_45, %c12] : memref<1x8x16xf32, #tpu.memory_space<vmem>>, vector<1x8x1xf32>
    %43 = vector.shape_cast %42 : vector<1x8x1xf32> to vector<8x1xf32>
    %c0_46 = arith.constant 0 : index
    %c90 = arith.constant 90 : index
    %44 = vector.load %arg11[%c0_46, %c90] : memref<8x152xf32, #tpu.memory_space<vmem>>, vector<8x1xf32>
    tpu.vector_store %arg11[%c0_46, %c90], %43 {strides = array<i32>} : memref<8x152xf32, #tpu.memory_space<vmem>>, vector<8x1xf32>,
    %c0_47 = arith.constant 0 : index
    %c0_48 = arith.constant 0 : index
    %c13 = arith.constant 13 : index
    %45 = vector.load %arg1[%c0_47, %c0_48, %c13] : memref<1x8x16xf32, #tpu.memory_space<vmem>>, vector<1x8x1xf32>
    %46 = vector.shape_cast %45 : vector<1x8x1xf32> to vector<8x1xf32>
    %c0_49 = arith.constant 0 : index
    %c92 = arith.constant 92 : index
    %47 = vector.load %arg11[%c0_49, %c92] : memref<8x152xf32, #tpu.memory_space<vmem>>, vector<8x1xf32>
    tpu.vector_store %arg11[%c0_49, %c92], %46 {strides = array<i32>} : memref<8x152xf32, #tpu.memory_space<vmem>>, vector<8x1xf32>,
    %c0_50 = arith.constant 0 : index
    %c0_51 = arith.constant 0 : index
    %c14 = arith.constant 14 : index
    %48 = vector.load %arg1[%c0_50, %c0_51, %c14] : memref<1x8x16xf32, #tpu.memory_space<vmem>>, vector<1x8x1xf32>
    %49 = vector.shape_cast %48 : vector<1x8x1xf32> to vector<8x1xf32>
    %c0_52 = arith.constant 0 : index
    %c94 = arith.constant 94 : index
    %50 = vector.load %arg11[%c0_52, %c94] : memref<8x152xf32, #tpu.memory_space<vmem>>, vector<8x1xf32>
    tpu.vector_store %arg11[%c0_52, %c94], %49 {strides = array<i32>} : memref<8x152xf32, #tpu.memory_space<vmem>>, vector<8x1xf32>,
    %c0_53 = arith.constant 0 : index
    %c0_54 = arith.constant 0 : index
    %c15 = arith.constant 15 : index
    %51 = vector.load %arg1[%c0_53, %c0_54, %c15] : memref<1x8x16xf32, #tpu.memory_space<vmem>>, vector<1x8x1xf32>
    %52 = vector.shape_cast %51 : vector<1x8x1xf32> to vector<8x1xf32>
    %c0_55 = arith.constant 0 : index
    %c96 = arith.constant 96 : index
    %53 = vector.load %arg11[%c0_55, %c96] : memref<8x152xf32, #tpu.memory_space<vmem>>, vector<8x1xf32>
    tpu.vector_store %arg11[%c0_55, %c96], %52 {strides = array<i32>} : memref<8x152xf32, #tpu.memory_space<vmem>>, vector<8x1xf32>,
    %c0_56 = arith.constant 0 : index
    %c0_57 = arith.constant 0 : index
    %54 = vector.load %arg2[%c0_56, %c0_57] : memref<16x72xf32, #tpu.memory_space<vmem>>, vector<16x72xf32>
    %c0_58 = arith.constant 0 : index
    %c0_59 = arith.constant 0 : index
    %55 = vector.load %arg11[%c0_58, %c0_59] : memref<8x152xf32, #tpu.memory_space<vmem>>, vector<8x128xf32>
    %c0_60 = arith.constant 0 : index
    %c0_61 = arith.constant 0 : index
    %56 = vector.load %arg14[%c0_60, %c0_61] : memref<72x128xf32, #tpu.memory_space<vmem>>, vector<8x128xf32>
    tpu.vector_store %arg14[%c0_60, %c0_61], %55 {strides = array<i32>} : memref<72x128xf32, #tpu.memory_space<vmem>>, vector<8x128xf32>,
    %c0_62 = arith.constant 0 : index
    %c1_63 = arith.constant 1 : index
    %57 = vector.load %arg11[%c0_62, %c1_63] : memref<8x152xf32, #tpu.memory_space<vmem>>, vector<8x128xf32>
    %c8_64 = arith.constant 8 : index
    %c0_65 = arith.constant 0 : index
    %58 = vector.load %arg14[%c8_64, %c0_65] : memref<72x128xf32, #tpu.memory_space<vmem>>, vector<8x128xf32>
    tpu.vector_store %arg14[%c8_64, %c0_65], %57 {strides = array<i32>} : memref<72x128xf32, #tpu.memory_space<vmem>>, vector<8x128xf32>,
    %c0_66 = arith.constant 0 : index
    %c2_67 = arith.constant 2 : index
    %59 = vector.load %arg11[%c0_66, %c2_67] : memref<8x152xf32, #tpu.memory_space<vmem>>, vector<8x128xf32>
    %c16 = arith.constant 16 : index
    %c0_68 = arith.constant 0 : index
    %60 = vector.load %arg14[%c16, %c0_68] : memref<72x128xf32, #tpu.memory_space<vmem>>, vector<8x128xf32>
    tpu.vector_store %arg14[%c16, %c0_68], %59 {strides = array<i32>} : memref<72x128xf32, #tpu.memory_space<vmem>>, vector<8x128xf32>,
    %c0_69 = arith.constant 0 : index
    %c11_70 = arith.constant 11 : index
    %61 = vector.load %arg11[%c0_69, %c11_70] : memref<8x152xf32, #tpu.memory_space<vmem>>, vector<8x128xf32>
    %c24_71 = arith.constant 24 : index
    %c0_72 = arith.constant 0 : index
    %62 = vector.load %arg14[%c24_71, %c0_72] : memref<72x128xf32, #tpu.memory_space<vmem>>, vector<8x128xf32>
    tpu.vector_store %arg14[%c24_71, %c0_72], %61 {strides = array<i32>} : memref<72x128xf32, #tpu.memory_space<vmem>>, vector<8x128xf32>,
    %c0_73 = arith.constant 0 : index
    %c12_74 = arith.constant 12 : index
    %63 = vector.load %arg11[%c0_73, %c12_74] : memref<8x152xf32, #tpu.memory_space<vmem>>, vector<8x128xf32>
    %c32 = arith.constant 32 : index
    %c0_75 = arith.constant 0 : index
    %64 = vector.load %arg14[%c32, %c0_75] : memref<72x128xf32, #tpu.memory_space<vmem>>, vector<8x128xf32>
    tpu.vector_store %arg14[%c32, %c0_75], %63 {strides = array<i32>} : memref<72x128xf32, #tpu.memory_space<vmem>>, vector<8x128xf32>,
    %c0_76 = arith.constant 0 : index
    %c13_77 = arith.constant 13 : index
    %65 = vector.load %arg11[%c0_76, %c13_77] : memref<8x152xf32, #tpu.memory_space<vmem>>, vector<8x128xf32>
    %c40 = arith.constant 40 : index
    %c0_78 = arith.constant 0 : index
    %66 = vector.load %arg14[%c40, %c0_78] : memref<72x128xf32, #tpu.memory_space<vmem>>, vector<8x128xf32>
    tpu.vector_store %arg14[%c40, %c0_78], %65 {strides = array<i32>} : memref<72x128xf32, #tpu.memory_space<vmem>>, vector<8x128xf32>,
    %c0_79 = arith.constant 0 : index
    %c22 = arith.constant 22 : index
    %67 = vector.load %arg11[%c0_79, %c22] : memref<8x152xf32, #tpu.memory_space<vmem>>, vector<8x128xf32>
    %c48_80 = arith.constant 48 : index
    %c0_81 = arith.constant 0 : index
    %68 = vector.load %arg14[%c48_80, %c0_81] : memref<72x128xf32, #tpu.memory_space<vmem>>, vector<8x128xf32>
    tpu.vector_store %arg14[%c48_80, %c0_81], %67 {strides = array<i32>} : memref<72x128xf32, #tpu.memory_space<vmem>>, vector<8x128xf32>,
    %c0_82 = arith.constant 0 : index
    %c23 = arith.constant 23 : index
    %69 = vector.load %arg11[%c0_82, %c23] : memref<8x152xf32, #tpu.memory_space<vmem>>, vector<8x128xf32>
    %c56 = arith.constant 56 : index
    %c0_83 = arith.constant 0 : index
    %70 = vector.load %arg14[%c56, %c0_83] : memref<72x128xf32, #tpu.memory_space<vmem>>, vector<8x128xf32>
    tpu.vector_store %arg14[%c56, %c0_83], %69 {strides = array<i32>} : memref<72x128xf32, #tpu.memory_space<vmem>>, vector<8x128xf32>,
    %c0_84 = arith.constant 0 : index
    %c24_85 = arith.constant 24 : index
    %71 = vector.load %arg11[%c0_84, %c24_85] : memref<8x152xf32, #tpu.memory_space<vmem>>, vector<8x128xf32>
    %c64 = arith.constant 64 : index
    %c0_86 = arith.constant 0 : index
    %72 = vector.load %arg14[%c64, %c0_86] : memref<72x128xf32, #tpu.memory_space<vmem>>, vector<8x128xf32>
    tpu.vector_store %arg14[%c64, %c0_86], %71 {strides = array<i32>} : memref<72x128xf32, #tpu.memory_space<vmem>>, vector<8x128xf32>,
    %c0_87 = arith.constant 0 : index
    %c0_88 = arith.constant 0 : index
    %73 = vector.load %arg14[%c0_87, %c0_88] : memref<72x128xf32, #tpu.memory_space<vmem>>, vector<72x128xf32>
    %cst_89 = arith.constant dense<0.000000e+00> : vector<16x128xf32>
    %74 = tpu.matmul %54, %73, %cst_89 {dimension_numbers = #tpu.dot_dimension_numbers<[1], [0], [0], [1], [0, 0, 1, 1], [], []>} : vector<16x72xf32>, vector<72x128xf32>, vector<16x128xf32> -> vector<16x128xf32>
    %c0_90 = arith.constant 0 : index
    %c0_91 = arith.constant 0 : index
    %75 = vector.load %arg3[%c0_90, %c0_91] : memref<16x1xf32, #tpu.memory_space<vmem>>, vector<16x1xf32>
    %76 = vector.broadcast %75 : vector<16x1xf32> to vector<16x128xf32>
    %77 = arith.addf %74, %76 : vector<16x128xf32>
    %cst_92 = arith.constant 0.000000e+00 : f32
    %78 = vector.broadcast %cst_92 : f32 to vector<16x128xf32>
    %79 = arith.maximumf %77, %78 : vector<16x128xf32>
    %c0_93 = arith.constant 0 : index
    %c0_94 = arith.constant 0 : index
    %80 = vector.load %arg6[%c0_93, %c0_94] : memref<9x25xf32, #tpu.memory_space<vmem>>, vector<9x25xf32>
    %81 = vector.extract_strided_slice %79 {offsets = [0, 0], sizes = [16, 9], strides = [1, 1]} : vector<16x128xf32> to vector<16x9xf32>
    %cst_95 = arith.constant dense<0.000000e+00> : vector<16x25xf32>
    %82 = tpu.matmul %81, %80, %cst_95 {dimension_numbers = #tpu.dot_dimension_numbers<[1], [0], [0], [1], [0, 0, 1, 1], [], []>} : vector<16x9xf32>, vector<9x25xf32>, vector<16x25xf32> -> vector<16x25xf32>
    %c0_96 = arith.constant 0 : index
    %c96_97 = arith.constant 96 : index
    %83 = vector.load %arg12[%c0_96, %c96_97] : memref<16x1024xf32, #tpu.memory_space<vmem>>, vector<16x25xf32>
    tpu.vector_store %arg12[%c0_96, %c96_97], %82 {strides = array<i32>} : memref<16x1024xf32, #tpu.memory_space<vmem>>, vector<16x25xf32>,
    %84 = vector.extract_strided_slice %79 {offsets = [0, 11], sizes = [16, 9], strides = [1, 1]} : vector<16x128xf32> to vector<16x9xf32>
    %cst_98 = arith.constant dense<0.000000e+00> : vector<16x25xf32>
    %85 = tpu.matmul %84, %80, %cst_98 {dimension_numbers = #tpu.dot_dimension_numbers<[1], [0], [0], [1], [0, 0, 1, 1], [], []>} : vector<16x9xf32>, vector<9x25xf32>, vector<16x25xf32> -> vector<16x25xf32>
    %c0_99 = arith.constant 0 : index
    %c189 = arith.constant 189 : index
    %86 = vector.load %arg12[%c0_99, %c189] : memref<16x1024xf32, #tpu.memory_space<vmem>>, vector<16x25xf32>
    tpu.vector_store %arg12[%c0_99, %c189], %85 {strides = array<i32>} : memref<16x1024xf32, #tpu.memory_space<vmem>>, vector<16x25xf32>,
    %87 = vector.extract_strided_slice %79 {offsets = [0, 22], sizes = [16, 9], strides = [1, 1]} : vector<16x128xf32> to vector<16x9xf32>
    %cst_100 = arith.constant dense<0.000000e+00> : vector<16x25xf32>
    %88 = tpu.matmul %87, %80, %cst_100 {dimension_numbers = #tpu.dot_dimension_numbers<[1], [0], [0], [1], [0, 0, 1, 1], [], []>} : vector<16x9xf32>, vector<9x25xf32>, vector<16x25xf32> -> vector<16x25xf32>
    %c0_101 = arith.constant 0 : index
    %c282 = arith.constant 282 : index
    %89 = vector.load %arg12[%c0_101, %c282] : memref<16x1024xf32, #tpu.memory_space<vmem>>, vector<16x25xf32>
    tpu.vector_store %arg12[%c0_101, %c282], %88 {strides = array<i32>} : memref<16x1024xf32, #tpu.memory_space<vmem>>, vector<16x25xf32>,
    %90 = vector.extract_strided_slice %79 {offsets = [0, 33], sizes = [16, 9], strides = [1, 1]} : vector<16x128xf32> to vector<16x9xf32>
    %cst_102 = arith.constant dense<0.000000e+00> : vector<16x25xf32>
    %91 = tpu.matmul %90, %80, %cst_102 {dimension_numbers = #tpu.dot_dimension_numbers<[1], [0], [0], [1], [0, 0, 1, 1], [], []>} : vector<16x9xf32>, vector<9x25xf32>, vector<16x25xf32> -> vector<16x25xf32>
    %c0_103 = arith.constant 0 : index
    %c375 = arith.constant 375 : index
    %92 = vector.load %arg12[%c0_103, %c375] : memref<16x1024xf32, #tpu.memory_space<vmem>>, vector<16x25xf32>
    tpu.vector_store %arg12[%c0_103, %c375], %91 {strides = array<i32>} : memref<16x1024xf32, #tpu.memory_space<vmem>>, vector<16x25xf32>,
    %93 = vector.extract_strided_slice %79 {offsets = [0, 44], sizes = [16, 9], strides = [1, 1]} : vector<16x128xf32> to vector<16x9xf32>
    %cst_104 = arith.constant dense<0.000000e+00> : vector<16x25xf32>
    %94 = tpu.matmul %93, %80, %cst_104 {dimension_numbers = #tpu.dot_dimension_numbers<[1], [0], [0], [1], [0, 0, 1, 1], [], []>} : vector<16x9xf32>, vector<9x25xf32>, vector<16x25xf32> -> vector<16x25xf32>
    %c0_105 = arith.constant 0 : index
    %c468 = arith.constant 468 : index
    %95 = vector.load %arg12[%c0_105, %c468] : memref<16x1024xf32, #tpu.memory_space<vmem>>, vector<16x25xf32>
    tpu.vector_store %arg12[%c0_105, %c468], %94 {strides = array<i32>} : memref<16x1024xf32, #tpu.memory_space<vmem>>, vector<16x25xf32>,
    %96 = vector.extract_strided_slice %79 {offsets = [0, 55], sizes = [16, 9], strides = [1, 1]} : vector<16x128xf32> to vector<16x9xf32>
    %cst_106 = arith.constant dense<0.000000e+00> : vector<16x25xf32>
    %97 = tpu.matmul %96, %80, %cst_106 {dimension_numbers = #tpu.dot_dimension_numbers<[1], [0], [0], [1], [0, 0, 1, 1], [], []>} : vector<16x9xf32>, vector<9x25xf32>, vector<16x25xf32> -> vector<16x25xf32>
    %c0_107 = arith.constant 0 : index
    %c561 = arith.constant 561 : index
    %98 = vector.load %arg12[%c0_107, %c561] : memref<16x1024xf32, #tpu.memory_space<vmem>>, vector<16x25xf32>
    tpu.vector_store %arg12[%c0_107, %c561], %97 {strides = array<i32>} : memref<16x1024xf32, #tpu.memory_space<vmem>>, vector<16x25xf32>,
    %99 = vector.extract_strided_slice %79 {offsets = [0, 66], sizes = [16, 9], strides = [1, 1]} : vector<16x128xf32> to vector<16x9xf32>
    %cst_108 = arith.constant dense<0.000000e+00> : vector<16x25xf32>
    %100 = tpu.matmul %99, %80, %cst_108 {dimension_numbers = #tpu.dot_dimension_numbers<[1], [0], [0], [1], [0, 0, 1, 1], [], []>} : vector<16x9xf32>, vector<9x25xf32>, vector<16x25xf32> -> vector<16x25xf32>
    %c0_109 = arith.constant 0 : index
    %c654 = arith.constant 654 : index
    %101 = vector.load %arg12[%c0_109, %c654] : memref<16x1024xf32, #tpu.memory_space<vmem>>, vector<16x25xf32>
    tpu.vector_store %arg12[%c0_109, %c654], %100 {strides = array<i32>} : memref<16x1024xf32, #tpu.memory_space<vmem>>, vector<16x25xf32>,
    %102 = vector.extract_strided_slice %79 {offsets = [0, 77], sizes = [16, 9], strides = [1, 1]} : vector<16x128xf32> to vector<16x9xf32>
    %cst_110 = arith.constant dense<0.000000e+00> : vector<16x25xf32>
    %103 = tpu.matmul %102, %80, %cst_110 {dimension_numbers = #tpu.dot_dimension_numbers<[1], [0], [0], [1], [0, 0, 1, 1], [], []>} : vector<16x9xf32>, vector<9x25xf32>, vector<16x25xf32> -> vector<16x25xf32>
    %c0_111 = arith.constant 0 : index
    %c747 = arith.constant 747 : index
    %104 = vector.load %arg12[%c0_111, %c747] : memref<16x1024xf32, #tpu.memory_space<vmem>>, vector<16x25xf32>
    tpu.vector_store %arg12[%c0_111, %c747], %103 {strides = array<i32>} : memref<16x1024xf32, #tpu.memory_space<vmem>>, vector<16x25xf32>,
    %105 = vector.extract_strided_slice %79 {offsets = [0, 88], sizes = [16, 9], strides = [1, 1]} : vector<16x128xf32> to vector<16x9xf32>
    %cst_112 = arith.constant dense<0.000000e+00> : vector<16x25xf32>
    %106 = tpu.matmul %105, %80, %cst_112 {dimension_numbers = #tpu.dot_dimension_numbers<[1], [0], [0], [1], [0, 0, 1, 1], [], []>} : vector<16x9xf32>, vector<9x25xf32>, vector<16x25xf32> -> vector<16x25xf32>
    %c0_113 = arith.constant 0 : index
    %c840 = arith.constant 840 : index
    %107 = vector.load %arg12[%c0_113, %c840] : memref<16x1024xf32, #tpu.memory_space<vmem>>, vector<16x25xf32>
    tpu.vector_store %arg12[%c0_113, %c840], %106 {strides = array<i32>} : memref<16x1024xf32, #tpu.memory_space<vmem>>, vector<16x25xf32>,
    %c0_114 = arith.constant 0 : index
    %c0_115 = arith.constant 0 : index
    %108 = vector.load %arg4[%c0_114, %c0_115] : memref<8x400xf32, #tpu.memory_space<vmem>>, vector<8x400xf32>
    %c0_116 = arith.constant 0 : index
    %c0_117 = arith.constant 0 : index
    %109 = vector.load %arg12[%c0_116, %c0_117] : memref<16x1024xf32, #tpu.memory_space<vmem>>, vector<16x896xf32>
    %c0_118 = arith.constant 0 : index
    %c0_119 = arith.constant 0 : index
    %110 = vector.load %arg15[%c0_118, %c0_119] : memref<400x896xf32, #tpu.memory_space<vmem>>, vector<16x896xf32>
    tpu.vector_store %arg15[%c0_118, %c0_119], %109 {strides = array<i32>} : memref<400x896xf32, #tpu.memory_space<vmem>>, vector<16x896xf32>,
    %c0_120 = arith.constant 0 : index
    %c1_121 = arith.constant 1 : index
    %111 = vector.load %arg12[%c0_120, %c1_121] : memref<16x1024xf32, #tpu.memory_space<vmem>>, vector<16x896xf32>
    %c16_122 = arith.constant 16 : index
    %c0_123 = arith.constant 0 : index
    %112 = vector.load %arg15[%c16_122, %c0_123] : memref<400x896xf32, #tpu.memory_space<vmem>>, vector<16x896xf32>
    tpu.vector_store %arg15[%c16_122, %c0_123], %111 {strides = array<i32>} : memref<400x896xf32, #tpu.memory_space<vmem>>, vector<16x896xf32>,
    %c0_124 = arith.constant 0 : index
    %c2_125 = arith.constant 2 : index
    %113 = vector.load %arg12[%c0_124, %c2_125] : memref<16x1024xf32, #tpu.memory_space<vmem>>, vector<16x896xf32>
    %c32_126 = arith.constant 32 : index
    %c0_127 = arith.constant 0 : index
    %114 = vector.load %arg15[%c32_126, %c0_127] : memref<400x896xf32, #tpu.memory_space<vmem>>, vector<16x896xf32>
    tpu.vector_store %arg15[%c32_126, %c0_127], %113 {strides = array<i32>} : memref<400x896xf32, #tpu.memory_space<vmem>>, vector<16x896xf32>,
    %c0_128 = arith.constant 0 : index
    %c3_129 = arith.constant 3 : index
    %115 = vector.load %arg12[%c0_128, %c3_129] : memref<16x1024xf32, #tpu.memory_space<vmem>>, vector<16x896xf32>
    %c48_130 = arith.constant 48 : index
    %c0_131 = arith.constant 0 : index
    %116 = vector.load %arg15[%c48_130, %c0_131] : memref<400x896xf32, #tpu.memory_space<vmem>>, vector<16x896xf32>
    tpu.vector_store %arg15[%c48_130, %c0_131], %115 {strides = array<i32>} : memref<400x896xf32, #tpu.memory_space<vmem>>, vector<16x896xf32>,
    %c0_132 = arith.constant 0 : index
    %c4_133 = arith.constant 4 : index
    %117 = vector.load %arg12[%c0_132, %c4_133] : memref<16x1024xf32, #tpu.memory_space<vmem>>, vector<16x896xf32>
    %c64_134 = arith.constant 64 : index
    %c0_135 = arith.constant 0 : index
    %118 = vector.load %arg15[%c64_134, %c0_135] : memref<400x896xf32, #tpu.memory_space<vmem>>, vector<16x896xf32>
    tpu.vector_store %arg15[%c64_134, %c0_135], %117 {strides = array<i32>} : memref<400x896xf32, #tpu.memory_space<vmem>>, vector<16x896xf32>,
    %c0_136 = arith.constant 0 : index
    %c31 = arith.constant 31 : index
    %119 = vector.load %arg12[%c0_136, %c31] : memref<16x1024xf32, #tpu.memory_space<vmem>>, vector<16x896xf32>
    %c80 = arith.constant 80 : index
    %c0_137 = arith.constant 0 : index
    %120 = vector.load %arg15[%c80, %c0_137] : memref<400x896xf32, #tpu.memory_space<vmem>>, vector<16x896xf32>
    tpu.vector_store %arg15[%c80, %c0_137], %119 {strides = array<i32>} : memref<400x896xf32, #tpu.memory_space<vmem>>, vector<16x896xf32>,
    %c0_138 = arith.constant 0 : index
    %c32_139 = arith.constant 32 : index
    %121 = vector.load %arg12[%c0_138, %c32_139] : memref<16x1024xf32, #tpu.memory_space<vmem>>, vector<16x896xf32>
    %c96_140 = arith.constant 96 : index
    %c0_141 = arith.constant 0 : index
    %122 = vector.load %arg15[%c96_140, %c0_141] : memref<400x896xf32, #tpu.memory_space<vmem>>, vector<16x896xf32>
    tpu.vector_store %arg15[%c96_140, %c0_141], %121 {strides = array<i32>} : memref<400x896xf32, #tpu.memory_space<vmem>>, vector<16x896xf32>,
    %c0_142 = arith.constant 0 : index
    %c33 = arith.constant 33 : index
    %123 = vector.load %arg12[%c0_142, %c33] : memref<16x1024xf32, #tpu.memory_space<vmem>>, vector<16x896xf32>
    %c112 = arith.constant 112 : index
    %c0_143 = arith.constant 0 : index
    %124 = vector.load %arg15[%c112, %c0_143] : memref<400x896xf32, #tpu.memory_space<vmem>>, vector<16x896xf32>
    tpu.vector_store %arg15[%c112, %c0_143], %123 {strides = array<i32>} : memref<400x896xf32, #tpu.memory_space<vmem>>, vector<16x896xf32>,
    %c0_144 = arith.constant 0 : index
    %c34 = arith.constant 34 : index
    %125 = vector.load %arg12[%c0_144, %c34] : memref<16x1024xf32, #tpu.memory_space<vmem>>, vector<16x896xf32>
    %c128 = arith.constant 128 : index
    %c0_145 = arith.constant 0 : index
    %126 = vector.load %arg15[%c128, %c0_145] : memref<400x896xf32, #tpu.memory_space<vmem>>, vector<16x896xf32>
    tpu.vector_store %arg15[%c128, %c0_145], %125 {strides = array<i32>} : memref<400x896xf32, #tpu.memory_space<vmem>>, vector<16x896xf32>,
    %c0_146 = arith.constant 0 : index
    %c35 = arith.constant 35 : index
    %127 = vector.load %arg12[%c0_146, %c35] : memref<16x1024xf32, #tpu.memory_space<vmem>>, vector<16x896xf32>
    %c144 = arith.constant 144 : index
    %c0_147 = arith.constant 0 : index
    %128 = vector.load %arg15[%c144, %c0_147] : memref<400x896xf32, #tpu.memory_space<vmem>>, vector<16x896xf32>
    tpu.vector_store %arg15[%c144, %c0_147], %127 {strides = array<i32>} : memref<400x896xf32, #tpu.memory_space<vmem>>, vector<16x896xf32>,
    %c0_148 = arith.constant 0 : index
    %c62 = arith.constant 62 : index
    %129 = vector.load %arg12[%c0_148, %c62] : memref<16x1024xf32, #tpu.memory_space<vmem>>, vector<16x896xf32>
    %c160 = arith.constant 160 : index
    %c0_149 = arith.constant 0 : index
    %130 = vector.load %arg15[%c160, %c0_149] : memref<400x896xf32, #tpu.memory_space<vmem>>, vector<16x896xf32>
    tpu.vector_store %arg15[%c160, %c0_149], %129 {strides = array<i32>} : memref<400x896xf32, #tpu.memory_space<vmem>>, vector<16x896xf32>,
    %c0_150 = arith.constant 0 : index
    %c63 = arith.constant 63 : index
    %131 = vector.load %arg12[%c0_150, %c63] : memref<16x1024xf32, #tpu.memory_space<vmem>>, vector<16x896xf32>
    %c176 = arith.constant 176 : index
    %c0_151 = arith.constant 0 : index
    %132 = vector.load %arg15[%c176, %c0_151] : memref<400x896xf32, #tpu.memory_space<vmem>>, vector<16x896xf32>
    tpu.vector_store %arg15[%c176, %c0_151], %131 {strides = array<i32>} : memref<400x896xf32, #tpu.memory_space<vmem>>, vector<16x896xf32>,
    %c0_152 = arith.constant 0 : index
    %c64_153 = arith.constant 64 : index
    %133 = vector.load %arg12[%c0_152, %c64_153] : memref<16x1024xf32, #tpu.memory_space<vmem>>, vector<16x896xf32>
    %c192 = arith.constant 192 : index
    %c0_154 = arith.constant 0 : index
    %134 = vector.load %arg15[%c192, %c0_154] : memref<400x896xf32, #tpu.memory_space<vmem>>, vector<16x896xf32>
    tpu.vector_store %arg15[%c192, %c0_154], %133 {strides = array<i32>} : memref<400x896xf32, #tpu.memory_space<vmem>>, vector<16x896xf32>,
    %c0_155 = arith.constant 0 : index
    %c65 = arith.constant 65 : index
    %135 = vector.load %arg12[%c0_155, %c65] : memref<16x1024xf32, #tpu.memory_space<vmem>>, vector<16x896xf32>
    %c208 = arith.constant 208 : index
    %c0_156 = arith.constant 0 : index
    %136 = vector.load %arg15[%c208, %c0_156] : memref<400x896xf32, #tpu.memory_space<vmem>>, vector<16x896xf32>
    tpu.vector_store %arg15[%c208, %c0_156], %135 {strides = array<i32>} : memref<400x896xf32, #tpu.memory_space<vmem>>, vector<16x896xf32>,
    %c0_157 = arith.constant 0 : index
    %c66 = arith.constant 66 : index
    %137 = vector.load %arg12[%c0_157, %c66] : memref<16x1024xf32, #tpu.memory_space<vmem>>, vector<16x896xf32>
    %c224 = arith.constant 224 : index
    %c0_158 = arith.constant 0 : index
    %138 = vector.load %arg15[%c224, %c0_158] : memref<400x896xf32, #tpu.memory_space<vmem>>, vector<16x896xf32>
    tpu.vector_store %arg15[%c224, %c0_158], %137 {strides = array<i32>} : memref<400x896xf32, #tpu.memory_space<vmem>>, vector<16x896xf32>,
    %c0_159 = arith.constant 0 : index
    %c93 = arith.constant 93 : index
    %139 = vector.load %arg12[%c0_159, %c93] : memref<16x1024xf32, #tpu.memory_space<vmem>>, vector<16x896xf32>
    %c240 = arith.constant 240 : index
    %c0_160 = arith.constant 0 : index
    %140 = vector.load %arg15[%c240, %c0_160] : memref<400x896xf32, #tpu.memory_space<vmem>>, vector<16x896xf32>
    tpu.vector_store %arg15[%c240, %c0_160], %139 {strides = array<i32>} : memref<400x896xf32, #tpu.memory_space<vmem>>, vector<16x896xf32>,
    %c0_161 = arith.constant 0 : index
    %c94_162 = arith.constant 94 : index
    %141 = vector.load %arg12[%c0_161, %c94_162] : memref<16x1024xf32, #tpu.memory_space<vmem>>, vector<16x896xf32>
    %c256 = arith.constant 256 : index
    %c0_163 = arith.constant 0 : index
    %142 = vector.load %arg15[%c256, %c0_163] : memref<400x896xf32, #tpu.memory_space<vmem>>, vector<16x896xf32>
    tpu.vector_store %arg15[%c256, %c0_163], %141 {strides = array<i32>} : memref<400x896xf32, #tpu.memory_space<vmem>>, vector<16x896xf32>,
    %c0_164 = arith.constant 0 : index
    %c95 = arith.constant 95 : index
    %143 = vector.load %arg12[%c0_164, %c95] : memref<16x1024xf32, #tpu.memory_space<vmem>>, vector<16x896xf32>
    %c272 = arith.constant 272 : index
    %c0_165 = arith.constant 0 : index
    %144 = vector.load %arg15[%c272, %c0_165] : memref<400x896xf32, #tpu.memory_space<vmem>>, vector<16x896xf32>
    tpu.vector_store %arg15[%c272, %c0_165], %143 {strides = array<i32>} : memref<400x896xf32, #tpu.memory_space<vmem>>, vector<16x896xf32>,
    %c0_166 = arith.constant 0 : index
    %c96_167 = arith.constant 96 : index
    %145 = vector.load %arg12[%c0_166, %c96_167] : memref<16x1024xf32, #tpu.memory_space<vmem>>, vector<16x896xf32>
    %c288 = arith.constant 288 : index
    %c0_168 = arith.constant 0 : index
    %146 = vector.load %arg15[%c288, %c0_168] : memref<400x896xf32, #tpu.memory_space<vmem>>, vector<16x896xf32>
    tpu.vector_store %arg15[%c288, %c0_168], %145 {strides = array<i32>} : memref<400x896xf32, #tpu.memory_space<vmem>>, vector<16x896xf32>,
    %c0_169 = arith.constant 0 : index
    %c97 = arith.constant 97 : index
    %147 = vector.load %arg12[%c0_169, %c97] : memref<16x1024xf32, #tpu.memory_space<vmem>>, vector<16x896xf32>
    %c304 = arith.constant 304 : index
    %c0_170 = arith.constant 0 : index
    %148 = vector.load %arg15[%c304, %c0_170] : memref<400x896xf32, #tpu.memory_space<vmem>>, vector<16x896xf32>
    tpu.vector_store %arg15[%c304, %c0_170], %147 {strides = array<i32>} : memref<400x896xf32, #tpu.memory_space<vmem>>, vector<16x896xf32>,
    %c0_171 = arith.constant 0 : index
    %c124 = arith.constant 124 : index
    %149 = vector.load %arg12[%c0_171, %c124] : memref<16x1024xf32, #tpu.memory_space<vmem>>, vector<16x896xf32>
    %c320 = arith.constant 320 : index
    %c0_172 = arith.constant 0 : index
    %150 = vector.load %arg15[%c320, %c0_172] : memref<400x896xf32, #tpu.memory_space<vmem>>, vector<16x896xf32>
    tpu.vector_store %arg15[%c320, %c0_172], %149 {strides = array<i32>} : memref<400x896xf32, #tpu.memory_space<vmem>>, vector<16x896xf32>,
    %c0_173 = arith.constant 0 : index
    %c125 = arith.constant 125 : index
    %151 = vector.load %arg12[%c0_173, %c125] : memref<16x1024xf32, #tpu.memory_space<vmem>>, vector<16x896xf32>
    %c336 = arith.constant 336 : index
    %c0_174 = arith.constant 0 : index
    %152 = vector.load %arg15[%c336, %c0_174] : memref<400x896xf32, #tpu.memory_space<vmem>>, vector<16x896xf32>
    tpu.vector_store %arg15[%c336, %c0_174], %151 {strides = array<i32>} : memref<400x896xf32, #tpu.memory_space<vmem>>, vector<16x896xf32>,
    %c0_175 = arith.constant 0 : index
    %c126 = arith.constant 126 : index
    %153 = vector.load %arg12[%c0_175, %c126] : memref<16x1024xf32, #tpu.memory_space<vmem>>, vector<16x896xf32>
    %c352 = arith.constant 352 : index
    %c0_176 = arith.constant 0 : index
    %154 = vector.load %arg15[%c352, %c0_176] : memref<400x896xf32, #tpu.memory_space<vmem>>, vector<16x896xf32>
    tpu.vector_store %arg15[%c352, %c0_176], %153 {strides = array<i32>} : memref<400x896xf32, #tpu.memory_space<vmem>>, vector<16x896xf32>,
    %c0_177 = arith.constant 0 : index
    %c127 = arith.constant 127 : index
    %155 = vector.load %arg12[%c0_177, %c127] : memref<16x1024xf32, #tpu.memory_space<vmem>>, vector<16x896xf32>
    %c368 = arith.constant 368 : index
    %c0_178 = arith.constant 0 : index
    %156 = vector.load %arg15[%c368, %c0_178] : memref<400x896xf32, #tpu.memory_space<vmem>>, vector<16x896xf32>
    tpu.vector_store %arg15[%c368, %c0_178], %155 {strides = array<i32>} : memref<400x896xf32, #tpu.memory_space<vmem>>, vector<16x896xf32>,
    %c0_179 = arith.constant 0 : index
    %c128_180 = arith.constant 128 : index
    %157 = vector.load %arg12[%c0_179, %c128_180] : memref<16x1024xf32, #tpu.memory_space<vmem>>, vector<16x896xf32>
    %c384 = arith.constant 384 : index
    %c0_181 = arith.constant 0 : index
    %158 = vector.load %arg15[%c384, %c0_181] : memref<400x896xf32, #tpu.memory_space<vmem>>, vector<16x896xf32>
    tpu.vector_store %arg15[%c384, %c0_181], %157 {strides = array<i32>} : memref<400x896xf32, #tpu.memory_space<vmem>>, vector<16x896xf32>,
    %c0_182 = arith.constant 0 : index
    %c0_183 = arith.constant 0 : index
    %159 = vector.load %arg15[%c0_182, %c0_183] : memref<400x896xf32, #tpu.memory_space<vmem>>, vector<400x896xf32>
    %cst_184 = arith.constant dense<0.000000e+00> : vector<8x896xf32>
    %160 = tpu.matmul %108, %159, %cst_184 {dimension_numbers = #tpu.dot_dimension_numbers<[1], [0], [0], [1], [0, 0, 1, 1], [], []>} : vector<8x400xf32>, vector<400x896xf32>, vector<8x896xf32> -> vector<8x896xf32>
    %c0_185 = arith.constant 0 : index
    %c0_186 = arith.constant 0 : index
    %161 = vector.load %arg5[%c0_185, %c0_186] : memref<8x1xf32, #tpu.memory_space<vmem>>, vector<8x1xf32>
    %162 = vector.broadcast %161 : vector<8x1xf32> to vector<8x896xf32>
    %163 = arith.addf %160, %162 : vector<8x896xf32>
    %cst_187 = arith.constant 0.000000e+00 : f32
    %164 = vector.broadcast %cst_187 : f32 to vector<8x896xf32>
    %165 = arith.maximumf %163, %164 : vector<8x896xf32>
    %c0_188 = arith.constant 0 : index
    %c0_189 = arith.constant 0 : index
    %166 = vector.load %arg9[%c0_188, %c0_189] : memref<27x53xf32, #tpu.memory_space<vmem>>, vector<27x53xf32>
    %167 = vector.extract_strided_slice %165 {offsets = [0, 0], sizes = [8, 27], strides = [1, 1]} : vector<8x896xf32> to vector<8x27xf32>
    %cst_190 = arith.constant dense<0.000000e+00> : vector<8x53xf32>
    %168 = tpu.matmul %167, %166, %cst_190 {dimension_numbers = #tpu.dot_dimension_numbers<[1], [0], [0], [1], [0, 0, 1, 1], [], []>} : vector<8x27xf32>, vector<27x53xf32>, vector<8x53xf32> -> vector<8x53xf32>
    %c0_191 = arith.constant 0 : index
    %c0_192 = arith.constant 0 : index
    %169 = vector.load %arg13[%c0_191, %c0_192] : memref<8x2870xf32, #tpu.memory_space<vmem>>, vector<8x53xf32>
    tpu.vector_store %arg13[%c0_191, %c0_192], %168 {strides = array<i32>} : memref<8x2870xf32, #tpu.memory_space<vmem>>, vector<8x53xf32>,
    %170 = vector.extract_strided_slice %165 {offsets = [0, 31], sizes = [8, 27], strides = [1, 1]} : vector<8x896xf32> to vector<8x27xf32>
    %cst_193 = arith.constant dense<0.000000e+00> : vector<8x53xf32>
    %171 = tpu.matmul %170, %166, %cst_193 {dimension_numbers = #tpu.dot_dimension_numbers<[1], [0], [0], [1], [0, 0, 1, 1], [], []>} : vector<8x27xf32>, vector<27x53xf32>, vector<8x53xf32> -> vector<8x53xf32>
    %c0_194 = arith.constant 0 : index
    %c106 = arith.constant 106 : index
    %172 = vector.load %arg13[%c0_194, %c106] : memref<8x2870xf32, #tpu.memory_space<vmem>>, vector<8x53xf32>
    tpu.vector_store %arg13[%c0_194, %c106], %171 {strides = array<i32>} : memref<8x2870xf32, #tpu.memory_space<vmem>>, vector<8x53xf32>,
    %173 = vector.extract_strided_slice %165 {offsets = [0, 62], sizes = [8, 27], strides = [1, 1]} : vector<8x896xf32> to vector<8x27xf32>
    %cst_195 = arith.constant dense<0.000000e+00> : vector<8x53xf32>
    %174 = tpu.matmul %173, %166, %cst_195 {dimension_numbers = #tpu.dot_dimension_numbers<[1], [0], [0], [1], [0, 0, 1, 1], [], []>} : vector<8x27xf32>, vector<27x53xf32>, vector<8x53xf32> -> vector<8x53xf32>
    %c0_196 = arith.constant 0 : index
    %c212 = arith.constant 212 : index
    %175 = vector.load %arg13[%c0_196, %c212] : memref<8x2870xf32, #tpu.memory_space<vmem>>, vector<8x53xf32>
    tpu.vector_store %arg13[%c0_196, %c212], %174 {strides = array<i32>} : memref<8x2870xf32, #tpu.memory_space<vmem>>, vector<8x53xf32>,
    %176 = vector.extract_strided_slice %165 {offsets = [0, 93], sizes = [8, 27], strides = [1, 1]} : vector<8x896xf32> to vector<8x27xf32>
    %cst_197 = arith.constant dense<0.000000e+00> : vector<8x53xf32>
    %177 = tpu.matmul %176, %166, %cst_197 {dimension_numbers = #tpu.dot_dimension_numbers<[1], [0], [0], [1], [0, 0, 1, 1], [], []>} : vector<8x27xf32>, vector<27x53xf32>, vector<8x53xf32> -> vector<8x53xf32>
    %c0_198 = arith.constant 0 : index
    %c318 = arith.constant 318 : index
    %178 = vector.load %arg13[%c0_198, %c318] : memref<8x2870xf32, #tpu.memory_space<vmem>>, vector<8x53xf32>
    tpu.vector_store %arg13[%c0_198, %c318], %177 {strides = array<i32>} : memref<8x2870xf32, #tpu.memory_space<vmem>>, vector<8x53xf32>,
    %179 = vector.extract_strided_slice %165 {offsets = [0, 124], sizes = [8, 27], strides = [1, 1]} : vector<8x896xf32> to vector<8x27xf32>
    %cst_199 = arith.constant dense<0.000000e+00> : vector<8x53xf32>
    %180 = tpu.matmul %179, %166, %cst_199 {dimension_numbers = #tpu.dot_dimension_numbers<[1], [0], [0], [1], [0, 0, 1, 1], [], []>} : vector<8x27xf32>, vector<27x53xf32>, vector<8x53xf32> -> vector<8x53xf32>
    %c0_200 = arith.constant 0 : index
    %c424 = arith.constant 424 : index
    %181 = vector.load %arg13[%c0_200, %c424] : memref<8x2870xf32, #tpu.memory_space<vmem>>, vector<8x53xf32>
    tpu.vector_store %arg13[%c0_200, %c424], %180 {strides = array<i32>} : memref<8x2870xf32, #tpu.memory_space<vmem>>, vector<8x53xf32>,
    %182 = vector.extract_strided_slice %165 {offsets = [0, 155], sizes = [8, 27], strides = [1, 1]} : vector<8x896xf32> to vector<8x27xf32>
    %cst_201 = arith.constant dense<0.000000e+00> : vector<8x53xf32>
    %183 = tpu.matmul %182, %166, %cst_201 {dimension_numbers = #tpu.dot_dimension_numbers<[1], [0], [0], [1], [0, 0, 1, 1], [], []>} : vector<8x27xf32>, vector<27x53xf32>, vector<8x53xf32> -> vector<8x53xf32>
    %c0_202 = arith.constant 0 : index
    %c530 = arith.constant 530 : index
    %184 = vector.load %arg13[%c0_202, %c530] : memref<8x2870xf32, #tpu.memory_space<vmem>>, vector<8x53xf32>
    tpu.vector_store %arg13[%c0_202, %c530], %183 {strides = array<i32>} : memref<8x2870xf32, #tpu.memory_space<vmem>>, vector<8x53xf32>,
    %185 = vector.extract_strided_slice %165 {offsets = [0, 186], sizes = [8, 27], strides = [1, 1]} : vector<8x896xf32> to vector<8x27xf32>
    %cst_203 = arith.constant dense<0.000000e+00> : vector<8x53xf32>
    %186 = tpu.matmul %185, %166, %cst_203 {dimension_numbers = #tpu.dot_dimension_numbers<[1], [0], [0], [1], [0, 0, 1, 1], [], []>} : vector<8x27xf32>, vector<27x53xf32>, vector<8x53xf32> -> vector<8x53xf32>
    %c0_204 = arith.constant 0 : index
    %c636 = arith.constant 636 : index
    %187 = vector.load %arg13[%c0_204, %c636] : memref<8x2870xf32, #tpu.memory_space<vmem>>, vector<8x53xf32>
    tpu.vector_store %arg13[%c0_204, %c636], %186 {strides = array<i32>} : memref<8x2870xf32, #tpu.memory_space<vmem>>, vector<8x53xf32>,
    %188 = vector.extract_strided_slice %165 {offsets = [0, 217], sizes = [8, 27], strides = [1, 1]} : vector<8x896xf32> to vector<8x27xf32>
    %cst_205 = arith.constant dense<0.000000e+00> : vector<8x53xf32>
    %189 = tpu.matmul %188, %166, %cst_205 {dimension_numbers = #tpu.dot_dimension_numbers<[1], [0], [0], [1], [0, 0, 1, 1], [], []>} : vector<8x27xf32>, vector<27x53xf32>, vector<8x53xf32> -> vector<8x53xf32>
    %c0_206 = arith.constant 0 : index
    %c742 = arith.constant 742 : index
    %190 = vector.load %arg13[%c0_206, %c742] : memref<8x2870xf32, #tpu.memory_space<vmem>>, vector<8x53xf32>
    tpu.vector_store %arg13[%c0_206, %c742], %189 {strides = array<i32>} : memref<8x2870xf32, #tpu.memory_space<vmem>>, vector<8x53xf32>,
    %191 = vector.extract_strided_slice %165 {offsets = [0, 248], sizes = [8, 27], strides = [1, 1]} : vector<8x896xf32> to vector<8x27xf32>
    %cst_207 = arith.constant dense<0.000000e+00> : vector<8x53xf32>
    %192 = tpu.matmul %191, %166, %cst_207 {dimension_numbers = #tpu.dot_dimension_numbers<[1], [0], [0], [1], [0, 0, 1, 1], [], []>} : vector<8x27xf32>, vector<27x53xf32>, vector<8x53xf32> -> vector<8x53xf32>
    %c0_208 = arith.constant 0 : index
    %c848 = arith.constant 848 : index
    %193 = vector.load %arg13[%c0_208, %c848] : memref<8x2870xf32, #tpu.memory_space<vmem>>, vector<8x53xf32>
    tpu.vector_store %arg13[%c0_208, %c848], %192 {strides = array<i32>} : memref<8x2870xf32, #tpu.memory_space<vmem>>, vector<8x53xf32>,
    %194 = vector.extract_strided_slice %165 {offsets = [0, 279], sizes = [8, 27], strides = [1, 1]} : vector<8x896xf32> to vector<8x27xf32>
    %cst_209 = arith.constant dense<0.000000e+00> : vector<8x53xf32>
    %195 = tpu.matmul %194, %166, %cst_209 {dimension_numbers = #tpu.dot_dimension_numbers<[1], [0], [0], [1], [0, 0, 1, 1], [], []>} : vector<8x27xf32>, vector<27x53xf32>, vector<8x53xf32> -> vector<8x53xf32>
    %c0_210 = arith.constant 0 : index
    %c954 = arith.constant 954 : index
    %196 = vector.load %arg13[%c0_210, %c954] : memref<8x2870xf32, #tpu.memory_space<vmem>>, vector<8x53xf32>
    tpu.vector_store %arg13[%c0_210, %c954], %195 {strides = array<i32>} : memref<8x2870xf32, #tpu.memory_space<vmem>>, vector<8x53xf32>,
    %197 = vector.extract_strided_slice %165 {offsets = [0, 310], sizes = [8, 27], strides = [1, 1]} : vector<8x896xf32> to vector<8x27xf32>
    %cst_211 = arith.constant dense<0.000000e+00> : vector<8x53xf32>
    %198 = tpu.matmul %197, %166, %cst_211 {dimension_numbers = #tpu.dot_dimension_numbers<[1], [0], [0], [1], [0, 0, 1, 1], [], []>} : vector<8x27xf32>, vector<27x53xf32>, vector<8x53xf32> -> vector<8x53xf32>
    %c0_212 = arith.constant 0 : index
    %c1060 = arith.constant 1060 : index
    %199 = vector.load %arg13[%c0_212, %c1060] : memref<8x2870xf32, #tpu.memory_space<vmem>>, vector<8x53xf32>
    tpu.vector_store %arg13[%c0_212, %c1060], %198 {strides = array<i32>} : memref<8x2870xf32, #tpu.memory_space<vmem>>, vector<8x53xf32>,
    %200 = vector.extract_strided_slice %165 {offsets = [0, 341], sizes = [8, 27], strides = [1, 1]} : vector<8x896xf32> to vector<8x27xf32>
    %cst_213 = arith.constant dense<0.000000e+00> : vector<8x53xf32>
    %201 = tpu.matmul %200, %166, %cst_213 {dimension_numbers = #tpu.dot_dimension_numbers<[1], [0], [0], [1], [0, 0, 1, 1], [], []>} : vector<8x27xf32>, vector<27x53xf32>, vector<8x53xf32> -> vector<8x53xf32>
    %c0_214 = arith.constant 0 : index
    %c1166 = arith.constant 1166 : index
    %202 = vector.load %arg13[%c0_214, %c1166] : memref<8x2870xf32, #tpu.memory_space<vmem>>, vector<8x53xf32>
    tpu.vector_store %arg13[%c0_214, %c1166], %201 {strides = array<i32>} : memref<8x2870xf32, #tpu.memory_space<vmem>>, vector<8x53xf32>,
    %203 = vector.extract_strided_slice %165 {offsets = [0, 372], sizes = [8, 27], strides = [1, 1]} : vector<8x896xf32> to vector<8x27xf32>
    %cst_215 = arith.constant dense<0.000000e+00> : vector<8x53xf32>
    %204 = tpu.matmul %203, %166, %cst_215 {dimension_numbers = #tpu.dot_dimension_numbers<[1], [0], [0], [1], [0, 0, 1, 1], [], []>} : vector<8x27xf32>, vector<27x53xf32>, vector<8x53xf32> -> vector<8x53xf32>
    %c0_216 = arith.constant 0 : index
    %c1272 = arith.constant 1272 : index
    %205 = vector.load %arg13[%c0_216, %c1272] : memref<8x2870xf32, #tpu.memory_space<vmem>>, vector<8x53xf32>
    tpu.vector_store %arg13[%c0_216, %c1272], %204 {strides = array<i32>} : memref<8x2870xf32, #tpu.memory_space<vmem>>, vector<8x53xf32>,
    %206 = vector.extract_strided_slice %165 {offsets = [0, 403], sizes = [8, 27], strides = [1, 1]} : vector<8x896xf32> to vector<8x27xf32>
    %cst_217 = arith.constant dense<0.000000e+00> : vector<8x53xf32>
    %207 = tpu.matmul %206, %166, %cst_217 {dimension_numbers = #tpu.dot_dimension_numbers<[1], [0], [0], [1], [0, 0, 1, 1], [], []>} : vector<8x27xf32>, vector<27x53xf32>, vector<8x53xf32> -> vector<8x53xf32>
    %c0_218 = arith.constant 0 : index
    %c1378 = arith.constant 1378 : index
    %208 = vector.load %arg13[%c0_218, %c1378] : memref<8x2870xf32, #tpu.memory_space<vmem>>, vector<8x53xf32>
    tpu.vector_store %arg13[%c0_218, %c1378], %207 {strides = array<i32>} : memref<8x2870xf32, #tpu.memory_space<vmem>>, vector<8x53xf32>,
    %209 = vector.extract_strided_slice %165 {offsets = [0, 434], sizes = [8, 27], strides = [1, 1]} : vector<8x896xf32> to vector<8x27xf32>
    %cst_219 = arith.constant dense<0.000000e+00> : vector<8x53xf32>
    %210 = tpu.matmul %209, %166, %cst_219 {dimension_numbers = #tpu.dot_dimension_numbers<[1], [0], [0], [1], [0, 0, 1, 1], [], []>} : vector<8x27xf32>, vector<27x53xf32>, vector<8x53xf32> -> vector<8x53xf32>
    %c0_220 = arith.constant 0 : index
    %c1484 = arith.constant 1484 : index
    %211 = vector.load %arg13[%c0_220, %c1484] : memref<8x2870xf32, #tpu.memory_space<vmem>>, vector<8x53xf32>
    tpu.vector_store %arg13[%c0_220, %c1484], %210 {strides = array<i32>} : memref<8x2870xf32, #tpu.memory_space<vmem>>, vector<8x53xf32>,
    %212 = vector.extract_strided_slice %165 {offsets = [0, 465], sizes = [8, 27], strides = [1, 1]} : vector<8x896xf32> to vector<8x27xf32>
    %cst_221 = arith.constant dense<0.000000e+00> : vector<8x53xf32>
    %213 = tpu.matmul %212, %166, %cst_221 {dimension_numbers = #tpu.dot_dimension_numbers<[1], [0], [0], [1], [0, 0, 1, 1], [], []>} : vector<8x27xf32>, vector<27x53xf32>, vector<8x53xf32> -> vector<8x53xf32>
    %c0_222 = arith.constant 0 : index
    %c1590 = arith.constant 1590 : index
    %214 = vector.load %arg13[%c0_222, %c1590] : memref<8x2870xf32, #tpu.memory_space<vmem>>, vector<8x53xf32>
    tpu.vector_store %arg13[%c0_222, %c1590], %213 {strides = array<i32>} : memref<8x2870xf32, #tpu.memory_space<vmem>>, vector<8x53xf32>,
    %215 = vector.extract_strided_slice %165 {offsets = [0, 496], sizes = [8, 27], strides = [1, 1]} : vector<8x896xf32> to vector<8x27xf32>
    %cst_223 = arith.constant dense<0.000000e+00> : vector<8x53xf32>
    %216 = tpu.matmul %215, %166, %cst_223 {dimension_numbers = #tpu.dot_dimension_numbers<[1], [0], [0], [1], [0, 0, 1, 1], [], []>} : vector<8x27xf32>, vector<27x53xf32>, vector<8x53xf32> -> vector<8x53xf32>
    %c0_224 = arith.constant 0 : index
    %c1696 = arith.constant 1696 : index
    %217 = vector.load %arg13[%c0_224, %c1696] : memref<8x2870xf32, #tpu.memory_space<vmem>>, vector<8x53xf32>
    tpu.vector_store %arg13[%c0_224, %c1696], %216 {strides = array<i32>} : memref<8x2870xf32, #tpu.memory_space<vmem>>, vector<8x53xf32>,
    %218 = vector.extract_strided_slice %165 {offsets = [0, 527], sizes = [8, 27], strides = [1, 1]} : vector<8x896xf32> to vector<8x27xf32>
    %cst_225 = arith.constant dense<0.000000e+00> : vector<8x53xf32>
    %219 = tpu.matmul %218, %166, %cst_225 {dimension_numbers = #tpu.dot_dimension_numbers<[1], [0], [0], [1], [0, 0, 1, 1], [], []>} : vector<8x27xf32>, vector<27x53xf32>, vector<8x53xf32> -> vector<8x53xf32>
    %c0_226 = arith.constant 0 : index
    %c1802 = arith.constant 1802 : index
    %220 = vector.load %arg13[%c0_226, %c1802] : memref<8x2870xf32, #tpu.memory_space<vmem>>, vector<8x53xf32>
    tpu.vector_store %arg13[%c0_226, %c1802], %219 {strides = array<i32>} : memref<8x2870xf32, #tpu.memory_space<vmem>>, vector<8x53xf32>,
    %221 = vector.extract_strided_slice %165 {offsets = [0, 558], sizes = [8, 27], strides = [1, 1]} : vector<8x896xf32> to vector<8x27xf32>
    %cst_227 = arith.constant dense<0.000000e+00> : vector<8x53xf32>
    %222 = tpu.matmul %221, %166, %cst_227 {dimension_numbers = #tpu.dot_dimension_numbers<[1], [0], [0], [1], [0, 0, 1, 1], [], []>} : vector<8x27xf32>, vector<27x53xf32>, vector<8x53xf32> -> vector<8x53xf32>
    %c0_228 = arith.constant 0 : index
    %c1908 = arith.constant 1908 : index
    %223 = vector.load %arg13[%c0_228, %c1908] : memref<8x2870xf32, #tpu.memory_space<vmem>>, vector<8x53xf32>
    tpu.vector_store %arg13[%c0_228, %c1908], %222 {strides = array<i32>} : memref<8x2870xf32, #tpu.memory_space<vmem>>, vector<8x53xf32>,
    %224 = vector.extract_strided_slice %165 {offsets = [0, 589], sizes = [8, 27], strides = [1, 1]} : vector<8x896xf32> to vector<8x27xf32>
    %cst_229 = arith.constant dense<0.000000e+00> : vector<8x53xf32>
    %225 = tpu.matmul %224, %166, %cst_229 {dimension_numbers = #tpu.dot_dimension_numbers<[1], [0], [0], [1], [0, 0, 1, 1], [], []>} : vector<8x27xf32>, vector<27x53xf32>, vector<8x53xf32> -> vector<8x53xf32>
    %c0_230 = arith.constant 0 : index
    %c2014 = arith.constant 2014 : index
    %226 = vector.load %arg13[%c0_230, %c2014] : memref<8x2870xf32, #tpu.memory_space<vmem>>, vector<8x53xf32>
    tpu.vector_store %arg13[%c0_230, %c2014], %225 {strides = array<i32>} : memref<8x2870xf32, #tpu.memory_space<vmem>>, vector<8x53xf32>,
    %227 = vector.extract_strided_slice %165 {offsets = [0, 620], sizes = [8, 27], strides = [1, 1]} : vector<8x896xf32> to vector<8x27xf32>
    %cst_231 = arith.constant dense<0.000000e+00> : vector<8x53xf32>
    %228 = tpu.matmul %227, %166, %cst_231 {dimension_numbers = #tpu.dot_dimension_numbers<[1], [0], [0], [1], [0, 0, 1, 1], [], []>} : vector<8x27xf32>, vector<27x53xf32>, vector<8x53xf32> -> vector<8x53xf32>
    %c0_232 = arith.constant 0 : index
    %c2120 = arith.constant 2120 : index
    %229 = vector.load %arg13[%c0_232, %c2120] : memref<8x2870xf32, #tpu.memory_space<vmem>>, vector<8x53xf32>
    tpu.vector_store %arg13[%c0_232, %c2120], %228 {strides = array<i32>} : memref<8x2870xf32, #tpu.memory_space<vmem>>, vector<8x53xf32>,
    %230 = vector.extract_strided_slice %165 {offsets = [0, 651], sizes = [8, 27], strides = [1, 1]} : vector<8x896xf32> to vector<8x27xf32>
    %cst_233 = arith.constant dense<0.000000e+00> : vector<8x53xf32>
    %231 = tpu.matmul %230, %166, %cst_233 {dimension_numbers = #tpu.dot_dimension_numbers<[1], [0], [0], [1], [0, 0, 1, 1], [], []>} : vector<8x27xf32>, vector<27x53xf32>, vector<8x53xf32> -> vector<8x53xf32>
    %c0_234 = arith.constant 0 : index
    %c2226 = arith.constant 2226 : index
    %232 = vector.load %arg13[%c0_234, %c2226] : memref<8x2870xf32, #tpu.memory_space<vmem>>, vector<8x53xf32>
    tpu.vector_store %arg13[%c0_234, %c2226], %231 {strides = array<i32>} : memref<8x2870xf32, #tpu.memory_space<vmem>>, vector<8x53xf32>,
    %233 = vector.extract_strided_slice %165 {offsets = [0, 682], sizes = [8, 27], strides = [1, 1]} : vector<8x896xf32> to vector<8x27xf32>
    %cst_235 = arith.constant dense<0.000000e+00> : vector<8x53xf32>
    %234 = tpu.matmul %233, %166, %cst_235 {dimension_numbers = #tpu.dot_dimension_numbers<[1], [0], [0], [1], [0, 0, 1, 1], [], []>} : vector<8x27xf32>, vector<27x53xf32>, vector<8x53xf32> -> vector<8x53xf32>
    %c0_236 = arith.constant 0 : index
    %c2332 = arith.constant 2332 : index
    %235 = vector.load %arg13[%c0_236, %c2332] : memref<8x2870xf32, #tpu.memory_space<vmem>>, vector<8x53xf32>
    tpu.vector_store %arg13[%c0_236, %c2332], %234 {strides = array<i32>} : memref<8x2870xf32, #tpu.memory_space<vmem>>, vector<8x53xf32>,
    %236 = vector.extract_strided_slice %165 {offsets = [0, 713], sizes = [8, 27], strides = [1, 1]} : vector<8x896xf32> to vector<8x27xf32>
    %cst_237 = arith.constant dense<0.000000e+00> : vector<8x53xf32>
    %237 = tpu.matmul %236, %166, %cst_237 {dimension_numbers = #tpu.dot_dimension_numbers<[1], [0], [0], [1], [0, 0, 1, 1], [], []>} : vector<8x27xf32>, vector<27x53xf32>, vector<8x53xf32> -> vector<8x53xf32>
    %c0_238 = arith.constant 0 : index
    %c2438 = arith.constant 2438 : index
    %238 = vector.load %arg13[%c0_238, %c2438] : memref<8x2870xf32, #tpu.memory_space<vmem>>, vector<8x53xf32>
    tpu.vector_store %arg13[%c0_238, %c2438], %237 {strides = array<i32>} : memref<8x2870xf32, #tpu.memory_space<vmem>>, vector<8x53xf32>,
    %239 = vector.extract_strided_slice %165 {offsets = [0, 744], sizes = [8, 27], strides = [1, 1]} : vector<8x896xf32> to vector<8x27xf32>
    %cst_239 = arith.constant dense<0.000000e+00> : vector<8x53xf32>
    %240 = tpu.matmul %239, %166, %cst_239 {dimension_numbers = #tpu.dot_dimension_numbers<[1], [0], [0], [1], [0, 0, 1, 1], [], []>} : vector<8x27xf32>, vector<27x53xf32>, vector<8x53xf32> -> vector<8x53xf32>
    %c0_240 = arith.constant 0 : index
    %c2544 = arith.constant 2544 : index
    %241 = vector.load %arg13[%c0_240, %c2544] : memref<8x2870xf32, #tpu.memory_space<vmem>>, vector<8x53xf32>
    tpu.vector_store %arg13[%c0_240, %c2544], %240 {strides = array<i32>} : memref<8x2870xf32, #tpu.memory_space<vmem>>, vector<8x53xf32>,
    %242 = vector.extract_strided_slice %165 {offsets = [0, 775], sizes = [8, 27], strides = [1, 1]} : vector<8x896xf32> to vector<8x27xf32>
    %cst_241 = arith.constant dense<0.000000e+00> : vector<8x53xf32>
    %243 = tpu.matmul %242, %166, %cst_241 {dimension_numbers = #tpu.dot_dimension_numbers<[1], [0], [0], [1], [0, 0, 1, 1], [], []>} : vector<8x27xf32>, vector<27x53xf32>, vector<8x53xf32> -> vector<8x53xf32>
    %c0_242 = arith.constant 0 : index
    %c2650 = arith.constant 2650 : index
    %244 = vector.load %arg13[%c0_242, %c2650] : memref<8x2870xf32, #tpu.memory_space<vmem>>, vector<8x53xf32>
    tpu.vector_store %arg13[%c0_242, %c2650], %243 {strides = array<i32>} : memref<8x2870xf32, #tpu.memory_space<vmem>>, vector<8x53xf32>,
    %245 = vector.extract_strided_slice %165 {offsets = [0, 806], sizes = [8, 27], strides = [1, 1]} : vector<8x896xf32> to vector<8x27xf32>
    %cst_243 = arith.constant dense<0.000000e+00> : vector<8x53xf32>
    %246 = tpu.matmul %245, %166, %cst_243 {dimension_numbers = #tpu.dot_dimension_numbers<[1], [0], [0], [1], [0, 0, 1, 1], [], []>} : vector<8x27xf32>, vector<27x53xf32>, vector<8x53xf32> -> vector<8x53xf32>
    %c0_244 = arith.constant 0 : index
    %c2756 = arith.constant 2756 : index
    %247 = vector.load %arg13[%c0_244, %c2756] : memref<8x2870xf32, #tpu.memory_space<vmem>>, vector<8x53xf32>
    tpu.vector_store %arg13[%c0_244, %c2756], %246 {strides = array<i32>} : memref<8x2870xf32, #tpu.memory_space<vmem>>, vector<8x53xf32>,
    %c0_245 = arith.constant 0 : index
    %c0_246 = arith.constant 0 : index
    %248 = vector.load %arg7[%c0_245, %c0_246] : memref<8x32xf32, #tpu.memory_space<vmem>>, vector<8x32xf32>
    %c0_247 = arith.constant 0 : index
    %c0_248 = arith.constant 0 : index
    %249 = vector.load %arg8[%c0_247, %c0_248] : memref<1x1xf32, #tpu.memory_space<vmem>>, vector<1x1xf32>
    %c0_249 = arith.constant 0 : index
    %c0_250 = arith.constant 0 : index
    %250 = vector.load %arg13[%c0_249, %c0_250] : memref<8x2870xf32, #tpu.memory_space<vmem>>, vector<8x1408xf32>
    %c0_251 = arith.constant 0 : index
    %c0_252 = arith.constant 0 : index
    %251 = vector.load %arg16[%c0_251, %c0_252] : memref<32x1408xf32, #tpu.memory_space<vmem>>, vector<8x1408xf32>
    tpu.vector_store %arg16[%c0_251, %c0_252], %250 {strides = array<i32>} : memref<32x1408xf32, #tpu.memory_space<vmem>>, vector<8x1408xf32>,
    %c0_253 = arith.constant 0 : index
    %c1_254 = arith.constant 1 : index
    %252 = vector.load %arg13[%c0_253, %c1_254] : memref<8x2870xf32, #tpu.memory_space<vmem>>, vector<8x1408xf32>
    %c8_255 = arith.constant 8 : index
    %c0_256 = arith.constant 0 : index
    %253 = vector.load %arg16[%c8_255, %c0_256] : memref<32x1408xf32, #tpu.memory_space<vmem>>, vector<8x1408xf32>
    tpu.vector_store %arg16[%c8_255, %c0_256], %252 {strides = array<i32>} : memref<32x1408xf32, #tpu.memory_space<vmem>>, vector<8x1408xf32>,
    %c0_257 = arith.constant 0 : index
    %c53 = arith.constant 53 : index
    %254 = vector.load %arg13[%c0_257, %c53] : memref<8x2870xf32, #tpu.memory_space<vmem>>, vector<8x1408xf32>
    %c16_258 = arith.constant 16 : index
    %c0_259 = arith.constant 0 : index
    %255 = vector.load %arg16[%c16_258, %c0_259] : memref<32x1408xf32, #tpu.memory_space<vmem>>, vector<8x1408xf32>
    tpu.vector_store %arg16[%c16_258, %c0_259], %254 {strides = array<i32>} : memref<32x1408xf32, #tpu.memory_space<vmem>>, vector<8x1408xf32>,
    %c0_260 = arith.constant 0 : index
    %c54 = arith.constant 54 : index
    %256 = vector.load %arg13[%c0_260, %c54] : memref<8x2870xf32, #tpu.memory_space<vmem>>, vector<8x1408xf32>
    %c24_261 = arith.constant 24 : index
    %c0_262 = arith.constant 0 : index
    %257 = vector.load %arg16[%c24_261, %c0_262] : memref<32x1408xf32, #tpu.memory_space<vmem>>, vector<8x1408xf32>
    tpu.vector_store %arg16[%c24_261, %c0_262], %256 {strides = array<i32>} : memref<32x1408xf32, #tpu.memory_space<vmem>>, vector<8x1408xf32>,
    %c0_263 = arith.constant 0 : index
    %c0_264 = arith.constant 0 : index
    %258 = vector.load %arg16[%c0_263, %c0_264] : memref<32x1408xf32, #tpu.memory_space<vmem>>, vector<32x1408xf32>
    %cst_265 = arith.constant dense<0.000000e+00> : vector<8x1408xf32>
    %259 = tpu.matmul %248, %258, %cst_265 {dimension_numbers = #tpu.dot_dimension_numbers<[1], [0], [0], [1], [0, 0, 1, 1], [], []>} : vector<8x32xf32>, vector<32x1408xf32>, vector<8x1408xf32> -> vector<8x1408xf32>
    %260 = vector.extract_strided_slice %259 {offsets = [0, 0], sizes = [1, 1408], strides = [1, 1]} : vector<8x1408xf32> to vector<1x1408xf32>
    %261 = vector.broadcast %249 : vector<1x1xf32> to vector<1x1408xf32>
    %262 = arith.addf %260, %261 : vector<1x1408xf32>
    %263 = math.tanh %262 : vector<1x1408xf32>
    %c0_266 = arith.constant 0 : index
    %c0_267 = arith.constant 0 : index
    %c0_268 = arith.constant 0 : index
    %264 = vector.load %arg10[%c0_266, %c0_267, %c0_268] : memref<1x1x2816xf32, #tpu.memory_space<vmem>>, vector<1x1x1408xf32>
    %265 = vector.shape_cast %264 : vector<1x1x1408xf32> to vector<1x1408xf32>
    %266 = vector.shape_cast %263 : vector<1x1408xf32> to vector<1x1x1408xf32>
    tpu.vector_store %arg10[%c0_266, %c0_267, %c0_268], %266 {strides = array<i32>} : memref<1x1x2816xf32, #tpu.memory_space<vmem>>, vector<1x1x1408xf32>,
    %c0_269 = arith.constant 0 : index
    %c1408 = arith.constant 1408 : index
    %267 = vector.load %arg13[%c0_269, %c1408] : memref<8x2870xf32, #tpu.memory_space<vmem>>, vector<8x1408xf32>
    %c0_270 = arith.constant 0 : index
    %c0_271 = arith.constant 0 : index
    %268 = vector.load %arg16[%c0_270, %c0_271] : memref<32x1408xf32, #tpu.memory_space<vmem>>, vector<8x1408xf32>
    tpu.vector_store %arg16[%c0_270, %c0_271], %267 {strides = array<i32>} : memref<32x1408xf32, #tpu.memory_space<vmem>>, vector<8x1408xf32>,
    %c0_272 = arith.constant 0 : index
    %c1409 = arith.constant 1409 : index
    %269 = vector.load %arg13[%c0_272, %c1409] : memref<8x2870xf32, #tpu.memory_space<vmem>>, vector<8x1408xf32>
    %c8_273 = arith.constant 8 : index
    %c0_274 = arith.constant 0 : index
    %270 = vector.load %arg16[%c8_273, %c0_274] : memref<32x1408xf32, #tpu.memory_space<vmem>>, vector<8x1408xf32>
    tpu.vector_store %arg16[%c8_273, %c0_274], %269 {strides = array<i32>} : memref<32x1408xf32, #tpu.memory_space<vmem>>, vector<8x1408xf32>,
    %c0_275 = arith.constant 0 : index
    %c1461 = arith.constant 1461 : index
    %271 = vector.load %arg13[%c0_275, %c1461] : memref<8x2870xf32, #tpu.memory_space<vmem>>, vector<8x1408xf32>
    %c16_276 = arith.constant 16 : index
    %c0_277 = arith.constant 0 : index
    %272 = vector.load %arg16[%c16_276, %c0_277] : memref<32x1408xf32, #tpu.memory_space<vmem>>, vector<8x1408xf32>
    tpu.vector_store %arg16[%c16_276, %c0_277], %271 {strides = array<i32>} : memref<32x1408xf32, #tpu.memory_space<vmem>>, vector<8x1408xf32>,
    %c0_278 = arith.constant 0 : index
    %c1462 = arith.constant 1462 : index
    %273 = vector.load %arg13[%c0_278, %c1462] : memref<8x2870xf32, #tpu.memory_space<vmem>>, vector<8x1408xf32>
    %c24_279 = arith.constant 24 : index
    %c0_280 = arith.constant 0 : index
    %274 = vector.load %arg16[%c24_279, %c0_280] : memref<32x1408xf32, #tpu.memory_space<vmem>>, vector<8x1408xf32>
    tpu.vector_store %arg16[%c24_279, %c0_280], %273 {strides = array<i32>} : memref<32x1408xf32, #tpu.memory_space<vmem>>, vector<8x1408xf32>,
    %c0_281 = arith.constant 0 : index
    %c0_282 = arith.constant 0 : index
    %275 = vector.load %arg16[%c0_281, %c0_282] : memref<32x1408xf32, #tpu.memory_space<vmem>>, vector<32x1408xf32>
    %cst_283 = arith.constant dense<0.000000e+00> : vector<8x1408xf32>
    %276 = tpu.matmul %248, %275, %cst_283 {dimension_numbers = #tpu.dot_dimension_numbers<[1], [0], [0], [1], [0, 0, 1, 1], [], []>} : vector<8x32xf32>, vector<32x1408xf32>, vector<8x1408xf32> -> vector<8x1408xf32>
    %277 = vector.extract_strided_slice %276 {offsets = [0, 0], sizes = [1, 1408], strides = [1, 1]} : vector<8x1408xf32> to vector<1x1408xf32>
    %278 = vector.broadcast %249 : vector<1x1xf32> to vector<1x1408xf32>
    %279 = arith.addf %277, %278 : vector<1x1408xf32>
    %280 = math.tanh %279 : vector<1x1408xf32>
    %c0_284 = arith.constant 0 : index
    %c0_285 = arith.constant 0 : index
    %c1408_286 = arith.constant 1408 : index
    %281 = vector.load %arg10[%c0_284, %c0_285, %c1408_286] : memref<1x1x2816xf32, #tpu.memory_space<vmem>>, vector<1x1x1408xf32>
    %282 = vector.shape_cast %281 : vector<1x1x1408xf32> to vector<1x1408xf32>
    %283 = vector.shape_cast %280 : vector<1x1408xf32> to vector<1x1x1408xf32>
    tpu.vector_store %arg10[%c0_284, %c0_285, %c1408_286], %283 {strides = array<i32>} : memref<1x1x2816xf32, #tpu.memory_space<vmem>>, vector<1x1x1408xf32>,
    return
  }
  func.func @transform_0(%arg0: i32) -> (i32, i32, i32) {
    %c0_i32 = arith.constant 0 : i32
    %c0_i32_0 = arith.constant 0 : i32
    %c0_i32_1 = arith.constant 0 : i32
    return %arg0, %c0_i32, %c0_i32_0 : i32, i32, i32
  }
  func.func @transform_1(%arg0: i32) -> (i32, i32) {
    %c0_i32 = arith.constant 0 : i32
    %c0_i32_0 = arith.constant 0 : i32
    %c0_i32_1 = arith.constant 0 : i32
    return %c0_i32, %c0_i32_0 : i32, i32
  }
  func.func @transform_2(%arg0: i32) -> (i32, i32) {
    %c0_i32 = arith.constant 0 : i32
    %c0_i32_0 = arith.constant 0 : i32
    %c0_i32_1 = arith.constant 0 : i32
    return %c0_i32, %c0_i32_0 : i32, i32
  }
  func.func @transform_3(%arg0: i32) -> (i32, i32) {
    %c0_i32 = arith.constant 0 : i32
    %c0_i32_0 = arith.constant 0 : i32
    %c0_i32_1 = arith.constant 0 : i32
    return %c0_i32, %c0_i32_0 : i32, i32
  }
  func.func @transform_4(%arg0: i32) -> (i32, i32) {
    %c0_i32 = arith.constant 0 : i32
    %c0_i32_0 = arith.constant 0 : i32
    %c0_i32_1 = arith.constant 0 : i32
    return %c0_i32, %c0_i32_0 : i32, i32
  }
  func.func @transform_5(%arg0: i32) -> (i32, i32) {
    %c0_i32 = arith.constant 0 : i32
    %c0_i32_0 = arith.constant 0 : i32
    %c0_i32_1 = arith.constant 0 : i32
    return %c0_i32, %c0_i32_0 : i32, i32
  }
  func.func @transform_6(%arg0: i32) -> (i32, i32) {
    %c0_i32 = arith.constant 0 : i32
    %c0_i32_0 = arith.constant 0 : i32
    %c0_i32_1 = arith.constant 0 : i32
    return %c0_i32, %c0_i32_0 : i32, i32
  }
  func.func @transform_7(%arg0: i32) -> (i32, i32) {
    %c0_i32 = arith.constant 0 : i32
    %c0_i32_0 = arith.constant 0 : i32
    %c0_i32_1 = arith.constant 0 : i32
    return %c0_i32, %c0_i32_0 : i32, i32
  }
  func.func @transform_8(%arg0: i32) -> (i32, i32) {
    %c0_i32 = arith.constant 0 : i32
    %c0_i32_0 = arith.constant 0 : i32
    %c0_i32_1 = arith.constant 0 : i32
    return %c0_i32, %c0_i32_0 : i32, i32
  }
  func.func @transform_9(%arg0: i32) -> (i32, i32, i32) {
    %c0_i32 = arith.constant 0 : i32
    %c0_i32_0 = arith.constant 0 : i32
    %c0_i32_1 = arith.constant 0 : i32
    return %arg0, %c0_i32, %c0_i32_0 : i32, i32, i32
  }
}

</mosaic_0001>

<llo_original>
// kernel: decoder1_forward.1
$region0: #{decoder1_forward.1}
  #allocation0 [shape = 'u32[]', space=smem, size = 0x4, offset = 0x4, fixed_abs, tag = 'smem constant byte address 0x4 - core index']
  #allocation1 [shape = 'u32[144,128]{1,0:T(1,128)}', space=vmem, size = 0x12000, scoped, tag = 'internal scratch']
  #allocation2 [shape = 'f32[8,152]{1,0:T(8,128)}', space=vmem, size = 0x2000, scoped, tag = 'scratch operand']
  #allocation3 [shape = 'f32[16,1024]{1,0:T(8,128)}', space=vmem, size = 0x10000, scoped, tag = 'scratch operand']
  #allocation4 [shape = 'f32[8,2870]{1,0:T(8,128)}', space=vmem, size = 0x17000, scoped, tag = 'scratch operand']
  #allocation5 [shape = 'f32[72,128]{1,0:T(8,128)}', space=vmem, size = 0x9000, scoped, tag = 'scratch operand']
  #allocation6 [shape = 'f32[400,896]{1,0:T(8,128)}', space=vmem, size = 0x15e000, scoped, tag = 'scratch operand']
  #allocation7 [shape = 'f32[32,1408]{1,0:T(8,128)}', space=vmem, size = 0x2c000, scoped, tag = 'scratch operand']
  #allocation8 [shape = 'f32[1,1]{1,0:T(1,128)S(1)}', space=vmem, size = 0x200, scoped, tag = 'scoped memory for decoder1_forward.1']
  %s0 = inlined_call_operand.vmem [shape: f32[2,8,16], index: 0, kind: input, shape index: {}]
  %s1 = inlined_call_operand.vmem [shape: f32[16,72], index: 1, kind: input, shape index: {}]
  %s2 = inlined_call_operand.vmem [shape: f32[16,1], index: 2, kind: input, shape index: {}]
  %s3 = inlined_call_operand.vmem [shape: f32[8,400], index: 3, kind: input, shape index: {}]
  %s4 = inlined_call_operand.vmem [shape: f32[8,1], index: 4, kind: input, shape index: {}]
  %s5 = inlined_call_operand.vmem [shape: f32[9,25], index: 5, kind: input, shape index: {}]
  %s6 = inlined_call_operand.vmem [shape: f32[8,32], index: 6, kind: input, shape index: {}]
  %s7 = inlined_call_operand.<no memory space> [shape: f32[1,1], index: 7, kind: input, shape index: {}]
  %s8 = inlined_call_operand.vmem [shape: f32[27,53], index: 8, kind: input, shape index: {}]
  %s9 = inlined_call_operand.vmem [shape: f32[2,1,2816], index: 9, kind: output, shape index: {}]
  %s10 = sld [smem:[#allocation0]]
  $region69: #{decoder1_forward.1} parent=0
    _
  %s12 = ssub.s32 1, %s10
  %s13 = scalar_select 0, %s12, %s10
  %v14 = vstv %s7
  %15 = vst [vmem:[#allocation8] sm:$0x1] %v14
  loop: start=0, step=1, limit=4
  $region2: #{decoder1_forward.1} parent=0 // loop_pre_header
    _
  $region3: #{decoder1_forward.1} parent=0 // loop_header
    %s17 = sphi 0, %s21
    %p18 = scmp.ge.s32.totalorder %s17, 4
    %s27 = sphi 0, %s29
    %s30 = sphi 0, %s27
    %s31 = sphi 0, %s30
    %s47 = sphi 0, %s31
    %s51 = sphi 0, %s51
    %s53 = sphi 0, %s51
    %s54 = sphi 0, %s53
    %s68 = sphi 0, %s54
    %s72 = sphi 0, %s72
    %s74 = sphi 0, %s72
    %s75 = sphi 0, %s74
    %s89 = sphi 0, %s75
    %s93 = sphi 0, %s93
    %s95 = sphi 0, %s93
    %s96 = sphi 0, %s95
    %s110 = sphi 0, %s96
    %s114 = sphi 0, %s114
    %s116 = sphi 0, %s114
    %s117 = sphi 0, %s116
    %s131 = sphi 0, %s117
    %s135 = sphi 0, %s135
    %s137 = sphi 0, %s135
    %s138 = sphi 0, %s137
    %s152 = sphi 0, %s138
    %s156 = sphi 0, %s156
    %s158 = sphi 0, %s156
    %s159 = sphi 0, %s158
    %s173 = sphi 0, %s159
    %s177 = sphi 0, %s177
    %s179 = sphi 0, %s177
    %s180 = sphi 0, %s179
    %s194 = sphi 0, %s180
    %s198 = sphi 0, %s198
    %s200 = sphi 0, %s198
    %s201 = sphi 0, %s200
    %s215 = sphi 0, %s201
    %s221 = sphi 0, %s223
    %s224 = sphi 0, %s221
    %s225 = sphi 0, %s224
    %s241 = sphi 0, %s225
  $region4: #{decoder1_forward.1} parent=0 // loop_header_branch
    %20 = sbr.rel (%p18) target = $region8
  $region5: #{decoder1_forward.1} parent=0 // loop_body
    %s22 = ssub.s32 %s17, 1
    %s23 = ssub.s32 %s17, 2
    %s24 = sadd.s32 %s17, 1
    %s25 = ssub.s32 %s17, %s24
    %p26 = scmp.eq.s32.totalorder %s25, 0
    %s28 = sadd.s32 %s27, 1
    %s29 = scalar_select %p26, %s27, %s28
    %p32 = pneg %p26
    %p33 = scmp.eq.s32.totalorder %s17, 1
    %p34 = por %p32, %p33
    %p35 = scmp.ne.s32.totalorder %s27, %s30
    %p36 = scmp.eq.s32.totalorder %s17, 0
    %p37 = por %p35, %p36
    %p38 = scmp.ne.s32.totalorder %s27, %s30
    %p39 = scmp.eq.s32.totalorder %s22, 1
    %p40 = por %p38, %p39
    %p41 = scmp.ne.s32.totalorder %s30, %s31
    %p42 = scmp.eq.s32.totalorder %s22, 0
    %p43 = por %p41, %p42
    %p44 = scmp.ne.s32.totalorder %s30, %s31
    %p45 = scmp.eq.s32.totalorder %s23, 1
    %p46 = por %p44, %p45
    %p48 = scmp.ne.s32.totalorder %s31, %s47
    %p49 = scmp.eq.s32.totalorder %s23, 0
    %p50 = por %p48, %p49
    %s52 = sadd.s32 %s51, 1
    %p55 = scmp.eq.s32.totalorder %s17, 1
    %p56 = scmp.ne.s32.totalorder %s51, %s53
    %p57 = scmp.eq.s32.totalorder %s17, 0
    %p58 = por %p56, %p57
    %p59 = scmp.ne.s32.totalorder %s51, %s53
    %p60 = scmp.eq.s32.totalorder %s22, 1
    %p61 = por %p59, %p60
    %p62 = scmp.ne.s32.totalorder %s53, %s54
    %p63 = scmp.eq.s32.totalorder %s22, 0
    %p64 = por %p62, %p63
    %p65 = scmp.ne.s32.totalorder %s53, %s54
    %p66 = scmp.eq.s32.totalorder %s23, 1
    %p67 = por %p65, %p66
    %p69 = scmp.ne.s32.totalorder %s54, %s68
    %p70 = scmp.eq.s32.totalorder %s23, 0
    %p71 = por %p69, %p70
    %s73 = sadd.s32 %s72, 1
    %p76 = scmp.eq.s32.totalorder %s17, 1
    %p77 = scmp.ne.s32.totalorder %s72, %s74
    %p78 = scmp.eq.s32.totalorder %s17, 0
    %p79 = por %p77, %p78
    %p80 = scmp.ne.s32.totalorder %s72, %s74
    %p81 = scmp.eq.s32.totalorder %s22, 1
    %p82 = por %p80, %p81
    %p83 = scmp.ne.s32.totalorder %s74, %s75
    %p84 = scmp.eq.s32.totalorder %s22, 0
    %p85 = por %p83, %p84
    %p86 = scmp.ne.s32.totalorder %s74, %s75
    %p87 = scmp.eq.s32.totalorder %s23, 1
    %p88 = por %p86, %p87
    %p90 = scmp.ne.s32.totalorder %s75, %s89
    %p91 = scmp.eq.s32.totalorder %s23, 0
    %p92 = por %p90, %p91
    %s94 = sadd.s32 %s93, 1
    %p97 = scmp.eq.s32.totalorder %s17, 1
    %p98 = scmp.ne.s32.totalorder %s93, %s95
    %p99 = scmp.eq.s32.totalorder %s17, 0
    %p100 = por %p98, %p99
    %p101 = scmp.ne.s32.totalorder %s93, %s95
    %p102 = scmp.eq.s32.totalorder %s22, 1
    %p103 = por %p101, %p102
    %p104 = scmp.ne.s32.totalorder %s95, %s96
    %p105 = scmp.eq.s32.totalorder %s22, 0
    %p106 = por %p104, %p105
    %p107 = scmp.ne.s32.totalorder %s95, %s96
    %p108 = scmp.eq.s32.totalorder %s23, 1
    %p109 = por %p107, %p108
    %p111 = scmp.ne.s32.totalorder %s96, %s110
    %p112 = scmp.eq.s32.totalorder %s23, 0
    %p113 = por %p111, %p112
    %s115 = sadd.s32 %s114, 1
    %p118 = scmp.eq.s32.totalorder %s17, 1
    %p119 = scmp.ne.s32.totalorder %s114, %s116
    %p120 = scmp.eq.s32.totalorder %s17, 0
    %p121 = por %p119, %p120
    %p122 = scmp.ne.s32.totalorder %s114, %s116
    %p123 = scmp.eq.s32.totalorder %s22, 1
    %p124 = por %p122, %p123
    %p125 = scmp.ne.s32.totalorder %s116, %s117
    %p126 = scmp.eq.s32.totalorder %s22, 0
    %p127 = por %p125, %p126
    %p128 = scmp.ne.s32.totalorder %s116, %s117
    %p129 = scmp.eq.s32.totalorder %s23, 1
    %p130 = por %p128, %p129
    %p132 = scmp.ne.s32.totalorder %s117, %s131
    %p133 = scmp.eq.s32.totalorder %s23, 0
    %p134 = por %p132, %p133
    %s136 = sadd.s32 %s135, 1
    %p139 = scmp.eq.s32.totalorder %s17, 1
    %p140 = scmp.ne.s32.totalorder %s135, %s137
    %p141 = scmp.eq.s32.totalorder %s17, 0
    %p142 = por %p140, %p141
    %p143 = scmp.ne.s32.totalorder %s135, %s137
    %p144 = scmp.eq.s32.totalorder %s22, 1
    %p145 = por %p143, %p144
    %p146 = scmp.ne.s32.totalorder %s137, %s138
    %p147 = scmp.eq.s32.totalorder %s22, 0
    %p148 = por %p146, %p147
    %p149 = scmp.ne.s32.totalorder %s137, %s138
    %p150 = scmp.eq.s32.totalorder %s23, 1
    %p151 = por %p149, %p150
    %p153 = scmp.ne.s32.totalorder %s138, %s152
    %p154 = scmp.eq.s32.totalorder %s23, 0
    %p155 = por %p153, %p154
    %s157 = sadd.s32 %s156, 1
    %p160 = scmp.eq.s32.totalorder %s17, 1
    %p161 = scmp.ne.s32.totalorder %s156, %s158
    %p162 = scmp.eq.s32.totalorder %s17, 0
    %p163 = por %p161, %p162
    %p164 = scmp.ne.s32.totalorder %s156, %s158
    %p165 = scmp.eq.s32.totalorder %s22, 1
    %p166 = por %p164, %p165
    %p167 = scmp.ne.s32.totalorder %s158, %s159
    %p168 = scmp.eq.s32.totalorder %s22, 0
    %p169 = por %p167, %p168
    %p170 = scmp.ne.s32.totalorder %s158, %s159
    %p171 = scmp.eq.s32.totalorder %s23, 1
    %p172 = por %p170, %p171
    %p174 = scmp.ne.s32.totalorder %s159, %s173
    %p175 = scmp.eq.s32.totalorder %s23, 0
    %p176 = por %p174, %p175
    %s178 = sadd.s32 %s177, 1
    %p181 = scmp.eq.s32.totalorder %s17, 1
    %p182 = scmp.ne.s32.totalorder %s177, %s179
    %p183 = scmp.eq.s32.totalorder %s17, 0
    %p184 = por %p182, %p183
    %p185 = scmp.ne.s32.totalorder %s177, %s179
    %p186 = scmp.eq.s32.totalorder %s22, 1
    %p187 = por %p185, %p186
    %p188 = scmp.ne.s32.totalorder %s179, %s180
    %p189 = scmp.eq.s32.totalorder %s22, 0
    %p190 = por %p188, %p189
    %p191 = scmp.ne.s32.totalorder %s179, %s180
    %p192 = scmp.eq.s32.totalorder %s23, 1
    %p193 = por %p191, %p192
    %p195 = scmp.ne.s32.totalorder %s180, %s194
    %p196 = scmp.eq.s32.totalorder %s23, 0
    %p197 = por %p195, %p196
    %s199 = sadd.s32 %s198, 1
    %p202 = scmp.eq.s32.totalorder %s17, 1
    %p203 = scmp.ne.s32.totalorder %s198, %s200
    %p204 = scmp.eq.s32.totalorder %s17, 0
    %p205 = por %p203, %p204
    %p206 = scmp.ne.s32.totalorder %s198, %s200
    %p207 = scmp.eq.s32.totalorder %s22, 1
    %p208 = por %p206, %p207
    %p209 = scmp.ne.s32.totalorder %s200, %s201
    %p210 = scmp.eq.s32.totalorder %s22, 0
    %p211 = por %p209, %p210
    %p212 = scmp.ne.s32.totalorder %s200, %s201
    %p213 = scmp.eq.s32.totalorder %s23, 1
    %p214 = por %p212, %p213
    %p216 = scmp.ne.s32.totalorder %s201, %s215
    %p217 = scmp.eq.s32.totalorder %s23, 0
    %p218 = por %p216, %p217
    %s219 = ssub.s32 %s17, %s24
    %p220 = scmp.eq.s32.totalorder %s219, 0
    %s222 = sadd.s32 %s221, 1
    %s223 = scalar_select %p220, %s221, %s222
    %p226 = pneg %p220
    %p227 = scmp.eq.s32.totalorder %s17, 1
    %p228 = por %p226, %p227
    %p229 = scmp.ne.s32.totalorder %s221, %s224
    %p230 = scmp.eq.s32.totalorder %s17, 0
    %p231 = por %p229, %p230
    %p232 = scmp.ne.s32.totalorder %s221, %s224
    %p233 = scmp.eq.s32.totalorder %s22, 1
    %p234 = por %p232, %p233
    %p235 = scmp.ne.s32.totalorder %s224, %s225
    %p236 = scmp.eq.s32.totalorder %s22, 0
    %p237 = por %p235, %p236
    %p238 = scmp.ne.s32.totalorder %s224, %s225
    %p239 = scmp.eq.s32.totalorder %s23, 1
    %p240 = por %p238, %p239
    %p242 = scmp.ne.s32.totalorder %s225, %s241
    %p243 = scmp.eq.s32.totalorder %s23, 0
    %p244 = por %p242, %p243
    %p245 = scmp.le.s32.totalorder 1, %s17
    %p246 = scmp.lt.s32.totalorder %s17, 3
    %p247 = pnand %p245, %p246
    %p248 = pneg %p247
    // Predicated region
    $region9: #{decoder1_forward.1} parent=5 // pred_check
      _
    $region10: #{decoder1_forward.1} parent=5 // pred_check_branch
      %250 = sbr.rel (%p247) target = $region12
    $region11: #{decoder1_forward.1} parent=5 // pred_region
      %s251 = ssub.s32 %s17, 1
      // Predicated region
      $region13: #{decoder1_forward.1} parent=11 // pred_check
        %p252 = pneg %p64
      $region14: #{decoder1_forward.1} parent=11 // pred_check_branch
        %254 = sbr.rel (%p252) target = $region16
      $region15: #{decoder1_forward.1} parent=11 // pred_region
        _
      $region16: #{decoder1_forward.1} parent=11 // pred_fallthru
        _
      // Predicated region
      $region17: #{decoder1_forward.1} parent=11 // pred_check
        %p255 = pneg %p85
      $region18: #{decoder1_forward.1} parent=11 // pred_check_branch
        %257 = sbr.rel (%p255) target = $region20
      $region19: #{decoder1_forward.1} parent=11 // pred_region
        _
      $region20: #{decoder1_forward.1} parent=11 // pred_fallthru
        _
      // Predicated region
      $region21: #{decoder1_forward.1} parent=11 // pred_check
        %p258 = pneg %p106
      $region22: #{decoder1_forward.1} parent=11 // pred_check_branch
        %260 = sbr.rel (%p258) target = $region24
      $region23: #{decoder1_forward.1} parent=11 // pred_region
        _
      $region24: #{decoder1_forward.1} parent=11 // pred_fallthru
        _
      // Predicated region
      $region25: #{decoder1_forward.1} parent=11 // pred_check
        %p261 = pneg %p127
      $region26: #{decoder1_forward.1} parent=11 // pred_check_branch
        %263 = sbr.rel (%p261) target = $region28
      $region27: #{decoder1_forward.1} parent=11 // pred_region
        _
      $region28: #{decoder1_forward.1} parent=11 // pred_fallthru
        _
      // Predicated region
      $region29: #{decoder1_forward.1} parent=11 // pred_check
        %p264 = pneg %p148
      $region30: #{decoder1_forward.1} parent=11 // pred_check_branch
        %266 = sbr.rel (%p264) target = $region32
      $region31: #{decoder1_forward.1} parent=11 // pred_region
        _
      $region32: #{decoder1_forward.1} parent=11 // pred_fallthru
        _
      // Predicated region
      $region33: #{decoder1_forward.1} parent=11 // pred_check
        %p267 = pneg %p169
      $region34: #{decoder1_forward.1} parent=11 // pred_check_branch
        %269 = sbr.rel (%p267) target = $region36
      $region35: #{decoder1_forward.1} parent=11 // pred_region
        _
      $region36: #{decoder1_forward.1} parent=11 // pred_fallthru
        _
      // Predicated region
      $region37: #{decoder1_forward.1} parent=11 // pred_check
        %p270 = pneg %p190
      $region38: #{decoder1_forward.1} parent=11 // pred_check_branch
        %272 = sbr.rel (%p270) target = $region40
      $region39: #{decoder1_forward.1} parent=11 // pred_region
        _
      $region40: #{decoder1_forward.1} parent=11 // pred_fallthru
        _
      // Predicated region
      $region41: #{decoder1_forward.1} parent=11 // pred_check
        %p273 = pneg %p211
      $region42: #{decoder1_forward.1} parent=11 // pred_check_branch
        %275 = sbr.rel (%p273) target = $region44
      $region43: #{decoder1_forward.1} parent=11 // pred_region
        _
      $region44: #{decoder1_forward.1} parent=11 // pred_fallthru
        _
    $region12: #{decoder1_forward.1} parent=5 // pred_fallthru
      _
    %p276 = scmp.lt.s32.totalorder %s17, 2
    // Predicated region
    $region45: #{decoder1_forward.1} parent=5 // pred_check
      %p277 = pneg %p276
    $region46: #{decoder1_forward.1} parent=5 // pred_check_branch
      %279 = sbr.rel (%p277) target = $region48
    $region47: #{decoder1_forward.1} parent=5 // pred_region
      // Predicated region
      $region49: #{decoder1_forward.1} parent=47 // pred_check
        %p280 = pneg %p37
      $region50: #{decoder1_forward.1} parent=47 // pred_check_branch
        %282 = sbr.rel (%p280) target = $region52
      $region51: #{decoder1_forward.1} parent=47 // pred_region
        %p283 = scmp.lt.s32.totalorder %s17, 1
        %s284 = scalar_select %p283, %s17, 1
        %s285 = smul.addr %s284, 8
        %s286 = scalar_lea.vmem %s0, %s285
      $region52: #{decoder1_forward.1} parent=47 // pred_fallthru
        _
    $region48: #{decoder1_forward.1} parent=5 // pred_fallthru
      _
    %p287 = scmp.le.s32.totalorder 1, %s17
    %p288 = scmp.lt.s32.totalorder %s17, 3
    %p289 = pnand %p287, %p288
    %p290 = pneg %p289
    // Predicated region
    $region53: #{decoder1_forward.1} parent=5 // pred_check
      _
    $region54: #{decoder1_forward.1} parent=5 // pred_check_branch
      %292 = sbr.rel (%p289) target = $region56
    $region55: #{decoder1_forward.1} parent=5 // pred_region
      %s293 = ssub.s32 %s17, 1
      %p294 = scmp.lt.s32.totalorder %s22, 1
      %s295 = scalar_select %p294, %s22, 1
      %s296 = smul.addr %s295, 8
      %s297 = scalar_lea.vmem %s0, %s296
      %p298 = pneg %p43
      %p299 = pneg %p40
      %p300 = pneg %p64
      %p301 = pneg %p61
      %p302 = pneg %p85
      %p303 = pneg %p82
      %p304 = pneg %p106
      %p305 = pneg %p103
      %p306 = pneg %p127
      %p307 = pneg %p124
      %p308 = pneg %p148
      %p309 = pneg %p145
      %p310 = pneg %p169
      %p311 = pneg %p166
      %p312 = pneg %p190
      %p313 = pneg %p187
      %p314 = pneg %p211
      %p315 = pneg %p208
      %p316 = pneg %p237
      %p317 = pneg %p234
      %p318 = scmp.lt.s32.totalorder %s22, 1
      %s319 = scalar_select %p318, %s22, 1
      %s320 = smul.addr %s319, 22
      %s321 = scalar_lea.vmem %s9, %s320
      %p322 = scmp.lt.s32.totalorder %s22, 1
      %s323 = scalar_select %p322, %s22, 1
      %s324 = smul.addr %s323, 8
      %s325 = scalar_lea.vmem %s0, %s324
      %p326 = scmp.lt.s32.totalorder %s22, 1
      %s327 = scalar_select %p326, %s22, 1
      %s328 = smul.addr %s327, 22
      %s329 = scalar_lea.vmem %s9, %s328
      %330 = vst [vmem:[#allocation2] sm:$0xff] 0.0
      %vm331 = vcmask 195584
      %332 = vst.msk [vmem:[#allocation2 + $0x8] sm:$0xff] %vm331, 0.0
      %333 = vst [vmem:[#allocation3] sm:$0xff] 0.0
      %334 = vst [vmem:[#allocation3 + $0x8] sm:$0xff] 0.0
      %335 = vst [vmem:[#allocation3 + $0x10] sm:$0xff] 0.0
      %336 = vst [vmem:[#allocation3 + $0x18] sm:$0xff] 0.0
      %337 = vst [vmem:[#allocation3 + $0x20] sm:$0xff] 0.0
      %338 = vst [vmem:[#allocation3 + $0x28] sm:$0xff] 0.0
      %339 = vst [vmem:[#allocation3 + $0x30] sm:$0xff] 0.0
      %340 = vst [vmem:[#allocation3 + $0x38] sm:$0xff] 0.0
      %341 = vst [vmem:[#allocation3 + $0x40] sm:$0xff] 0.0
      %342 = vst [vmem:[#allocation3 + $0x48] sm:$0xff] 0.0
      %343 = vst [vmem:[#allocation3 + $0x50] sm:$0xff] 0.0
      %344 = vst [vmem:[#allocation3 + $0x58] sm:$0xff] 0.0
      %345 = vst [vmem:[#allocation3 + $0x60] sm:$0xff] 0.0
      %346 = vst [vmem:[#allocation3 + $0x68] sm:$0xff] 0.0
      %347 = vst [vmem:[#allocation3 + $0x70] sm:$0xff] 0.0
      %348 = vst [vmem:[#allocation3 + $0x78] sm:$0xff] 0.0
      %349 = vst [vmem:[#allocation4] sm:$0xff] 0.0
      %350 = vst [vmem:[#allocation4 + $0x8] sm:$0xff] 0.0
      %351 = vst [vmem:[#allocation4 + $0x10] sm:$0xff] 0.0
      %352 = vst [vmem:[#allocation4 + $0x18] sm:$0xff] 0.0
      %353 = vst [vmem:[#allocation4 + $0x20] sm:$0xff] 0.0
      %354 = vst [vmem:[#allocation4 + $0x28] sm:$0xff] 0.0
      %355 = vst [vmem:[#allocation4 + $0x30] sm:$0xff] 0.0
      %356 = vst [vmem:[#allocation4 + $0x38] sm:$0xff] 0.0
      %357 = vst [vmem:[#allocation4 + $0x40] sm:$0xff] 0.0
      %358 = vst [vmem:[#allocation4 + $0x48] sm:$0xff] 0.0
      %359 = vst [vmem:[#allocation4 + $0x50] sm:$0xff] 0.0
      %360 = vst [vmem:[#allocation4 + $0x58] sm:$0xff] 0.0
      %361 = vst [vmem:[#allocation4 + $0x60] sm:$0xff] 0.0
      %362 = vst [vmem:[#allocation4 + $0x68] sm:$0xff] 0.0
      %363 = vst [vmem:[#allocation4 + $0x70] sm:$0xff] 0.0
      %364 = vst [vmem:[#allocation4 + $0x78] sm:$0xff] 0.0
      %365 = vst [vmem:[#allocation4 + $0x80] sm:$0xff] 0.0
      %366 = vst [vmem:[#allocation4 + $0x88] sm:$0xff] 0.0
      %367 = vst [vmem:[#allocation4 + $0x90] sm:$0xff] 0.0
      %368 = vst [vmem:[#allocation4 + $0x98] sm:$0xff] 0.0
      %369 = vst [vmem:[#allocation4 + $0xa0] sm:$0xff] 0.0
      %370 = vst [vmem:[#allocation4 + $0xa8] sm:$0xff] 0.0
      %vm371 = vcmask 441344
      %372 = vst.msk [vmem:[#allocation4 + $0xb0] sm:$0xff] %vm371, 0.0
      %v373 = vld [vmem:[%s325] sm:$0xff]
      %375 = vrot.lane.b32.xlu0 %v373, 24
      %v376 = vpop.permute.xlu0 %375
      %vm378 = vcmask 203968
      %379 = vst.msk [vmem:[#allocation2] sm:$0xff] %vm378, %v376
      %v380 = vld [vmem:[%s325] sm:$0xff]
      %382 = vrot.lane.b32.xlu0 %v380, 25
      %v383 = vpop.permute.xlu0 %382
      %vm385 = vcmask 220368
      %386 = vst.msk [vmem:[#allocation2] sm:$0xff] %vm385, %v383
      %v387 = vld [vmem:[%s325] sm:$0xff]
      %389 = vrot.lane.b32.xlu0 %v387, 26
      %v390 = vpop.permute.xlu0 %389
      %vm392 = vcmask 236768
      %393 = vst.msk [vmem:[#allocation2] sm:$0xff] %vm392, %v390
      %v394 = vld [vmem:[%s325] sm:$0xff]
      %396 = vrot.lane.b32.xlu0 %v394, 27
      %v397 = vpop.permute.xlu0 %396
      %vm399 = vcmask 253168
      %400 = vst.msk [vmem:[#allocation2] sm:$0xff] %vm399, %v397
      %v401 = vld [vmem:[%s325] sm:$0xff]
      %403 = vrot.lane.b32.xlu0 %v401, 42
      %v404 = vpop.permute.xlu0 %403
      %vm406 = vcmask 384368
      %407 = vst.msk [vmem:[#allocation2] sm:$0xff] %vm406, %v404
      %v408 = vld [vmem:[%s325] sm:$0xff]
      %410 = vrot.lane.b32.xlu0 %v408, 43
      %v411 = vpop.permute.xlu0 %410
      %vm413 = vcmask 400768
      %414 = vst.msk [vmem:[#allocation2] sm:$0xff] %vm413, %v411
      %v415 = vld [vmem:[%s325] sm:$0xff]
      %417 = vrot.lane.b32.xlu0 %v415, 44
      %v418 = vpop.permute.xlu0 %417
      %vm420 = vcmask 417168
      %421 = vst.msk [vmem:[#allocation2] sm:$0xff] %vm420, %v418
      %v422 = vld [vmem:[%s325] sm:$0xff]
      %424 = vrot.lane.b32.xlu0 %v422, 45
      %v425 = vpop.permute.xlu0 %424
      %vm427 = vcmask 433568
      %428 = vst.msk [vmem:[#allocation2] sm:$0xff] %vm427, %v425
      %v429 = vld [vmem:[%s325] sm:$0xff]
      %431 = vrot.lane.b32.xlu0 %v429, 60
      %v432 = vpop.permute.xlu0 %431
      %vm434 = vcmask 564768
      %435 = vst.msk [vmem:[#allocation2] sm:$0xff] %vm434, %v432
      %v436 = vld [vmem:[%s325] sm:$0xff]
      %438 = vrot.lane.b32.xlu0 %v436, 61
      %v439 = vpop.permute.xlu0 %438
      %vm441 = vcmask 581168
      %442 = vst.msk [vmem:[#allocation2] sm:$0xff] %vm441, %v439
      %v443 = vld [vmem:[%s325] sm:$0xff]
      %445 = vrot.lane.b32.xlu0 %v443, 62
      %v446 = vpop.permute.xlu0 %445
      %vm448 = vcmask 597568
      %449 = vst.msk [vmem:[#allocation2] sm:$0xff] %vm448, %v446
      %v450 = vld [vmem:[%s325] sm:$0xff]
      %452 = vrot.lane.b32.xlu0 %v450, 63
      %v453 = vpop.permute.xlu0 %452
      %vm455 = vcmask 613968
      %456 = vst.msk [vmem:[#allocation2] sm:$0xff] %vm455, %v453
      %v457 = vld [vmem:[%s325] sm:$0xff]
      %459 = vrot.lane.b32.xlu0 %v457, 78
      %v460 = vpop.permute.xlu0 %459
      %vm462 = vcmask 745168
      %463 = vst.msk [vmem:[#allocation2] sm:$0xff] %vm462, %v460
      %v464 = vld [vmem:[%s325] sm:$0xff]
      %466 = vrot.lane.b32.xlu0 %v464, 79
      %v467 = vpop.permute.xlu0 %466
      %vm469 = vcmask 761568
      %470 = vst.msk [vmem:[#allocation2] sm:$0xff] %vm469, %v467
      %v471 = vld [vmem:[%s325] sm:$0xff]
      %473 = vrot.lane.b32.xlu0 %v471, 80
      %v474 = vpop.permute.xlu0 %473
      %vm476 = vcmask 777968
      %477 = vst.msk [vmem:[#allocation2] sm:$0xff] %vm476, %v474
      %v478 = vld [vmem:[%s325] sm:$0xff]
      %480 = vrot.lane.b32.xlu0 %v478, 81
      %v481 = vpop.permute.xlu0 %480
      %vm483 = vcmask 794368
      %484 = vst.msk [vmem:[#allocation2] sm:$0xff] %vm483, %v481
      %v485 = vld [vmem:[%s1] sm:$0xff]
      %v486 = vld [vmem:[%s1 + $0x8] sm:$0xff]
      %v487 = vld [vmem:[#allocation2] sm:$0xff]
      %488 = vst [vmem:[#allocation5] sm:$0xff] %v487
      %v489 = vld [vmem:[#allocation2] sm:$0xff]
      %v490 = vld [vmem:[#allocation2 + $0x8] sm:$0xff]
      %493 = vrot.lane.b32.xlu0 %v489, 127
      %v494 = vpop.permute.xlu0 %493
      %495 = vrot.lane.b32.xlu0 %v490, 127
      %v496 = vpop.permute.xlu0 %495
      %vm497 = vcmask 1039360
      %v498 = vsel %vm497, %v494, %v496
      %500 = vst [vmem:[#allocation5 + $0x8] sm:$0xff] %v498
      %v501 = vld [vmem:[#allocation2] sm:$0xff]
      %v502 = vld [vmem:[#allocation2 + $0x8] sm:$0xff]
      %505 = vrot.lane.b32.xlu0 %v501, 126
      %v506 = vpop.permute.xlu0 %505
      %507 = vrot.lane.b32.xlu0 %v502, 126
      %v508 = vpop.permute.xlu0 %507
      %vm509 = vcmask 1031168
      %v510 = vsel %vm509, %v506, %v508
      %512 = vst [vmem:[#allocation5 + $0x10] sm:$0xff] %v510
      %v513 = vld [vmem:[#allocation2] sm:$0xff]
      %v514 = vld [vmem:[#allocation2 + $0x8] sm:$0xff]
      %517 = vrot.lane.b32.xlu0 %v513, 117
      %v518 = vpop.permute.xlu0 %517
      %519 = vrot.lane.b32.xlu0 %v514, 117
      %v520 = vpop.permute.xlu0 %519
      %vm521 = vcmask 957440
      %v522 = vsel %vm521, %v518, %v520
      %524 = vst [vmem:[#allocation5 + $0x18] sm:$0xff] %v522
      %v525 = vld [vmem:[#allocation2] sm:$0xff]
      %v526 = vld [vmem:[#allocation2 + $0x8] sm:$0xff]
      %529 = vrot.lane.b32.xlu0 %v525, 116
      %v530 = vpop.permute.xlu0 %529
      %531 = vrot.lane.b32.xlu0 %v526, 116
      %v532 = vpop.permute.xlu0 %531
      %vm533 = vcmask 949248
      %v534 = vsel %vm533, %v530, %v532
      %536 = vst [vmem:[#allocation5 + $0x20] sm:$0xff] %v534
      %v537 = vld [vmem:[#allocation2] sm:$0xff]
      %v538 = vld [vmem:[#allocation2 + $0x8] sm:$0xff]
      %541 = vrot.lane.b32.xlu0 %v537, 115
      %v542 = vpop.permute.xlu0 %541
      %543 = vrot.lane.b32.xlu0 %v538, 115
      %v544 = vpop.permute.xlu0 %543
      %vm545 = vcmask 941056
      %v546 = vsel %vm545, %v542, %v544
      %548 = vst [vmem:[#allocation5 + $0x28] sm:$0xff] %v546
      %v549 = vld [vmem:[#allocation2] sm:$0xff]
      %v550 = vld [vmem:[#allocation2 + $0x8] sm:$0xff]
      %553 = vrot.lane.b32.xlu0 %v549, 106
      %v554 = vpop.permute.xlu0 %553
      %555 = vrot.lane.b32.xlu0 %v550, 106
      %v556 = vpop.permute.xlu0 %555
      %vm557 = vcmask 867328
      %v558 = vsel %vm557, %v554, %v556
      %560 = vst [vmem:[#allocation5 + $0x30] sm:$0xff] %v558
      %v561 = vld [vmem:[#allocation2] sm:$0xff]
      %v562 = vld [vmem:[#allocation2 + $0x8] sm:$0xff]
      %565 = vrot.lane.b32.xlu0 %v561, 105
      %v566 = vpop.permute.xlu0 %565
      %567 = vrot.lane.b32.xlu0 %v562, 105
      %v568 = vpop.permute.xlu0 %567
      %vm569 = vcmask 859136
      %v570 = vsel %vm569, %v566, %v568
      %572 = vst [vmem:[#allocation5 + $0x38] sm:$0xff] %v570
      %v573 = vld [vmem:[#allocation2] sm:$0xff]
      %v574 = vld [vmem:[#allocation2 + $0x8] sm:$0xff]
      %577 = vrot.lane.b32.xlu0 %v573, 104
      %v578 = vpop.permute.xlu0 %577
      %579 = vrot.lane.b32.xlu0 %v574, 104
      %v580 = vpop.permute.xlu0 %579
      %vm581 = vcmask 850944
      %v582 = vsel %vm581, %v578, %v580
      %584 = vst [vmem:[#allocation5 + $0x40] sm:$0xff] %v582
      %v585 = vld [vmem:[#allocation5] sm:$0xff]
      %v586 = vld [vmem:[#allocation5 + $0x8] sm:$0xff]
      %v587 = vld [vmem:[#allocation5 + $0x10] sm:$0xff]
      %v588 = vld [vmem:[#allocation5 + $0x18] sm:$0xff]
      %v589 = vld [vmem:[#allocation5 + $0x20] sm:$0xff]
      %v590 = vld [vmem:[#allocation5 + $0x28] sm:$0xff]
      %v591 = vld [vmem:[#allocation5 + $0x30] sm:$0xff]
      %v592 = vld [vmem:[#allocation5 + $0x38] sm:$0xff]
      %v593 = vld [vmem:[#allocation5 + $0x40] sm:$0xff]
      %v594 = vld [vmem:[%s2] sm:$0xff]
      %v595 = vld [vmem:[%s2 + $0x8] sm:$0xff]
      %597 = vset.pattern.permute.xlu0 0
      %598 = vperm.xlu0 %597, %v594
      %v599 = vpop.permute.xlu0 %598
      %602 = vset.pattern.permute.xlu0 0
      %603 = vperm.xlu0 %602, %v595
      %v604 = vpop.permute.xlu0 %603
      %vm606 = vcmask 588800
      %v608 = vsel %vm606, %v485, 0
      %v611 = vsel %vm606, %v486, 0
      %613 = vmatprep.subr.mxu0 0.0
      %614 = vmatpush1.msra.mxu0 %v585
      %615 = vmatprep.subr.mxu0 0.0
      %616 = vmatpush1.msra.mxu0 %v586
      %617 = vmatprep.subr.mxu0 0.0
      %618 = vmatpush1.msra.mxu0 %v587
      %619 = vmatprep.subr.mxu0 0.0
      %620 = vmatpush1.msra.mxu0 %v588
      %621 = vmatprep.subr.mxu0 0.0
      %622 = vmatpush1.msra.mxu0 %v589
      %623 = vmatprep.subr.mxu0 0.0
      %624 = vmatpush1.msra.mxu0 %v590
      %625 = vmatprep.subr.mxu0 0.0
      %626 = vmatpush1.msra.mxu0 %v591
      %627 = vmatprep.subr.mxu0 0.0
      %628 = vmatpush1.msra.mxu0 %v592
      %629 = vmatprep.subr.mxu0 0.0
      %630 = vmatpush1.msra.mxu0 %v593
      %631 = vmatprep.subr.mxu0 0.0
      %632 = vmatpush1.msra.mxu0 0.0
      %633 = vmatprep.subr.mxu0 0.0
      %634 = vmatpush1.msra.mxu0 0.0
      %635 = vmatprep.subr.mxu0 0.0
      %636 = vmatpush1.msra.mxu0 0.0
      %637 = vmatprep.subr.mxu0 0.0
      %638 = vmatpush1.msra.mxu0 0.0
      %639 = vmatprep.subr.mxu0 0.0
      %640 = vmatpush1.msra.mxu0 0.0
      %641 = vmatprep.subr.mxu0 0.0
      %642 = vmatpush1.msra.mxu0 0.0
      %643 = vmatprep.subr.mxu0 0.0
      %644 = vmatpush1.msra.mxu0 0.0
      %645 = vmatprep.subr.mxu0 0.0
      %646 = vmatpush1.msra.mxu0 0.0
      %647 = vmatprep.subr.mxu0 0.0
      %648 = vmatpush1.msra.mxu0 0.0
      %649 = vmatprep.subr.mxu0 0.0
      %650 = vmatpush1.msra.mxu0 0.0
      %651 = vmatprep.subr.mxu0 0.0
      %652 = vmatpush1.msra.mxu0 0.0
      %653 = vmatprep.subr.mxu0 0.0
      %654 = vmatpush1.msra.mxu0 0.0
      %655 = vmatprep.subr.mxu0 0.0
      %656 = vmatpush1.msra.mxu0 0.0
      %657 = vmatprep.subr.mxu0 0.0
      %658 = vmatpush1.msra.mxu0 0.0
      %659 = vmatprep.subr.mxu0 0.0
      %660 = vmatpush1.msra.mxu0 0.0
      %661 = vmatprep.subr.mxu0 0.0
      %662 = vmatpush1.msra.mxu0 0.0
      %663 = vmatprep.subr.mxu0 0.0
      %664 = vmatpush1.msra.mxu0 0.0
      %665 = vmatprep.subr.mxu0 0.0
      %666 = vmatpush1.msra.mxu0 0.0
      %667 = vmatprep.subr.mxu0 0.0
      %668 = vmatpush1.msra.mxu0 0.0
      %669 = vmatprep.subr.mxu0 0.0
      %670 = vmatpush1.msra.mxu0 0.0
      %671 = vmatprep.subr.mxu0 0.0
      %672 = vmatpush1.msra.mxu0 0.0
      %673 = vmatprep.subr.mxu0 0.0
      %674 = vmatpush1.msra.mxu0 0.0
      %675 = vmatprep.subr.mxu0 0.0
      %676 = vmatpush1.msra.mxu0 0.0
      %677 = vmatprep.mubr.f32.mxu0 0.0
      %678 = vmatmul.mubr.f32.gmra.mrb[0].mxu0 %v608
      %v679 = vpop.f32.mrb[0].mxu0
      %v680 = vadd.f32 %v599, %v679
      %v681 = vpop.f32.mrb[0].mxu0
      %682 = vmatprep.mubr.f32.mxu0 0.0
      %683 = vmatmul.mubr.f32.gmra.mrb[0].mxu0 %v611
      %v684 = vpop.f32.mrb[0].mxu0
      %v685 = vadd.f32 %v604, %v684
      %v686 = vpop.f32.mrb[0].mxu0
      %687 = vdwg.mxu0
      %v688 = vmax.f32 %v680, 0.0
      %v689 = vmax.f32 %v685, 0.0
      %v690 = vld [vmem:[%s5] sm:$0xff]
      %v691 = vld [vmem:[%s5 + $0x8] sm:$0x1]
      %vm692 = vcmask 72704
      %v694 = vsel %vm692, %v688, 0
      %v697 = vsel %vm692, %v689, 0
      %vm699 = vcmask 1040384
      %v701 = vsel %vm699, %v691, 0
      %703 = vmatprep.subr.mxu0 0.0
      %704 = vmatpush1.msra.mxu0 %v690
      %705 = vmatprep.subr.mxu0 0.0
      %706 = vmatpush1.msra.mxu0 %v701
      %707 = vmatprep.subr.mxu0 0.0
      %708 = vmatpush1.msra.mxu0 0.0
      %709 = vmatprep.subr.mxu0 0.0
      %710 = vmatpush1.msra.mxu0 0.0
      %711 = vmatprep.subr.mxu0 0.0
      %712 = vmatpush1.msra.mxu0 0.0
      %713 = vmatprep.subr.mxu0 0.0
      %714 = vmatpush1.msra.mxu0 0.0
      %715 = vmatprep.subr.mxu0 0.0
      %716 = vmatpush1.msra.mxu0 0.0
      %717 = vmatprep.subr.mxu0 0.0
      %718 = vmatpush1.msra.mxu0 0.0
      %719 = vmatprep.subr.mxu0 0.0
      %720 = vmatpush1.msra.mxu0 0.0
      %721 = vmatprep.subr.mxu0 0.0
      %722 = vmatpush1.msra.mxu0 0.0
      %723 = vmatprep.subr.mxu0 0.0
      %724 = vmatpush1.msra.mxu0 0.0
      %725 = vmatprep.subr.mxu0 0.0
      %726 = vmatpush1.msra.mxu0 0.0
      %727 = vmatprep.subr.mxu0 0.0
      %728 = vmatpush1.msra.mxu0 0.0
      %729 = vmatprep.subr.mxu0 0.0
      %730 = vmatpush1.msra.mxu0 0.0
      %731 = vmatprep.subr.mxu0 0.0
      %732 = vmatpush1.msra.mxu0 0.0
      %733 = vmatprep.subr.mxu0 0.0
      %734 = vmatpush1.msra.mxu0 0.0
      %735 = vmatprep.subr.mxu0 0.0
      %736 = vmatpush1.msra.mxu0 0.0
      %737 = vmatprep.subr.mxu0 0.0
      %738 = vmatpush1.msra.mxu0 0.0
      %739 = vmatprep.subr.mxu0 0.0
      %740 = vmatpush1.msra.mxu0 0.0
      %741 = vmatprep.subr.mxu0 0.0
      %742 = vmatpush1.msra.mxu0 0.0
      %743 = vmatprep.subr.mxu0 0.0
      %744 = vmatpush1.msra.mxu0 0.0
      %745 = vmatprep.subr.mxu0 0.0
      %746 = vmatpush1.msra.mxu0 0.0
      %747 = vmatprep.subr.mxu0 0.0
      %748 = vmatpush1.msra.mxu0 0.0
      %749 = vmatprep.subr.mxu0 0.0
      %750 = vmatpush1.msra.mxu0 0.0
      %751 = vmatprep.subr.mxu0 0.0
      %752 = vmatpush1.msra.mxu0 0.0
      %753 = vmatprep.subr.mxu0 0.0
      %754 = vmatpush1.msra.mxu0 0.0
      %755 = vmatprep.subr.mxu0 0.0
      %756 = vmatpush1.msra.mxu0 0.0
      %757 = vmatprep.subr.mxu0 0.0
      %758 = vmatpush1.msra.mxu0 0.0
      %759 = vmatprep.subr.mxu0 0.0
      %760 = vmatpush1.msra.mxu0 0.0
      %761 = vmatprep.subr.mxu0 0.0
      %762 = vmatpush1.msra.mxu0 0.0
      %763 = vmatprep.subr.mxu0 0.0
      %764 = vmatpush1.msra.mxu0 0.0
      %765 = vmatprep.subr.mxu0 0.0
      %766 = vmatpush1.msra.mxu0 0.0
      %767 = vmatprep.mubr.f32.mxu0 0.0
      %768 = vmatmul.mubr.f32.gmra.mrb[0].mxu0 %v694
      %v769 = vpop.f32.mrb[0].mxu0
      %v770 = vadd.f32 0.0, %v769
      %v771 = vpop.f32.mrb[0].mxu0
      %772 = vmatprep.mubr.f32.mxu0 0.0
      %773 = vmatmul.mubr.f32.gmra.mrb[0].mxu0 %v697
      %v774 = vpop.f32.mrb[0].mxu0
      %v775 = vadd.f32 0.0, %v774
      %v776 = vpop.f32.mrb[0].mxu0
      %777 = vdwg.mxu0
      %780 = vrot.lane.b32.xlu0 %v770, 96
      %v781 = vpop.permute.xlu0 %780
      %782 = vrot.lane.b32.xlu0 %v775, 96
      %v783 = vpop.permute.xlu0 %782
      %vm786 = vcmask 990976
      %787 = vst.msk [vmem:[#allocation3] sm:$0xff] %vm786, %v781
      %788 = vst.msk [vmem:[#allocation3 + $0x40] sm:$0xff] %vm786, %v783
      %789 = vrot.lane.b32.xlu0 %v688, 117
      %v790 = vpop.permute.xlu0 %789
      %791 = vrot.lane.b32.xlu0 %v689, 117
      %v792 = vpop.permute.xlu0 %791
      %v793 = vsel %vm692, %v790, 0
      %v795 = vsel %vm692, %v792, 0
      %797 = vmatprep.subr.mxu0 0.0
      %798 = vmatpush1.msra.mxu0 %v690
      %799 = vmatprep.subr.mxu0 0.0
      %800 = vmatpush1.msra.mxu0 %v701
      %801 = vmatprep.subr.mxu0 0.0
      %802 = vmatpush1.msra.mxu0 0.0
      %803 = vmatprep.subr.mxu0 0.0
      %804 = vmatpush1.msra.mxu0 0.0
      %805 = vmatprep.subr.mxu0 0.0
      %806 = vmatpush1.msra.mxu0 0.0
      %807 = vmatprep.subr.mxu0 0.0
      %808 = vmatpush1.msra.mxu0 0.0
      %809 = vmatprep.subr.mxu0 0.0
      %810 = vmatpush1.msra.mxu0 0.0
      %811 = vmatprep.subr.mxu0 0.0
      %812 = vmatpush1.msra.mxu0 0.0
      %813 = vmatprep.subr.mxu0 0.0
      %814 = vmatpush1.msra.mxu0 0.0
      %815 = vmatprep.subr.mxu0 0.0
      %816 = vmatpush1.msra.mxu0 0.0
      %817 = vmatprep.subr.mxu0 0.0
      %818 = vmatpush1.msra.mxu0 0.0
      %819 = vmatprep.subr.mxu0 0.0
      %820 = vmatpush1.msra.mxu0 0.0
      %821 = vmatprep.subr.mxu0 0.0
      %822 = vmatpush1.msra.mxu0 0.0
      %823 = vmatprep.subr.mxu0 0.0
      %824 = vmatpush1.msra.mxu0 0.0
      %825 = vmatprep.subr.mxu0 0.0
      %826 = vmatpush1.msra.mxu0 0.0
      %827 = vmatprep.subr.mxu0 0.0
      %828 = vmatpush1.msra.mxu0 0.0
      %829 = vmatprep.subr.mxu0 0.0
      %830 = vmatpush1.msra.mxu0 0.0
      %831 = vmatprep.subr.mxu0 0.0
      %832 = vmatpush1.msra.mxu0 0.0
      %833 = vmatprep.subr.mxu0 0.0
      %834 = vmatpush1.msra.mxu0 0.0
      %835 = vmatprep.subr.mxu0 0.0
      %836 = vmatpush1.msra.mxu0 0.0
      %837 = vmatprep.subr.mxu0 0.0
      %838 = vmatpush1.msra.mxu0 0.0
      %839 = vmatprep.subr.mxu0 0.0
      %840 = vmatpush1.msra.mxu0 0.0
      %841 = vmatprep.subr.mxu0 0.0
      %842 = vmatpush1.msra.mxu0 0.0
      %843 = vmatprep.subr.mxu0 0.0
      %844 = vmatpush1.msra.mxu0 0.0
      %845 = vmatprep.subr.mxu0 0.0
      %846 = vmatpush1.msra.mxu0 0.0
      %847 = vmatprep.subr.mxu0 0.0
      %848 = vmatpush1.msra.mxu0 0.0
      %849 = vmatprep.subr.mxu0 0.0
      %850 = vmatpush1.msra.mxu0 0.0
      %851 = vmatprep.subr.mxu0 0.0
      %852 = vmatpush1.msra.mxu0 0.0
      %853 = vmatprep.subr.mxu0 0.0
      %854 = vmatpush1.msra.mxu0 0.0
      %855 = vmatprep.subr.mxu0 0.0
      %856 = vmatpush1.msra.mxu0 0.0
      %857 = vmatprep.subr.mxu0 0.0
      %858 = vmatpush1.msra.mxu0 0.0
      %859 = vmatprep.subr.mxu0 0.0
      %860 = vmatpush1.msra.mxu0 0.0
      %861 = vmatprep.mubr.f32.mxu0 0.0
      %862 = vmatmul.mubr.f32.gmra.mrb[0].mxu0 %v793
      %v863 = vpop.f32.mrb[0].mxu0
      %v864 = vadd.f32 0.0, %v863
      %v865 = vpop.f32.mrb[0].mxu0
      %866 = vmatprep.mubr.f32.mxu0 0.0
      %867 = vmatmul.mubr.f32.gmra.mrb[0].mxu0 %v795
      %v868 = vpop.f32.mrb[0].mxu0
      %v869 = vadd.f32 0.0, %v868
      %v870 = vpop.f32.mrb[0].mxu0
      %871 = vdwg.mxu0
      %874 = vrot.lane.b32.xlu0 %v864, 61
      %v875 = vpop.permute.xlu0 %874
      %876 = vrot.lane.b32.xlu0 %v869, 61
      %v877 = vpop.permute.xlu0 %876
      %vm880 = vcmask 703976
      %881 = vst.msk [vmem:[#allocation3 + $0x8] sm:$0xff] %vm880, %v875
      %882 = vst.msk [vmem:[#allocation3 + $0x48] sm:$0xff] %vm880, %v877
      %883 = vrot.lane.b32.xlu0 %v688, 106
      %v884 = vpop.permute.xlu0 %883
      %885 = vrot.lane.b32.xlu0 %v689, 106
      %v886 = vpop.permute.xlu0 %885
      %v887 = vsel %vm692, %v884, 0
      %v889 = vsel %vm692, %v886, 0
      %891 = vmatprep.subr.mxu0 0.0
      %892 = vmatpush1.msra.mxu0 %v690
      %893 = vmatprep.subr.mxu0 0.0
      %894 = vmatpush1.msra.mxu0 %v701
      %895 = vmatprep.subr.mxu0 0.0
      %896 = vmatpush1.msra.mxu0 0.0
      %897 = vmatprep.subr.mxu0 0.0
      %898 = vmatpush1.msra.mxu0 0.0
      %899 = vmatprep.subr.mxu0 0.0
      %900 = vmatpush1.msra.mxu0 0.0
      %901 = vmatprep.subr.mxu0 0.0
      %902 = vmatpush1.msra.mxu0 0.0
      %903 = vmatprep.subr.mxu0 0.0
      %904 = vmatpush1.msra.mxu0 0.0
      %905 = vmatprep.subr.mxu0 0.0
      %906 = vmatpush1.msra.mxu0 0.0
      %907 = vmatprep.subr.mxu0 0.0
      %908 = vmatpush1.msra.mxu0 0.0
      %909 = vmatprep.subr.mxu0 0.0
      %910 = vmatpush1.msra.mxu0 0.0
      %911 = vmatprep.subr.mxu0 0.0
      %912 = vmatpush1.msra.mxu0 0.0
      %913 = vmatprep.subr.mxu0 0.0
      %914 = vmatpush1.msra.mxu0 0.0
      %915 = vmatprep.subr.mxu0 0.0
      %916 = vmatpush1.msra.mxu0 0.0
      %917 = vmatprep.subr.mxu0 0.0
      %918 = vmatpush1.msra.mxu0 0.0
      %919 = vmatprep.subr.mxu0 0.0
      %920 = vmatpush1.msra.mxu0 0.0
      %921 = vmatprep.subr.mxu0 0.0
      %922 = vmatpush1.msra.mxu0 0.0
      %923 = vmatprep.subr.mxu0 0.0
      %924 = vmatpush1.msra.mxu0 0.0
      %925 = vmatprep.subr.mxu0 0.0
      %926 = vmatpush1.msra.mxu0 0.0
      %927 = vmatprep.subr.mxu0 0.0
      %928 = vmatpush1.msra.mxu0 0.0
      %929 = vmatprep.subr.mxu0 0.0
      %930 = vmatpush1.msra.mxu0 0.0
      %931 = vmatprep.subr.mxu0 0.0
      %932 = vmatpush1.msra.mxu0 0.0
      %933 = vmatprep.subr.mxu0 0.0
      %934 = vmatpush1.msra.mxu0 0.0
      %935 = vmatprep.subr.mxu0 0.0
      %936 = vmatpush1.msra.mxu0 0.0
      %937 = vmatprep.subr.mxu0 0.0
      %938 = vmatpush1.msra.mxu0 0.0
      %939 = vmatprep.subr.mxu0 0.0
      %940 = vmatpush1.msra.mxu0 0.0
      %941 = vmatprep.subr.mxu0 0.0
      %942 = vmatpush1.msra.mxu0 0.0
      %943 = vmatprep.subr.mxu0 0.0
      %944 = vmatpush1.msra.mxu0 0.0
      %945 = vmatprep.subr.mxu0 0.0
      %946 = vmatpush1.msra.mxu0 0.0
      %947 = vmatprep.subr.mxu0 0.0
      %948 = vmatpush1.msra.mxu0 0.0
      %949 = vmatprep.subr.mxu0 0.0
      %950 = vmatpush1.msra.mxu0 0.0
      %951 = vmatprep.subr.mxu0 0.0
      %952 = vmatpush1.msra.mxu0 0.0
      %953 = vmatprep.subr.mxu0 0.0
      %954 = vmatpush1.msra.mxu0 0.0
      %955 = vmatprep.mubr.f32.mxu0 0.0
      %956 = vmatmul.mubr.f32.gmra.mrb[0].mxu0 %v887
      %v957 = vpop.f32.mrb[0].mxu0
      %v958 = vadd.f32 0.0, %v957
      %v959 = vpop.f32.mrb[0].mxu0
      %960 = vmatprep.mubr.f32.mxu0 0.0
      %961 = vmatmul.mubr.f32.gmra.mrb[0].mxu0 %v889
      %v962 = vpop.f32.mrb[0].mxu0
      %v963 = vadd.f32 0.0, %v962
      %v964 = vpop.f32.mrb[0].mxu0
      %965 = vdwg.mxu0
      %968 = vrot.lane.b32.xlu0 %v958, 26
      %v969 = vpop.permute.xlu0 %968
      %970 = vrot.lane.b32.xlu0 %v963, 26
      %v971 = vpop.permute.xlu0 %970
      %vm974 = vcmask 416976
      %975 = vst.msk [vmem:[#allocation3 + $0x10] sm:$0xff] %vm974, %v969
      %976 = vst.msk [vmem:[#allocation3 + $0x50] sm:$0xff] %vm974, %v971
      %977 = vrot.lane.b32.xlu0 %v688, 95
      %v978 = vpop.permute.xlu0 %977
      %979 = vrot.lane.b32.xlu0 %v689, 95
      %v980 = vpop.permute.xlu0 %979
      %v981 = vsel %vm692, %v978, 0
      %v983 = vsel %vm692, %v980, 0
      %985 = vmatprep.subr.mxu0 0.0
      %986 = vmatpush1.msra.mxu0 %v690
      %987 = vmatprep.subr.mxu0 0.0
      %988 = vmatpush1.msra.mxu0 %v701
      %989 = vmatprep.subr.mxu0 0.0
      %990 = vmatpush1.msra.mxu0 0.0
      %991 = vmatprep.subr.mxu0 0.0
      %992 = vmatpush1.msra.mxu0 0.0
      %993 = vmatprep.subr.mxu0 0.0
      %994 = vmatpush1.msra.mxu0 0.0
      %995 = vmatprep.subr.mxu0 0.0
      %996 = vmatpush1.msra.mxu0 0.0
      %997 = vmatprep.subr.mxu0 0.0
      %998 = vmatpush1.msra.mxu0 0.0
      %999 = vmatprep.subr.mxu0 0.0
      %1000 = vmatpush1.msra.mxu0 0.0
      %1001 = vmatprep.subr.mxu0 0.0
      %1002 = vmatpush1.msra.mxu0 0.0
      %1003 = vmatprep.subr.mxu0 0.0
      %1004 = vmatpush1.msra.mxu0 0.0
      %1005 = vmatprep.subr.mxu0 0.0
      %1006 = vmatpush1.msra.mxu0 0.0
      %1007 = vmatprep.subr.mxu0 0.0
      %1008 = vmatpush1.msra.mxu0 0.0
      %1009 = vmatprep.subr.mxu0 0.0
      %1010 = vmatpush1.msra.mxu0 0.0
      %1011 = vmatprep.subr.mxu0 0.0
      %1012 = vmatpush1.msra.mxu0 0.0
      %1013 = vmatprep.subr.mxu0 0.0
      %1014 = vmatpush1.msra.mxu0 0.0
      %1015 = vmatprep.subr.mxu0 0.0
      %1016 = vmatpush1.msra.mxu0 0.0
      %1017 = vmatprep.subr.mxu0 0.0
      %1018 = vmatpush1.msra.mxu0 0.0
      %1019 = vmatprep.subr.mxu0 0.0
      %1020 = vmatpush1.msra.mxu0 0.0
      %1021 = vmatprep.subr.mxu0 0.0
      %1022 = vmatpush1.msra.mxu0 0.0
      %1023 = vmatprep.subr.mxu0 0.0
      %1024 = vmatpush1.msra.mxu0 0.0
      %1025 = vmatprep.subr.mxu0 0.0
      %1026 = vmatpush1.msra.mxu0 0.0
      %1027 = vmatprep.subr.mxu0 0.0
      %1028 = vmatpush1.msra.mxu0 0.0
      %1029 = vmatprep.subr.mxu0 0.0
      %1030 = vmatpush1.msra.mxu0 0.0
      %1031 = vmatprep.subr.mxu0 0.0
      %1032 = vmatpush1.msra.mxu0 0.0
      %1033 = vmatprep.subr.mxu0 0.0
      %1034 = vmatpush1.msra.mxu0 0.0
      %1035 = vmatprep.subr.mxu0 0.0
      %1036 = vmatpush1.msra.mxu0 0.0
      %1037 = vmatprep.subr.mxu0 0.0
      %1038 = vmatpush1.msra.mxu0 0.0
      %1039 = vmatprep.subr.mxu0 0.0
      %1040 = vmatpush1.msra.mxu0 0.0
      %1041 = vmatprep.subr.mxu0 0.0
      %1042 = vmatpush1.msra.mxu0 0.0
      %1043 = vmatprep.subr.mxu0 0.0
      %1044 = vmatpush1.msra.mxu0 0.0
      %1045 = vmatprep.subr.mxu0 0.0
      %1046 = vmatpush1.msra.mxu0 0.0
      %1047 = vmatprep.subr.mxu0 0.0
      %1048 = vmatpush1.msra.mxu0 0.0
      %1049 = vmatprep.mubr.f32.mxu0 0.0
      %1050 = vmatmul.mubr.f32.gmra.mrb[0].mxu0 %v981
      %v1051 = vpop.f32.mrb[0].mxu0
      %v1052 = vadd.f32 0.0, %v1051
      %v1053 = vpop.f32.mrb[0].mxu0
      %1054 = vmatprep.mubr.f32.mxu0 0.0
      %1055 = vmatmul.mubr.f32.gmra.mrb[0].mxu0 %v983
      %v1056 = vpop.f32.mrb[0].mxu0
      %v1057 = vadd.f32 0.0, %v1056
      %v1058 = vpop.f32.mrb[0].mxu0
      %1059 = vdwg.mxu0
      %1062 = vrot.lane.b32.xlu0 %v1052, 119
      %v1063 = vpop.permute.xlu0 %1062
      %1064 = vrot.lane.b32.xlu0 %v1057, 119
      %v1065 = vpop.permute.xlu0 %1064
      %vm1068 = vcmask 1048504
      %1069 = vst.msk [vmem:[#allocation3 + $0x10] sm:$0xff] %vm1068, %v1063
      %vm1070 = vcmask 130048
      %1071 = vst.msk [vmem:[#allocation3 + $0x18] sm:$0xff] %vm1070, %v1063
      %1072 = vst.msk [vmem:[#allocation3 + $0x50] sm:$0xff] %vm1068, %v1065
      %1073 = vst.msk [vmem:[#allocation3 + $0x58] sm:$0xff] %vm1070, %v1065
      %1074 = vrot.lane.b32.xlu0 %v688, 84
      %v1075 = vpop.permute.xlu0 %1074
      %1076 = vrot.lane.b32.xlu0 %v689, 84
      %v1077 = vpop.permute.xlu0 %1076
      %v1078 = vsel %vm692, %v1075, 0
      %v1080 = vsel %vm692, %v1077, 0
      %1082 = vmatprep.subr.mxu0 0.0
      %1083 = vmatpush1.msra.mxu0 %v690
      %1084 = vmatprep.subr.mxu0 0.0
      %1085 = vmatpush1.msra.mxu0 %v701
      %1086 = vmatprep.subr.mxu0 0.0
      %1087 = vmatpush1.msra.mxu0 0.0
      %1088 = vmatprep.subr.mxu0 0.0
      %1089 = vmatpush1.msra.mxu0 0.0
      %1090 = vmatprep.subr.mxu0 0.0
      %1091 = vmatpush1.msra.mxu0 0.0
      %1092 = vmatprep.subr.mxu0 0.0
      %1093 = vmatpush1.msra.mxu0 0.0
      %1094 = vmatprep.subr.mxu0 0.0
      %1095 = vmatpush1.msra.mxu0 0.0
      %1096 = vmatprep.subr.mxu0 0.0
      %1097 = vmatpush1.msra.mxu0 0.0
      %1098 = vmatprep.subr.mxu0 0.0
      %1099 = vmatpush1.msra.mxu0 0.0
      %1100 = vmatprep.subr.mxu0 0.0
      %1101 = vmatpush1.msra.mxu0 0.0
      %1102 = vmatprep.subr.mxu0 0.0
      %1103 = vmatpush1.msra.mxu0 0.0
      %1104 = vmatprep.subr.mxu0 0.0
      %1105 = vmatpush1.msra.mxu0 0.0
      %1106 = vmatprep.subr.mxu0 0.0
      %1107 = vmatpush1.msra.mxu0 0.0
      %1108 = vmatprep.subr.mxu0 0.0
      %1109 = vmatpush1.msra.mxu0 0.0
      %1110 = vmatprep.subr.mxu0 0.0
      %1111 = vmatpush1.msra.mxu0 0.0
      %1112 = vmatprep.subr.mxu0 0.0
      %1113 = vmatpush1.msra.mxu0 0.0
      %1114 = vmatprep.subr.mxu0 0.0
      %1115 = vmatpush1.msra.mxu0 0.0
      %1116 = vmatprep.subr.mxu0 0.0
      %1117 = vmatpush1.msra.mxu0 0.0
      %1118 = vmatprep.subr.mxu0 0.0
      %1119 = vmatpush1.msra.mxu0 0.0
      %1120 = vmatprep.subr.mxu0 0.0
      %1121 = vmatpush1.msra.mxu0 0.0
      %1122 = vmatprep.subr.mxu0 0.0
      %1123 = vmatpush1.msra.mxu0 0.0
      %1124 = vmatprep.subr.mxu0 0.0
      %1125 = vmatpush1.msra.mxu0 0.0
      %1126 = vmatprep.subr.mxu0 0.0
      %1127 = vmatpush1.msra.mxu0 0.0
      %1128 = vmatprep.subr.mxu0 0.0
      %1129 = vmatpush1.msra.mxu0 0.0
      %1130 = vmatprep.subr.mxu0 0.0
      %1131 = vmatpush1.msra.mxu0 0.0
      %1132 = vmatprep.subr.mxu0 0.0
      %1133 = vmatpush1.msra.mxu0 0.0
      %1134 = vmatprep.subr.mxu0 0.0
      %1135 = vmatpush1.msra.mxu0 0.0
      %1136 = vmatprep.subr.mxu0 0.0
      %1137 = vmatpush1.msra.mxu0 0.0
      %1138 = vmatprep.subr.mxu0 0.0
      %1139 = vmatpush1.msra.mxu0 0.0
      %1140 = vmatprep.subr.mxu0 0.0
      %1141 = vmatpush1.msra.mxu0 0.0
      %1142 = vmatprep.subr.mxu0 0.0
      %1143 = vmatpush1.msra.mxu0 0.0
      %1144 = vmatprep.subr.mxu0 0.0
      %1145 = vmatpush1.msra.mxu0 0.0
      %1146 = vmatprep.mubr.f32.mxu0 0.0
      %1147 = vmatmul.mubr.f32.gmra.mrb[0].mxu0 %v1078
      %v1148 = vpop.f32.mrb[0].mxu0
      %v1149 = vadd.f32 0.0, %v1148
      %v1150 = vpop.f32.mrb[0].mxu0
      %1151 = vmatprep.mubr.f32.mxu0 0.0
      %1152 = vmatmul.mubr.f32.gmra.mrb[0].mxu0 %v1080
      %v1153 = vpop.f32.mrb[0].mxu0
      %v1154 = vadd.f32 0.0, %v1153
      %v1155 = vpop.f32.mrb[0].mxu0
      %1156 = vdwg.mxu0
      %1159 = vrot.lane.b32.xlu0 %v1149, 84
      %v1160 = vpop.permute.xlu0 %1159
      %1161 = vrot.lane.b32.xlu0 %v1154, 84
      %v1162 = vpop.permute.xlu0 %1161
      %vm1165 = vcmask 892576
      %1166 = vst.msk [vmem:[#allocation3 + $0x18] sm:$0xff] %vm1165, %v1160
      %1167 = vst.msk [vmem:[#allocation3 + $0x58] sm:$0xff] %vm1165, %v1162
      %1168 = vrot.lane.b32.xlu0 %v688, 73
      %v1169 = vpop.permute.xlu0 %1168
      %1170 = vrot.lane.b32.xlu0 %v689, 73
      %v1171 = vpop.permute.xlu0 %1170
      %v1172 = vsel %vm692, %v1169, 0
      %v1174 = vsel %vm692, %v1171, 0
      %1176 = vmatprep.subr.mxu0 0.0
      %1177 = vmatpush1.msra.mxu0 %v690
      %1178 = vmatprep.subr.mxu0 0.0
      %1179 = vmatpush1.msra.mxu0 %v701
      %1180 = vmatprep.subr.mxu0 0.0
      %1181 = vmatpush1.msra.mxu0 0.0
      %1182 = vmatprep.subr.mxu0 0.0
      %1183 = vmatpush1.msra.mxu0 0.0
      %1184 = vmatprep.subr.mxu0 0.0
      %1185 = vmatpush1.msra.mxu0 0.0
      %1186 = vmatprep.subr.mxu0 0.0
      %1187 = vmatpush1.msra.mxu0 0.0
      %1188 = vmatprep.subr.mxu0 0.0
      %1189 = vmatpush1.msra.mxu0 0.0
      %1190 = vmatprep.subr.mxu0 0.0
      %1191 = vmatpush1.msra.mxu0 0.0
      %1192 = vmatprep.subr.mxu0 0.0
      %1193 = vmatpush1.msra.mxu0 0.0
      %1194 = vmatprep.subr.mxu0 0.0
      %1195 = vmatpush1.msra.mxu0 0.0
      %1196 = vmatprep.subr.mxu0 0.0
      %1197 = vmatpush1.msra.mxu0 0.0
      %1198 = vmatprep.subr.mxu0 0.0
      %1199 = vmatpush1.msra.mxu0 0.0
      %1200 = vmatprep.subr.mxu0 0.0
      %1201 = vmatpush1.msra.mxu0 0.0
      %1202 = vmatprep.subr.mxu0 0.0
      %1203 = vmatpush1.msra.mxu0 0.0
      %1204 = vmatprep.subr.mxu0 0.0
      %1205 = vmatpush1.msra.mxu0 0.0
      %1206 = vmatprep.subr.mxu0 0.0
      %1207 = vmatpush1.msra.mxu0 0.0
      %1208 = vmatprep.subr.mxu0 0.0
      %1209 = vmatpush1.msra.mxu0 0.0
      %1210 = vmatprep.subr.mxu0 0.0
      %1211 = vmatpush1.msra.mxu0 0.0
      %1212 = vmatprep.subr.mxu0 0.0
      %1213 = vmatpush1.msra.mxu0 0.0
      %1214 = vmatprep.subr.mxu0 0.0
      %1215 = vmatpush1.msra.mxu0 0.0
      %1216 = vmatprep.subr.mxu0 0.0
      %1217 = vmatpush1.msra.mxu0 0.0
      %1218 = vmatprep.subr.mxu0 0.0
      %1219 = vmatpush1.msra.mxu0 0.0
      %1220 = vmatprep.subr.mxu0 0.0
      %1221 = vmatpush1.msra.mxu0 0.0
      %1222 = vmatprep.subr.mxu0 0.0
      %1223 = vmatpush1.msra.mxu0 0.0
      %1224 = vmatprep.subr.mxu0 0.0
      %1225 = vmatpush1.msra.mxu0 0.0
      %1226 = vmatprep.subr.mxu0 0.0
      %1227 = vmatpush1.msra.mxu0 0.0
      %1228 = vmatprep.subr.mxu0 0.0
      %1229 = vmatpush1.msra.mxu0 0.0
      %1230 = vmatprep.subr.mxu0 0.0
      %1231 = vmatpush1.msra.mxu0 0.0
      %1232 = vmatprep.subr.mxu0 0.0
      %1233 = vmatpush1.msra.mxu0 0.0
      %1234 = vmatprep.subr.mxu0 0.0
      %1235 = vmatpush1.msra.mxu0 0.0
      %1236 = vmatprep.subr.mxu0 0.0
      %1237 = vmatpush1.msra.mxu0 0.0
      %1238 = vmatprep.subr.mxu0 0.0
      %1239 = vmatpush1.msra.mxu0 0.0
      %1240 = vmatprep.mubr.f32.mxu0 0.0
      %1241 = vmatmul.mubr.f32.gmra.mrb[0].mxu0 %v1172
      %v1242 = vpop.f32.mrb[0].mxu0
      %v1243 = vadd.f32 0.0, %v1242
      %v1244 = vpop.f32.mrb[0].mxu0
      %1245 = vmatprep.mubr.f32.mxu0 0.0
      %1246 = vmatmul.mubr.f32.gmra.mrb[0].mxu0 %v1174
      %v1247 = vpop.f32.mrb[0].mxu0
      %v1248 = vadd.f32 0.0, %v1247
      %v1249 = vpop.f32.mrb[0].mxu0
      %1250 = vdwg.mxu0
      %1253 = vrot.lane.b32.xlu0 %v1243, 49
      %v1254 = vpop.permute.xlu0 %1253
      %1255 = vrot.lane.b32.xlu0 %v1248, 49
      %v1256 = vpop.permute.xlu0 %1255
      %vm1259 = vcmask 605576
      %1260 = vst.msk [vmem:[#allocation3 + $0x20] sm:$0xff] %vm1259, %v1254
      %1261 = vst.msk [vmem:[#allocation3 + $0x60] sm:$0xff] %vm1259, %v1256
      %1262 = vrot.lane.b32.xlu0 %v688, 62
      %v1263 = vpop.permute.xlu0 %1262
      %1264 = vrot.lane.b32.xlu0 %v689, 62
      %v1265 = vpop.permute.xlu0 %1264
      %v1266 = vsel %vm692, %v1263, 0
      %v1268 = vsel %vm692, %v1265, 0
      %1270 = vmatprep.subr.mxu0 0.0
      %1271 = vmatpush1.msra.mxu0 %v690
      %1272 = vmatprep.subr.mxu0 0.0
      %1273 = vmatpush1.msra.mxu0 %v701
      %1274 = vmatprep.subr.mxu0 0.0
      %1275 = vmatpush1.msra.mxu0 0.0
      %1276 = vmatprep.subr.mxu0 0.0
      %1277 = vmatpush1.msra.mxu0 0.0
      %1278 = vmatprep.subr.mxu0 0.0
      %1279 = vmatpush1.msra.mxu0 0.0
      %1280 = vmatprep.subr.mxu0 0.0
      %1281 = vmatpush1.msra.mxu0 0.0
      %1282 = vmatprep.subr.mxu0 0.0
      %1283 = vmatpush1.msra.mxu0 0.0
      %1284 = vmatprep.subr.mxu0 0.0
      %1285 = vmatpush1.msra.mxu0 0.0
      %1286 = vmatprep.subr.mxu0 0.0
      %1287 = vmatpush1.msra.mxu0 0.0
      %1288 = vmatprep.subr.mxu0 0.0
      %1289 = vmatpush1.msra.mxu0 0.0
      %1290 = vmatprep.subr.mxu0 0.0
      %1291 = vmatpush1.msra.mxu0 0.0
      %1292 = vmatprep.subr.mxu0 0.0
      %1293 = vmatpush1.msra.mxu0 0.0
      %1294 = vmatprep.subr.mxu0 0.0
      %1295 = vmatpush1.msra.mxu0 0.0
      %1296 = vmatprep.subr.mxu0 0.0
      %1297 = vmatpush1.msra.mxu0 0.0
      %1298 = vmatprep.subr.mxu0 0.0
      %1299 = vmatpush1.msra.mxu0 0.0
      %1300 = vmatprep.subr.mxu0 0.0
      %1301 = vmatpush1.msra.mxu0 0.0
      %1302 = vmatprep.subr.mxu0 0.0
      %1303 = vmatpush1.msra.mxu0 0.0
      %1304 = vmatprep.subr.mxu0 0.0
      %1305 = vmatpush1.msra.mxu0 0.0
      %1306 = vmatprep.subr.mxu0 0.0
      %1307 = vmatpush1.msra.mxu0 0.0
      %1308 = vmatprep.subr.mxu0 0.0
      %1309 = vmatpush1.msra.mxu0 0.0
      %1310 = vmatprep.subr.mxu0 0.0
      %1311 = vmatpush1.msra.mxu0 0.0
      %1312 = vmatprep.subr.mxu0 0.0
      %1313 = vmatpush1.msra.mxu0 0.0
      %1314 = vmatprep.subr.mxu0 0.0
      %1315 = vmatpush1.msra.mxu0 0.0
      %1316 = vmatprep.subr.mxu0 0.0
      %1317 = vmatpush1.msra.mxu0 0.0
      %1318 = vmatprep.subr.mxu0 0.0
      %1319 = vmatpush1.msra.mxu0 0.0
      %1320 = vmatprep.subr.mxu0 0.0
      %1321 = vmatpush1.msra.mxu0 0.0
      %1322 = vmatprep.subr.mxu0 0.0
      %1323 = vmatpush1.msra.mxu0 0.0
      %1324 = vmatprep.subr.mxu0 0.0
      %1325 = vmatpush1.msra.mxu0 0.0
      %1326 = vmatprep.subr.mxu0 0.0
      %1327 = vmatpush1.msra.mxu0 0.0
      %1328 = vmatprep.subr.mxu0 0.0
      %1329 = vmatpush1.msra.mxu0 0.0
      %1330 = vmatprep.subr.mxu0 0.0
      %1331 = vmatpush1.msra.mxu0 0.0
      %1332 = vmatprep.subr.mxu0 0.0
      %1333 = vmatpush1.msra.mxu0 0.0
      %1334 = vmatprep.mubr.f32.mxu0 0.0
      %1335 = vmatmul.mubr.f32.gmra.mrb[0].mxu0 %v1266
      %v1336 = vpop.f32.mrb[0].mxu0
      %v1337 = vadd.f32 0.0, %v1336
      %v1338 = vpop.f32.mrb[0].mxu0
      %1339 = vmatprep.mubr.f32.mxu0 0.0
      %1340 = vmatmul.mubr.f32.gmra.mrb[0].mxu0 %v1268
      %v1341 = vpop.f32.mrb[0].mxu0
      %v1342 = vadd.f32 0.0, %v1341
      %v1343 = vpop.f32.mrb[0].mxu0
      %1344 = vdwg.mxu0
      %1347 = vrot.lane.b32.xlu0 %v1337, 14
      %v1348 = vpop.permute.xlu0 %1347
      %1349 = vrot.lane.b32.xlu0 %v1342, 14
      %v1350 = vpop.permute.xlu0 %1349
      %vm1353 = vcmask 318576
      %1354 = vst.msk [vmem:[#allocation3 + $0x28] sm:$0xff] %vm1353, %v1348
      %1355 = vst.msk [vmem:[#allocation3 + $0x68] sm:$0xff] %vm1353, %v1350
      %1356 = vrot.lane.b32.xlu0 %v688, 51
      %v1357 = vpop.permute.xlu0 %1356
      %1358 = vrot.lane.b32.xlu0 %v689, 51
      %v1359 = vpop.permute.xlu0 %1358
      %v1360 = vsel %vm692, %v1357, 0
      %v1362 = vsel %vm692, %v1359, 0
      %1364 = vmatprep.subr.mxu0 0.0
      %1365 = vmatpush1.msra.mxu0 %v690
      %1366 = vmatprep.subr.mxu0 0.0
      %1367 = vmatpush1.msra.mxu0 %v701
      %1368 = vmatprep.subr.mxu0 0.0
      %1369 = vmatpush1.msra.mxu0 0.0
      %1370 = vmatprep.subr.mxu0 0.0
      %1371 = vmatpush1.msra.mxu0 0.0
      %1372 = vmatprep.subr.mxu0 0.0
      %1373 = vmatpush1.msra.mxu0 0.0
      %1374 = vmatprep.subr.mxu0 0.0
      %1375 = vmatpush1.msra.mxu0 0.0
      %1376 = vmatprep.subr.mxu0 0.0
      %1377 = vmatpush1.msra.mxu0 0.0
      %1378 = vmatprep.subr.mxu0 0.0
      %1379 = vmatpush1.msra.mxu0 0.0
      %1380 = vmatprep.subr.mxu0 0.0
      %1381 = vmatpush1.msra.mxu0 0.0
      %1382 = vmatprep.subr.mxu0 0.0
      %1383 = vmatpush1.msra.mxu0 0.0
      %1384 = vmatprep.subr.mxu0 0.0
      %1385 = vmatpush1.msra.mxu0 0.0
      %1386 = vmatprep.subr.mxu0 0.0
      %1387 = vmatpush1.msra.mxu0 0.0
      %1388 = vmatprep.subr.mxu0 0.0
      %1389 = vmatpush1.msra.mxu0 0.0
      %1390 = vmatprep.subr.mxu0 0.0
      %1391 = vmatpush1.msra.mxu0 0.0
      %1392 = vmatprep.subr.mxu0 0.0
      %1393 = vmatpush1.msra.mxu0 0.0
      %1394 = vmatprep.subr.mxu0 0.0
      %1395 = vmatpush1.msra.mxu0 0.0
      %1396 = vmatprep.subr.mxu0 0.0
      %1397 = vmatpush1.msra.mxu0 0.0
      %1398 = vmatprep.subr.mxu0 0.0
      %1399 = vmatpush1.msra.mxu0 0.0
      %1400 = vmatprep.subr.mxu0 0.0
      %1401 = vmatpush1.msra.mxu0 0.0
      %1402 = vmatprep.subr.mxu0 0.0
      %1403 = vmatpush1.msra.mxu0 0.0
      %1404 = vmatprep.subr.mxu0 0.0
      %1405 = vmatpush1.msra.mxu0 0.0
      %1406 = vmatprep.subr.mxu0 0.0
      %1407 = vmatpush1.msra.mxu0 0.0
      %1408 = vmatprep.subr.mxu0 0.0
      %1409 = vmatpush1.msra.mxu0 0.0
      %1410 = vmatprep.subr.mxu0 0.0
      %1411 = vmatpush1.msra.mxu0 0.0
      %1412 = vmatprep.subr.mxu0 0.0
      %1413 = vmatpush1.msra.mxu0 0.0
      %1414 = vmatprep.subr.mxu0 0.0
      %1415 = vmatpush1.msra.mxu0 0.0
      %1416 = vmatprep.subr.mxu0 0.0
      %1417 = vmatpush1.msra.mxu0 0.0
      %1418 = vmatprep.subr.mxu0 0.0
      %1419 = vmatpush1.msra.mxu0 0.0
      %1420 = vmatprep.subr.mxu0 0.0
      %1421 = vmatpush1.msra.mxu0 0.0
      %1422 = vmatprep.subr.mxu0 0.0
      %1423 = vmatpush1.msra.mxu0 0.0
      %1424 = vmatprep.subr.mxu0 0.0
      %1425 = vmatpush1.msra.mxu0 0.0
      %1426 = vmatprep.subr.mxu0 0.0
      %1427 = vmatpush1.msra.mxu0 0.0
      %1428 = vmatprep.mubr.f32.mxu0 0.0
      %1429 = vmatmul.mubr.f32.gmra.mrb[0].mxu0 %v1360
      %v1430 = vpop.f32.mrb[0].mxu0
      %v1431 = vadd.f32 0.0, %v1430
      %v1432 = vpop.f32.mrb[0].mxu0
      %1433 = vmatprep.mubr.f32.mxu0 0.0
      %1434 = vmatmul.mubr.f32.gmra.mrb[0].mxu0 %v1362
      %v1435 = vpop.f32.mrb[0].mxu0
      %v1436 = vadd.f32 0.0, %v1435
      %v1437 = vpop.f32.mrb[0].mxu0
      %1438 = vdwg.mxu0
      %1441 = vrot.lane.b32.xlu0 %v1431, 107
      %v1442 = vpop.permute.xlu0 %1441
      %1443 = vrot.lane.b32.xlu0 %v1436, 107
      %v1444 = vpop.permute.xlu0 %1443
      %vm1447 = vcmask 1048408
      %1448 = vst.msk [vmem:[#allocation3 + $0x28] sm:$0xff] %vm1447, %v1442
      %vm1449 = vcmask 31744
      %1450 = vst.msk [vmem:[#allocation3 + $0x30] sm:$0xff] %vm1449, %v1442
      %1451 = vst.msk [vmem:[#allocation3 + $0x68] sm:$0xff] %vm1447, %v1444
      %1452 = vst.msk [vmem:[#allocation3 + $0x70] sm:$0xff] %vm1449, %v1444
      %1453 = vrot.lane.b32.xlu0 %v688, 40
      %v1454 = vpop.permute.xlu0 %1453
      %1455 = vrot.lane.b32.xlu0 %v689, 40
      %v1456 = vpop.permute.xlu0 %1455
      %v1457 = vsel %vm692, %v1454, 0
      %v1459 = vsel %vm692, %v1456, 0
      %1461 = vmatprep.subr.mxu0 0.0
      %1462 = vmatpush1.msra.mxu0 %v690
      %1463 = vmatprep.subr.mxu0 0.0
      %1464 = vmatpush1.msra.mxu0 %v701
      %1465 = vmatprep.subr.mxu0 0.0
      %1466 = vmatpush1.msra.mxu0 0.0
      %1467 = vmatprep.subr.mxu0 0.0
      %1468 = vmatpush1.msra.mxu0 0.0
      %1469 = vmatprep.subr.mxu0 0.0
      %1470 = vmatpush1.msra.mxu0 0.0
      %1471 = vmatprep.subr.mxu0 0.0
      %1472 = vmatpush1.msra.mxu0 0.0
      %1473 = vmatprep.subr.mxu0 0.0
      %1474 = vmatpush1.msra.mxu0 0.0
      %1475 = vmatprep.subr.mxu0 0.0
      %1476 = vmatpush1.msra.mxu0 0.0
      %1477 = vmatprep.subr.mxu0 0.0
      %1478 = vmatpush1.msra.mxu0 0.0
      %1479 = vmatprep.subr.mxu0 0.0
      %1480 = vmatpush1.msra.mxu0 0.0
      %1481 = vmatprep.subr.mxu0 0.0
      %1482 = vmatpush1.msra.mxu0 0.0
      %1483 = vmatprep.subr.mxu0 0.0
      %1484 = vmatpush1.msra.mxu0 0.0
      %1485 = vmatprep.subr.mxu0 0.0
      %1486 = vmatpush1.msra.mxu0 0.0
      %1487 = vmatprep.subr.mxu0 0.0
      %1488 = vmatpush1.msra.mxu0 0.0
      %1489 = vmatprep.subr.mxu0 0.0
      %1490 = vmatpush1.msra.mxu0 0.0
      %1491 = vmatprep.subr.mxu0 0.0
      %1492 = vmatpush1.msra.mxu0 0.0
      %1493 = vmatprep.subr.mxu0 0.0
      %1494 = vmatpush1.msra.mxu0 0.0
      %1495 = vmatprep.subr.mxu0 0.0
      %1496 = vmatpush1.msra.mxu0 0.0
      %1497 = vmatprep.subr.mxu0 0.0
      %1498 = vmatpush1.msra.mxu0 0.0
      %1499 = vmatprep.subr.mxu0 0.0
      %1500 = vmatpush1.msra.mxu0 0.0
      %1501 = vmatprep.subr.mxu0 0.0
      %1502 = vmatpush1.msra.mxu0 0.0
      %1503 = vmatprep.subr.mxu0 0.0
      %1504 = vmatpush1.msra.mxu0 0.0
      %1505 = vmatprep.subr.mxu0 0.0
      %1506 = vmatpush1.msra.mxu0 0.0
      %1507 = vmatprep.subr.mxu0 0.0
      %1508 = vmatpush1.msra.mxu0 0.0
      %1509 = vmatprep.subr.mxu0 0.0
      %1510 = vmatpush1.msra.mxu0 0.0
      %1511 = vmatprep.subr.mxu0 0.0
      %1512 = vmatpush1.msra.mxu0 0.0
      %1513 = vmatprep.subr.mxu0 0.0
      %1514 = vmatpush1.msra.mxu0 0.0
      %1515 = vmatprep.subr.mxu0 0.0
      %1516 = vmatpush1.msra.mxu0 0.0
      %1517 = vmatprep.subr.mxu0 0.0
      %1518 = vmatpush1.msra.mxu0 0.0
      %1519 = vmatprep.subr.mxu0 0.0
      %1520 = vmatpush1.msra.mxu0 0.0
      %1521 = vmatprep.subr.mxu0 0.0
      %1522 = vmatpush1.msra.mxu0 0.0
      %1523 = vmatprep.subr.mxu0 0.0
      %1524 = vmatpush1.msra.mxu0 0.0
      %1525 = vmatprep.mubr.f32.mxu0 0.0
      %1526 = vmatmul.mubr.f32.gmra.mrb[0].mxu0 %v1457
      %v1527 = vpop.f32.mrb[0].mxu0
      %v1528 = vadd.f32 0.0, %v1527
      %v1529 = vpop.f32.mrb[0].mxu0
      %1530 = vmatprep.mubr.f32.mxu0 0.0
      %1531 = vmatmul.mubr.f32.gmra.mrb[0].mxu0 %v1459
      %v1532 = vpop.f32.mrb[0].mxu0
      %v1533 = vadd.f32 0.0, %v1532
      %v1534 = vpop.f32.mrb[0].mxu0
      %1535 = vdwg.mxu0
      %1538 = vrot.lane.b32.xlu0 %v1528, 72
      %v1539 = vpop.permute.xlu0 %1538
      %1540 = vrot.lane.b32.xlu0 %v1533, 72
      %v1541 = vpop.permute.xlu0 %1540
      %vm1544 = vcmask 794176
      %1545 = vst.msk [vmem:[#allocation3 + $0x30] sm:$0xff] %vm1544, %v1539
      %1546 = vst.msk [vmem:[#allocation3 + $0x70] sm:$0xff] %vm1544, %v1541
      %v1547 = vld [vmem:[%s3] sm:$0xff]
      %v1548 = vld [vmem:[%s3 + $0x8] sm:$0xff]
      %v1549 = vld [vmem:[%s3 + $0x10] sm:$0xff]
      %v1550 = vld [vmem:[%s3 + $0x18] sm:$0xff]
      %v1551 = vld [vmem:[#allocation3] sm:$0xff]
      %v1552 = vld [vmem:[#allocation3 + $0x8] sm:$0xff]
      %v1553 = vld [vmem:[#allocation3 + $0x10] sm:$0xff]
      %v1554 = vld [vmem:[#allocation3 + $0x18] sm:$0xff]
      %v1555 = vld [vmem:[#allocation3 + $0x20] sm:$0xff]
      %v1556 = vld [vmem:[#allocation3 + $0x28] sm:$0xff]
      %v1557 = vld [vmem:[#allocation3 + $0x30] sm:$0xff]
      %v1558 = vld [vmem:[#allocation3 + $0x40] sm:$0xff]
      %v1559 = vld [vmem:[#allocation3 + $0x48] sm:$0xff]
      %v1560 = vld [vmem:[#allocation3 + $0x50] sm:$0xff]
      %v1561 = vld [vmem:[#allocation3 + $0x58] sm:$0xff]
      %v1562 = vld [vmem:[#allocation3 + $0x60] sm:$0xff]
      %v1563 = vld [vmem:[#allocation3 + $0x68] sm:$0xff]
      %v1564 = vld [vmem:[#allocation3 + $0x70] sm:$0xff]
      %1565 = vst [vmem:[#allocation6] sm:$0xff] %v1551
      %1566 = vst [vmem:[#allocation6 + $0x8] sm:$0xff] %v1552
      %1567 = vst [vmem:[#allocation6 + $0x10] sm:$0xff] %v1553
      %1568 = vst [vmem:[#allocation6 + $0x18] sm:$0xff] %v1554
      %1569 = vst [vmem:[#allocation6 + $0x20] sm:$0xff] %v1555
      %1570 = vst [vmem:[#allocation6 + $0x28] sm:$0xff] %v1556
      %1571 = vst [vmem:[#allocation6 + $0x30] sm:$0xff] %v1557
      %1572 = vst [vmem:[#allocation6 + $0x38] sm:$0xff] %v1558
      %1573 = vst [vmem:[#allocation6 + $0x40] sm:$0xff] %v1559
      %1574 = vst [vmem:[#allocation6 + $0x48] sm:$0xff] %v1560
      %1575 = vst [vmem:[#allocation6 + $0x50] sm:$0xff] %v1561
      %1576 = vst [vmem:[#allocation6 + $0x58] sm:$0xff] %v1562
      %1577 = vst [vmem:[#allocation6 + $0x60] sm:$0xff] %v1563
      %1578 = vst [vmem:[#allocation6 + $0x68] sm:$0xff] %v1564
      %v1579 = vld [vmem:[#allocation3] sm:$0xff]
      %v1580 = vld [vmem:[#allocation3 + $0x8] sm:$0xff]
      %v1581 = vld [vmem:[#allocation3 + $0x10] sm:$0xff]
      %v1582 = vld [vmem:[#allocation3 + $0x18] sm:$0xff]
      %v1583 = vld [vmem:[#allocation3 + $0x20] sm:$0xff]
      %v1584 = vld [vmem:[#allocation3 + $0x28] sm:$0xff]
      %v1585 = vld [vmem:[#allocation3 + $0x30] sm:$0xff]
      %v1586 = vld [vmem:[#allocation3 + $0x38] sm:$0xff]
      %v1587 = vld [vmem:[#allocation3 + $0x40] sm:$0xff]
      %v1588 = vld [vmem:[#allocation3 + $0x48] sm:$0xff]
      %v1589 = vld [vmem:[#allocation3 + $0x50] sm:$0xff]
      %v1590 = vld [vmem:[#allocation3 + $0x58] sm:$0xff]
      %v1591 = vld [vmem:[#allocation3 + $0x60] sm:$0xff]
      %v1592 = vld [vmem:[#allocation3 + $0x68] sm:$0xff]
      %v1593 = vld [vmem:[#allocation3 + $0x70] sm:$0xff]
      %v1594 = vld [vmem:[#allocation3 + $0x78] sm:$0xff]
      %1611 = vrot.lane.b32.xlu0 %v1579, 127
      %v1612 = vpop.permute.xlu0 %1611
      %1613 = vrot.lane.b32.xlu0 %v1580, 127
      %v1614 = vpop.permute.xlu0 %1613
      %1615 = vrot.lane.b32.xlu0 %v1581, 127
      %v1616 = vpop.permute.xlu0 %1615
      %1617 = vrot.lane.b32.xlu0 %v1582, 127
      %v1618 = vpop.permute.xlu0 %1617
      %1619 = vrot.lane.b32.xlu0 %v1583, 127
      %v1620 = vpop.permute.xlu0 %1619
      %1621 = vrot.lane.b32.xlu0 %v1584, 127
      %v1622 = vpop.permute.xlu0 %1621
      %1623 = vrot.lane.b32.xlu0 %v1585, 127
      %v1624 = vpop.permute.xlu0 %1623
      %1625 = vrot.lane.b32.xlu0 %v1586, 127
      %v1626 = vpop.permute.xlu0 %1625
      %1627 = vrot.lane.b32.xlu0 %v1587, 127
      %v1628 = vpop.permute.xlu0 %1627
      %1629 = vrot.lane.b32.xlu0 %v1588, 127
      %v1630 = vpop.permute.xlu0 %1629
      %1631 = vrot.lane.b32.xlu0 %v1589, 127
      %v1632 = vpop.permute.xlu0 %1631
      %1633 = vrot.lane.b32.xlu0 %v1590, 127
      %v1634 = vpop.permute.xlu0 %1633
      %1635 = vrot.lane.b32.xlu0 %v1591, 127
      %v1636 = vpop.permute.xlu0 %1635
      %1637 = vrot.lane.b32.xlu0 %v1592, 127
      %v1638 = vpop.permute.xlu0 %1637
      %1639 = vrot.lane.b32.xlu0 %v1593, 127
      %v1640 = vpop.permute.xlu0 %1639
      %1641 = vrot.lane.b32.xlu0 %v1594, 127
      %v1642 = vpop.permute.xlu0 %1641
      %v1643 = vsel %vm497, %v1612, %v1614
      %v1644 = vsel %vm497, %v1614, %v1616
      %v1645 = vsel %vm497, %v1616, %v1618
      %v1646 = vsel %vm497, %v1618, %v1620
      %v1647 = vsel %vm497, %v1620, %v1622
      %v1648 = vsel %vm497, %v1622, %v1624
      %v1649 = vsel %vm497, %v1624, %v1626
      %v1650 = vsel %vm497, %v1628, %v1630
      %v1651 = vsel %vm497, %v1630, %v1632
      %v1652 = vsel %vm497, %v1632, %v1634
      %v1653 = vsel %vm497, %v1634, %v1636
      %v1654 = vsel %vm497, %v1636, %v1638
      %v1655 = vsel %vm497, %v1638, %v1640
      %v1656 = vsel %vm497, %v1640, %v1642
      %1671 = vst [vmem:[#allocation6 + $0x70] sm:$0xff] %v1643
      %1672 = vst [vmem:[#allocation6 + $0x78] sm:$0xff] %v1644
      %1673 = vst [vmem:[#allocation6 + $0x80] sm:$0xff] %v1645
      %1674 = vst [vmem:[#allocation6 + $0x88] sm:$0xff] %v1646
      %1675 = vst [vmem:[#allocation6 + $0x90] sm:$0xff] %v1647
      %1676 = vst [vmem:[#allocation6 + $0x98] sm:$0xff] %v1648
      %1677 = vst [vmem:[#allocation6 + $0xa0] sm:$0xff] %v1649
      %1678 = vst [vmem:[#allocation6 + $0xa8] sm:$0xff] %v1650
      %1679 = vst [vmem:[#allocation6 + $0xb0] sm:$0xff] %v1651
      %1680 = vst [vmem:[#allocation6 + $0xb8] sm:$0xff] %v1652
      %1681 = vst [vmem:[#allocation6 + $0xc0] sm:$0xff] %v1653
      %1682 = vst [vmem:[#allocation6 + $0xc8] sm:$0xff] %v1654
      %1683 = vst [vmem:[#allocation6 + $0xd0] sm:$0xff] %v1655
      %1684 = vst [vmem:[#allocation6 + $0xd8] sm:$0xff] %v1656
      %v1685 = vld [vmem:[#allocation3] sm:$0xff]
      %v1686 = vld [vmem:[#allocation3 + $0x8] sm:$0xff]
      %v1687 = vld [vmem:[#allocation3 + $0x10] sm:$0xff]
      %v1688 = vld [vmem:[#allocation3 + $0x18] sm:$0xff]
      %v1689 = vld [vmem:[#allocation3 + $0x20] sm:$0xff]
      %v1690 = vld [vmem:[#allocation3 + $0x28] sm:$0xff]
      %v1691 = vld [vmem:[#allocation3 + $0x30] sm:$0xff]
      %v1692 = vld [vmem:[#allocation3 + $0x38] sm:$0xff]
      %v1693 = vld [vmem:[#allocation3 + $0x40] sm:$0xff]
      %v1694 = vld [vmem:[#allocation3 + $0x48] sm:$0xff]
      %v1695 = vld [vmem:[#allocation3 + $0x50] sm:$0xff]
      %v1696 = vld [vmem:[#allocation3 + $0x58] sm:$0xff]
      %v1697 = vld [vmem:[#allocation3 + $0x60] sm:$0xff]
      %v1698 = vld [vmem:[#allocation3 + $0x68] sm:$0xff]
      %v1699 = vld [vmem:[#allocation3 + $0x70] sm:$0xff]
      %v1700 = vld [vmem:[#allocation3 + $0x78] sm:$0xff]
      %1717 = vrot.lane.b32.xlu0 %v1685, 126
      %v1718 = vpop.permute.xlu0 %1717
      %1719 = vrot.lane.b32.xlu0 %v1686, 126
      %v1720 = vpop.permute.xlu0 %1719
      %1721 = vrot.lane.b32.xlu0 %v1687, 126
      %v1722 = vpop.permute.xlu0 %1721
      %1723 = vrot.lane.b32.xlu0 %v1688, 126
      %v1724 = vpop.permute.xlu0 %1723
      %1725 = vrot.lane.b32.xlu0 %v1689, 126
      %v1726 = vpop.permute.xlu0 %1725
      %1727 = vrot.lane.b32.xlu0 %v1690, 126
      %v1728 = vpop.permute.xlu0 %1727
      %1729 = vrot.lane.b32.xlu0 %v1691, 126
      %v1730 = vpop.permute.xlu0 %1729
      %1731 = vrot.lane.b32.xlu0 %v1692, 126
      %v1732 = vpop.permute.xlu0 %1731
      %1733 = vrot.lane.b32.xlu0 %v1693, 126
      %v1734 = vpop.permute.xlu0 %1733
      %1735 = vrot.lane.b32.xlu0 %v1694, 126
      %v1736 = vpop.permute.xlu0 %1735
      %1737 = vrot.lane.b32.xlu0 %v1695, 126
      %v1738 = vpop.permute.xlu0 %1737
      %1739 = vrot.lane.b32.xlu0 %v1696, 126
      %v1740 = vpop.permute.xlu0 %1739
      %1741 = vrot.lane.b32.xlu0 %v1697, 126
      %v1742 = vpop.permute.xlu0 %1741
      %1743 = vrot.lane.b32.xlu0 %v1698, 126
      %v1744 = vpop.permute.xlu0 %1743
      %1745 = vrot.lane.b32.xlu0 %v1699, 126
      %v1746 = vpop.permute.xlu0 %1745
      %1747 = vrot.lane.b32.xlu0 %v1700, 126
      %v1748 = vpop.permute.xlu0 %1747
      %v1749 = vsel %vm509, %v1718, %v1720
      %v1750 = vsel %vm509, %v1720, %v1722
      %v1751 = vsel %vm509, %v1722, %v1724
      %v1752 = vsel %vm509, %v1724, %v1726
      %v1753 = vsel %vm509, %v1726, %v1728
      %v1754 = vsel %vm509, %v1728, %v1730
      %v1755 = vsel %vm509, %v1730, %v1732
      %v1756 = vsel %vm509, %v1734, %v1736
      %v1757 = vsel %vm509, %v1736, %v1738
      %v1758 = vsel %vm509, %v1738, %v1740
      %v1759 = vsel %vm509, %v1740, %v1742
      %v1760 = vsel %vm509, %v1742, %v1744
      %v1761 = vsel %vm509, %v1744, %v1746
      %v1762 = vsel %vm509, %v1746, %v1748
      %1777 = vst [vmem:[#allocation6 + $0xe0] sm:$0xff] %v1749
      %1778 = vst [vmem:[#allocation6 + $0xe8] sm:$0xff] %v1750
      %1779 = vst [vmem:[#allocation6 + $0xf0] sm:$0xff] %v1751
      %1780 = vst [vmem:[#allocation6 + $0xf8] sm:$0xff] %v1752
      %1781 = vst [vmem:[#allocation6 + $0x100] sm:$0xff] %v1753
      %1782 = vst [vmem:[#allocation6 + $0x108] sm:$0xff] %v1754
      %1783 = vst [vmem:[#allocation6 + $0x110] sm:$0xff] %v1755
      %1784 = vst [vmem:[#allocation6 + $0x118] sm:$0xff] %v1756
      %1785 = vst [vmem:[#allocation6 + $0x120] sm:$0xff] %v1757
      %1786 = vst [vmem:[#allocation6 + $0x128] sm:$0xff] %v1758
      %1787 = vst [vmem:[#allocation6 + $0x130] sm:$0xff] %v1759
      %1788 = vst [vmem:[#allocation6 + $0x138] sm:$0xff] %v1760
      %1789 = vst [vmem:[#allocation6 + $0x140] sm:$0xff] %v1761
      %1790 = vst [vmem:[#allocation6 + $0x148] sm:$0xff] %v1762
      %v1791 = vld [vmem:[#allocation3] sm:$0xff]
      %v1792 = vld [vmem:[#allocation3 + $0x8] sm:$0xff]
      %v1793 = vld [vmem:[#allocation3 + $0x10] sm:$0xff]
      %v1794 = vld [vmem:[#allocation3 + $0x18] sm:$0xff]
      %v1795 = vld [vmem:[#allocation3 + $0x20] sm:$0xff]
      %v1796 = vld [vmem:[#allocation3 + $0x28] sm:$0xff]
      %v1797 = vld [vmem:[#allocation3 + $0x30] sm:$0xff]
      %v1798 = vld [vmem:[#allocation3 + $0x38] sm:$0xff]
      %v1799 = vld [vmem:[#allocation3 + $0x40] sm:$0xff]
      %v1800 = vld [vmem:[#allocation3 + $0x48] sm:$0xff]
      %v1801 = vld [vmem:[#allocation3 + $0x50] sm:$0xff]
      %v1802 = vld [vmem:[#allocation3 + $0x58] sm:$0xff]
      %v1803 = vld [vmem:[#allocation3 + $0x60] sm:$0xff]
      %v1804 = vld [vmem:[#allocation3 + $0x68] sm:$0xff]
      %v1805 = vld [vmem:[#allocation3 + $0x70] sm:$0xff]
      %v1806 = vld [vmem:[#allocation3 + $0x78] sm:$0xff]
      %1823 = vrot.lane.b32.xlu0 %v1791, 125
      %v1824 = vpop.permute.xlu0 %1823
      %1825 = vrot.lane.b32.xlu0 %v1792, 125
      %v1826 = vpop.permute.xlu0 %1825
      %1827 = vrot.lane.b32.xlu0 %v1793, 125
      %v1828 = vpop.permute.xlu0 %1827
      %1829 = vrot.lane.b32.xlu0 %v1794, 125
      %v1830 = vpop.permute.xlu0 %1829
      %1831 = vrot.lane.b32.xlu0 %v1795, 125
      %v1832 = vpop.permute.xlu0 %1831
      %1833 = vrot.lane.b32.xlu0 %v1796, 125
      %v1834 = vpop.permute.xlu0 %1833
      %1835 = vrot.lane.b32.xlu0 %v1797, 125
      %v1836 = vpop.permute.xlu0 %1835
      %1837 = vrot.lane.b32.xlu0 %v1798, 125
      %v1838 = vpop.permute.xlu0 %1837
      %1839 = vrot.lane.b32.xlu0 %v1799, 125
      %v1840 = vpop.permute.xlu0 %1839
      %1841 = vrot.lane.b32.xlu0 %v1800, 125
      %v1842 = vpop.permute.xlu0 %1841
      %1843 = vrot.lane.b32.xlu0 %v1801, 125
      %v1844 = vpop.permute.xlu0 %1843
      %1845 = vrot.lane.b32.xlu0 %v1802, 125
      %v1846 = vpop.permute.xlu0 %1845
      %1847 = vrot.lane.b32.xlu0 %v1803, 125
      %v1848 = vpop.permute.xlu0 %1847
      %1849 = vrot.lane.b32.xlu0 %v1804, 125
      %v1850 = vpop.permute.xlu0 %1849
      %1851 = vrot.lane.b32.xlu0 %v1805, 125
      %v1852 = vpop.permute.xlu0 %1851
      %1853 = vrot.lane.b32.xlu0 %v1806, 125
      %v1854 = vpop.permute.xlu0 %1853
      %vm1855 = vcmask 1022976
      %v1856 = vsel %vm1855, %v1824, %v1826
      %v1857 = vsel %vm1855, %v1826, %v1828
      %v1858 = vsel %vm1855, %v1828, %v1830
      %v1859 = vsel %vm1855, %v1830, %v1832
      %v1860 = vsel %vm1855, %v1832, %v1834
      %v1861 = vsel %vm1855, %v1834, %v1836
      %v1862 = vsel %vm1855, %v1836, %v1838
      %v1863 = vsel %vm1855, %v1840, %v1842
      %v1864 = vsel %vm1855, %v1842, %v1844
      %v1865 = vsel %vm1855, %v1844, %v1846
      %v1866 = vsel %vm1855, %v1846, %v1848
      %v1867 = vsel %vm1855, %v1848, %v1850
      %v1868 = vsel %vm1855, %v1850, %v1852
      %v1869 = vsel %vm1855, %v1852, %v1854
      %1884 = vst [vmem:[#allocation6 + $0x150] sm:$0xff] %v1856
      %1885 = vst [vmem:[#allocation6 + $0x158] sm:$0xff] %v1857
      %1886 = vst [vmem:[#allocation6 + $0x160] sm:$0xff] %v1858
      %1887 = vst [vmem:[#allocation6 + $0x168] sm:$0xff] %v1859
      %1888 = vst [vmem:[#allocation6 + $0x170] sm:$0xff] %v1860
      %1889 = vst [vmem:[#allocation6 + $0x178] sm:$0xff] %v1861
      %1890 = vst [vmem:[#allocation6 + $0x180] sm:$0xff] %v1862
      %1891 = vst [vmem:[#allocation6 + $0x188] sm:$0xff] %v1863
      %1892 = vst [vmem:[#allocation6 + $0x190] sm:$0xff] %v1864
      %1893 = vst [vmem:[#allocation6 + $0x198] sm:$0xff] %v1865
      %1894 = vst [vmem:[#allocation6 + $0x1a0] sm:$0xff] %v1866
      %1895 = vst [vmem:[#allocation6 + $0x1a8] sm:$0xff] %v1867
      %1896 = vst [vmem:[#allocation6 + $0x1b0] sm:$0xff] %v1868
      %1897 = vst [vmem:[#allocation6 + $0x1b8] sm:$0xff] %v1869
      %v1898 = vld [vmem:[#allocation3] sm:$0xff]
      %v1899 = vld [vmem:[#allocation3 + $0x8] sm:$0xff]
      %v1900 = vld [vmem:[#allocation3 + $0x10] sm:$0xff]
      %v1901 = vld [vmem:[#allocation3 + $0x18] sm:$0xff]
      %v1902 = vld [vmem:[#allocation3 + $0x20] sm:$0xff]
      %v1903 = vld [vmem:[#allocation3 + $0x28] sm:$0xff]
      %v1904 = vld [vmem:[#allocation3 + $0x30] sm:$0xff]
      %v1905 = vld [vmem:[#allocation3 + $0x38] sm:$0xff]
      %v1906 = vld [vmem:[#allocation3 + $0x40] sm:$0xff]
      %v1907 = vld [vmem:[#allocation3 + $0x48] sm:$0xff]
      %v1908 = vld [vmem:[#allocation3 + $0x50] sm:$0xff]
      %v1909 = vld [vmem:[#allocation3 + $0x58] sm:$0xff]
      %v1910 = vld [vmem:[#allocation3 + $0x60] sm:$0xff]
      %v1911 = vld [vmem:[#allocation3 + $0x68] sm:$0xff]
      %v1912 = vld [vmem:[#allocation3 + $0x70] sm:$0xff]
      %v1913 = vld [vmem:[#allocation3 + $0x78] sm:$0xff]
      %1930 = vrot.lane.b32.xlu0 %v1898, 124
      %v1931 = vpop.permute.xlu0 %1930
      %1932 = vrot.lane.b32.xlu0 %v1899, 124
      %v1933 = vpop.permute.xlu0 %1932
      %1934 = vrot.lane.b32.xlu0 %v1900, 124
      %v1935 = vpop.permute.xlu0 %1934
      %1936 = vrot.lane.b32.xlu0 %v1901, 124
      %v1937 = vpop.permute.xlu0 %1936
      %1938 = vrot.lane.b32.xlu0 %v1902, 124
      %v1939 = vpop.permute.xlu0 %1938
      %1940 = vrot.lane.b32.xlu0 %v1903, 124
      %v1941 = vpop.permute.xlu0 %1940
      %1942 = vrot.lane.b32.xlu0 %v1904, 124
      %v1943 = vpop.permute.xlu0 %1942
      %1944 = vrot.lane.b32.xlu0 %v1905, 124
      %v1945 = vpop.permute.xlu0 %1944
      %1946 = vrot.lane.b32.xlu0 %v1906, 124
      %v1947 = vpop.permute.xlu0 %1946
      %1948 = vrot.lane.b32.xlu0 %v1907, 124
      %v1949 = vpop.permute.xlu0 %1948
      %1950 = vrot.lane.b32.xlu0 %v1908, 124
      %v1951 = vpop.permute.xlu0 %1950
      %1952 = vrot.lane.b32.xlu0 %v1909, 124
      %v1953 = vpop.permute.xlu0 %1952
      %1954 = vrot.lane.b32.xlu0 %v1910, 124
      %v1955 = vpop.permute.xlu0 %1954
      %1956 = vrot.lane.b32.xlu0 %v1911, 124
      %v1957 = vpop.permute.xlu0 %1956
      %1958 = vrot.lane.b32.xlu0 %v1912, 124
      %v1959 = vpop.permute.xlu0 %1958
      %1960 = vrot.lane.b32.xlu0 %v1913, 124
      %v1961 = vpop.permute.xlu0 %1960
      %vm1962 = vcmask 1014784
      %v1963 = vsel %vm1962, %v1931, %v1933
      %v1964 = vsel %vm1962, %v1933, %v1935
      %v1965 = vsel %vm1962, %v1935, %v1937
      %v1966 = vsel %vm1962, %v1937, %v1939
      %v1967 = vsel %vm1962, %v1939, %v1941
      %v1968 = vsel %vm1962, %v1941, %v1943
      %v1969 = vsel %vm1962, %v1943, %v1945
      %v1970 = vsel %vm1962, %v1947, %v1949
      %v1971 = vsel %vm1962, %v1949, %v1951
      %v1972 = vsel %vm1962, %v1951, %v1953
      %v1973 = vsel %vm1962, %v1953, %v1955
      %v1974 = vsel %vm1962, %v1955, %v1957
      %v1975 = vsel %vm1962, %v1957, %v1959
      %v1976 = vsel %vm1962, %v1959, %v1961
      %1991 = vst [vmem:[#allocation6 + $0x1c0] sm:$0xff] %v1963
      %1992 = vst [vmem:[#allocation6 + $0x1c8] sm:$0xff] %v1964
      %1993 = vst [vmem:[#allocation6 + $0x1d0] sm:$0xff] %v1965
      %1994 = vst [vmem:[#allocation6 + $0x1d8] sm:$0xff] %v1966
      %1995 = vst [vmem:[#allocation6 + $0x1e0] sm:$0xff] %v1967
      %1996 = vst [vmem:[#allocation6 + $0x1e8] sm:$0xff] %v1968
      %1997 = vst [vmem:[#allocation6 + $0x1f0] sm:$0xff] %v1969
      %1998 = vst [vmem:[#allocation6 + $0x1f8] sm:$0xff] %v1970
      %1999 = vst [vmem:[#allocation6 + $0x200] sm:$0xff] %v1971
      %2000 = vst [vmem:[#allocation6 + $0x208] sm:$0xff] %v1972
      %2001 = vst [vmem:[#allocation6 + $0x210] sm:$0xff] %v1973
      %2002 = vst [vmem:[#allocation6 + $0x218] sm:$0xff] %v1974
      %2003 = vst [vmem:[#allocation6 + $0x220] sm:$0xff] %v1975
      %2004 = vst [vmem:[#allocation6 + $0x228] sm:$0xff] %v1976
      %v2005 = vld [vmem:[#allocation3] sm:$0xff]
      %v2006 = vld [vmem:[#allocation3 + $0x8] sm:$0xff]
      %v2007 = vld [vmem:[#allocation3 + $0x10] sm:$0xff]
      %v2008 = vld [vmem:[#allocation3 + $0x18] sm:$0xff]
      %v2009 = vld [vmem:[#allocation3 + $0x20] sm:$0xff]
      %v2010 = vld [vmem:[#allocation3 + $0x28] sm:$0xff]
      %v2011 = vld [vmem:[#allocation3 + $0x30] sm:$0xff]
      %v2012 = vld [vmem:[#allocation3 + $0x38] sm:$0xff]
      %v2013 = vld [vmem:[#allocation3 + $0x40] sm:$0xff]
      %v2014 = vld [vmem:[#allocation3 + $0x48] sm:$0xff]
      %v2015 = vld [vmem:[#allocation3 + $0x50] sm:$0xff]
      %v2016 = vld [vmem:[#allocation3 + $0x58] sm:$0xff]
      %v2017 = vld [vmem:[#allocation3 + $0x60] sm:$0xff]
      %v2018 = vld [vmem:[#allocation3 + $0x68] sm:$0xff]
      %v2019 = vld [vmem:[#allocation3 + $0x70] sm:$0xff]
      %v2020 = vld [vmem:[#allocation3 + $0x78] sm:$0xff]
      %2037 = vrot.lane.b32.xlu0 %v2005, 97
      %v2038 = vpop.permute.xlu0 %2037
      %2039 = vrot.lane.b32.xlu0 %v2006, 97
      %v2040 = vpop.permute.xlu0 %2039
      %2041 = vrot.lane.b32.xlu0 %v2007, 97
      %v2042 = vpop.permute.xlu0 %2041
      %2043 = vrot.lane.b32.xlu0 %v2008, 97
      %v2044 = vpop.permute.xlu0 %2043
      %2045 = vrot.lane.b32.xlu0 %v2009, 97
      %v2046 = vpop.permute.xlu0 %2045
      %2047 = vrot.lane.b32.xlu0 %v2010, 97
      %v2048 = vpop.permute.xlu0 %2047
      %2049 = vrot.lane.b32.xlu0 %v2011, 97
      %v2050 = vpop.permute.xlu0 %2049
      %2051 = vrot.lane.b32.xlu0 %v2012, 97
      %v2052 = vpop.permute.xlu0 %2051
      %2053 = vrot.lane.b32.xlu0 %v2013, 97
      %v2054 = vpop.permute.xlu0 %2053
      %2055 = vrot.lane.b32.xlu0 %v2014, 97
      %v2056 = vpop.permute.xlu0 %2055
      %2057 = vrot.lane.b32.xlu0 %v2015, 97
      %v2058 = vpop.permute.xlu0 %2057
      %2059 = vrot.lane.b32.xlu0 %v2016, 97
      %v2060 = vpop.permute.xlu0 %2059
      %2061 = vrot.lane.b32.xlu0 %v2017, 97
      %v2062 = vpop.permute.xlu0 %2061
      %2063 = vrot.lane.b32.xlu0 %v2018, 97
      %v2064 = vpop.permute.xlu0 %2063
      %2065 = vrot.lane.b32.xlu0 %v2019, 97
      %v2066 = vpop.permute.xlu0 %2065
      %2067 = vrot.lane.b32.xlu0 %v2020, 97
      %v2068 = vpop.permute.xlu0 %2067
      %vm2069 = vcmask 793600
      %v2070 = vsel %vm2069, %v2038, %v2040
      %v2071 = vsel %vm2069, %v2040, %v2042
      %v2072 = vsel %vm2069, %v2042, %v2044
      %v2073 = vsel %vm2069, %v2044, %v2046
      %v2074 = vsel %vm2069, %v2046, %v2048
      %v2075 = vsel %vm2069, %v2048, %v2050
      %v2076 = vsel %vm2069, %v2050, %v2052
      %v2077 = vsel %vm2069, %v2054, %v2056
      %v2078 = vsel %vm2069, %v2056, %v2058
      %v2079 = vsel %vm2069, %v2058, %v2060
      %v2080 = vsel %vm2069, %v2060, %v2062
      %v2081 = vsel %vm2069, %v2062, %v2064
      %v2082 = vsel %vm2069, %v2064, %v2066
      %v2083 = vsel %vm2069, %v2066, %v2068
      %2098 = vst [vmem:[#allocation6 + $0x230] sm:$0xff] %v2070
      %2099 = vst [vmem:[#allocation6 + $0x238] sm:$0xff] %v2071
      %2100 = vst [vmem:[#allocation6 + $0x240] sm:$0xff] %v2072
      %2101 = vst [vmem:[#allocation6 + $0x248] sm:$0xff] %v2073
      %2102 = vst [vmem:[#allocation6 + $0x250] sm:$0xff] %v2074
      %2103 = vst [vmem:[#allocation6 + $0x258] sm:$0xff] %v2075
      %2104 = vst [vmem:[#allocation6 + $0x260] sm:$0xff] %v2076
      %2105 = vst [vmem:[#allocation6 + $0x268] sm:$0xff] %v2077
      %2106 = vst [vmem:[#allocation6 + $0x270] sm:$0xff] %v2078
      %2107 = vst [vmem:[#allocation6 + $0x278] sm:$0xff] %v2079
      %2108 = vst [vmem:[#allocation6 + $0x280] sm:$0xff] %v2080
      %2109 = vst [vmem:[#allocation6 + $0x288] sm:$0xff] %v2081
      %2110 = vst [vmem:[#allocation6 + $0x290] sm:$0xff] %v2082
      %2111 = vst [vmem:[#allocation6 + $0x298] sm:$0xff] %v2083
      %v2112 = vld [vmem:[#allocation3] sm:$0xff]
      %v2113 = vld [vmem:[#allocation3 + $0x8] sm:$0xff]
      %v2114 = vld [vmem:[#allocation3 + $0x10] sm:$0xff]
      %v2115 = vld [vmem:[#allocation3 + $0x18] sm:$0xff]
      %v2116 = vld [vmem:[#allocation3 + $0x20] sm:$0xff]
      %v2117 = vld [vmem:[#allocation3 + $0x28] sm:$0xff]
      %v2118 = vld [vmem:[#allocation3 + $0x30] sm:$0xff]
      %v2119 = vld [vmem:[#allocation3 + $0x38] sm:$0xff]
      %v2120 = vld [vmem:[#allocation3 + $0x40] sm:$0xff]
      %v2121 = vld [vmem:[#allocation3 + $0x48] sm:$0xff]
      %v2122 = vld [vmem:[#allocation3 + $0x50] sm:$0xff]
      %v2123 = vld [vmem:[#allocation3 + $0x58] sm:$0xff]
      %v2124 = vld [vmem:[#allocation3 + $0x60] sm:$0xff]
      %v2125 = vld [vmem:[#allocation3 + $0x68] sm:$0xff]
      %v2126 = vld [vmem:[#allocation3 + $0x70] sm:$0xff]
      %v2127 = vld [vmem:[#allocation3 + $0x78] sm:$0xff]
      %2144 = vrot.lane.b32.xlu0 %v2112, 96
      %v2145 = vpop.permute.xlu0 %2144
      %2146 = vrot.lane.b32.xlu0 %v2113, 96
      %v2147 = vpop.permute.xlu0 %2146
      %2148 = vrot.lane.b32.xlu0 %v2114, 96
      %v2149 = vpop.permute.xlu0 %2148
      %2150 = vrot.lane.b32.xlu0 %v2115, 96
      %v2151 = vpop.permute.xlu0 %2150
      %2152 = vrot.lane.b32.xlu0 %v2116, 96
      %v2153 = vpop.permute.xlu0 %2152
      %2154 = vrot.lane.b32.xlu0 %v2117, 96
      %v2155 = vpop.permute.xlu0 %2154
      %2156 = vrot.lane.b32.xlu0 %v2118, 96
      %v2157 = vpop.permute.xlu0 %2156
      %2158 = vrot.lane.b32.xlu0 %v2119, 96
      %v2159 = vpop.permute.xlu0 %2158
      %2160 = vrot.lane.b32.xlu0 %v2120, 96
      %v2161 = vpop.permute.xlu0 %2160
      %2162 = vrot.lane.b32.xlu0 %v2121, 96
      %v2163 = vpop.permute.xlu0 %2162
      %2164 = vrot.lane.b32.xlu0 %v2122, 96
      %v2165 = vpop.permute.xlu0 %2164
      %2166 = vrot.lane.b32.xlu0 %v2123, 96
      %v2167 = vpop.permute.xlu0 %2166
      %2168 = vrot.lane.b32.xlu0 %v2124, 96
      %v2169 = vpop.permute.xlu0 %2168
      %2170 = vrot.lane.b32.xlu0 %v2125, 96
      %v2171 = vpop.permute.xlu0 %2170
      %2172 = vrot.lane.b32.xlu0 %v2126, 96
      %v2173 = vpop.permute.xlu0 %2172
      %2174 = vrot.lane.b32.xlu0 %v2127, 96
      %v2175 = vpop.permute.xlu0 %2174
      %vm2176 = vcmask 785408
      %v2177 = vsel %vm2176, %v2145, %v2147
      %v2178 = vsel %vm2176, %v2147, %v2149
      %v2179 = vsel %vm2176, %v2149, %v2151
      %v2180 = vsel %vm2176, %v2151, %v2153
      %v2181 = vsel %vm2176, %v2153, %v2155
      %v2182 = vsel %vm2176, %v2155, %v2157
      %v2183 = vsel %vm2176, %v2157, %v2159
      %v2184 = vsel %vm2176, %v2161, %v2163
      %v2185 = vsel %vm2176, %v2163, %v2165
      %v2186 = vsel %vm2176, %v2165, %v2167
      %v2187 = vsel %vm2176, %v2167, %v2169
      %v2188 = vsel %vm2176, %v2169, %v2171
      %v2189 = vsel %vm2176, %v2171, %v2173
      %v2190 = vsel %vm2176, %v2173, %v2175
      %2205 = vst [vmem:[#allocation6 + $0x2a0] sm:$0xff] %v2177
      %2206 = vst [vmem:[#allocation6 + $0x2a8] sm:$0xff] %v2178
      %2207 = vst [vmem:[#allocation6 + $0x2b0] sm:$0xff] %v2179
      %2208 = vst [vmem:[#allocation6 + $0x2b8] sm:$0xff] %v2180
      %2209 = vst [vmem:[#allocation6 + $0x2c0] sm:$0xff] %v2181
      %2210 = vst [vmem:[#allocation6 + $0x2c8] sm:$0xff] %v2182
      %2211 = vst [vmem:[#allocation6 + $0x2d0] sm:$0xff] %v2183
      %2212 = vst [vmem:[#allocation6 + $0x2d8] sm:$0xff] %v2184
      %2213 = vst [vmem:[#allocation6 + $0x2e0] sm:$0xff] %v2185
      %2214 = vst [vmem:[#allocation6 + $0x2e8] sm:$0xff] %v2186
      %2215 = vst [vmem:[#allocation6 + $0x2f0] sm:$0xff] %v2187
      %2216 = vst [vmem:[#allocation6 + $0x2f8] sm:$0xff] %v2188
      %2217 = vst [vmem:[#allocation6 + $0x300] sm:$0xff] %v2189
      %2218 = vst [vmem:[#allocation6 + $0x308] sm:$0xff] %v2190
      %v2219 = vld [vmem:[#allocation3] sm:$0xff]
      %v2220 = vld [vmem:[#allocation3 + $0x8] sm:$0xff]
      %v2221 = vld [vmem:[#allocation3 + $0x10] sm:$0xff]
      %v2222 = vld [vmem:[#allocation3 + $0x18] sm:$0xff]
      %v2223 = vld [vmem:[#allocation3 + $0x20] sm:$0xff]
      %v2224 = vld [vmem:[#allocation3 + $0x28] sm:$0xff]
      %v2225 = vld [vmem:[#allocation3 + $0x30] sm:$0xff]
      %v2226 = vld [vmem:[#allocation3 + $0x38] sm:$0xff]
      %v2227 = vld [vmem:[#allocation3 + $0x40] sm:$0xff]
      %v2228 = vld [vmem:[#allocation3 + $0x48] sm:$0xff]
      %v2229 = vld [vmem:[#allocation3 + $0x50] sm:$0xff]
      %v2230 = vld [vmem:[#allocation3 + $0x58] sm:$0xff]
      %v2231 = vld [vmem:[#allocation3 + $0x60] sm:$0xff]
      %v2232 = vld [vmem:[#allocation3 + $0x68] sm:$0xff]
      %v2233 = vld [vmem:[#allocation3 + $0x70] sm:$0xff]
      %v2234 = vld [vmem:[#allocation3 + $0x78] sm:$0xff]
      %2251 = vrot.lane.b32.xlu0 %v2219, 95
      %v2252 = vpop.permute.xlu0 %2251
      %2253 = vrot.lane.b32.xlu0 %v2220, 95
      %v2254 = vpop.permute.xlu0 %2253
      %2255 = vrot.lane.b32.xlu0 %v2221, 95
      %v2256 = vpop.permute.xlu0 %2255
      %2257 = vrot.lane.b32.xlu0 %v2222, 95
      %v2258 = vpop.permute.xlu0 %2257
      %2259 = vrot.lane.b32.xlu0 %v2223, 95
      %v2260 = vpop.permute.xlu0 %2259
      %2261 = vrot.lane.b32.xlu0 %v2224, 95
      %v2262 = vpop.permute.xlu0 %2261
      %2263 = vrot.lane.b32.xlu0 %v2225, 95
      %v2264 = vpop.permute.xlu0 %2263
      %2265 = vrot.lane.b32.xlu0 %v2226, 95
      %v2266 = vpop.permute.xlu0 %2265
      %2267 = vrot.lane.b32.xlu0 %v2227, 95
      %v2268 = vpop.permute.xlu0 %2267
      %2269 = vrot.lane.b32.xlu0 %v2228, 95
      %v2270 = vpop.permute.xlu0 %2269
      %2271 = vrot.lane.b32.xlu0 %v2229, 95
      %v2272 = vpop.permute.xlu0 %2271
      %2273 = vrot.lane.b32.xlu0 %v2230, 95
      %v2274 = vpop.permute.xlu0 %2273
      %2275 = vrot.lane.b32.xlu0 %v2231, 95
      %v2276 = vpop.permute.xlu0 %2275
      %2277 = vrot.lane.b32.xlu0 %v2232, 95
      %v2278 = vpop.permute.xlu0 %2277
      %2279 = vrot.lane.b32.xlu0 %v2233, 95
      %v2280 = vpop.permute.xlu0 %2279
      %2281 = vrot.lane.b32.xlu0 %v2234, 95
      %v2282 = vpop.permute.xlu0 %2281
      %vm2283 = vcmask 777216
      %v2284 = vsel %vm2283, %v2252, %v2254
      %v2285 = vsel %vm2283, %v2254, %v2256
      %v2286 = vsel %vm2283, %v2256, %v2258
      %v2287 = vsel %vm2283, %v2258, %v2260
      %v2288 = vsel %vm2283, %v2260, %v2262
      %v2289 = vsel %vm2283, %v2262, %v2264
      %v2290 = vsel %vm2283, %v2264, %v2266
      %v2291 = vsel %vm2283, %v2268, %v2270
      %v2292 = vsel %vm2283, %v2270, %v2272
      %v2293 = vsel %vm2283, %v2272, %v2274
      %v2294 = vsel %vm2283, %v2274, %v2276
      %v2295 = vsel %vm2283, %v2276, %v2278
      %v2296 = vsel %vm2283, %v2278, %v2280
      %v2297 = vsel %vm2283, %v2280, %v2282
      %2312 = vst [vmem:[#allocation6 + $0x310] sm:$0xff] %v2284
      %2313 = vst [vmem:[#allocation6 + $0x318] sm:$0xff] %v2285
      %2314 = vst [vmem:[#allocation6 + $0x320] sm:$0xff] %v2286
      %2315 = vst [vmem:[#allocation6 + $0x328] sm:$0xff] %v2287
      %2316 = vst [vmem:[#allocation6 + $0x330] sm:$0xff] %v2288
      %2317 = vst [vmem:[#allocation6 + $0x338] sm:$0xff] %v2289
      %2318 = vst [vmem:[#allocation6 + $0x340] sm:$0xff] %v2290
      %2319 = vst [vmem:[#allocation6 + $0x348] sm:$0xff] %v2291
      %2320 = vst [vmem:[#allocation6 + $0x350] sm:$0xff] %v2292
      %2321 = vst [vmem:[#allocation6 + $0x358] sm:$0xff] %v2293
      %2322 = vst [vmem:[#allocation6 + $0x360] sm:$0xff] %v2294
      %2323 = vst [vmem:[#allocation6 + $0x368] sm:$0xff] %v2295
      %2324 = vst [vmem:[#allocation6 + $0x370] sm:$0xff] %v2296
      %2325 = vst [vmem:[#allocation6 + $0x378] sm:$0xff] %v2297
      %v2326 = vld [vmem:[#allocation3] sm:$0xff]
      %v2327 = vld [vmem:[#allocation3 + $0x8] sm:$0xff]
      %v2328 = vld [vmem:[#allocation3 + $0x10] sm:$0xff]
      %v2329 = vld [vmem:[#allocation3 + $0x18] sm:$0xff]
      %v2330 = vld [vmem:[#allocation3 + $0x20] sm:$0xff]
      %v2331 = vld [vmem:[#allocation3 + $0x28] sm:$0xff]
      %v2332 = vld [vmem:[#allocation3 + $0x30] sm:$0xff]
      %v2333 = vld [vmem:[#allocation3 + $0x38] sm:$0xff]
      %v2334 = vld [vmem:[#allocation3 + $0x40] sm:$0xff]
      %v2335 = vld [vmem:[#allocation3 + $0x48] sm:$0xff]
      %v2336 = vld [vmem:[#allocation3 + $0x50] sm:$0xff]
      %v2337 = vld [vmem:[#allocation3 + $0x58] sm:$0xff]
      %v2338 = vld [vmem:[#allocation3 + $0x60] sm:$0xff]
      %v2339 = vld [vmem:[#allocation3 + $0x68] sm:$0xff]
      %v2340 = vld [vmem:[#allocation3 + $0x70] sm:$0xff]
      %v2341 = vld [vmem:[#allocation3 + $0x78] sm:$0xff]
      %2358 = vrot.lane.b32.xlu0 %v2326, 94
      %v2359 = vpop.permute.xlu0 %2358
      %2360 = vrot.lane.b32.xlu0 %v2327, 94
      %v2361 = vpop.permute.xlu0 %2360
      %2362 = vrot.lane.b32.xlu0 %v2328, 94
      %v2363 = vpop.permute.xlu0 %2362
      %2364 = vrot.lane.b32.xlu0 %v2329, 94
      %v2365 = vpop.permute.xlu0 %2364
      %2366 = vrot.lane.b32.xlu0 %v2330, 94
      %v2367 = vpop.permute.xlu0 %2366
      %2368 = vrot.lane.b32.xlu0 %v2331, 94
      %v2369 = vpop.permute.xlu0 %2368
      %2370 = vrot.lane.b32.xlu0 %v2332, 94
      %v2371 = vpop.permute.xlu0 %2370
      %2372 = vrot.lane.b32.xlu0 %v2333, 94
      %v2373 = vpop.permute.xlu0 %2372
      %2374 = vrot.lane.b32.xlu0 %v2334, 94
      %v2375 = vpop.permute.xlu0 %2374
      %2376 = vrot.lane.b32.xlu0 %v2335, 94
      %v2377 = vpop.permute.xlu0 %2376
      %2378 = vrot.lane.b32.xlu0 %v2336, 94
      %v2379 = vpop.permute.xlu0 %2378
      %2380 = vrot.lane.b32.xlu0 %v2337, 94
      %v2381 = vpop.permute.xlu0 %2380
      %2382 = vrot.lane.b32.xlu0 %v2338, 94
      %v2383 = vpop.permute.xlu0 %2382
      %2384 = vrot.lane.b32.xlu0 %v2339, 94
      %v2385 = vpop.permute.xlu0 %2384
      %2386 = vrot.lane.b32.xlu0 %v2340, 94
      %v2387 = vpop.permute.xlu0 %2386
      %2388 = vrot.lane.b32.xlu0 %v2341, 94
      %v2389 = vpop.permute.xlu0 %2388
      %vm2390 = vcmask 769024
      %v2391 = vsel %vm2390, %v2359, %v2361
      %v2392 = vsel %vm2390, %v2361, %v2363
      %v2393 = vsel %vm2390, %v2363, %v2365
      %v2394 = vsel %vm2390, %v2365, %v2367
      %v2395 = vsel %vm2390, %v2367, %v2369
      %v2396 = vsel %vm2390, %v2369, %v2371
      %v2397 = vsel %vm2390, %v2371, %v2373
      %v2398 = vsel %vm2390, %v2375, %v2377
      %v2399 = vsel %vm2390, %v2377, %v2379
      %v2400 = vsel %vm2390, %v2379, %v2381
      %v2401 = vsel %vm2390, %v2381, %v2383
      %v2402 = vsel %vm2390, %v2383, %v2385
      %v2403 = vsel %vm2390, %v2385, %v2387
      %v2404 = vsel %vm2390, %v2387, %v2389
      %2419 = vst [vmem:[#allocation6 + $0x380] sm:$0xff] %v2391
      %2420 = vst [vmem:[#allocation6 + $0x388] sm:$0xff] %v2392
      %2421 = vst [vmem:[#allocation6 + $0x390] sm:$0xff] %v2393
      %2422 = vst [vmem:[#allocation6 + $0x398] sm:$0xff] %v2394
      %2423 = vst [vmem:[#allocation6 + $0x3a0] sm:$0xff] %v2395
      %2424 = vst [vmem:[#allocation6 + $0x3a8] sm:$0xff] %v2396
      %2425 = vst [vmem:[#allocation6 + $0x3b0] sm:$0xff] %v2397
      %2426 = vst [vmem:[#allocation6 + $0x3b8] sm:$0xff] %v2398
      %2427 = vst [vmem:[#allocation6 + $0x3c0] sm:$0xff] %v2399
      %2428 = vst [vmem:[#allocation6 + $0x3c8] sm:$0xff] %v2400
      %2429 = vst [vmem:[#allocation6 + $0x3d0] sm:$0xff] %v2401
      %2430 = vst [vmem:[#allocation6 + $0x3d8] sm:$0xff] %v2402
      %2431 = vst [vmem:[#allocation6 + $0x3e0] sm:$0xff] %v2403
      %2432 = vst [vmem:[#allocation6 + $0x3e8] sm:$0xff] %v2404
      %v2433 = vld [vmem:[#allocation3] sm:$0xff]
      %v2434 = vld [vmem:[#allocation3 + $0x8] sm:$0xff]
      %v2435 = vld [vmem:[#allocation3 + $0x10] sm:$0xff]
      %v2436 = vld [vmem:[#allocation3 + $0x18] sm:$0xff]
      %v2437 = vld [vmem:[#allocation3 + $0x20] sm:$0xff]
      %v2438 = vld [vmem:[#allocation3 + $0x28] sm:$0xff]
      %v2439 = vld [vmem:[#allocation3 + $0x30] sm:$0xff]
      %v2440 = vld [vmem:[#allocation3 + $0x38] sm:$0xff]
      %v2441 = vld [vmem:[#allocation3 + $0x40] sm:$0xff]
      %v2442 = vld [vmem:[#allocation3 + $0x48] sm:$0xff]
      %v2443 = vld [vmem:[#allocation3 + $0x50] sm:$0xff]
      %v2444 = vld [vmem:[#allocation3 + $0x58] sm:$0xff]
      %v2445 = vld [vmem:[#allocation3 + $0x60] sm:$0xff]
      %v2446 = vld [vmem:[#allocation3 + $0x68] sm:$0xff]
      %v2447 = vld [vmem:[#allocation3 + $0x70] sm:$0xff]
      %v2448 = vld [vmem:[#allocation3 + $0x78] sm:$0xff]
      %2465 = vrot.lane.b32.xlu0 %v2433, 93
      %v2466 = vpop.permute.xlu0 %2465
      %2467 = vrot.lane.b32.xlu0 %v2434, 93
      %v2468 = vpop.permute.xlu0 %2467
      %2469 = vrot.lane.b32.xlu0 %v2435, 93
      %v2470 = vpop.permute.xlu0 %2469
      %2471 = vrot.lane.b32.xlu0 %v2436, 93
      %v2472 = vpop.permute.xlu0 %2471
      %2473 = vrot.lane.b32.xlu0 %v2437, 93
      %v2474 = vpop.permute.xlu0 %2473
      %2475 = vrot.lane.b32.xlu0 %v2438, 93
      %v2476 = vpop.permute.xlu0 %2475
      %2477 = vrot.lane.b32.xlu0 %v2439, 93
      %v2478 = vpop.permute.xlu0 %2477
      %2479 = vrot.lane.b32.xlu0 %v2440, 93
      %v2480 = vpop.permute.xlu0 %2479
      %2481 = vrot.lane.b32.xlu0 %v2441, 93
      %v2482 = vpop.permute.xlu0 %2481
      %2483 = vrot.lane.b32.xlu0 %v2442, 93
      %v2484 = vpop.permute.xlu0 %2483
      %2485 = vrot.lane.b32.xlu0 %v2443, 93
      %v2486 = vpop.permute.xlu0 %2485
      %2487 = vrot.lane.b32.xlu0 %v2444, 93
      %v2488 = vpop.permute.xlu0 %2487
      %2489 = vrot.lane.b32.xlu0 %v2445, 93
      %v2490 = vpop.permute.xlu0 %2489
      %2491 = vrot.lane.b32.xlu0 %v2446, 93
      %v2492 = vpop.permute.xlu0 %2491
      %2493 = vrot.lane.b32.xlu0 %v2447, 93
      %v2494 = vpop.permute.xlu0 %2493
      %2495 = vrot.lane.b32.xlu0 %v2448, 93
      %v2496 = vpop.permute.xlu0 %2495
      %vm2497 = vcmask 760832
      %v2498 = vsel %vm2497, %v2466, %v2468
      %v2499 = vsel %vm2497, %v2468, %v2470
      %v2500 = vsel %vm2497, %v2470, %v2472
      %v2501 = vsel %vm2497, %v2472, %v2474
      %v2502 = vsel %vm2497, %v2474, %v2476
      %v2503 = vsel %vm2497, %v2476, %v2478
      %v2504 = vsel %vm2497, %v2478, %v2480
      %v2505 = vsel %vm2497, %v2482, %v2484
      %v2506 = vsel %vm2497, %v2484, %v2486
      %v2507 = vsel %vm2497, %v2486, %v2488
      %v2508 = vsel %vm2497, %v2488, %v2490
      %v2509 = vsel %vm2497, %v2490, %v2492
      %v2510 = vsel %vm2497, %v2492, %v2494
      %v2511 = vsel %vm2497, %v2494, %v2496
      %2526 = vst [vmem:[#allocation6 + $0x3f0] sm:$0xff] %v2498
      %2527 = vst [vmem:[#allocation6 + $0x3f8] sm:$0xff] %v2499
      %2528 = vst [vmem:[#allocation6 + $0x400] sm:$0xff] %v2500
      %2529 = vst [vmem:[#allocation6 + $0x408] sm:$0xff] %v2501
      %2530 = vst [vmem:[#allocation6 + $0x410] sm:$0xff] %v2502
      %2531 = vst [vmem:[#allocation6 + $0x418] sm:$0xff] %v2503
      %2532 = vst [vmem:[#allocation6 + $0x420] sm:$0xff] %v2504
      %2533 = vst [vmem:[#allocation6 + $0x428] sm:$0xff] %v2505
      %2534 = vst [vmem:[#allocation6 + $0x430] sm:$0xff] %v2506
      %2535 = vst [vmem:[#allocation6 + $0x438] sm:$0xff] %v2507
      %2536 = vst [vmem:[#allocation6 + $0x440] sm:$0xff] %v2508
      %2537 = vst [vmem:[#allocation6 + $0x448] sm:$0xff] %v2509
      %2538 = vst [vmem:[#allocation6 + $0x450] sm:$0xff] %v2510
      %2539 = vst [vmem:[#allocation6 + $0x458] sm:$0xff] %v2511
      %v2540 = vld [vmem:[#allocation3] sm:$0xff]
      %v2541 = vld [vmem:[#allocation3 + $0x8] sm:$0xff]
      %v2542 = vld [vmem:[#allocation3 + $0x10] sm:$0xff]
      %v2543 = vld [vmem:[#allocation3 + $0x18] sm:$0xff]
      %v2544 = vld [vmem:[#allocation3 + $0x20] sm:$0xff]
      %v2545 = vld [vmem:[#allocation3 + $0x28] sm:$0xff]
      %v2546 = vld [vmem:[#allocation3 + $0x30] sm:$0xff]
      %v2547 = vld [vmem:[#allocation3 + $0x38] sm:$0xff]
      %v2548 = vld [vmem:[#allocation3 + $0x40] sm:$0xff]
      %v2549 = vld [vmem:[#allocation3 + $0x48] sm:$0xff]
      %v2550 = vld [vmem:[#allocation3 + $0x50] sm:$0xff]
      %v2551 = vld [vmem:[#allocation3 + $0x58] sm:$0xff]
      %v2552 = vld [vmem:[#allocation3 + $0x60] sm:$0xff]
      %v2553 = vld [vmem:[#allocation3 + $0x68] sm:$0xff]
      %v2554 = vld [vmem:[#allocation3 + $0x70] sm:$0xff]
      %v2555 = vld [vmem:[#allocation3 + $0x78] sm:$0xff]
      %2572 = vrot.lane.b32.xlu0 %v2540, 66
      %v2573 = vpop.permute.xlu0 %2572
      %2574 = vrot.lane.b32.xlu0 %v2541, 66
      %v2575 = vpop.permute.xlu0 %2574
      %2576 = vrot.lane.b32.xlu0 %v2542, 66
      %v2577 = vpop.permute.xlu0 %2576
      %2578 = vrot.lane.b32.xlu0 %v2543, 66
      %v2579 = vpop.permute.xlu0 %2578
      %2580 = vrot.lane.b32.xlu0 %v2544, 66
      %v2581 = vpop.permute.xlu0 %2580
      %2582 = vrot.lane.b32.xlu0 %v2545, 66
      %v2583 = vpop.permute.xlu0 %2582
      %2584 = vrot.lane.b32.xlu0 %v2546, 66
      %v2585 = vpop.permute.xlu0 %2584
      %2586 = vrot.lane.b32.xlu0 %v2547, 66
      %v2587 = vpop.permute.xlu0 %2586
      %2588 = vrot.lane.b32.xlu0 %v2548, 66
      %v2589 = vpop.permute.xlu0 %2588
      %2590 = vrot.lane.b32.xlu0 %v2549, 66
      %v2591 = vpop.permute.xlu0 %2590
      %2592 = vrot.lane.b32.xlu0 %v2550, 66
      %v2593 = vpop.permute.xlu0 %2592
      %2594 = vrot.lane.b32.xlu0 %v2551, 66
      %v2595 = vpop.permute.xlu0 %2594
      %2596 = vrot.lane.b32.xlu0 %v2552, 66
      %v2597 = vpop.permute.xlu0 %2596
      %2598 = vrot.lane.b32.xlu0 %v2553, 66
      %v2599 = vpop.permute.xlu0 %2598
      %2600 = vrot.lane.b32.xlu0 %v2554, 66
      %v2601 = vpop.permute.xlu0 %2600
      %2602 = vrot.lane.b32.xlu0 %v2555, 66
      %v2603 = vpop.permute.xlu0 %2602
      %vm2604 = vcmask 539648
      %v2605 = vsel %vm2604, %v2573, %v2575
      %v2606 = vsel %vm2604, %v2575, %v2577
      %v2607 = vsel %vm2604, %v2577, %v2579
      %v2608 = vsel %vm2604, %v2579, %v2581
      %v2609 = vsel %vm2604, %v2581, %v2583
      %v2610 = vsel %vm2604, %v2583, %v2585
      %v2611 = vsel %vm2604, %v2585, %v2587
      %v2612 = vsel %vm2604, %v2589, %v2591
      %v2613 = vsel %vm2604, %v2591, %v2593
      %v2614 = vsel %vm2604, %v2593, %v2595
      %v2615 = vsel %vm2604, %v2595, %v2597
      %v2616 = vsel %vm2604, %v2597, %v2599
      %v2617 = vsel %vm2604, %v2599, %v2601
      %v2618 = vsel %vm2604, %v2601, %v2603
      %2633 = vst [vmem:[#allocation6 + $0x460] sm:$0xff] %v2605
      %2634 = vst [vmem:[#allocation6 + $0x468] sm:$0xff] %v2606
      %2635 = vst [vmem:[#allocation6 + $0x470] sm:$0xff] %v2607
      %2636 = vst [vmem:[#allocation6 + $0x478] sm:$0xff] %v2608
      %2637 = vst [vmem:[#allocation6 + $0x480] sm:$0xff] %v2609
      %2638 = vst [vmem:[#allocation6 + $0x488] sm:$0xff] %v2610
      %2639 = vst [vmem:[#allocation6 + $0x490] sm:$0xff] %v2611
      %2640 = vst [vmem:[#allocation6 + $0x498] sm:$0xff] %v2612
      %2641 = vst [vmem:[#allocation6 + $0x4a0] sm:$0xff] %v2613
      %2642 = vst [vmem:[#allocation6 + $0x4a8] sm:$0xff] %v2614
      %2643 = vst [vmem:[#allocation6 + $0x4b0] sm:$0xff] %v2615
      %2644 = vst [vmem:[#allocation6 + $0x4b8] sm:$0xff] %v2616
      %2645 = vst [vmem:[#allocation6 + $0x4c0] sm:$0xff] %v2617
      %2646 = vst [vmem:[#allocation6 + $0x4c8] sm:$0xff] %v2618
      %v2647 = vld [vmem:[#allocation3] sm:$0xff]
      %v2648 = vld [vmem:[#allocation3 + $0x8] sm:$0xff]
      %v2649 = vld [vmem:[#allocation3 + $0x10] sm:$0xff]
      %v2650 = vld [vmem:[#allocation3 + $0x18] sm:$0xff]
      %v2651 = vld [vmem:[#allocation3 + $0x20] sm:$0xff]
      %v2652 = vld [vmem:[#allocation3 + $0x28] sm:$0xff]
      %v2653 = vld [vmem:[#allocation3 + $0x30] sm:$0xff]
      %v2654 = vld [vmem:[#allocation3 + $0x38] sm:$0xff]
      %v2655 = vld [vmem:[#allocation3 + $0x40] sm:$0xff]
      %v2656 = vld [vmem:[#allocation3 + $0x48] sm:$0xff]
      %v2657 = vld [vmem:[#allocation3 + $0x50] sm:$0xff]
      %v2658 = vld [vmem:[#allocation3 + $0x58] sm:$0xff]
      %v2659 = vld [vmem:[#allocation3 + $0x60] sm:$0xff]
      %v2660 = vld [vmem:[#allocation3 + $0x68] sm:$0xff]
      %v2661 = vld [vmem:[#allocation3 + $0x70] sm:$0xff]
      %v2662 = vld [vmem:[#allocation3 + $0x78] sm:$0xff]
      %2679 = vrot.lane.b32.xlu0 %v2647, 65
      %v2680 = vpop.permute.xlu0 %2679
      %2681 = vrot.lane.b32.xlu0 %v2648, 65
      %v2682 = vpop.permute.xlu0 %2681
      %2683 = vrot.lane.b32.xlu0 %v2649, 65
      %v2684 = vpop.permute.xlu0 %2683
      %2685 = vrot.lane.b32.xlu0 %v2650, 65
      %v2686 = vpop.permute.xlu0 %2685
      %2687 = vrot.lane.b32.xlu0 %v2651, 65
      %v2688 = vpop.permute.xlu0 %2687
      %2689 = vrot.lane.b32.xlu0 %v2652, 65
      %v2690 = vpop.permute.xlu0 %2689
      %2691 = vrot.lane.b32.xlu0 %v2653, 65
      %v2692 = vpop.permute.xlu0 %2691
      %2693 = vrot.lane.b32.xlu0 %v2654, 65
      %v2694 = vpop.permute.xlu0 %2693
      %2695 = vrot.lane.b32.xlu0 %v2655, 65
      %v2696 = vpop.permute.xlu0 %2695
      %2697 = vrot.lane.b32.xlu0 %v2656, 65
      %v2698 = vpop.permute.xlu0 %2697
      %2699 = vrot.lane.b32.xlu0 %v2657, 65
      %v2700 = vpop.permute.xlu0 %2699
      %2701 = vrot.lane.b32.xlu0 %v2658, 65
      %v2702 = vpop.permute.xlu0 %2701
      %2703 = vrot.lane.b32.xlu0 %v2659, 65
      %v2704 = vpop.permute.xlu0 %2703
      %2705 = vrot.lane.b32.xlu0 %v2660, 65
      %v2706 = vpop.permute.xlu0 %2705
      %2707 = vrot.lane.b32.xlu0 %v2661, 65
      %v2708 = vpop.permute.xlu0 %2707
      %2709 = vrot.lane.b32.xlu0 %v2662, 65
      %v2710 = vpop.permute.xlu0 %2709
      %vm2711 = vcmask 531456
      %v2712 = vsel %vm2711, %v2680, %v2682
      %v2713 = vsel %vm2711, %v2682, %v2684
      %v2714 = vsel %vm2711, %v2684, %v2686
      %v2715 = vsel %vm2711, %v2686, %v2688
      %v2716 = vsel %vm2711, %v2688, %v2690
      %v2717 = vsel %vm2711, %v2690, %v2692
      %v2718 = vsel %vm2711, %v2692, %v2694
      %v2719 = vsel %vm2711, %v2696, %v2698
      %v2720 = vsel %vm2711, %v2698, %v2700
      %v2721 = vsel %vm2711, %v2700, %v2702
      %v2722 = vsel %vm2711, %v2702, %v2704
      %v2723 = vsel %vm2711, %v2704, %v2706
      %v2724 = vsel %vm2711, %v2706, %v2708
      %v2725 = vsel %vm2711, %v2708, %v2710
      %2740 = vst [vmem:[#allocation6 + $0x4d0] sm:$0xff] %v2712
      %2741 = vst [vmem:[#allocation6 + $0x4d8] sm:$0xff] %v2713
      %2742 = vst [vmem:[#allocation6 + $0x4e0] sm:$0xff] %v2714
      %2743 = vst [vmem:[#allocation6 + $0x4e8] sm:$0xff] %v2715
      %2744 = vst [vmem:[#allocation6 + $0x4f0] sm:$0xff] %v2716
      %2745 = vst [vmem:[#allocation6 + $0x4f8] sm:$0xff] %v2717
      %2746 = vst [vmem:[#allocation6 + $0x500] sm:$0xff] %v2718
      %2747 = vst [vmem:[#allocation6 + $0x508] sm:$0xff] %v2719
      %2748 = vst [vmem:[#allocation6 + $0x510] sm:$0xff] %v2720
      %2749 = vst [vmem:[#allocation6 + $0x518] sm:$0xff] %v2721
      %2750 = vst [vmem:[#allocation6 + $0x520] sm:$0xff] %v2722
      %2751 = vst [vmem:[#allocation6 + $0x528] sm:$0xff] %v2723
      %2752 = vst [vmem:[#allocation6 + $0x530] sm:$0xff] %v2724
      %2753 = vst [vmem:[#allocation6 + $0x538] sm:$0xff] %v2725
      %v2754 = vld [vmem:[#allocation3] sm:$0xff]
      %v2755 = vld [vmem:[#allocation3 + $0x8] sm:$0xff]
      %v2756 = vld [vmem:[#allocation3 + $0x10] sm:$0xff]
      %v2757 = vld [vmem:[#allocation3 + $0x18] sm:$0xff]
      %v2758 = vld [vmem:[#allocation3 + $0x20] sm:$0xff]
      %v2759 = vld [vmem:[#allocation3 + $0x28] sm:$0xff]
      %v2760 = vld [vmem:[#allocation3 + $0x30] sm:$0xff]
      %v2761 = vld [vmem:[#allocation3 + $0x38] sm:$0xff]
      %v2762 = vld [vmem:[#allocation3 + $0x40] sm:$0xff]
      %v2763 = vld [vmem:[#allocation3 + $0x48] sm:$0xff]
      %v2764 = vld [vmem:[#allocation3 + $0x50] sm:$0xff]
      %v2765 = vld [vmem:[#allocation3 + $0x58] sm:$0xff]
      %v2766 = vld [vmem:[#allocation3 + $0x60] sm:$0xff]
      %v2767 = vld [vmem:[#allocation3 + $0x68] sm:$0xff]
      %v2768 = vld [vmem:[#allocation3 + $0x70] sm:$0xff]
      %v2769 = vld [vmem:[#allocation3 + $0x78] sm:$0xff]
      %2786 = vrot.lane.b32.xlu0 %v2754, 64
      %v2787 = vpop.permute.xlu0 %2786
      %2788 = vrot.lane.b32.xlu0 %v2755, 64
      %v2789 = vpop.permute.xlu0 %2788
      %2790 = vrot.lane.b32.xlu0 %v2756, 64
      %v2791 = vpop.permute.xlu0 %2790
      %2792 = vrot.lane.b32.xlu0 %v2757, 64
      %v2793 = vpop.permute.xlu0 %2792
      %2794 = vrot.lane.b32.xlu0 %v2758, 64
      %v2795 = vpop.permute.xlu0 %2794
      %2796 = vrot.lane.b32.xlu0 %v2759, 64
      %v2797 = vpop.permute.xlu0 %2796
      %2798 = vrot.lane.b32.xlu0 %v2760, 64
      %v2799 = vpop.permute.xlu0 %2798
      %2800 = vrot.lane.b32.xlu0 %v2761, 64
      %v2801 = vpop.permute.xlu0 %2800
      %2802 = vrot.lane.b32.xlu0 %v2762, 64
      %v2803 = vpop.permute.xlu0 %2802
      %2804 = vrot.lane.b32.xlu0 %v2763, 64
      %v2805 = vpop.permute.xlu0 %2804
      %2806 = vrot.lane.b32.xlu0 %v2764, 64
      %v2807 = vpop.permute.xlu0 %2806
      %2808 = vrot.lane.b32.xlu0 %v2765, 64
      %v2809 = vpop.permute.xlu0 %2808
      %2810 = vrot.lane.b32.xlu0 %v2766, 64
      %v2811 = vpop.permute.xlu0 %2810
      %2812 = vrot.lane.b32.xlu0 %v2767, 64
      %v2813 = vpop.permute.xlu0 %2812
      %2814 = vrot.lane.b32.xlu0 %v2768, 64
      %v2815 = vpop.permute.xlu0 %2814
      %2816 = vrot.lane.b32.xlu0 %v2769, 64
      %v2817 = vpop.permute.xlu0 %2816
      %vm2818 = vcmask 523264
      %v2819 = vsel %vm2818, %v2787, %v2789
      %v2820 = vsel %vm2818, %v2789, %v2791
      %v2821 = vsel %vm2818, %v2791, %v2793
      %v2822 = vsel %vm2818, %v2793, %v2795
      %v2823 = vsel %vm2818, %v2795, %v2797
      %v2824 = vsel %vm2818, %v2797, %v2799
      %v2825 = vsel %vm2818, %v2799, %v2801
      %v2826 = vsel %vm2818, %v2803, %v2805
      %v2827 = vsel %vm2818, %v2805, %v2807
      %v2828 = vsel %vm2818, %v2807, %v2809
      %v2829 = vsel %vm2818, %v2809, %v2811
      %v2830 = vsel %vm2818, %v2811, %v2813
      %v2831 = vsel %vm2818, %v2813, %v2815
      %v2832 = vsel %vm2818, %v2815, %v2817
      %2847 = vst [vmem:[#allocation6 + $0x540] sm:$0xff] %v2819
      %2848 = vst [vmem:[#allocation6 + $0x548] sm:$0xff] %v2820
      %2849 = vst [vmem:[#allocation6 + $0x550] sm:$0xff] %v2821
      %2850 = vst [vmem:[#allocation6 + $0x558] sm:$0xff] %v2822
      %2851 = vst [vmem:[#allocation6 + $0x560] sm:$0xff] %v2823
      %2852 = vst [vmem:[#allocation6 + $0x568] sm:$0xff] %v2824
      %2853 = vst [vmem:[#allocation6 + $0x570] sm:$0xff] %v2825
      %2854 = vst [vmem:[#allocation6 + $0x578] sm:$0xff] %v2826
      %2855 = vst [vmem:[#allocation6 + $0x580] sm:$0xff] %v2827
      %2856 = vst [vmem:[#allocation6 + $0x588] sm:$0xff] %v2828
      %2857 = vst [vmem:[#allocation6 + $0x590] sm:$0xff] %v2829
      %2858 = vst [vmem:[#allocation6 + $0x598] sm:$0xff] %v2830
      %2859 = vst [vmem:[#allocation6 + $0x5a0] sm:$0xff] %v2831
      %2860 = vst [vmem:[#allocation6 + $0x5a8] sm:$0xff] %v2832
      %v2861 = vld [vmem:[#allocation3] sm:$0xff]
      %v2862 = vld [vmem:[#allocation3 + $0x8] sm:$0xff]
      %v2863 = vld [vmem:[#allocation3 + $0x10] sm:$0xff]
      %v2864 = vld [vmem:[#allocation3 + $0x18] sm:$0xff]
      %v2865 = vld [vmem:[#allocation3 + $0x20] sm:$0xff]
      %v2866 = vld [vmem:[#allocation3 + $0x28] sm:$0xff]
      %v2867 = vld [vmem:[#allocation3 + $0x30] sm:$0xff]
      %v2868 = vld [vmem:[#allocation3 + $0x38] sm:$0xff]
      %v2869 = vld [vmem:[#allocation3 + $0x40] sm:$0xff]
      %v2870 = vld [vmem:[#allocation3 + $0x48] sm:$0xff]
      %v2871 = vld [vmem:[#allocation3 + $0x50] sm:$0xff]
      %v2872 = vld [vmem:[#allocation3 + $0x58] sm:$0xff]
      %v2873 = vld [vmem:[#allocation3 + $0x60] sm:$0xff]
      %v2874 = vld [vmem:[#allocation3 + $0x68] sm:$0xff]
      %v2875 = vld [vmem:[#allocation3 + $0x70] sm:$0xff]
      %v2876 = vld [vmem:[#allocation3 + $0x78] sm:$0xff]
      %2893 = vrot.lane.b32.xlu0 %v2861, 63
      %v2894 = vpop.permute.xlu0 %2893
      %2895 = vrot.lane.b32.xlu0 %v2862, 63
      %v2896 = vpop.permute.xlu0 %2895
      %2897 = vrot.lane.b32.xlu0 %v2863, 63
      %v2898 = vpop.permute.xlu0 %2897
      %2899 = vrot.lane.b32.xlu0 %v2864, 63
      %v2900 = vpop.permute.xlu0 %2899
      %2901 = vrot.lane.b32.xlu0 %v2865, 63
      %v2902 = vpop.permute.xlu0 %2901
      %2903 = vrot.lane.b32.xlu0 %v2866, 63
      %v2904 = vpop.permute.xlu0 %2903
      %2905 = vrot.lane.b32.xlu0 %v2867, 63
      %v2906 = vpop.permute.xlu0 %2905
      %2907 = vrot.lane.b32.xlu0 %v2868, 63
      %v2908 = vpop.permute.xlu0 %2907
      %2909 = vrot.lane.b32.xlu0 %v2869, 63
      %v2910 = vpop.permute.xlu0 %2909
      %2911 = vrot.lane.b32.xlu0 %v2870, 63
      %v2912 = vpop.permute.xlu0 %2911
      %2913 = vrot.lane.b32.xlu0 %v2871, 63
      %v2914 = vpop.permute.xlu0 %2913
      %2915 = vrot.lane.b32.xlu0 %v2872, 63
      %v2916 = vpop.permute.xlu0 %2915
      %2917 = vrot.lane.b32.xlu0 %v2873, 63
      %v2918 = vpop.permute.xlu0 %2917
      %2919 = vrot.lane.b32.xlu0 %v2874, 63
      %v2920 = vpop.permute.xlu0 %2919
      %2921 = vrot.lane.b32.xlu0 %v2875, 63
      %v2922 = vpop.permute.xlu0 %2921
      %2923 = vrot.lane.b32.xlu0 %v2876, 63
      %v2924 = vpop.permute.xlu0 %2923
      %vm2925 = vcmask 515072
      %v2926 = vsel %vm2925, %v2894, %v2896
      %v2927 = vsel %vm2925, %v2896, %v2898
      %v2928 = vsel %vm2925, %v2898, %v2900
      %v2929 = vsel %vm2925, %v2900, %v2902
      %v2930 = vsel %vm2925, %v2902, %v2904
      %v2931 = vsel %vm2925, %v2904, %v2906
      %v2932 = vsel %vm2925, %v2906, %v2908
      %v2933 = vsel %vm2925, %v2910, %v2912
      %v2934 = vsel %vm2925, %v2912, %v2914
      %v2935 = vsel %vm2925, %v2914, %v2916
      %v2936 = vsel %vm2925, %v2916, %v2918
      %v2937 = vsel %vm2925, %v2918, %v2920
      %v2938 = vsel %vm2925, %v2920, %v2922
      %v2939 = vsel %vm2925, %v2922, %v2924
      %2954 = vst [vmem:[#allocation6 + $0x5b0] sm:$0xff] %v2926
      %2955 = vst [vmem:[#allocation6 + $0x5b8] sm:$0xff] %v2927
      %2956 = vst [vmem:[#allocation6 + $0x5c0] sm:$0xff] %v2928
      %2957 = vst [vmem:[#allocation6 + $0x5c8] sm:$0xff] %v2929
      %2958 = vst [vmem:[#allocation6 + $0x5d0] sm:$0xff] %v2930
      %2959 = vst [vmem:[#allocation6 + $0x5d8] sm:$0xff] %v2931
      %2960 = vst [vmem:[#allocation6 + $0x5e0] sm:$0xff] %v2932
      %2961 = vst [vmem:[#allocation6 + $0x5e8] sm:$0xff] %v2933
      %2962 = vst [vmem:[#allocation6 + $0x5f0] sm:$0xff] %v2934
      %2963 = vst [vmem:[#allocation6 + $0x5f8] sm:$0xff] %v2935
      %2964 = vst [vmem:[#allocation6 + $0x600] sm:$0xff] %v2936
      %2965 = vst [vmem:[#allocation6 + $0x608] sm:$0xff] %v2937
      %2966 = vst [vmem:[#allocation6 + $0x610] sm:$0xff] %v2938
      %2967 = vst [vmem:[#allocation6 + $0x618] sm:$0xff] %v2939
      %v2968 = vld [vmem:[#allocation3] sm:$0xff]
      %v2969 = vld [vmem:[#allocation3 + $0x8] sm:$0xff]
      %v2970 = vld [vmem:[#allocation3 + $0x10] sm:$0xff]
      %v2971 = vld [vmem:[#allocation3 + $0x18] sm:$0xff]
      %v2972 = vld [vmem:[#allocation3 + $0x20] sm:$0xff]
      %v2973 = vld [vmem:[#allocation3 + $0x28] sm:$0xff]
      %v2974 = vld [vmem:[#allocation3 + $0x30] sm:$0xff]
      %v2975 = vld [vmem:[#allocation3 + $0x38] sm:$0xff]
      %v2976 = vld [vmem:[#allocation3 + $0x40] sm:$0xff]
      %v2977 = vld [vmem:[#allocation3 + $0x48] sm:$0xff]
      %v2978 = vld [vmem:[#allocation3 + $0x50] sm:$0xff]
      %v2979 = vld [vmem:[#allocation3 + $0x58] sm:$0xff]
      %v2980 = vld [vmem:[#allocation3 + $0x60] sm:$0xff]
      %v2981 = vld [vmem:[#allocation3 + $0x68] sm:$0xff]
      %v2982 = vld [vmem:[#allocation3 + $0x70] sm:$0xff]
      %v2983 = vld [vmem:[#allocation3 + $0x78] sm:$0xff]
      %3000 = vrot.lane.b32.xlu0 %v2968, 62
      %v3001 = vpop.permute.xlu0 %3000
      %3002 = vrot.lane.b32.xlu0 %v2969, 62
      %v3003 = vpop.permute.xlu0 %3002
      %3004 = vrot.lane.b32.xlu0 %v2970, 62
      %v3005 = vpop.permute.xlu0 %3004
      %3006 = vrot.lane.b32.xlu0 %v2971, 62
      %v3007 = vpop.permute.xlu0 %3006
      %3008 = vrot.lane.b32.xlu0 %v2972, 62
      %v3009 = vpop.permute.xlu0 %3008
      %3010 = vrot.lane.b32.xlu0 %v2973, 62
      %v3011 = vpop.permute.xlu0 %3010
      %3012 = vrot.lane.b32.xlu0 %v2974, 62
      %v3013 = vpop.permute.xlu0 %3012
      %3014 = vrot.lane.b32.xlu0 %v2975, 62
      %v3015 = vpop.permute.xlu0 %3014
      %3016 = vrot.lane.b32.xlu0 %v2976, 62
      %v3017 = vpop.permute.xlu0 %3016
      %3018 = vrot.lane.b32.xlu0 %v2977, 62
      %v3019 = vpop.permute.xlu0 %3018
      %3020 = vrot.lane.b32.xlu0 %v2978, 62
      %v3021 = vpop.permute.xlu0 %3020
      %3022 = vrot.lane.b32.xlu0 %v2979, 62
      %v3023 = vpop.permute.xlu0 %3022
      %3024 = vrot.lane.b32.xlu0 %v2980, 62
      %v3025 = vpop.permute.xlu0 %3024
      %3026 = vrot.lane.b32.xlu0 %v2981, 62
      %v3027 = vpop.permute.xlu0 %3026
      %3028 = vrot.lane.b32.xlu0 %v2982, 62
      %v3029 = vpop.permute.xlu0 %3028
      %3030 = vrot.lane.b32.xlu0 %v2983, 62
      %v3031 = vpop.permute.xlu0 %3030
      %vm3032 = vcmask 506880
      %v3033 = vsel %vm3032, %v3001, %v3003
      %v3034 = vsel %vm3032, %v3003, %v3005
      %v3035 = vsel %vm3032, %v3005, %v3007
      %v3036 = vsel %vm3032, %v3007, %v3009
      %v3037 = vsel %vm3032, %v3009, %v3011
      %v3038 = vsel %vm3032, %v3011, %v3013
      %v3039 = vsel %vm3032, %v3013, %v3015
      %v3040 = vsel %vm3032, %v3017, %v3019
      %v3041 = vsel %vm3032, %v3019, %v3021
      %v3042 = vsel %vm3032, %v3021, %v3023
      %v3043 = vsel %vm3032, %v3023, %v3025
      %v3044 = vsel %vm3032, %v3025, %v3027
      %v3045 = vsel %vm3032, %v3027, %v3029
      %v3046 = vsel %vm3032, %v3029, %v3031
      %3061 = vst [vmem:[#allocation6 + $0x620] sm:$0xff] %v3033
      %3062 = vst [vmem:[#allocation6 + $0x628] sm:$0xff] %v3034
      %3063 = vst [vmem:[#allocation6 + $0x630] sm:$0xff] %v3035
      %3064 = vst [vmem:[#allocation6 + $0x638] sm:$0xff] %v3036
      %3065 = vst [vmem:[#allocation6 + $0x640] sm:$0xff] %v3037
      %3066 = vst [vmem:[#allocation6 + $0x648] sm:$0xff] %v3038
      %3067 = vst [vmem:[#allocation6 + $0x650] sm:$0xff] %v3039
      %3068 = vst [vmem:[#allocation6 + $0x658] sm:$0xff] %v3040
      %3069 = vst [vmem:[#allocation6 + $0x660] sm:$0xff] %v3041
      %3070 = vst [vmem:[#allocation6 + $0x668] sm:$0xff] %v3042
      %3071 = vst [vmem:[#allocation6 + $0x670] sm:$0xff] %v3043
      %3072 = vst [vmem:[#allocation6 + $0x678] sm:$0xff] %v3044
      %3073 = vst [vmem:[#allocation6 + $0x680] sm:$0xff] %v3045
      %3074 = vst [vmem:[#allocation6 + $0x688] sm:$0xff] %v3046
      %v3075 = vld [vmem:[#allocation3] sm:$0xff]
      %v3076 = vld [vmem:[#allocation3 + $0x8] sm:$0xff]
      %v3077 = vld [vmem:[#allocation3 + $0x10] sm:$0xff]
      %v3078 = vld [vmem:[#allocation3 + $0x18] sm:$0xff]
      %v3079 = vld [vmem:[#allocation3 + $0x20] sm:$0xff]
      %v3080 = vld [vmem:[#allocation3 + $0x28] sm:$0xff]
      %v3081 = vld [vmem:[#allocation3 + $0x30] sm:$0xff]
      %v3082 = vld [vmem:[#allocation3 + $0x38] sm:$0xff]
      %v3083 = vld [vmem:[#allocation3 + $0x40] sm:$0xff]
      %v3084 = vld [vmem:[#allocation3 + $0x48] sm:$0xff]
      %v3085 = vld [vmem:[#allocation3 + $0x50] sm:$0xff]
      %v3086 = vld [vmem:[#allocation3 + $0x58] sm:$0xff]
      %v3087 = vld [vmem:[#allocation3 + $0x60] sm:$0xff]
      %v3088 = vld [vmem:[#allocation3 + $0x68] sm:$0xff]
      %v3089 = vld [vmem:[#allocation3 + $0x70] sm:$0xff]
      %v3090 = vld [vmem:[#allocation3 + $0x78] sm:$0xff]
      %3107 = vrot.lane.b32.xlu0 %v3075, 35
      %v3108 = vpop.permute.xlu0 %3107
      %3109 = vrot.lane.b32.xlu0 %v3076, 35
      %v3110 = vpop.permute.xlu0 %3109
      %3111 = vrot.lane.b32.xlu0 %v3077, 35
      %v3112 = vpop.permute.xlu0 %3111
      %3113 = vrot.lane.b32.xlu0 %v3078, 35
      %v3114 = vpop.permute.xlu0 %3113
      %3115 = vrot.lane.b32.xlu0 %v3079, 35
      %v3116 = vpop.permute.xlu0 %3115
      %3117 = vrot.lane.b32.xlu0 %v3080, 35
      %v3118 = vpop.permute.xlu0 %3117
      %3119 = vrot.lane.b32.xlu0 %v3081, 35
      %v3120 = vpop.permute.xlu0 %3119
      %3121 = vrot.lane.b32.xlu0 %v3082, 35
      %v3122 = vpop.permute.xlu0 %3121
      %3123 = vrot.lane.b32.xlu0 %v3083, 35
      %v3124 = vpop.permute.xlu0 %3123
      %3125 = vrot.lane.b32.xlu0 %v3084, 35
      %v3126 = vpop.permute.xlu0 %3125
      %3127 = vrot.lane.b32.xlu0 %v3085, 35
      %v3128 = vpop.permute.xlu0 %3127
      %3129 = vrot.lane.b32.xlu0 %v3086, 35
      %v3130 = vpop.permute.xlu0 %3129
      %3131 = vrot.lane.b32.xlu0 %v3087, 35
      %v3132 = vpop.permute.xlu0 %3131
      %3133 = vrot.lane.b32.xlu0 %v3088, 35
      %v3134 = vpop.permute.xlu0 %3133
      %3135 = vrot.lane.b32.xlu0 %v3089, 35
      %v3136 = vpop.permute.xlu0 %3135
      %3137 = vrot.lane.b32.xlu0 %v3090, 35
      %v3138 = vpop.permute.xlu0 %3137
      %vm3139 = vcmask 285696
      %v3140 = vsel %vm3139, %v3108, %v3110
      %v3141 = vsel %vm3139, %v3110, %v3112
      %v3142 = vsel %vm3139, %v3112, %v3114
      %v3143 = vsel %vm3139, %v3114, %v3116
      %v3144 = vsel %vm3139, %v3116, %v3118
      %v3145 = vsel %vm3139, %v3118, %v3120
      %v3146 = vsel %vm3139, %v3120, %v3122
      %v3147 = vsel %vm3139, %v3124, %v3126
      %v3148 = vsel %vm3139, %v3126, %v3128
      %v3149 = vsel %vm3139, %v3128, %v3130
      %v3150 = vsel %vm3139, %v3130, %v3132
      %v3151 = vsel %vm3139, %v3132, %v3134
      %v3152 = vsel %vm3139, %v3134, %v3136
      %v3153 = vsel %vm3139, %v3136, %v3138
      %3168 = vst [vmem:[#allocation6 + $0x690] sm:$0xff] %v3140
      %3169 = vst [vmem:[#allocation6 + $0x698] sm:$0xff] %v3141
      %3170 = vst [vmem:[#allocation6 + $0x6a0] sm:$0xff] %v3142
      %3171 = vst [vmem:[#allocation6 + $0x6a8] sm:$0xff] %v3143
      %3172 = vst [vmem:[#allocation6 + $0x6b0] sm:$0xff] %v3144
      %3173 = vst [vmem:[#allocation6 + $0x6b8] sm:$0xff] %v3145
      %3174 = vst [vmem:[#allocation6 + $0x6c0] sm:$0xff] %v3146
      %3175 = vst [vmem:[#allocation6 + $0x6c8] sm:$0xff] %v3147
      %3176 = vst [vmem:[#allocation6 + $0x6d0] sm:$0xff] %v3148
      %3177 = vst [vmem:[#allocation6 + $0x6d8] sm:$0xff] %v3149
      %3178 = vst [vmem:[#allocation6 + $0x6e0] sm:$0xff] %v3150
      %3179 = vst [vmem:[#allocation6 + $0x6e8] sm:$0xff] %v3151
      %3180 = vst [vmem:[#allocation6 + $0x6f0] sm:$0xff] %v3152
      %3181 = vst [vmem:[#allocation6 + $0x6f8] sm:$0xff] %v3153
      %v3182 = vld [vmem:[#allocation3] sm:$0xff]
      %v3183 = vld [vmem:[#allocation3 + $0x8] sm:$0xff]
      %v3184 = vld [vmem:[#allocation3 + $0x10] sm:$0xff]
      %v3185 = vld [vmem:[#allocation3 + $0x18] sm:$0xff]
      %v3186 = vld [vmem:[#allocation3 + $0x20] sm:$0xff]
      %v3187 = vld [vmem:[#allocation3 + $0x28] sm:$0xff]
      %v3188 = vld [vmem:[#allocation3 + $0x30] sm:$0xff]
      %v3189 = vld [vmem:[#allocation3 + $0x38] sm:$0xff]
      %v3190 = vld [vmem:[#allocation3 + $0x40] sm:$0xff]
      %v3191 = vld [vmem:[#allocation3 + $0x48] sm:$0xff]
      %v3192 = vld [vmem:[#allocation3 + $0x50] sm:$0xff]
      %v3193 = vld [vmem:[#allocation3 + $0x58] sm:$0xff]
      %v3194 = vld [vmem:[#allocation3 + $0x60] sm:$0xff]
      %v3195 = vld [vmem:[#allocation3 + $0x68] sm:$0xff]
      %v3196 = vld [vmem:[#allocation3 + $0x70] sm:$0xff]
      %v3197 = vld [vmem:[#allocation3 + $0x78] sm:$0xff]
      %3214 = vrot.lane.b32.xlu0 %v3182, 34
      %v3215 = vpop.permute.xlu0 %3214
      %3216 = vrot.lane.b32.xlu0 %v3183, 34
      %v3217 = vpop.permute.xlu0 %3216
      %3218 = vrot.lane.b32.xlu0 %v3184, 34
      %v3219 = vpop.permute.xlu0 %3218
      %3220 = vrot.lane.b32.xlu0 %v3185, 34
      %v3221 = vpop.permute.xlu0 %3220
      %3222 = vrot.lane.b32.xlu0 %v3186, 34
      %v3223 = vpop.permute.xlu0 %3222
      %3224 = vrot.lane.b32.xlu0 %v3187, 34
      %v3225 = vpop.permute.xlu0 %3224
      %3226 = vrot.lane.b32.xlu0 %v3188, 34
      %v3227 = vpop.permute.xlu0 %3226
      %3228 = vrot.lane.b32.xlu0 %v3189, 34
      %v3229 = vpop.permute.xlu0 %3228
      %3230 = vrot.lane.b32.xlu0 %v3190, 34
      %v3231 = vpop.permute.xlu0 %3230
      %3232 = vrot.lane.b32.xlu0 %v3191, 34
      %v3233 = vpop.permute.xlu0 %3232
      %3234 = vrot.lane.b32.xlu0 %v3192, 34
      %v3235 = vpop.permute.xlu0 %3234
      %3236 = vrot.lane.b32.xlu0 %v3193, 34
      %v3237 = vpop.permute.xlu0 %3236
      %3238 = vrot.lane.b32.xlu0 %v3194, 34
      %v3239 = vpop.permute.xlu0 %3238
      %3240 = vrot.lane.b32.xlu0 %v3195, 34
      %v3241 = vpop.permute.xlu0 %3240
      %3242 = vrot.lane.b32.xlu0 %v3196, 34
      %v3243 = vpop.permute.xlu0 %3242
      %3244 = vrot.lane.b32.xlu0 %v3197, 34
      %v3245 = vpop.permute.xlu0 %3244
      %vm3246 = vcmask 277504
      %v3247 = vsel %vm3246, %v3215, %v3217
      %v3248 = vsel %vm3246, %v3217, %v3219
      %v3249 = vsel %vm3246, %v3219, %v3221
      %v3250 = vsel %vm3246, %v3221, %v3223
      %v3251 = vsel %vm3246, %v3223, %v3225
      %v3252 = vsel %vm3246, %v3225, %v3227
      %v3253 = vsel %vm3246, %v3227, %v3229
      %v3254 = vsel %vm3246, %v3231, %v3233
      %v3255 = vsel %vm3246, %v3233, %v3235
      %v3256 = vsel %vm3246, %v3235, %v3237
      %v3257 = vsel %vm3246, %v3237, %v3239
      %v3258 = vsel %vm3246, %v3239, %v3241
      %v3259 = vsel %vm3246, %v3241, %v3243
      %v3260 = vsel %vm3246, %v3243, %v3245
      %3275 = vst [vmem:[#allocation6 + $0x700] sm:$0xff] %v3247
      %3276 = vst [vmem:[#allocation6 + $0x708] sm:$0xff] %v3248
      %3277 = vst [vmem:[#allocation6 + $0x710] sm:$0xff] %v3249
      %3278 = vst [vmem:[#allocation6 + $0x718] sm:$0xff] %v3250
      %3279 = vst [vmem:[#allocation6 + $0x720] sm:$0xff] %v3251
      %3280 = vst [vmem:[#allocation6 + $0x728] sm:$0xff] %v3252
      %3281 = vst [vmem:[#allocation6 + $0x730] sm:$0xff] %v3253
      %3282 = vst [vmem:[#allocation6 + $0x738] sm:$0xff] %v3254
      %3283 = vst [vmem:[#allocation6 + $0x740] sm:$0xff] %v3255
      %3284 = vst [vmem:[#allocation6 + $0x748] sm:$0xff] %v3256
      %3285 = vst [vmem:[#allocation6 + $0x750] sm:$0xff] %v3257
      %3286 = vst [vmem:[#allocation6 + $0x758] sm:$0xff] %v3258
      %3287 = vst [vmem:[#allocation6 + $0x760] sm:$0xff] %v3259
      %3288 = vst [vmem:[#allocation6 + $0x768] sm:$0xff] %v3260
      %v3289 = vld [vmem:[#allocation3] sm:$0xff]
      %v3290 = vld [vmem:[#allocation3 + $0x8] sm:$0xff]
      %v3291 = vld [vmem:[#allocation3 + $0x10] sm:$0xff]
      %v3292 = vld [vmem:[#allocation3 + $0x18] sm:$0xff]
      %v3293 = vld [vmem:[#allocation3 + $0x20] sm:$0xff]
      %v3294 = vld [vmem:[#allocation3 + $0x28] sm:$0xff]
      %v3295 = vld [vmem:[#allocation3 + $0x30] sm:$0xff]
      %v3296 = vld [vmem:[#allocation3 + $0x38] sm:$0xff]
      %v3297 = vld [vmem:[#allocation3 + $0x40] sm:$0xff]
      %v3298 = vld [vmem:[#allocation3 + $0x48] sm:$0xff]
      %v3299 = vld [vmem:[#allocation3 + $0x50] sm:$0xff]
      %v3300 = vld [vmem:[#allocation3 + $0x58] sm:$0xff]
      %v3301 = vld [vmem:[#allocation3 + $0x60] sm:$0xff]
      %v3302 = vld [vmem:[#allocation3 + $0x68] sm:$0xff]
      %v3303 = vld [vmem:[#allocation3 + $0x70] sm:$0xff]
      %v3304 = vld [vmem:[#allocation3 + $0x78] sm:$0xff]
      %3321 = vrot.lane.b32.xlu0 %v3289, 33
      %v3322 = vpop.permute.xlu0 %3321
      %3323 = vrot.lane.b32.xlu0 %v3290, 33
      %v3324 = vpop.permute.xlu0 %3323
      %3325 = vrot.lane.b32.xlu0 %v3291, 33
      %v3326 = vpop.permute.xlu0 %3325
      %3327 = vrot.lane.b32.xlu0 %v3292, 33
      %v3328 = vpop.permute.xlu0 %3327
      %3329 = vrot.lane.b32.xlu0 %v3293, 33
      %v3330 = vpop.permute.xlu0 %3329
      %3331 = vrot.lane.b32.xlu0 %v3294, 33
      %v3332 = vpop.permute.xlu0 %3331
      %3333 = vrot.lane.b32.xlu0 %v3295, 33
      %v3334 = vpop.permute.xlu0 %3333
      %3335 = vrot.lane.b32.xlu0 %v3296, 33
      %v3336 = vpop.permute.xlu0 %3335
      %3337 = vrot.lane.b32.xlu0 %v3297, 33
      %v3338 = vpop.permute.xlu0 %3337
      %3339 = vrot.lane.b32.xlu0 %v3298, 33
      %v3340 = vpop.permute.xlu0 %3339
      %3341 = vrot.lane.b32.xlu0 %v3299, 33
      %v3342 = vpop.permute.xlu0 %3341
      %3343 = vrot.lane.b32.xlu0 %v3300, 33
      %v3344 = vpop.permute.xlu0 %3343
      %3345 = vrot.lane.b32.xlu0 %v3301, 33
      %v3346 = vpop.permute.xlu0 %3345
      %3347 = vrot.lane.b32.xlu0 %v3302, 33
      %v3348 = vpop.permute.xlu0 %3347
      %3349 = vrot.lane.b32.xlu0 %v3303, 33
      %v3350 = vpop.permute.xlu0 %3349
      %3351 = vrot.lane.b32.xlu0 %v3304, 33
      %v3352 = vpop.permute.xlu0 %3351
      %vm3353 = vcmask 269312
      %v3354 = vsel %vm3353, %v3322, %v3324
      %v3355 = vsel %vm3353, %v3324, %v3326
      %v3356 = vsel %vm3353, %v3326, %v3328
      %v3357 = vsel %vm3353, %v3328, %v3330
      %v3358 = vsel %vm3353, %v3330, %v3332
      %v3359 = vsel %vm3353, %v3332, %v3334
      %v3360 = vsel %vm3353, %v3334, %v3336
      %v3361 = vsel %vm3353, %v3338, %v3340
      %v3362 = vsel %vm3353, %v3340, %v3342
      %v3363 = vsel %vm3353, %v3342, %v3344
      %v3364 = vsel %vm3353, %v3344, %v3346
      %v3365 = vsel %vm3353, %v3346, %v3348
      %v3366 = vsel %vm3353, %v3348, %v3350
      %v3367 = vsel %vm3353, %v3350, %v3352
      %3382 = vst [vmem:[#allocation6 + $0x770] sm:$0xff] %v3354
      %3383 = vst [vmem:[#allocation6 + $0x778] sm:$0xff] %v3355
      %3384 = vst [vmem:[#allocation6 + $0x780] sm:$0xff] %v3356
      %3385 = vst [vmem:[#allocation6 + $0x788] sm:$0xff] %v3357
      %3386 = vst [vmem:[#allocation6 + $0x790] sm:$0xff] %v3358
      %3387 = vst [vmem:[#allocation6 + $0x798] sm:$0xff] %v3359
      %3388 = vst [vmem:[#allocation6 + $0x7a0] sm:$0xff] %v3360
      %3389 = vst [vmem:[#allocation6 + $0x7a8] sm:$0xff] %v3361
      %3390 = vst [vmem:[#allocation6 + $0x7b0] sm:$0xff] %v3362
      %3391 = vst [vmem:[#allocation6 + $0x7b8] sm:$0xff] %v3363
      %3392 = vst [vmem:[#allocation6 + $0x7c0] sm:$0xff] %v3364
      %3393 = vst [vmem:[#allocation6 + $0x7c8] sm:$0xff] %v3365
      %3394 = vst [vmem:[#allocation6 + $0x7d0] sm:$0xff] %v3366
      %3395 = vst [vmem:[#allocation6 + $0x7d8] sm:$0xff] %v3367
      %v3396 = vld [vmem:[#allocation3] sm:$0xff]
      %v3397 = vld [vmem:[#allocation3 + $0x8] sm:$0xff]
      %v3398 = vld [vmem:[#allocation3 + $0x10] sm:$0xff]
      %v3399 = vld [vmem:[#allocation3 + $0x18] sm:$0xff]
      %v3400 = vld [vmem:[#allocation3 + $0x20] sm:$0xff]
      %v3401 = vld [vmem:[#allocation3 + $0x28] sm:$0xff]
      %v3402 = vld [vmem:[#allocation3 + $0x30] sm:$0xff]
      %v3403 = vld [vmem:[#allocation3 + $0x38] sm:$0xff]
      %v3404 = vld [vmem:[#allocation3 + $0x40] sm:$0xff]
      %v3405 = vld [vmem:[#allocation3 + $0x48] sm:$0xff]
      %v3406 = vld [vmem:[#allocation3 + $0x50] sm:$0xff]
      %v3407 = vld [vmem:[#allocation3 + $0x58] sm:$0xff]
      %v3408 = vld [vmem:[#allocation3 + $0x60] sm:$0xff]
      %v3409 = vld [vmem:[#allocation3 + $0x68] sm:$0xff]
      %v3410 = vld [vmem:[#allocation3 + $0x70] sm:$0xff]
      %v3411 = vld [vmem:[#allocation3 + $0x78] sm:$0xff]
      %3428 = vrot.lane.b32.xlu0 %v3396, 32
      %v3429 = vpop.permute.xlu0 %3428
      %3430 = vrot.lane.b32.xlu0 %v3397, 32
      %v3431 = vpop.permute.xlu0 %3430
      %3432 = vrot.lane.b32.xlu0 %v3398, 32
      %v3433 = vpop.permute.xlu0 %3432
      %3434 = vrot.lane.b32.xlu0 %v3399, 32
      %v3435 = vpop.permute.xlu0 %3434
      %3436 = vrot.lane.b32.xlu0 %v3400, 32
      %v3437 = vpop.permute.xlu0 %3436
      %3438 = vrot.lane.b32.xlu0 %v3401, 32
      %v3439 = vpop.permute.xlu0 %3438
      %3440 = vrot.lane.b32.xlu0 %v3402, 32
      %v3441 = vpop.permute.xlu0 %3440
      %3442 = vrot.lane.b32.xlu0 %v3403, 32
      %v3443 = vpop.permute.xlu0 %3442
      %3444 = vrot.lane.b32.xlu0 %v3404, 32
      %v3445 = vpop.permute.xlu0 %3444
      %3446 = vrot.lane.b32.xlu0 %v3405, 32
      %v3447 = vpop.permute.xlu0 %3446
      %3448 = vrot.lane.b32.xlu0 %v3406, 32
      %v3449 = vpop.permute.xlu0 %3448
      %3450 = vrot.lane.b32.xlu0 %v3407, 32
      %v3451 = vpop.permute.xlu0 %3450
      %3452 = vrot.lane.b32.xlu0 %v3408, 32
      %v3453 = vpop.permute.xlu0 %3452
      %3454 = vrot.lane.b32.xlu0 %v3409, 32
      %v3455 = vpop.permute.xlu0 %3454
      %3456 = vrot.lane.b32.xlu0 %v3410, 32
      %v3457 = vpop.permute.xlu0 %3456
      %3458 = vrot.lane.b32.xlu0 %v3411, 32
      %v3459 = vpop.permute.xlu0 %3458
      %vm3460 = vcmask 261120
      %v3461 = vsel %vm3460, %v3429, %v3431
      %v3462 = vsel %vm3460, %v3431, %v3433
      %v3463 = vsel %vm3460, %v3433, %v3435
      %v3464 = vsel %vm3460, %v3435, %v3437
      %v3465 = vsel %vm3460, %v3437, %v3439
      %v3466 = vsel %vm3460, %v3439, %v3441
      %v3467 = vsel %vm3460, %v3441, %v3443
      %v3468 = vsel %vm3460, %v3445, %v3447
      %v3469 = vsel %vm3460, %v3447, %v3449
      %v3470 = vsel %vm3460, %v3449, %v3451
      %v3471 = vsel %vm3460, %v3451, %v3453
      %v3472 = vsel %vm3460, %v3453, %v3455
      %v3473 = vsel %vm3460, %v3455, %v3457
      %v3474 = vsel %vm3460, %v3457, %v3459
      %3489 = vst [vmem:[#allocation6 + $0x7e0] sm:$0xff] %v3461
      %3490 = vst [vmem:[#allocation6 + $0x7e8] sm:$0xff] %v3462
      %3491 = vst [vmem:[#allocation6 + $0x7f0] sm:$0xff] %v3463
      %3492 = vst [vmem:[#allocation6 + $0x7f8] sm:$0xff] %v3464
      %3493 = vst [vmem:[#allocation6 + $0x800] sm:$0xff] %v3465
      %3494 = vst [vmem:[#allocation6 + $0x808] sm:$0xff] %v3466
      %3495 = vst [vmem:[#allocation6 + $0x810] sm:$0xff] %v3467
      %3496 = vst [vmem:[#allocation6 + $0x818] sm:$0xff] %v3468
      %3497 = vst [vmem:[#allocation6 + $0x820] sm:$0xff] %v3469
      %3498 = vst [vmem:[#allocation6 + $0x828] sm:$0xff] %v3470
      %3499 = vst [vmem:[#allocation6 + $0x830] sm:$0xff] %v3471
      %3500 = vst [vmem:[#allocation6 + $0x838] sm:$0xff] %v3472
      %3501 = vst [vmem:[#allocation6 + $0x840] sm:$0xff] %v3473
      %3502 = vst [vmem:[#allocation6 + $0x848] sm:$0xff] %v3474
      %v3503 = vld [vmem:[#allocation3] sm:$0xff]
      %v3504 = vld [vmem:[#allocation3 + $0x8] sm:$0xff]
      %v3505 = vld [vmem:[#allocation3 + $0x10] sm:$0xff]
      %v3506 = vld [vmem:[#allocation3 + $0x18] sm:$0xff]
      %v3507 = vld [vmem:[#allocation3 + $0x20] sm:$0xff]
      %v3508 = vld [vmem:[#allocation3 + $0x28] sm:$0xff]
      %v3509 = vld [vmem:[#allocation3 + $0x30] sm:$0xff]
      %v3510 = vld [vmem:[#allocation3 + $0x38] sm:$0xff]
      %v3511 = vld [vmem:[#allocation3 + $0x40] sm:$0xff]
      %v3512 = vld [vmem:[#allocation3 + $0x48] sm:$0xff]
      %v3513 = vld [vmem:[#allocation3 + $0x50] sm:$0xff]
      %v3514 = vld [vmem:[#allocation3 + $0x58] sm:$0xff]
      %v3515 = vld [vmem:[#allocation3 + $0x60] sm:$0xff]
      %v3516 = vld [vmem:[#allocation3 + $0x68] sm:$0xff]
      %v3517 = vld [vmem:[#allocation3 + $0x70] sm:$0xff]
      %v3518 = vld [vmem:[#allocation3 + $0x78] sm:$0xff]
      %3535 = vrot.lane.b32.xlu0 %v3503, 31
      %v3536 = vpop.permute.xlu0 %3535
      %3537 = vrot.lane.b32.xlu0 %v3504, 31
      %v3538 = vpop.permute.xlu0 %3537
      %3539 = vrot.lane.b32.xlu0 %v3505, 31
      %v3540 = vpop.permute.xlu0 %3539
      %3541 = vrot.lane.b32.xlu0 %v3506, 31
      %v3542 = vpop.permute.xlu0 %3541
      %3543 = vrot.lane.b32.xlu0 %v3507, 31
      %v3544 = vpop.permute.xlu0 %3543
      %3545 = vrot.lane.b32.xlu0 %v3508, 31
      %v3546 = vpop.permute.xlu0 %3545
      %3547 = vrot.lane.b32.xlu0 %v3509, 31
      %v3548 = vpop.permute.xlu0 %3547
      %3549 = vrot.lane.b32.xlu0 %v3510, 31
      %v3550 = vpop.permute.xlu0 %3549
      %3551 = vrot.lane.b32.xlu0 %v3511, 31
      %v3552 = vpop.permute.xlu0 %3551
      %3553 = vrot.lane.b32.xlu0 %v3512, 31
      %v3554 = vpop.permute.xlu0 %3553
      %3555 = vrot.lane.b32.xlu0 %v3513, 31
      %v3556 = vpop.permute.xlu0 %3555
      %3557 = vrot.lane.b32.xlu0 %v3514, 31
      %v3558 = vpop.permute.xlu0 %3557
      %3559 = vrot.lane.b32.xlu0 %v3515, 31
      %v3560 = vpop.permute.xlu0 %3559
      %3561 = vrot.lane.b32.xlu0 %v3516, 31
      %v3562 = vpop.permute.xlu0 %3561
      %3563 = vrot.lane.b32.xlu0 %v3517, 31
      %v3564 = vpop.permute.xlu0 %3563
      %3565 = vrot.lane.b32.xlu0 %v3518, 31
      %v3566 = vpop.permute.xlu0 %3565
      %vm3567 = vcmask 252928
      %v3568 = vsel %vm3567, %v3536, %v3538
      %v3569 = vsel %vm3567, %v3538, %v3540
      %v3570 = vsel %vm3567, %v3540, %v3542
      %v3571 = vsel %vm3567, %v3542, %v3544
      %v3572 = vsel %vm3567, %v3544, %v3546
      %v3573 = vsel %vm3567, %v3546, %v3548
      %v3574 = vsel %vm3567, %v3548, %v3550
      %v3575 = vsel %vm3567, %v3552, %v3554
      %v3576 = vsel %vm3567, %v3554, %v3556
      %v3577 = vsel %vm3567, %v3556, %v3558
      %v3578 = vsel %vm3567, %v3558, %v3560
      %v3579 = vsel %vm3567, %v3560, %v3562
      %v3580 = vsel %vm3567, %v3562, %v3564
      %v3581 = vsel %vm3567, %v3564, %v3566
      %3596 = vst [vmem:[#allocation6 + $0x850] sm:$0xff] %v3568
      %3597 = vst [vmem:[#allocation6 + $0x858] sm:$0xff] %v3569
      %3598 = vst [vmem:[#allocation6 + $0x860] sm:$0xff] %v3570
      %3599 = vst [vmem:[#allocation6 + $0x868] sm:$0xff] %v3571
      %3600 = vst [vmem:[#allocation6 + $0x870] sm:$0xff] %v3572
      %3601 = vst [vmem:[#allocation6 + $0x878] sm:$0xff] %v3573
      %3602 = vst [vmem:[#allocation6 + $0x880] sm:$0xff] %v3574
      %3603 = vst [vmem:[#allocation6 + $0x888] sm:$0xff] %v3575
      %3604 = vst [vmem:[#allocation6 + $0x890] sm:$0xff] %v3576
      %3605 = vst [vmem:[#allocation6 + $0x898] sm:$0xff] %v3577
      %3606 = vst [vmem:[#allocation6 + $0x8a0] sm:$0xff] %v3578
      %3607 = vst [vmem:[#allocation6 + $0x8a8] sm:$0xff] %v3579
      %3608 = vst [vmem:[#allocation6 + $0x8b0] sm:$0xff] %v3580
      %3609 = vst [vmem:[#allocation6 + $0x8b8] sm:$0xff] %v3581
      %v3610 = vld [vmem:[#allocation3] sm:$0xff]
      %v3611 = vld [vmem:[#allocation3 + $0x8] sm:$0xff]
      %v3612 = vld [vmem:[#allocation3 + $0x10] sm:$0xff]
      %v3613 = vld [vmem:[#allocation3 + $0x18] sm:$0xff]
      %v3614 = vld [vmem:[#allocation3 + $0x20] sm:$0xff]
      %v3615 = vld [vmem:[#allocation3 + $0x28] sm:$0xff]
      %v3616 = vld [vmem:[#allocation3 + $0x30] sm:$0xff]
      %v3617 = vld [vmem:[#allocation3 + $0x38] sm:$0xff]
      %v3618 = vld [vmem:[#allocation3 + $0x40] sm:$0xff]
      %v3619 = vld [vmem:[#allocation3 + $0x48] sm:$0xff]
      %v3620 = vld [vmem:[#allocation3 + $0x50] sm:$0xff]
      %v3621 = vld [vmem:[#allocation3 + $0x58] sm:$0xff]
      %v3622 = vld [vmem:[#allocation3 + $0x60] sm:$0xff]
      %v3623 = vld [vmem:[#allocation3 + $0x68] sm:$0xff]
      %v3624 = vld [vmem:[#allocation3 + $0x70] sm:$0xff]
      %v3625 = vld [vmem:[#allocation3 + $0x78] sm:$0xff]
      %3642 = vrot.lane.b32.xlu0 %v3610, 4
      %v3643 = vpop.permute.xlu0 %3642
      %3644 = vrot.lane.b32.xlu0 %v3611, 4
      %v3645 = vpop.permute.xlu0 %3644
      %3646 = vrot.lane.b32.xlu0 %v3612, 4
      %v3647 = vpop.permute.xlu0 %3646
      %3648 = vrot.lane.b32.xlu0 %v3613, 4
      %v3649 = vpop.permute.xlu0 %3648
      %3650 = vrot.lane.b32.xlu0 %v3614, 4
      %v3651 = vpop.permute.xlu0 %3650
      %3652 = vrot.lane.b32.xlu0 %v3615, 4
      %v3653 = vpop.permute.xlu0 %3652
      %3654 = vrot.lane.b32.xlu0 %v3616, 4
      %v3655 = vpop.permute.xlu0 %3654
      %3656 = vrot.lane.b32.xlu0 %v3617, 4
      %v3657 = vpop.permute.xlu0 %3656
      %3658 = vrot.lane.b32.xlu0 %v3618, 4
      %v3659 = vpop.permute.xlu0 %3658
      %3660 = vrot.lane.b32.xlu0 %v3619, 4
      %v3661 = vpop.permute.xlu0 %3660
      %3662 = vrot.lane.b32.xlu0 %v3620, 4
      %v3663 = vpop.permute.xlu0 %3662
      %3664 = vrot.lane.b32.xlu0 %v3621, 4
      %v3665 = vpop.permute.xlu0 %3664
      %3666 = vrot.lane.b32.xlu0 %v3622, 4
      %v3667 = vpop.permute.xlu0 %3666
      %3668 = vrot.lane.b32.xlu0 %v3623, 4
      %v3669 = vpop.permute.xlu0 %3668
      %3670 = vrot.lane.b32.xlu0 %v3624, 4
      %v3671 = vpop.permute.xlu0 %3670
      %3672 = vrot.lane.b32.xlu0 %v3625, 4
      %v3673 = vpop.permute.xlu0 %3672
      %v3674 = vsel %vm1449, %v3643, %v3645
      %v3675 = vsel %vm1449, %v3645, %v3647
      %v3676 = vsel %vm1449, %v3647, %v3649
      %v3677 = vsel %vm1449, %v3649, %v3651
      %v3678 = vsel %vm1449, %v3651, %v3653
      %v3679 = vsel %vm1449, %v3653, %v3655
      %v3680 = vsel %vm1449, %v3655, %v3657
      %v3681 = vsel %vm1449, %v3659, %v3661
      %v3682 = vsel %vm1449, %v3661, %v3663
      %v3683 = vsel %vm1449, %v3663, %v3665
      %v3684 = vsel %vm1449, %v3665, %v3667
      %v3685 = vsel %vm1449, %v3667, %v3669
      %v3686 = vsel %vm1449, %v3669, %v3671
      %v3687 = vsel %vm1449, %v3671, %v3673
      %3702 = vst [vmem:[#allocation6 + $0x8c0] sm:$0xff] %v3674
      %3703 = vst [vmem:[#allocation6 + $0x8c8] sm:$0xff] %v3675
      %3704 = vst [vmem:[#allocation6 + $0x8d0] sm:$0xff] %v3676
      %3705 = vst [vmem:[#allocation6 + $0x8d8] sm:$0xff] %v3677
      %3706 = vst [vmem:[#allocation6 + $0x8e0] sm:$0xff] %v3678
      %3707 = vst [vmem:[#allocation6 + $0x8e8] sm:$0xff] %v3679
      %3708 = vst [vmem:[#allocation6 + $0x8f0] sm:$0xff] %v3680
      %3709 = vst [vmem:[#allocation6 + $0x8f8] sm:$0xff] %v3681
      %3710 = vst [vmem:[#allocation6 + $0x900] sm:$0xff] %v3682
      %3711 = vst [vmem:[#allocation6 + $0x908] sm:$0xff] %v3683
      %3712 = vst [vmem:[#allocation6 + $0x910] sm:$0xff] %v3684
      %3713 = vst [vmem:[#allocation6 + $0x918] sm:$0xff] %v3685
      %3714 = vst [vmem:[#allocation6 + $0x920] sm:$0xff] %v3686
      %3715 = vst [vmem:[#allocation6 + $0x928] sm:$0xff] %v3687
      %v3716 = vld [vmem:[#allocation3] sm:$0xff]
      %v3717 = vld [vmem:[#allocation3 + $0x8] sm:$0xff]
      %v3718 = vld [vmem:[#allocation3 + $0x10] sm:$0xff]
      %v3719 = vld [vmem:[#allocation3 + $0x18] sm:$0xff]
      %v3720 = vld [vmem:[#allocation3 + $0x20] sm:$0xff]
      %v3721 = vld [vmem:[#allocation3 + $0x28] sm:$0xff]
      %v3722 = vld [vmem:[#allocation3 + $0x30] sm:$0xff]
      %v3723 = vld [vmem:[#allocation3 + $0x38] sm:$0xff]
      %v3724 = vld [vmem:[#allocation3 + $0x40] sm:$0xff]
      %v3725 = vld [vmem:[#allocation3 + $0x48] sm:$0xff]
      %v3726 = vld [vmem:[#allocation3 + $0x50] sm:$0xff]
      %v3727 = vld [vmem:[#allocation3 + $0x58] sm:$0xff]
      %v3728 = vld [vmem:[#allocation3 + $0x60] sm:$0xff]
      %v3729 = vld [vmem:[#allocation3 + $0x68] sm:$0xff]
      %v3730 = vld [vmem:[#allocation3 + $0x70] sm:$0xff]
      %v3731 = vld [vmem:[#allocation3 + $0x78] sm:$0xff]
      %3748 = vrot.lane.b32.xlu0 %v3716, 3
      %v3749 = vpop.permute.xlu0 %3748
      %3750 = vrot.lane.b32.xlu0 %v3717, 3
      %v3751 = vpop.permute.xlu0 %3750
      %3752 = vrot.lane.b32.xlu0 %v3718, 3
      %v3753 = vpop.permute.xlu0 %3752
      %3754 = vrot.lane.b32.xlu0 %v3719, 3
      %v3755 = vpop.permute.xlu0 %3754
      %3756 = vrot.lane.b32.xlu0 %v3720, 3
      %v3757 = vpop.permute.xlu0 %3756
      %3758 = vrot.lane.b32.xlu0 %v3721, 3
      %v3759 = vpop.permute.xlu0 %3758
      %3760 = vrot.lane.b32.xlu0 %v3722, 3
      %v3761 = vpop.permute.xlu0 %3760
      %3762 = vrot.lane.b32.xlu0 %v3723, 3
      %v3763 = vpop.permute.xlu0 %3762
      %3764 = vrot.lane.b32.xlu0 %v3724, 3
      %v3765 = vpop.permute.xlu0 %3764
      %3766 = vrot.lane.b32.xlu0 %v3725, 3
      %v3767 = vpop.permute.xlu0 %3766
      %3768 = vrot.lane.b32.xlu0 %v3726, 3
      %v3769 = vpop.permute.xlu0 %3768
      %3770 = vrot.lane.b32.xlu0 %v3727, 3
      %v3771 = vpop.permute.xlu0 %3770
      %3772 = vrot.lane.b32.xlu0 %v3728, 3
      %v3773 = vpop.permute.xlu0 %3772
      %3774 = vrot.lane.b32.xlu0 %v3729, 3
      %v3775 = vpop.permute.xlu0 %3774
      %3776 = vrot.lane.b32.xlu0 %v3730, 3
      %v3777 = vpop.permute.xlu0 %3776
      %3778 = vrot.lane.b32.xlu0 %v3731, 3
      %v3779 = vpop.permute.xlu0 %3778
      %vm3780 = vcmask 23552
      %v3781 = vsel %vm3780, %v3749, %v3751
      %v3782 = vsel %vm3780, %v3751, %v3753
      %v3783 = vsel %vm3780, %v3753, %v3755
      %v3784 = vsel %vm3780, %v3755, %v3757
      %v3785 = vsel %vm3780, %v3757, %v3759
      %v3786 = vsel %vm3780, %v3759, %v3761
      %v3787 = vsel %vm3780, %v3761, %v3763
      %v3788 = vsel %vm3780, %v3765, %v3767
      %v3789 = vsel %vm3780, %v3767, %v3769
      %v3790 = vsel %vm3780, %v3769, %v3771
      %v3791 = vsel %vm3780, %v3771, %v3773
      %v3792 = vsel %vm3780, %v3773, %v3775
      %v3793 = vsel %vm3780, %v3775, %v3777
      %v3794 = vsel %vm3780, %v3777, %v3779
      %3809 = vst [vmem:[#allocation6 + $0x930] sm:$0xff] %v3781
      %3810 = vst [vmem:[#allocation6 + $0x938] sm:$0xff] %v3782
      %3811 = vst [vmem:[#allocation6 + $0x940] sm:$0xff] %v3783
      %3812 = vst [vmem:[#allocation6 + $0x948] sm:$0xff] %v3784
      %3813 = vst [vmem:[#allocation6 + $0x950] sm:$0xff] %v3785
      %3814 = vst [vmem:[#allocation6 + $0x958] sm:$0xff] %v3786
      %3815 = vst [vmem:[#allocation6 + $0x960] sm:$0xff] %v3787
      %3816 = vst [vmem:[#allocation6 + $0x968] sm:$0xff] %v3788
      %3817 = vst [vmem:[#allocation6 + $0x970] sm:$0xff] %v3789
      %3818 = vst [vmem:[#allocation6 + $0x978] sm:$0xff] %v3790
      %3819 = vst [vmem:[#allocation6 + $0x980] sm:$0xff] %v3791
      %3820 = vst [vmem:[#allocation6 + $0x988] sm:$0xff] %v3792
      %3821 = vst [vmem:[#allocation6 + $0x990] sm:$0xff] %v3793
      %3822 = vst [vmem:[#allocation6 + $0x998] sm:$0xff] %v3794
      %v3823 = vld [vmem:[#allocation3] sm:$0xff]
      %v3824 = vld [vmem:[#allocation3 + $0x8] sm:$0xff]
      %v3825 = vld [vmem:[#allocation3 + $0x10] sm:$0xff]
      %v3826 = vld [vmem:[#allocation3 + $0x18] sm:$0xff]
      %v3827 = vld [vmem:[#allocation3 + $0x20] sm:$0xff]
      %v3828 = vld [vmem:[#allocation3 + $0x28] sm:$0xff]
      %v3829 = vld [vmem:[#allocation3 + $0x30] sm:$0xff]
      %v3830 = vld [vmem:[#allocation3 + $0x38] sm:$0xff]
      %v3831 = vld [vmem:[#allocation3 + $0x40] sm:$0xff]
      %v3832 = vld [vmem:[#allocation3 + $0x48] sm:$0xff]
      %v3833 = vld [vmem:[#allocation3 + $0x50] sm:$0xff]
      %v3834 = vld [vmem:[#allocation3 + $0x58] sm:$0xff]
      %v3835 = vld [vmem:[#allocation3 + $0x60] sm:$0xff]
      %v3836 = vld [vmem:[#allocation3 + $0x68] sm:$0xff]
      %v3837 = vld [vmem:[#allocation3 + $0x70] sm:$0xff]
      %v3838 = vld [vmem:[#allocation3 + $0x78] sm:$0xff]
      %3855 = vrot.lane.b32.xlu0 %v3823, 2
      %v3856 = vpop.permute.xlu0 %3855
      %3857 = vrot.lane.b32.xlu0 %v3824, 2
      %v3858 = vpop.permute.xlu0 %3857
      %3859 = vrot.lane.b32.xlu0 %v3825, 2
      %v3860 = vpop.permute.xlu0 %3859
      %3861 = vrot.lane.b32.xlu0 %v3826, 2
      %v3862 = vpop.permute.xlu0 %3861
      %3863 = vrot.lane.b32.xlu0 %v3827, 2
      %v3864 = vpop.permute.xlu0 %3863
      %3865 = vrot.lane.b32.xlu0 %v3828, 2
      %v3866 = vpop.permute.xlu0 %3865
      %3867 = vrot.lane.b32.xlu0 %v3829, 2
      %v3868 = vpop.permute.xlu0 %3867
      %3869 = vrot.lane.b32.xlu0 %v3830, 2
      %v3870 = vpop.permute.xlu0 %3869
      %3871 = vrot.lane.b32.xlu0 %v3831, 2
      %v3872 = vpop.permute.xlu0 %3871
      %3873 = vrot.lane.b32.xlu0 %v3832, 2
      %v3874 = vpop.permute.xlu0 %3873
      %3875 = vrot.lane.b32.xlu0 %v3833, 2
      %v3876 = vpop.permute.xlu0 %3875
      %3877 = vrot.lane.b32.xlu0 %v3834, 2
      %v3878 = vpop.permute.xlu0 %3877
      %3879 = vrot.lane.b32.xlu0 %v3835, 2
      %v3880 = vpop.permute.xlu0 %3879
      %3881 = vrot.lane.b32.xlu0 %v3836, 2
      %v3882 = vpop.permute.xlu0 %3881
      %3883 = vrot.lane.b32.xlu0 %v3837, 2
      %v3884 = vpop.permute.xlu0 %3883
      %3885 = vrot.lane.b32.xlu0 %v3838, 2
      %v3886 = vpop.permute.xlu0 %3885
      %vm3887 = vcmask 15360
      %v3888 = vsel %vm3887, %v3856, %v3858
      %v3889 = vsel %vm3887, %v3858, %v3860
      %v3890 = vsel %vm3887, %v3860, %v3862
      %v3891 = vsel %vm3887, %v3862, %v3864
      %v3892 = vsel %vm3887, %v3864, %v3866
      %v3893 = vsel %vm3887, %v3866, %v3868
      %v3894 = vsel %vm3887, %v3868, %v3870
      %v3895 = vsel %vm3887, %v3872, %v3874
      %v3896 = vsel %vm3887, %v3874, %v3876
      %v3897 = vsel %vm3887, %v3876, %v3878
      %v3898 = vsel %vm3887, %v3878, %v3880
      %v3899 = vsel %vm3887, %v3880, %v3882
      %v3900 = vsel %vm3887, %v3882, %v3884
      %v3901 = vsel %vm3887, %v3884, %v3886
      %3916 = vst [vmem:[#allocation6 + $0x9a0] sm:$0xff] %v3888
      %3917 = vst [vmem:[#allocation6 + $0x9a8] sm:$0xff] %v3889
      %3918 = vst [vmem:[#allocation6 + $0x9b0] sm:$0xff] %v3890
      %3919 = vst [vmem:[#allocation6 + $0x9b8] sm:$0xff] %v3891
      %3920 = vst [vmem:[#allocation6 + $0x9c0] sm:$0xff] %v3892
      %3921 = vst [vmem:[#allocation6 + $0x9c8] sm:$0xff] %v3893
      %3922 = vst [vmem:[#allocation6 + $0x9d0] sm:$0xff] %v3894
      %3923 = vst [vmem:[#allocation6 + $0x9d8] sm:$0xff] %v3895
      %3924 = vst [vmem:[#allocation6 + $0x9e0] sm:$0xff] %v3896
      %3925 = vst [vmem:[#allocation6 + $0x9e8] sm:$0xff] %v3897
      %3926 = vst [vmem:[#allocation6 + $0x9f0] sm:$0xff] %v3898
      %3927 = vst [vmem:[#allocation6 + $0x9f8] sm:$0xff] %v3899
      %3928 = vst [vmem:[#allocation6 + $0xa00] sm:$0xff] %v3900
      %3929 = vst [vmem:[#allocation6 + $0xa08] sm:$0xff] %v3901
      %v3930 = vld [vmem:[#allocation3] sm:$0xff]
      %v3931 = vld [vmem:[#allocation3 + $0x8] sm:$0xff]
      %v3932 = vld [vmem:[#allocation3 + $0x10] sm:$0xff]
      %v3933 = vld [vmem:[#allocation3 + $0x18] sm:$0xff]
      %v3934 = vld [vmem:[#allocation3 + $0x20] sm:$0xff]
      %v3935 = vld [vmem:[#allocation3 + $0x28] sm:$0xff]
      %v3936 = vld [vmem:[#allocation3 + $0x30] sm:$0xff]
      %v3937 = vld [vmem:[#allocation3 + $0x38] sm:$0xff]
      %v3938 = vld [vmem:[#allocation3 + $0x40] sm:$0xff]
      %v3939 = vld [vmem:[#allocation3 + $0x48] sm:$0xff]
      %v3940 = vld [vmem:[#allocation3 + $0x50] sm:$0xff]
      %v3941 = vld [vmem:[#allocation3 + $0x58] sm:$0xff]
      %v3942 = vld [vmem:[#allocation3 + $0x60] sm:$0xff]
      %v3943 = vld [vmem:[#allocation3 + $0x68] sm:$0xff]
      %v3944 = vld [vmem:[#allocation3 + $0x70] sm:$0xff]
      %v3945 = vld [vmem:[#allocation3 + $0x78] sm:$0xff]
      %3962 = vrot.lane.b32.xlu0 %v3930, 1
      %v3963 = vpop.permute.xlu0 %3962
      %3964 = vrot.lane.b32.xlu0 %v3931, 1
      %v3965 = vpop.permute.xlu0 %3964
      %3966 = vrot.lane.b32.xlu0 %v3932, 1
      %v3967 = vpop.permute.xlu0 %3966
      %3968 = vrot.lane.b32.xlu0 %v3933, 1
      %v3969 = vpop.permute.xlu0 %3968
      %3970 = vrot.lane.b32.xlu0 %v3934, 1
      %v3971 = vpop.permute.xlu0 %3970
      %3972 = vrot.lane.b32.xlu0 %v3935, 1
      %v3973 = vpop.permute.xlu0 %3972
      %3974 = vrot.lane.b32.xlu0 %v3936, 1
      %v3975 = vpop.permute.xlu0 %3974
      %3976 = vrot.lane.b32.xlu0 %v3937, 1
      %v3977 = vpop.permute.xlu0 %3976
      %3978 = vrot.lane.b32.xlu0 %v3938, 1
      %v3979 = vpop.permute.xlu0 %3978
      %3980 = vrot.lane.b32.xlu0 %v3939, 1
      %v3981 = vpop.permute.xlu0 %3980
      %3982 = vrot.lane.b32.xlu0 %v3940, 1
      %v3983 = vpop.permute.xlu0 %3982
      %3984 = vrot.lane.b32.xlu0 %v3941, 1
      %v3985 = vpop.permute.xlu0 %3984
      %3986 = vrot.lane.b32.xlu0 %v3942, 1
      %v3987 = vpop.permute.xlu0 %3986
      %3988 = vrot.lane.b32.xlu0 %v3943, 1
      %v3989 = vpop.permute.xlu0 %3988
      %3990 = vrot.lane.b32.xlu0 %v3944, 1
      %v3991 = vpop.permute.xlu0 %3990
      %3992 = vrot.lane.b32.xlu0 %v3945, 1
      %v3993 = vpop.permute.xlu0 %3992
      %vm3994 = vcmask 7168
      %v3995 = vsel %vm3994, %v3963, %v3965
      %v3996 = vsel %vm3994, %v3965, %v3967
      %v3997 = vsel %vm3994, %v3967, %v3969
      %v3998 = vsel %vm3994, %v3969, %v3971
      %v3999 = vsel %vm3994, %v3971, %v3973
      %v4000 = vsel %vm3994, %v3973, %v3975
      %v4001 = vsel %vm3994, %v3975, %v3977
      %v4002 = vsel %vm3994, %v3979, %v3981
      %v4003 = vsel %vm3994, %v3981, %v3983
      %v4004 = vsel %vm3994, %v3983, %v3985
      %v4005 = vsel %vm3994, %v3985, %v3987
      %v4006 = vsel %vm3994, %v3987, %v3989
      %v4007 = vsel %vm3994, %v3989, %v3991
      %v4008 = vsel %vm3994, %v3991, %v3993
      %4023 = vst [vmem:[#allocation6 + $0xa10] sm:$0xff] %v3995
      %4024 = vst [vmem:[#allocation6 + $0xa18] sm:$0xff] %v3996
      %4025 = vst [vmem:[#allocation6 + $0xa20] sm:$0xff] %v3997
      %4026 = vst [vmem:[#allocation6 + $0xa28] sm:$0xff] %v3998
      %4027 = vst [vmem:[#allocation6 + $0xa30] sm:$0xff] %v3999
      %4028 = vst [vmem:[#allocation6 + $0xa38] sm:$0xff] %v4000
      %4029 = vst [vmem:[#allocation6 + $0xa40] sm:$0xff] %v4001
      %4030 = vst [vmem:[#allocation6 + $0xa48] sm:$0xff] %v4002
      %4031 = vst [vmem:[#allocation6 + $0xa50] sm:$0xff] %v4003
      %4032 = vst [vmem:[#allocation6 + $0xa58] sm:$0xff] %v4004
      %4033 = vst [vmem:[#allocation6 + $0xa60] sm:$0xff] %v4005
      %4034 = vst [vmem:[#allocation6 + $0xa68] sm:$0xff] %v4006
      %4035 = vst [vmem:[#allocation6 + $0xa70] sm:$0xff] %v4007
      %4036 = vst [vmem:[#allocation6 + $0xa78] sm:$0xff] %v4008
      %v4037 = vld [vmem:[#allocation3 + $0x8] sm:$0xff]
      %v4038 = vld [vmem:[#allocation3 + $0x10] sm:$0xff]
      %v4039 = vld [vmem:[#allocation3 + $0x18] sm:$0xff]
      %v4040 = vld [vmem:[#allocation3 + $0x20] sm:$0xff]
      %v4041 = vld [vmem:[#allocation3 + $0x28] sm:$0xff]
      %v4042 = vld [vmem:[#allocation3 + $0x30] sm:$0xff]
      %v4043 = vld [vmem:[#allocation3 + $0x38] sm:$0xff]
      %v4044 = vld [vmem:[#allocation3 + $0x48] sm:$0xff]
      %v4045 = vld [vmem:[#allocation3 + $0x50] sm:$0xff]
      %v4046 = vld [vmem:[#allocation3 + $0x58] sm:$0xff]
      %v4047 = vld [vmem:[#allocation3 + $0x60] sm:$0xff]
      %v4048 = vld [vmem:[#allocation3 + $0x68] sm:$0xff]
      %v4049 = vld [vmem:[#allocation3 + $0x70] sm:$0xff]
      %v4050 = vld [vmem:[#allocation3 + $0x78] sm:$0xff]
      %4051 = vst [vmem:[#allocation6 + $0xa80] sm:$0xff] %v4037
      %4052 = vst [vmem:[#allocation6 + $0xa88] sm:$0xff] %v4038
      %4053 = vst [vmem:[#allocation6 + $0xa90] sm:$0xff] %v4039
      %4054 = vst [vmem:[#allocation6 + $0xa98] sm:$0xff] %v4040
      %4055 = vst [vmem:[#allocation6 + $0xaa0] sm:$0xff] %v4041
      %4056 = vst [vmem:[#allocation6 + $0xaa8] sm:$0xff] %v4042
      %4057 = vst [vmem:[#allocation6 + $0xab0] sm:$0xff] %v4043
      %4058 = vst [vmem:[#allocation6 + $0xab8] sm:$0xff] %v4044
      %4059 = vst [vmem:[#allocation6 + $0xac0] sm:$0xff] %v4045
      %4060 = vst [vmem:[#allocation6 + $0xac8] sm:$0xff] %v4046
      %4061 = vst [vmem:[#allocation6 + $0xad0] sm:$0xff] %v4047
      %4062 = vst [vmem:[#allocation6 + $0xad8] sm:$0xff] %v4048
      %4063 = vst [vmem:[#allocation6 + $0xae0] sm:$0xff] %v4049
      %4064 = vst [vmem:[#allocation6 + $0xae8] sm:$0xff] %v4050
      %v4065 = vld [vmem:[#allocation6] sm:$0xff]
      %v4066 = vld [vmem:[#allocation6 + $0x8] sm:$0xff]
      %v4067 = vld [vmem:[#allocation6 + $0x10] sm:$0xff]
      %v4068 = vld [vmem:[#allocation6 + $0x18] sm:$0xff]
      %v4069 = vld [vmem:[#allocation6 + $0x20] sm:$0xff]
      %v4070 = vld [vmem:[#allocation6 + $0x28] sm:$0xff]
      %v4071 = vld [vmem:[#allocation6 + $0x30] sm:$0xff]
      %v4072 = vld [vmem:[#allocation6 + $0x38] sm:$0xff]
      %v4073 = vld [vmem:[#allocation6 + $0x40] sm:$0xff]
      %v4074 = vld [vmem:[#allocation6 + $0x48] sm:$0xff]
      %v4075 = vld [vmem:[#allocation6 + $0x50] sm:$0xff]
      %v4076 = vld [vmem:[#allocation6 + $0x58] sm:$0xff]
      %v4077 = vld [vmem:[#allocation6 + $0x60] sm:$0xff]
      %v4078 = vld [vmem:[#allocation6 + $0x68] sm:$0xff]
      %v4079 = vld [vmem:[#allocation6 + $0x70] sm:$0xff]
      %v4080 = vld [vmem:[#allocation6 + $0x78] sm:$0xff]
      %v4081 = vld [vmem:[#allocation6 + $0x80] sm:$0xff]
      %v4082 = vld [vmem:[#allocation6 + $0x88] sm:$0xff]
      %v4083 = vld [vmem:[#allocation6 + $0x90] sm:$0xff]
      %v4084 = vld [vmem:[#allocation6 + $0x98] sm:$0xff]
      %v4085 = vld [vmem:[#allocation6 + $0xa0] sm:$0xff]
      %v4086 = vld [vmem:[#allocation6 + $0xa8] sm:$0xff]
      %v4087 = vld [vmem:[#allocation6 + $0xb0] sm:$0xff]
      %v4088 = vld [vmem:[#allocation6 + $0xb8] sm:$0xff]
      %v4089 = vld [vmem:[#allocation6 + $0xc0] sm:$0xff]
      %v4090 = vld [vmem:[#allocation6 + $0xc8] sm:$0xff]
      %v4091 = vld [vmem:[#allocation6 + $0xd0] sm:$0xff]
      %v4092 = vld [vmem:[#allocation6 + $0xd8] sm:$0xff]
      %v4093 = vld [vmem:[#allocation6 + $0xe0] sm:$0xff]
      %v4094 = vld [vmem:[#allocation6 + $0xe8] sm:$0xff]
      %v4095 = vld [vmem:[#allocation6 + $0xf0] sm:$0xff]
      %v4096 = vld [vmem:[#allocation6 + $0xf8] sm:$0xff]
      %v4097 = vld [vmem:[#allocation6 + $0x100] sm:$0xff]
      %v4098 = vld [vmem:[#allocation6 + $0x108] sm:$0xff]
      %v4099 = vld [vmem:[#allocation6 + $0x110] sm:$0xff]
      %v4100 = vld [vmem:[#allocation6 + $0x118] sm:$0xff]
      %v4101 = vld [vmem:[#allocation6 + $0x120] sm:$0xff]
      %v4102 = vld [vmem:[#allocation6 + $0x128] sm:$0xff]
      %v4103 = vld [vmem:[#allocation6 + $0x130] sm:$0xff]
      %v4104 = vld [vmem:[#allocation6 + $0x138] sm:$0xff]
      %v4105 = vld [vmem:[#allocation6 + $0x140] sm:$0xff]
      %v4106 = vld [vmem:[#allocation6 + $0x148] sm:$0xff]
      %v4107 = vld [vmem:[#allocation6 + $0x150] sm:$0xff]
      %v4108 = vld [vmem:[#allocation6 + $0x158] sm:$0xff]
      %v4109 = vld [vmem:[#allocation6 + $0x160] sm:$0xff]
      %v4110 = vld [vmem:[#allocation6 + $0x168] sm:$0xff]
      %v4111 = vld [vmem:[#allocation6 + $0x170] sm:$0xff]
      %v4112 = vld [vmem:[#allocation6 + $0x178] sm:$0xff]
      %v4113 = vld [vmem:[#allocation6 + $0x180] sm:$0xff]
      %v4114 = vld [vmem:[#allocation6 + $0x188] sm:$0xff]
      %v4115 = vld [vmem:[#allocation6 + $0x190] sm:$0xff]
      %v4116 = vld [vmem:[#allocation6 + $0x198] sm:$0xff]
      %v4117 = vld [vmem:[#allocation6 + $0x1a0] sm:$0xff]
      %v4118 = vld [vmem:[#allocation6 + $0x1a8] sm:$0xff]
      %v4119 = vld [vmem:[#allocation6 + $0x1b0] sm:$0xff]
      %v4120 = vld [vmem:[#allocation6 + $0x1b8] sm:$0xff]
      %v4121 = vld [vmem:[#allocation6 + $0x1c0] sm:$0xff]
      %v4122 = vld [vmem:[#allocation6 + $0x1c8] sm:$0xff]
      %v4123 = vld [vmem:[#allocation6 + $0x1d0] sm:$0xff]
      %v4124 = vld [vmem:[#allocation6 + $0x1d8] sm:$0xff]
      %v4125 = vld [vmem:[#allocation6 + $0x1e0] sm:$0xff]
      %v4126 = vld [vmem:[#allocation6 + $0x1e8] sm:$0xff]
      %v4127 = vld [vmem:[#allocation6 + $0x1f0] sm:$0xff]
      %v4128 = vld [vmem:[#allocation6 + $0x1f8] sm:$0xff]
      %v4129 = vld [vmem:[#allocation6 + $0x200] sm:$0xff]
      %v4130 = vld [vmem:[#allocation6 + $0x208] sm:$0xff]
      %v4131 = vld [vmem:[#allocation6 + $0x210] sm:$0xff]
      %v4132 = vld [vmem:[#allocation6 + $0x218] sm:$0xff]
      %v4133 = vld [vmem:[#allocation6 + $0x220] sm:$0xff]
      %v4134 = vld [vmem:[#allocation6 + $0x228] sm:$0xff]
      %v4135 = vld [vmem:[#allocation6 + $0x230] sm:$0xff]
      %v4136 = vld [vmem:[#allocation6 + $0x238] sm:$0xff]
      %v4137 = vld [vmem:[#allocation6 + $0x240] sm:$0xff]
      %v4138 = vld [vmem:[#allocation6 + $0x248] sm:$0xff]
      %v4139 = vld [vmem:[#allocation6 + $0x250] sm:$0xff]
      %v4140 = vld [vmem:[#allocation6 + $0x258] sm:$0xff]
      %v4141 = vld [vmem:[#allocation6 + $0x260] sm:$0xff]
      %v4142 = vld [vmem:[#allocation6 + $0x268] sm:$0xff]
      %v4143 = vld [vmem:[#allocation6 + $0x270] sm:$0xff]
      %v4144 = vld [vmem:[#allocation6 + $0x278] sm:$0xff]
      %v4145 = vld [vmem:[#allocation6 + $0x280] sm:$0xff]
      %v4146 = vld [vmem:[#allocation6 + $0x288] sm:$0xff]
      %v4147 = vld [vmem:[#allocation6 + $0x290] sm:$0xff]
      %v4148 = vld [vmem:[#allocation6 + $0x298] sm:$0xff]
      %v4149 = vld [vmem:[#allocation6 + $0x2a0] sm:$0xff]
      %v4150 = vld [vmem:[#allocation6 + $0x2a8] sm:$0xff]
      %v4151 = vld [vmem:[#allocation6 + $0x2b0] sm:$0xff]
      %v4152 = vld [vmem:[#allocation6 + $0x2b8] sm:$0xff]
      %v4153 = vld [vmem:[#allocation6 + $0x2c0] sm:$0xff]
      %v4154 = vld [vmem:[#allocation6 + $0x2c8] sm:$0xff]
      %v4155 = vld [vmem:[#allocation6 + $0x2d0] sm:$0xff]
      %v4156 = vld [vmem:[#allocation6 + $0x2d8] sm:$0xff]
      %v4157 = vld [vmem:[#allocation6 + $0x2e0] sm:$0xff]
      %v4158 = vld [vmem:[#allocation6 + $0x2e8] sm:$0xff]
      %v4159 = vld [vmem:[#allocation6 + $0x2f0] sm:$0xff]
      %v4160 = vld [vmem:[#allocation6 + $0x2f8] sm:$0xff]
      %v4161 = vld [vmem:[#allocation6 + $0x300] sm:$0xff]
      %v4162 = vld [vmem:[#allocation6 + $0x308] sm:$0xff]
      %v4163 = vld [vmem:[#allocation6 + $0x310] sm:$0xff]
      %v4164 = vld [vmem:[#allocation6 + $0x318] sm:$0xff]
      %v4165 = vld [vmem:[#allocation6 + $0x320] sm:$0xff]
      %v4166 = vld [vmem:[#allocation6 + $0x328] sm:$0xff]
      %v4167 = vld [vmem:[#allocation6 + $0x330] sm:$0xff]
      %v4168 = vld [vmem:[#allocation6 + $0x338] sm:$0xff]
      %v4169 = vld [vmem:[#allocation6 + $0x340] sm:$0xff]
      %v4170 = vld [vmem:[#allocation6 + $0x348] sm:$0xff]
      %v4171 = vld [vmem:[#allocation6 + $0x350] sm:$0xff]
      %v4172 = vld [vmem:[#allocation6 + $0x358] sm:$0xff]
      %v4173 = vld [vmem:[#allocation6 + $0x360] sm:$0xff]
      %v4174 = vld [vmem:[#allocation6 + $0x368] sm:$0xff]
      %v4175 = vld [vmem:[#allocation6 + $0x370] sm:$0xff]
      %v4176 = vld [vmem:[#allocation6 + $0x378] sm:$0xff]
      %v4177 = vld [vmem:[#allocation6 + $0x380] sm:$0xff]
      %v4178 = vld [vmem:[#allocation6 + $0x388] sm:$0xff]
      %v4179 = vld [vmem:[#allocation6 + $0x390] sm:$0xff]
      %v4180 = vld [vmem:[#allocation6 + $0x398] sm:$0xff]
      %v4181 = vld [vmem:[#allocation6 + $0x3a0] sm:$0xff]
      %v4182 = vld [vmem:[#allocation6 + $0x3a8] sm:$0xff]
      %v4183 = vld [vmem:[#allocation6 + $0x3b0] sm:$0xff]
      %v4184 = vld [vmem:[#allocation6 + $0x3b8] sm:$0xff]
      %v4185 = vld [vmem:[#allocation6 + $0x3c0] sm:$0xff]
      %v4186 = vld [vmem:[#allocation6 + $0x3c8] sm:$0xff]
      %v4187 = vld [vmem:[#allocation6 + $0x3d0] sm:$0xff]
      %v4188 = vld [vmem:[#allocation6 + $0x3d8] sm:$0xff]
      %v4189 = vld [vmem:[#allocation6 + $0x3e0] sm:$0xff]
      %v4190 = vld [vmem:[#allocation6 + $0x3e8] sm:$0xff]
      %v4191 = vld [vmem:[#allocation6 + $0x3f0] sm:$0xff]
      %v4192 = vld [vmem:[#allocation6 + $0x3f8] sm:$0xff]
      %v4193 = vld [vmem:[#allocation6 + $0x400] sm:$0xff]
      %v4194 = vld [vmem:[#allocation6 + $0x408] sm:$0xff]
      %v4195 = vld [vmem:[#allocation6 + $0x410] sm:$0xff]
      %v4196 = vld [vmem:[#allocation6 + $0x418] sm:$0xff]
      %v4197 = vld [vmem:[#allocation6 + $0x420] sm:$0xff]
      %v4198 = vld [vmem:[#allocation6 + $0x428] sm:$0xff]
      %v4199 = vld [vmem:[#allocation6 + $0x430] sm:$0xff]
      %v4200 = vld [vmem:[#allocation6 + $0x438] sm:$0xff]
      %v4201 = vld [vmem:[#allocation6 + $0x440] sm:$0xff]
      %v4202 = vld [vmem:[#allocation6 + $0x448] sm:$0xff]
      %v4203 = vld [vmem:[#allocation6 + $0x450] sm:$0xff]
      %v4204 = vld [vmem:[#allocation6 + $0x458] sm:$0xff]
      %v4205 = vld [vmem:[#allocation6 + $0x460] sm:$0xff]
      %v4206 = vld [vmem:[#allocation6 + $0x468] sm:$0xff]
      %v4207 = vld [vmem:[#allocation6 + $0x470] sm:$0xff]
      %v4208 = vld [vmem:[#allocation6 + $0x478] sm:$0xff]
      %v4209 = vld [vmem:[#allocation6 + $0x480] sm:$0xff]
      %v4210 = vld [vmem:[#allocation6 + $0x488] sm:$0xff]
      %v4211 = vld [vmem:[#allocation6 + $0x490] sm:$0xff]
      %v4212 = vld [vmem:[#allocation6 + $0x498] sm:$0xff]
      %v4213 = vld [vmem:[#allocation6 + $0x4a0] sm:$0xff]
      %v4214 = vld [vmem:[#allocation6 + $0x4a8] sm:$0xff]
      %v4215 = vld [vmem:[#allocation6 + $0x4b0] sm:$0xff]
      %v4216 = vld [vmem:[#allocation6 + $0x4b8] sm:$0xff]
      %v4217 = vld [vmem:[#allocation6 + $0x4c0] sm:$0xff]
      %v4218 = vld [vmem:[#allocation6 + $0x4c8] sm:$0xff]
      %v4219 = vld [vmem:[#allocation6 + $0x4d0] sm:$0xff]
      %v4220 = vld [vmem:[#allocation6 + $0x4d8] sm:$0xff]
      %v4221 = vld [vmem:[#allocation6 + $0x4e0] sm:$0xff]
      %v4222 = vld [vmem:[#allocation6 + $0x4e8] sm:$0xff]
      %v4223 = vld [vmem:[#allocation6 + $0x4f0] sm:$0xff]
      %v4224 = vld [vmem:[#allocation6 + $0x4f8] sm:$0xff]
      %v4225 = vld [vmem:[#allocation6 + $0x500] sm:$0xff]
      %v4226 = vld [vmem:[#allocation6 + $0x508] sm:$0xff]
      %v4227 = vld [vmem:[#allocation6 + $0x510] sm:$0xff]
      %v4228 = vld [vmem:[#allocation6 + $0x518] sm:$0xff]
      %v4229 = vld [vmem:[#allocation6 + $0x520] sm:$0xff]
      %v4230 = vld [vmem:[#allocation6 + $0x528] sm:$0xff]
      %v4231 = vld [vmem:[#allocation6 + $0x530] sm:$0xff]
      %v4232 = vld [vmem:[#allocation6 + $0x538] sm:$0xff]
      %v4233 = vld [vmem:[#allocation6 + $0x540] sm:$0xff]
      %v4234 = vld [vmem:[#allocation6 + $0x548] sm:$0xff]
      %v4235 = vld [vmem:[#allocation6 + $0x550] sm:$0xff]
      %v4236 = vld [vmem:[#allocation6 + $0x558] sm:$0xff]
      %v4237 = vld [vmem:[#allocation6 + $0x560] sm:$0xff]
      %v4238 = vld [vmem:[#allocation6 + $0x568] sm:$0xff]
      %v4239 = vld [vmem:[#allocation6 + $0x570] sm:$0xff]
      %v4240 = vld [vmem:[#allocation6 + $0x578] sm:$0xff]
      %v4241 = vld [vmem:[#allocation6 + $0x580] sm:$0xff]
      %v4242 = vld [vmem:[#allocation6 + $0x588] sm:$0xff]
      %v4243 = vld [vmem:[#allocation6 + $0x590] sm:$0xff]
      %v4244 = vld [vmem:[#allocation6 + $0x598] sm:$0xff]
      %v4245 = vld [vmem:[#allocation6 + $0x5a0] sm:$0xff]
      %v4246 = vld [vmem:[#allocation6 + $0x5a8] sm:$0xff]
      %v4247 = vld [vmem:[#allocation6 + $0x5b0] sm:$0xff]
      %v4248 = vld [vmem:[#allocation6 + $0x5b8] sm:$0xff]
      %v4249 = vld [vmem:[#allocation6 + $0x5c0] sm:$0xff]
      %v4250 = vld [vmem:[#allocation6 + $0x5c8] sm:$0xff]
      %v4251 = vld [vmem:[#allocation6 + $0x5d0] sm:$0xff]
      %v4252 = vld [vmem:[#allocation6 + $0x5d8] sm:$0xff]
      %v4253 = vld [vmem:[#allocation6 + $0x5e0] sm:$0xff]
      %v4254 = vld [vmem:[#allocation6 + $0x5e8] sm:$0xff]
      %v4255 = vld [vmem:[#allocation6 + $0x5f0] sm:$0xff]
      %v4256 = vld [vmem:[#allocation6 + $0x5f8] sm:$0xff]
      %v4257 = vld [vmem:[#allocation6 + $0x600] sm:$0xff]
      %v4258 = vld [vmem:[#allocation6 + $0x608] sm:$0xff]
      %v4259 = vld [vmem:[#allocation6 + $0x610] sm:$0xff]
      %v4260 = vld [vmem:[#allocation6 + $0x618] sm:$0xff]
      %v4261 = vld [vmem:[#allocation6 + $0x620] sm:$0xff]
      %v4262 = vld [vmem:[#allocation6 + $0x628] sm:$0xff]
      %v4263 = vld [vmem:[#allocation6 + $0x630] sm:$0xff]
      %v4264 = vld [vmem:[#allocation6 + $0x638] sm:$0xff]
      %v4265 = vld [vmem:[#allocation6 + $0x640] sm:$0xff]
      %v4266 = vld [vmem:[#allocation6 + $0x648] sm:$0xff]
      %v4267 = vld [vmem:[#allocation6 + $0x650] sm:$0xff]
      %v4268 = vld [vmem:[#allocation6 + $0x658] sm:$0xff]
      %v4269 = vld [vmem:[#allocation6 + $0x660] sm:$0xff]
      %v4270 = vld [vmem:[#allocation6 + $0x668] sm:$0xff]
      %v4271 = vld [vmem:[#allocation6 + $0x670] sm:$0xff]
      %v4272 = vld [vmem:[#allocation6 + $0x678] sm:$0xff]
      %v4273 = vld [vmem:[#allocation6 + $0x680] sm:$0xff]
      %v4274 = vld [vmem:[#allocation6 + $0x688] sm:$0xff]
      %v4275 = vld [vmem:[#allocation6 + $0x690] sm:$0xff]
      %v4276 = vld [vmem:[#allocation6 + $0x698] sm:$0xff]
      %v4277 = vld [vmem:[#allocation6 + $0x6a0] sm:$0xff]
      %v4278 = vld [vmem:[#allocation6 + $0x6a8] sm:$0xff]
      %v4279 = vld [vmem:[#allocation6 + $0x6b0] sm:$0xff]
      %v4280 = vld [vmem:[#allocation6 + $0x6b8] sm:$0xff]
      %v4281 = vld [vmem:[#allocation6 + $0x6c0] sm:$0xff]
      %v4282 = vld [vmem:[#allocation6 + $0x6c8] sm:$0xff]
      %v4283 = vld [vmem:[#allocation6 + $0x6d0] sm:$0xff]
      %v4284 = vld [vmem:[#allocation6 + $0x6d8] sm:$0xff]
      %v4285 = vld [vmem:[#allocation6 + $0x6e0] sm:$0xff]
      %v4286 = vld [vmem:[#allocation6 + $0x6e8] sm:$0xff]
      %v4287 = vld [vmem:[#allocation6 + $0x6f0] sm:$0xff]
      %v4288 = vld [vmem:[#allocation6 + $0x6f8] sm:$0xff]
      %v4289 = vld [vmem:[#allocation6 + $0x700] sm:$0xff]
      %v4290 = vld [vmem:[#allocation6 + $0x708] sm:$0xff]
      %v4291 = vld [vmem:[#allocation6 + $0x710] sm:$0xff]
      %v4292 = vld [vmem:[#allocation6 + $0x718] sm:$0xff]
      %v4293 = vld [vmem:[#allocation6 + $0x720] sm:$0xff]
      %v4294 = vld [vmem:[#allocation6 + $0x728] sm:$0xff]
      %v4295 = vld [vmem:[#allocation6 + $0x730] sm:$0xff]
      %v4296 = vld [vmem:[#allocation6 + $0x738] sm:$0xff]
      %v4297 = vld [vmem:[#allocation6 + $0x740] sm:$0xff]
      %v4298 = vld [vmem:[#allocation6 + $0x748] sm:$0xff]
      %v4299 = vld [vmem:[#allocation6 + $0x750] sm:$0xff]
      %v4300 = vld [vmem:[#allocation6 + $0x758] sm:$0xff]
      %v4301 = vld [vmem:[#allocation6 + $0x760] sm:$0xff]
      %v4302 = vld [vmem:[#allocation6 + $0x768] sm:$0xff]
      %v4303 = vld [vmem:[#allocation6 + $0x770] sm:$0xff]
      %v4304 = vld [vmem:[#allocation6 + $0x778] sm:$0xff]
      %v4305 = vld [vmem:[#allocation6 + $0x780] sm:$0xff]
      %v4306 = vld [vmem:[#allocation6 + $0x788] sm:$0xff]
      %v4307 = vld [vmem:[#allocation6 + $0x790] sm:$0xff]
      %v4308 = vld [vmem:[#allocation6 + $0x798] sm:$0xff]
      %v4309 = vld [vmem:[#allocation6 + $0x7a0] sm:$0xff]
      %v4310 = vld [vmem:[#allocation6 + $0x7a8] sm:$0xff]
      %v4311 = vld [vmem:[#allocation6 + $0x7b0] sm:$0xff]
      %v4312 = vld [vmem:[#allocation6 + $0x7b8] sm:$0xff]
      %v4313 = vld [vmem:[#allocation6 + $0x7c0] sm:$0xff]
      %v4314 = vld [vmem:[#allocation6 + $0x7c8] sm:$0xff]
      %v4315 = vld [vmem:[#allocation6 + $0x7d0] sm:$0xff]
      %v4316 = vld [vmem:[#allocation6 + $0x7d8] sm:$0xff]
      %v4317 = vld [vmem:[#allocation6 + $0x7e0] sm:$0xff]
      %v4318 = vld [vmem:[#allocation6 + $0x7e8] sm:$0xff]
      %v4319 = vld [vmem:[#allocation6 + $0x7f0] sm:$0xff]
      %v4320 = vld [vmem:[#allocation6 + $0x7f8] sm:$0xff]
      %v4321 = vld [vmem:[#allocation6 + $0x800] sm:$0xff]
      %v4322 = vld [vmem:[#allocation6 + $0x808] sm:$0xff]
      %v4323 = vld [vmem:[#allocation6 + $0x810] sm:$0xff]
      %v4324 = vld [vmem:[#allocation6 + $0x818] sm:$0xff]
      %v4325 = vld [vmem:[#allocation6 + $0x820] sm:$0xff]
      %v4326 = vld [vmem:[#allocation6 + $0x828] sm:$0xff]
      %v4327 = vld [vmem:[#allocation6 + $0x830] sm:$0xff]
      %v4328 = vld [vmem:[#allocation6 + $0x838] sm:$0xff]
      %v4329 = vld [vmem:[#allocation6 + $0x840] sm:$0xff]
      %v4330 = vld [vmem:[#allocation6 + $0x848] sm:$0xff]
      %v4331 = vld [vmem:[#allocation6 + $0x850] sm:$0xff]
      %v4332 = vld [vmem:[#allocation6 + $0x858] sm:$0xff]
      %v4333 = vld [vmem:[#allocation6 + $0x860] sm:$0xff]
      %v4334 = vld [vmem:[#allocation6 + $0x868] sm:$0xff]
      %v4335 = vld [vmem:[#allocation6 + $0x870] sm:$0xff]
      %v4336 = vld [vmem:[#allocation6 + $0x878] sm:$0xff]
      %v4337 = vld [vmem:[#allocation6 + $0x880] sm:$0xff]
      %v4338 = vld [vmem:[#allocation6 + $0x888] sm:$0xff]
      %v4339 = vld [vmem:[#allocation6 + $0x890] sm:$0xff]
      %v4340 = vld [vmem:[#allocation6 + $0x898] sm:$0xff]
      %v4341 = vld [vmem:[#allocation6 + $0x8a0] sm:$0xff]
      %v4342 = vld [vmem:[#allocation6 + $0x8a8] sm:$0xff]
      %v4343 = vld [vmem:[#allocation6 + $0x8b0] sm:$0xff]
      %v4344 = vld [vmem:[#allocation6 + $0x8b8] sm:$0xff]
      %v4345 = vld [vmem:[#allocation6 + $0x8c0] sm:$0xff]
      %v4346 = vld [vmem:[#allocation6 + $0x8c8] sm:$0xff]
      %v4347 = vld [vmem:[#allocation6 + $0x8d0] sm:$0xff]
      %v4348 = vld [vmem:[#allocation6 + $0x8d8] sm:$0xff]
      %v4349 = vld [vmem:[#allocation6 + $0x8e0] sm:$0xff]
      %v4350 = vld [vmem:[#allocation6 + $0x8e8] sm:$0xff]
      %v4351 = vld [vmem:[#allocation6 + $0x8f0] sm:$0xff]
      %v4352 = vld [vmem:[#allocation6 + $0x8f8] sm:$0xff]
      %v4353 = vld [vmem:[#allocation6 + $0x900] sm:$0xff]
      %v4354 = vld [vmem:[#allocation6 + $0x908] sm:$0xff]
      %v4355 = vld [vmem:[#allocation6 + $0x910] sm:$0xff]
      %v4356 = vld [vmem:[#allocation6 + $0x918] sm:$0xff]
      %v4357 = vld [vmem:[#allocation6 + $0x920] sm:$0xff]
      %v4358 = vld [vmem:[#allocation6 + $0x928] sm:$0xff]
      %v4359 = vld [vmem:[#allocation6 + $0x930] sm:$0xff]
      %v4360 = vld [vmem:[#allocation6 + $0x938] sm:$0xff]
      %v4361 = vld [vmem:[#allocation6 + $0x940] sm:$0xff]
      %v4362 = vld [vmem:[#allocation6 + $0x948] sm:$0xff]
      %v4363 = vld [vmem:[#allocation6 + $0x950] sm:$0xff]
      %v4364 = vld [vmem:[#allocation6 + $0x958] sm:$0xff]
      %v4365 = vld [vmem:[#allocation6 + $0x960] sm:$0xff]
      %v4366 = vld [vmem:[#allocation6 + $0x968] sm:$0xff]
      %v4367 = vld [vmem:[#allocation6 + $0x970] sm:$0xff]
      %v4368 = vld [vmem:[#allocation6 + $0x978] sm:$0xff]
      %v4369 = vld [vmem:[#allocation6 + $0x980] sm:$0xff]
      %v4370 = vld [vmem:[#allocation6 + $0x988] sm:$0xff]
      %v4371 = vld [vmem:[#allocation6 + $0x990] sm:$0xff]
      %v4372 = vld [vmem:[#allocation6 + $0x998] sm:$0xff]
      %v4373 = vld [vmem:[#allocation6 + $0x9a0] sm:$0xff]
      %v4374 = vld [vmem:[#allocation6 + $0x9a8] sm:$0xff]
      %v4375 = vld [vmem:[#allocation6 + $0x9b0] sm:$0xff]
      %v4376 = vld [vmem:[#allocation6 + $0x9b8] sm:$0xff]
      %v4377 = vld [vmem:[#allocation6 + $0x9c0] sm:$0xff]
      %v4378 = vld [vmem:[#allocation6 + $0x9c8] sm:$0xff]
      %v4379 = vld [vmem:[#allocation6 + $0x9d0] sm:$0xff]
      %v4380 = vld [vmem:[#allocation6 + $0x9d8] sm:$0xff]
      %v4381 = vld [vmem:[#allocation6 + $0x9e0] sm:$0xff]
      %v4382 = vld [vmem:[#allocation6 + $0x9e8] sm:$0xff]
      %v4383 = vld [vmem:[#allocation6 + $0x9f0] sm:$0xff]
      %v4384 = vld [vmem:[#allocation6 + $0x9f8] sm:$0xff]
      %v4385 = vld [vmem:[#allocation6 + $0xa00] sm:$0xff]
      %v4386 = vld [vmem:[#allocation6 + $0xa08] sm:$0xff]
      %v4387 = vld [vmem:[#allocation6 + $0xa10] sm:$0xff]
      %v4388 = vld [vmem:[#allocation6 + $0xa18] sm:$0xff]
      %v4389 = vld [vmem:[#allocation6 + $0xa20] sm:$0xff]
      %v4390 = vld [vmem:[#allocation6 + $0xa28] sm:$0xff]
      %v4391 = vld [vmem:[#allocation6 + $0xa30] sm:$0xff]
      %v4392 = vld [vmem:[#allocation6 + $0xa38] sm:$0xff]
      %v4393 = vld [vmem:[#allocation6 + $0xa40] sm:$0xff]
      %v4394 = vld [vmem:[#allocation6 + $0xa48] sm:$0xff]
      %v4395 = vld [vmem:[#allocation6 + $0xa50] sm:$0xff]
      %v4396 = vld [vmem:[#allocation6 + $0xa58] sm:$0xff]
      %v4397 = vld [vmem:[#allocation6 + $0xa60] sm:$0xff]
      %v4398 = vld [vmem:[#allocation6 + $0xa68] sm:$0xff]
      %v4399 = vld [vmem:[#allocation6 + $0xa70] sm:$0xff]
      %v4400 = vld [vmem:[#allocation6 + $0xa78] sm:$0xff]
      %v4401 = vld [vmem:[#allocation6 + $0xa80] sm:$0xff]
      %v4402 = vld [vmem:[#allocation6 + $0xa88] sm:$0xff]
      %v4403 = vld [vmem:[#allocation6 + $0xa90] sm:$0xff]
      %v4404 = vld [vmem:[#allocation6 + $0xa98] sm:$0xff]
      %v4405 = vld [vmem:[#allocation6 + $0xaa0] sm:$0xff]
      %v4406 = vld [vmem:[#allocation6 + $0xaa8] sm:$0xff]
      %v4407 = vld [vmem:[#allocation6 + $0xab0] sm:$0xff]
      %v4408 = vld [vmem:[#allocation6 + $0xab8] sm:$0xff]
      %v4409 = vld [vmem:[#allocation6 + $0xac0] sm:$0xff]
      %v4410 = vld [vmem:[#allocation6 + $0xac8] sm:$0xff]
      %v4411 = vld [vmem:[#allocation6 + $0xad0] sm:$0xff]
      %v4412 = vld [vmem:[#allocation6 + $0xad8] sm:$0xff]
      %v4413 = vld [vmem:[#allocation6 + $0xae0] sm:$0xff]
      %v4414 = vld [vmem:[#allocation6 + $0xae8] sm:$0xff]
      %v4415 = vld [vmem:[%s4] sm:$0xff]
      %4417 = vset.pattern.permute.xlu0 0
      %4418 = vperm.xlu0 %4417, %v4415
      %v4419 = vpop.permute.xlu0 %4418
      %v4422 = vsel %vm1070, %v1550, 0
      %4424 = vmatprep.subr.mxu0 %v4066
      %4425 = vmatpush1.msra.mxu0 %v4065
      %4426 = vmatprep.subr.mxu0 %v4073
      %4427 = vmatpush1.msra.mxu0 %v4072
      %4428 = vmatprep.subr.mxu0 %v4080
      %4429 = vmatpush1.msra.mxu0 %v4079
      %4430 = vmatprep.subr.mxu0 %v4087
      %4431 = vmatpush1.msra.mxu0 %v4086
      %4432 = vmatprep.subr.mxu0 %v4094
      %4433 = vmatpush1.msra.mxu0 %v4093
      %4434 = vmatprep.subr.mxu0 %v4101
      %4435 = vmatpush1.msra.mxu0 %v4100
      %4436 = vmatprep.subr.mxu0 %v4108
      %4437 = vmatpush1.msra.mxu0 %v4107
      %4438 = vmatprep.subr.mxu0 %v4115
      %4439 = vmatpush1.msra.mxu0 %v4114
      %4440 = vmatprep.subr.mxu0 %v4122
      %4441 = vmatpush1.msra.mxu0 %v4121
      %4442 = vmatprep.subr.mxu0 %v4129
      %4443 = vmatpush1.msra.mxu0 %v4128
      %4444 = vmatprep.subr.mxu0 %v4136
      %4445 = vmatpush1.msra.mxu0 %v4135
      %4446 = vmatprep.subr.mxu0 %v4143
      %4447 = vmatpush1.msra.mxu0 %v4142
      %4448 = vmatprep.subr.mxu0 %v4150
      %4449 = vmatpush1.msra.mxu0 %v4149
      %4450 = vmatprep.subr.mxu0 %v4157
      %4451 = vmatpush1.msra.mxu0 %v4156
      %4452 = vmatprep.subr.mxu0 %v4164
      %4453 = vmatpush1.msra.mxu0 %v4163
      %4454 = vmatprep.subr.mxu0 %v4171
      %4455 = vmatpush1.msra.mxu0 %v4170
      %4456 = vmatprep.subr.mxu0 %v4178
      %4457 = vmatpush1.msra.mxu0 %v4177
      %4458 = vmatprep.subr.mxu0 %v4185
      %4459 = vmatpush1.msra.mxu0 %v4184
      %4460 = vmatprep.subr.mxu0 %v4192
      %4461 = vmatpush1.msra.mxu0 %v4191
      %4462 = vmatprep.subr.mxu0 %v4199
      %4463 = vmatpush1.msra.mxu0 %v4198
      %4464 = vmatprep.subr.mxu0 %v4206
      %4465 = vmatpush1.msra.mxu0 %v4205
      %4466 = vmatprep.subr.mxu0 %v4213
      %4467 = vmatpush1.msra.mxu0 %v4212
      %4468 = vmatprep.subr.mxu0 %v4220
      %4469 = vmatpush1.msra.mxu0 %v4219
      %4470 = vmatprep.subr.mxu0 %v4227
      %4471 = vmatpush1.msra.mxu0 %v4226
      %4472 = vmatprep.subr.mxu0 %v4234
      %4473 = vmatpush1.msra.mxu0 %v4233
      %4474 = vmatprep.subr.mxu0 %v4241
      %4475 = vmatpush1.msra.mxu0 %v4240
      %4476 = vmatprep.subr.mxu0 %v4248
      %4477 = vmatpush1.msra.mxu0 %v4247
      %4478 = vmatprep.subr.mxu0 %v4255
      %4479 = vmatpush1.msra.mxu0 %v4254
      %4480 = vmatprep.subr.mxu0 %v4262
      %4481 = vmatpush1.msra.mxu0 %v4261
      %4482 = vmatprep.subr.mxu0 %v4269
      %4483 = vmatpush1.msra.mxu0 %v4268
      %4484 = vmatprep.subr.mxu0 %v4276
      %4485 = vmatpush1.msra.mxu0 %v4275
      %4486 = vmatprep.subr.mxu0 %v4283
      %4487 = vmatpush1.msra.mxu0 %v4282
      %4488 = vmatprep.mubr.f32.mxu0 %v1548
      %4489 = vmatmul.mubr.f32.gmra.mrb[0].mxu0 %v1547
      %v4490 = vpop.f32.mrb[0].mxu0
      %v4491 = vadd.f32 %v4419, %v4490
      %v4492 = vpop.f32.mrb[0].mxu0
      %v4493 = vadd.f32 %v4419, %v4492
      %4494 = vdwg.mxu0
      %4495 = vmatprep.subr.mxu0 %v4290
      %4496 = vmatpush1.msra.mxu0 %v4289
      %4497 = vmatprep.subr.mxu0 %v4297
      %4498 = vmatpush1.msra.mxu0 %v4296
      %4499 = vmatprep.subr.mxu0 %v4304
      %4500 = vmatpush1.msra.mxu0 %v4303
      %4501 = vmatprep.subr.mxu0 %v4311
      %4502 = vmatpush1.msra.mxu0 %v4310
      %4503 = vmatprep.subr.mxu0 %v4318
      %4504 = vmatpush1.msra.mxu0 %v4317
      %4505 = vmatprep.subr.mxu0 %v4325
      %4506 = vmatpush1.msra.mxu0 %v4324
      %4507 = vmatprep.subr.mxu0 %v4332
      %4508 = vmatpush1.msra.mxu0 %v4331
      %4509 = vmatprep.subr.mxu0 %v4339
      %4510 = vmatpush1.msra.mxu0 %v4338
      %4511 = vmatprep.subr.mxu0 %v4346
      %4512 = vmatpush1.msra.mxu0 %v4345
      %4513 = vmatprep.subr.mxu0 %v4353
      %4514 = vmatpush1.msra.mxu0 %v4352
      %4515 = vmatprep.subr.mxu0 %v4360
      %4516 = vmatpush1.msra.mxu0 %v4359
      %4517 = vmatprep.subr.mxu0 %v4367
      %4518 = vmatpush1.msra.mxu0 %v4366
      %4519 = vmatprep.subr.mxu0 %v4374
      %4520 = vmatpush1.msra.mxu0 %v4373
      %4521 = vmatprep.subr.mxu0 %v4381
      %4522 = vmatpush1.msra.mxu0 %v4380
      %4523 = vmatprep.subr.mxu0 %v4388
      %4524 = vmatpush1.msra.mxu0 %v4387
      %4525 = vmatprep.subr.mxu0 %v4395
      %4526 = vmatpush1.msra.mxu0 %v4394
      %4527 = vmatprep.subr.mxu0 %v4402
      %4528 = vmatpush1.msra.mxu0 %v4401
      %4529 = vmatprep.subr.mxu0 %v4409
      %4530 = vmatpush1.msra.mxu0 %v4408
      %4531 = vmatprep.subr.mxu0 0.0
      %4532 = vmatpush1.msra.mxu0 0.0
      %4533 = vmatprep.subr.mxu0 0.0
      %4534 = vmatpush1.msra.mxu0 0.0
      %4535 = vmatprep.subr.mxu0 0.0
      %4536 = vmatpush1.msra.mxu0 0.0
      %4537 = vmatprep.subr.mxu0 0.0
      %4538 = vmatpush1.msra.mxu0 0.0
      %4539 = vmatprep.subr.mxu0 0.0
      %4540 = vmatpush1.msra.mxu0 0.0
      %4541 = vmatprep.subr.mxu0 0.0
      %4542 = vmatpush1.msra.mxu0 0.0
      %4543 = vmatprep.subr.mxu0 0.0
      %4544 = vmatpush1.msra.mxu0 0.0
      %4545 = vmatprep.subr.mxu0 0.0
      %4546 = vmatpush1.msra.mxu0 0.0
      %4547 = vmatprep.subr.mxu0 0.0
      %4548 = vmatpush1.msra.mxu0 0.0
      %4549 = vmatprep.subr.mxu0 0.0
      %4550 = vmatpush1.msra.mxu0 0.0
      %4551 = vmatprep.subr.mxu0 0.0
      %4552 = vmatpush1.msra.mxu0 0.0
      %4553 = vmatprep.subr.mxu0 0.0
      %4554 = vmatpush1.msra.mxu0 0.0
      %4555 = vmatprep.subr.mxu0 0.0
      %4556 = vmatpush1.msra.mxu0 0.0
      %4557 = vmatprep.subr.mxu0 0.0
      %4558 = vmatpush1.msra.mxu0 0.0
      %4559 = vmatprep.mubr.f32.mxu0 %v4422
      %4560 = vmatmul.mubr.f32.gmra.mrb[0].mxu0 %v1549
      %v4561 = vpop.f32.mrb[0].mxu0
      %v4562 = vadd.f32 %v4491, %v4561
      %v4563 = vpop.f32.mrb[0].mxu0
      %v4564 = vadd.f32 %v4493, %v4563
      %4565 = vdwg.mxu0
      %4566 = vmatprep.subr.mxu0 %v4068
      %4567 = vmatpush1.msra.mxu0 %v4067
      %4568 = vmatprep.subr.mxu0 %v4075
      %4569 = vmatpush1.msra.mxu0 %v4074
      %4570 = vmatprep.subr.mxu0 %v4082
      %4571 = vmatpush1.msra.mxu0 %v4081
      %4572 = vmatprep.subr.mxu0 %v4089
      %4573 = vmatpush1.msra.mxu0 %v4088
      %4574 = vmatprep.subr.mxu0 %v4096
      %4575 = vmatpush1.msra.mxu0 %v4095
      %4576 = vmatprep.subr.mxu0 %v4103
      %4577 = vmatpush1.msra.mxu0 %v4102
      %4578 = vmatprep.subr.mxu0 %v4110
      %4579 = vmatpush1.msra.mxu0 %v4109
      %4580 = vmatprep.subr.mxu0 %v4117
      %4581 = vmatpush1.msra.mxu0 %v4116
      %4582 = vmatprep.subr.mxu0 %v4124
      %4583 = vmatpush1.msra.mxu0 %v4123
      %4584 = vmatprep.subr.mxu0 %v4131
      %4585 = vmatpush1.msra.mxu0 %v4130
      %4586 = vmatprep.subr.mxu0 %v4138
      %4587 = vmatpush1.msra.mxu0 %v4137
      %4588 = vmatprep.subr.mxu0 %v4145
      %4589 = vmatpush1.msra.mxu0 %v4144
      %4590 = vmatprep.subr.mxu0 %v4152
      %4591 = vmatpush1.msra.mxu0 %v4151
      %4592 = vmatprep.subr.mxu0 %v4159
      %4593 = vmatpush1.msra.mxu0 %v4158
      %4594 = vmatprep.subr.mxu0 %v4166
      %4595 = vmatpush1.msra.mxu0 %v4165
      %4596 = vmatprep.subr.mxu0 %v4173
      %4597 = vmatpush1.msra.mxu0 %v4172
      %4598 = vmatprep.subr.mxu0 %v4180
      %4599 = vmatpush1.msra.mxu0 %v4179
      %4600 = vmatprep.subr.mxu0 %v4187
      %4601 = vmatpush1.msra.mxu0 %v4186
      %4602 = vmatprep.subr.mxu0 %v4194
      %4603 = vmatpush1.msra.mxu0 %v4193
      %4604 = vmatprep.subr.mxu0 %v4201
      %4605 = vmatpush1.msra.mxu0 %v4200
      %4606 = vmatprep.subr.mxu0 %v4208
      %4607 = vmatpush1.msra.mxu0 %v4207
      %4608 = vmatprep.subr.mxu0 %v4215
      %4609 = vmatpush1.msra.mxu0 %v4214
      %4610 = vmatprep.subr.mxu0 %v4222
      %4611 = vmatpush1.msra.mxu0 %v4221
      %4612 = vmatprep.subr.mxu0 %v4229
      %4613 = vmatpush1.msra.mxu0 %v4228
      %4614 = vmatprep.subr.mxu0 %v4236
      %4615 = vmatpush1.msra.mxu0 %v4235
      %4616 = vmatprep.subr.mxu0 %v4243
      %4617 = vmatpush1.msra.mxu0 %v4242
      %4618 = vmatprep.subr.mxu0 %v4250
      %4619 = vmatpush1.msra.mxu0 %v4249
      %4620 = vmatprep.subr.mxu0 %v4257
      %4621 = vmatpush1.msra.mxu0 %v4256
      %4622 = vmatprep.subr.mxu0 %v4264
      %4623 = vmatpush1.msra.mxu0 %v4263
      %4624 = vmatprep.subr.mxu0 %v4271
      %4625 = vmatpush1.msra.mxu0 %v4270
      %4626 = vmatprep.subr.mxu0 %v4278
      %4627 = vmatpush1.msra.mxu0 %v4277
      %4628 = vmatprep.subr.mxu0 %v4285
      %4629 = vmatpush1.msra.mxu0 %v4284
      %4630 = vmatprep.mubr.f32.mxu0 %v1548
      %4631 = vmatmul.mubr.f32.gmra.mrb[0].mxu0 %v1547
      %v4632 = vpop.f32.mrb[0].mxu0
      %v4633 = vadd.f32 %v4419, %v4632
      %v4634 = vpop.f32.mrb[0].mxu0
      %v4635 = vadd.f32 %v4419, %v4634
      %4636 = vdwg.mxu0
      %4637 = vmatprep.subr.mxu0 %v4292
      %4638 = vmatpush1.msra.mxu0 %v4291
      %4639 = vmatprep.subr.mxu0 %v4299
      %4640 = vmatpush1.msra.mxu0 %v4298
      %4641 = vmatprep.subr.mxu0 %v4306
      %4642 = vmatpush1.msra.mxu0 %v4305
      %4643 = vmatprep.subr.mxu0 %v4313
      %4644 = vmatpush1.msra.mxu0 %v4312
      %4645 = vmatprep.subr.mxu0 %v4320
      %4646 = vmatpush1.msra.mxu0 %v4319
      %4647 = vmatprep.subr.mxu0 %v4327
      %4648 = vmatpush1.msra.mxu0 %v4326
      %4649 = vmatprep.subr.mxu0 %v4334
      %4650 = vmatpush1.msra.mxu0 %v4333
      %4651 = vmatprep.subr.mxu0 %v4341
      %4652 = vmatpush1.msra.mxu0 %v4340
      %4653 = vmatprep.subr.mxu0 %v4348
      %4654 = vmatpush1.msra.mxu0 %v4347
      %4655 = vmatprep.subr.mxu0 %v4355
      %4656 = vmatpush1.msra.mxu0 %v4354
      %4657 = vmatprep.subr.mxu0 %v4362
      %4658 = vmatpush1.msra.mxu0 %v4361
      %4659 = vmatprep.subr.mxu0 %v4369
      %4660 = vmatpush1.msra.mxu0 %v4368
      %4661 = vmatprep.subr.mxu0 %v4376
      %4662 = vmatpush1.msra.mxu0 %v4375
      %4663 = vmatprep.subr.mxu0 %v4383
      %4664 = vmatpush1.msra.mxu0 %v4382
      %4665 = vmatprep.subr.mxu0 %v4390
      %4666 = vmatpush1.msra.mxu0 %v4389
      %4667 = vmatprep.subr.mxu0 %v4397
      %4668 = vmatpush1.msra.mxu0 %v4396
      %4669 = vmatprep.subr.mxu0 %v4404
      %4670 = vmatpush1.msra.mxu0 %v4403
      %4671 = vmatprep.subr.mxu0 %v4411
      %4672 = vmatpush1.msra.mxu0 %v4410
      %4673 = vmatprep.subr.mxu0 0.0
      %4674 = vmatpush1.msra.mxu0 0.0
      %4675 = vmatprep.subr.mxu0 0.0
      %4676 = vmatpush1.msra.mxu0 0.0
      %4677 = vmatprep.subr.mxu0 0.0
      %4678 = vmatpush1.msra.mxu0 0.0
      %4679 = vmatprep.subr.mxu0 0.0
      %4680 = vmatpush1.msra.mxu0 0.0
      %4681 = vmatprep.subr.mxu0 0.0
      %4682 = vmatpush1.msra.mxu0 0.0
      %4683 = vmatprep.subr.mxu0 0.0
      %4684 = vmatpush1.msra.mxu0 0.0
      %4685 = vmatprep.subr.mxu0 0.0
      %4686 = vmatpush1.msra.mxu0 0.0
      %4687 = vmatprep.subr.mxu0 0.0
      %4688 = vmatpush1.msra.mxu0 0.0
      %4689 = vmatprep.subr.mxu0 0.0
      %4690 = vmatpush1.msra.mxu0 0.0
      %4691 = vmatprep.subr.mxu0 0.0
      %4692 = vmatpush1.msra.mxu0 0.0
      %4693 = vmatprep.subr.mxu0 0.0
      %4694 = vmatpush1.msra.mxu0 0.0
      %4695 = vmatprep.subr.mxu0 0.0
      %4696 = vmatpush1.msra.mxu0 0.0
      %4697 = vmatprep.subr.mxu0 0.0
      %4698 = vmatpush1.msra.mxu0 0.0
      %4699 = vmatprep.subr.mxu0 0.0
      %4700 = vmatpush1.msra.mxu0 0.0
      %4701 = vmatprep.mubr.f32.mxu0 %v4422
      %4702 = vmatmul.mubr.f32.gmra.mrb[0].mxu0 %v1549
      %v4703 = vpop.f32.mrb[0].mxu0
      %v4704 = vadd.f32 %v4633, %v4703
      %v4705 = vpop.f32.mrb[0].mxu0
      %v4706 = vadd.f32 %v4635, %v4705
      %4707 = vdwg.mxu0
      %4708 = vmatprep.subr.mxu0 %v4070
      %4709 = vmatpush1.msra.mxu0 %v4069
      %4710 = vmatprep.subr.mxu0 %v4077
      %4711 = vmatpush1.msra.mxu0 %v4076
      %4712 = vmatprep.subr.mxu0 %v4084
      %4713 = vmatpush1.msra.mxu0 %v4083
      %4714 = vmatprep.subr.mxu0 %v4091
      %4715 = vmatpush1.msra.mxu0 %v4090
      %4716 = vmatprep.subr.mxu0 %v4098
      %4717 = vmatpush1.msra.mxu0 %v4097
      %4718 = vmatprep.subr.mxu0 %v4105
      %4719 = vmatpush1.msra.mxu0 %v4104
      %4720 = vmatprep.subr.mxu0 %v4112
      %4721 = vmatpush1.msra.mxu0 %v4111
      %4722 = vmatprep.subr.mxu0 %v4119
      %4723 = vmatpush1.msra.mxu0 %v4118
      %4724 = vmatprep.subr.mxu0 %v4126
      %4725 = vmatpush1.msra.mxu0 %v4125
      %4726 = vmatprep.subr.mxu0 %v4133
      %4727 = vmatpush1.msra.mxu0 %v4132
      %4728 = vmatprep.subr.mxu0 %v4140
      %4729 = vmatpush1.msra.mxu0 %v4139
      %4730 = vmatprep.subr.mxu0 %v4147
      %4731 = vmatpush1.msra.mxu0 %v4146
      %4732 = vmatprep.subr.mxu0 %v4154
      %4733 = vmatpush1.msra.mxu0 %v4153
      %4734 = vmatprep.subr.mxu0 %v4161
      %4735 = vmatpush1.msra.mxu0 %v4160
      %4736 = vmatprep.subr.mxu0 %v4168
      %4737 = vmatpush1.msra.mxu0 %v4167
      %4738 = vmatprep.subr.mxu0 %v4175
      %4739 = vmatpush1.msra.mxu0 %v4174
      %4740 = vmatprep.subr.mxu0 %v4182
      %4741 = vmatpush1.msra.mxu0 %v4181
      %4742 = vmatprep.subr.mxu0 %v4189
      %4743 = vmatpush1.msra.mxu0 %v4188
      %4744 = vmatprep.subr.mxu0 %v4196
      %4745 = vmatpush1.msra.mxu0 %v4195
      %4746 = vmatprep.subr.mxu0 %v4203
      %4747 = vmatpush1.msra.mxu0 %v4202
      %4748 = vmatprep.subr.mxu0 %v4210
      %4749 = vmatpush1.msra.mxu0 %v4209
      %4750 = vmatprep.subr.mxu0 %v4217
      %4751 = vmatpush1.msra.mxu0 %v4216
      %4752 = vmatprep.subr.mxu0 %v4224
      %4753 = vmatpush1.msra.mxu0 %v4223
      %4754 = vmatprep.subr.mxu0 %v4231
      %4755 = vmatpush1.msra.mxu0 %v4230
      %4756 = vmatprep.subr.mxu0 %v4238
      %4757 = vmatpush1.msra.mxu0 %v4237
      %4758 = vmatprep.subr.mxu0 %v4245
      %4759 = vmatpush1.msra.mxu0 %v4244
      %4760 = vmatprep.subr.mxu0 %v4252
      %4761 = vmatpush1.msra.mxu0 %v4251
      %4762 = vmatprep.subr.mxu0 %v4259
      %4763 = vmatpush1.msra.mxu0 %v4258
      %4764 = vmatprep.subr.mxu0 %v4266
      %4765 = vmatpush1.msra.mxu0 %v4265
      %4766 = vmatprep.subr.mxu0 %v4273
      %4767 = vmatpush1.msra.mxu0 %v4272
      %4768 = vmatprep.subr.mxu0 %v4280
      %4769 = vmatpush1.msra.mxu0 %v4279
      %4770 = vmatprep.subr.mxu0 %v4287
      %4771 = vmatpush1.msra.mxu0 %v4286
      %4772 = vmatprep.mubr.f32.mxu0 %v1548
      %4773 = vmatmul.mubr.f32.gmra.mrb[0].mxu0 %v1547
      %v4774 = vpop.f32.mrb[0].mxu0
      %v4775 = vadd.f32 %v4419, %v4774
      %v4776 = vpop.f32.mrb[0].mxu0
      %v4777 = vadd.f32 %v4419, %v4776
      %4778 = vdwg.mxu0
      %4779 = vmatprep.subr.mxu0 %v4294
      %4780 = vmatpush1.msra.mxu0 %v4293
      %4781 = vmatprep.subr.mxu0 %v4301
      %4782 = vmatpush1.msra.mxu0 %v4300
      %4783 = vmatprep.subr.mxu0 %v4308
      %4784 = vmatpush1.msra.mxu0 %v4307
      %4785 = vmatprep.subr.mxu0 %v4315
      %4786 = vmatpush1.msra.mxu0 %v4314
      %4787 = vmatprep.subr.mxu0 %v4322
      %4788 = vmatpush1.msra.mxu0 %v4321
      %4789 = vmatprep.subr.mxu0 %v4329
      %4790 = vmatpush1.msra.mxu0 %v4328
      %4791 = vmatprep.subr.mxu0 %v4336
      %4792 = vmatpush1.msra.mxu0 %v4335
      %4793 = vmatprep.subr.mxu0 %v4343
      %4794 = vmatpush1.msra.mxu0 %v4342
      %4795 = vmatprep.subr.mxu0 %v4350
      %4796 = vmatpush1.msra.mxu0 %v4349
      %4797 = vmatprep.subr.mxu0 %v4357
      %4798 = vmatpush1.msra.mxu0 %v4356
      %4799 = vmatprep.subr.mxu0 %v4364
      %4800 = vmatpush1.msra.mxu0 %v4363
      %4801 = vmatprep.subr.mxu0 %v4371
      %4802 = vmatpush1.msra.mxu0 %v4370
      %4803 = vmatprep.subr.mxu0 %v4378
      %4804 = vmatpush1.msra.mxu0 %v4377
      %4805 = vmatprep.subr.mxu0 %v4385
      %4806 = vmatpush1.msra.mxu0 %v4384
      %4807 = vmatprep.subr.mxu0 %v4392
      %4808 = vmatpush1.msra.mxu0 %v4391
      %4809 = vmatprep.subr.mxu0 %v4399
      %4810 = vmatpush1.msra.mxu0 %v4398
      %4811 = vmatprep.subr.mxu0 %v4406
      %4812 = vmatpush1.msra.mxu0 %v4405
      %4813 = vmatprep.subr.mxu0 %v4413
      %4814 = vmatpush1.msra.mxu0 %v4412
      %4815 = vmatprep.subr.mxu0 0.0
      %4816 = vmatpush1.msra.mxu0 0.0
      %4817 = vmatprep.subr.mxu0 0.0
      %4818 = vmatpush1.msra.mxu0 0.0
      %4819 = vmatprep.subr.mxu0 0.0
      %4820 = vmatpush1.msra.mxu0 0.0
      %4821 = vmatprep.subr.mxu0 0.0
      %4822 = vmatpush1.msra.mxu0 0.0
      %4823 = vmatprep.subr.mxu0 0.0
      %4824 = vmatpush1.msra.mxu0 0.0
      %4825 = vmatprep.subr.mxu0 0.0
      %4826 = vmatpush1.msra.mxu0 0.0
      %4827 = vmatprep.subr.mxu0 0.0
      %4828 = vmatpush1.msra.mxu0 0.0
      %4829 = vmatprep.subr.mxu0 0.0
      %4830 = vmatpush1.msra.mxu0 0.0
      %4831 = vmatprep.subr.mxu0 0.0
      %4832 = vmatpush1.msra.mxu0 0.0
      %4833 = vmatprep.subr.mxu0 0.0
      %4834 = vmatpush1.msra.mxu0 0.0
      %4835 = vmatprep.subr.mxu0 0.0
      %4836 = vmatpush1.msra.mxu0 0.0
      %4837 = vmatprep.subr.mxu0 0.0
      %4838 = vmatpush1.msra.mxu0 0.0
      %4839 = vmatprep.subr.mxu0 0.0
      %4840 = vmatpush1.msra.mxu0 0.0
      %4841 = vmatprep.subr.mxu0 0.0
      %4842 = vmatpush1.msra.mxu0 0.0
      %4843 = vmatprep.mubr.f32.mxu0 %v4422
      %4844 = vmatmul.mubr.f32.gmra.mrb[0].mxu0 %v1549
      %v4845 = vpop.f32.mrb[0].mxu0
      %v4846 = vadd.f32 %v4775, %v4845
      %v4847 = vpop.f32.mrb[0].mxu0
      %v4848 = vadd.f32 %v4777, %v4847
      %4849 = vdwg.mxu0
      %4850 = vmatprep.subr.mxu0 0.0
      %4851 = vmatpush1.msra.mxu0 %v4071
      %4852 = vmatprep.subr.mxu0 0.0
      %4853 = vmatpush1.msra.mxu0 %v4078
      %4854 = vmatprep.subr.mxu0 0.0
      %4855 = vmatpush1.msra.mxu0 %v4085
      %4856 = vmatprep.subr.mxu0 0.0
      %4857 = vmatpush1.msra.mxu0 %v4092
      %4858 = vmatprep.subr.mxu0 0.0
      %4859 = vmatpush1.msra.mxu0 %v4099
      %4860 = vmatprep.subr.mxu0 0.0
      %4861 = vmatpush1.msra.mxu0 %v4106
      %4862 = vmatprep.subr.mxu0 0.0
      %4863 = vmatpush1.msra.mxu0 %v4113
      %4864 = vmatprep.subr.mxu0 0.0
      %4865 = vmatpush1.msra.mxu0 %v4120
      %4866 = vmatprep.subr.mxu0 0.0
      %4867 = vmatpush1.msra.mxu0 %v4127
      %4868 = vmatprep.subr.mxu0 0.0
      %4869 = vmatpush1.msra.mxu0 %v4134
      %4870 = vmatprep.subr.mxu0 0.0
      %4871 = vmatpush1.msra.mxu0 %v4141
      %4872 = vmatprep.subr.mxu0 0.0
      %4873 = vmatpush1.msra.mxu0 %v4148
      %4874 = vmatprep.subr.mxu0 0.0
      %4875 = vmatpush1.msra.mxu0 %v4155
      %4876 = vmatprep.subr.mxu0 0.0
      %4877 = vmatpush1.msra.mxu0 %v4162
      %4878 = vmatprep.subr.mxu0 0.0
      %4879 = vmatpush1.msra.mxu0 %v4169
      %4880 = vmatprep.subr.mxu0 0.0
      %4881 = vmatpush1.msra.mxu0 %v4176
      %4882 = vmatprep.subr.mxu0 0.0
      %4883 = vmatpush1.msra.mxu0 %v4183
      %4884 = vmatprep.subr.mxu0 0.0
      %4885 = vmatpush1.msra.mxu0 %v4190
      %4886 = vmatprep.subr.mxu0 0.0
      %4887 = vmatpush1.msra.mxu0 %v4197
      %4888 = vmatprep.subr.mxu0 0.0
      %4889 = vmatpush1.msra.mxu0 %v4204
      %4890 = vmatprep.subr.mxu0 0.0
      %4891 = vmatpush1.msra.mxu0 %v4211
      %4892 = vmatprep.subr.mxu0 0.0
      %4893 = vmatpush1.msra.mxu0 %v4218
      %4894 = vmatprep.subr.mxu0 0.0
      %4895 = vmatpush1.msra.mxu0 %v4225
      %4896 = vmatprep.subr.mxu0 0.0
      %4897 = vmatpush1.msra.mxu0 %v4232
      %4898 = vmatprep.subr.mxu0 0.0
      %4899 = vmatpush1.msra.mxu0 %v4239
      %4900 = vmatprep.subr.mxu0 0.0
      %4901 = vmatpush1.msra.mxu0 %v4246
      %4902 = vmatprep.subr.mxu0 0.0
      %4903 = vmatpush1.msra.mxu0 %v4253
      %4904 = vmatprep.subr.mxu0 0.0
      %4905 = vmatpush1.msra.mxu0 %v4260
      %4906 = vmatprep.subr.mxu0 0.0
      %4907 = vmatpush1.msra.mxu0 %v4267
      %4908 = vmatprep.subr.mxu0 0.0
      %4909 = vmatpush1.msra.mxu0 %v4274
      %4910 = vmatprep.subr.mxu0 0.0
      %4911 = vmatpush1.msra.mxu0 %v4281
      %4912 = vmatprep.subr.mxu0 0.0
      %4913 = vmatpush1.msra.mxu0 %v4288
      %4914 = vmatprep.mubr.f32.mxu0 %v1548
      %4915 = vmatmul.mubr.f32.gmra.mrb[0].mxu0 %v1547
      %v4916 = vpop.f32.mrb[0].mxu0
      %v4917 = vadd.f32 %v4419, %v4916
      %v4918 = vpop.f32.mrb[0].mxu0
      %4919 = vdwg.mxu0
      %4920 = vmatprep.subr.mxu0 0.0
      %4921 = vmatpush1.msra.mxu0 %v4295
      %4922 = vmatprep.subr.mxu0 0.0
      %4923 = vmatpush1.msra.mxu0 %v4302
      %4924 = vmatprep.subr.mxu0 0.0
      %4925 = vmatpush1.msra.mxu0 %v4309
      %4926 = vmatprep.subr.mxu0 0.0
      %4927 = vmatpush1.msra.mxu0 %v4316
      %4928 = vmatprep.subr.mxu0 0.0
      %4929 = vmatpush1.msra.mxu0 %v4323
      %4930 = vmatprep.subr.mxu0 0.0
      %4931 = vmatpush1.msra.mxu0 %v4330
      %4932 = vmatprep.subr.mxu0 0.0
      %4933 = vmatpush1.msra.mxu0 %v4337
      %4934 = vmatprep.subr.mxu0 0.0
      %4935 = vmatpush1.msra.mxu0 %v4344
      %4936 = vmatprep.subr.mxu0 0.0
      %4937 = vmatpush1.msra.mxu0 %v4351
      %4938 = vmatprep.subr.mxu0 0.0
      %4939 = vmatpush1.msra.mxu0 %v4358
      %4940 = vmatprep.subr.mxu0 0.0
      %4941 = vmatpush1.msra.mxu0 %v4365
      %4942 = vmatprep.subr.mxu0 0.0
      %4943 = vmatpush1.msra.mxu0 %v4372
      %4944 = vmatprep.subr.mxu0 0.0
      %4945 = vmatpush1.msra.mxu0 %v4379
      %4946 = vmatprep.subr.mxu0 0.0
      %4947 = vmatpush1.msra.mxu0 %v4386
      %4948 = vmatprep.subr.mxu0 0.0
      %4949 = vmatpush1.msra.mxu0 %v4393
      %4950 = vmatprep.subr.mxu0 0.0
      %4951 = vmatpush1.msra.mxu0 %v4400
      %4952 = vmatprep.subr.mxu0 0.0
      %4953 = vmatpush1.msra.mxu0 %v4407
      %4954 = vmatprep.subr.mxu0 0.0
      %4955 = vmatpush1.msra.mxu0 %v4414
      %4956 = vmatprep.subr.mxu0 0.0
      %4957 = vmatpush1.msra.mxu0 0.0
      %4958 = vmatprep.subr.mxu0 0.0
      %4959 = vmatpush1.msra.mxu0 0.0
      %4960 = vmatprep.subr.mxu0 0.0
      %4961 = vmatpush1.msra.mxu0 0.0
      %4962 = vmatprep.subr.mxu0 0.0
      %4963 = vmatpush1.msra.mxu0 0.0
      %4964 = vmatprep.subr.mxu0 0.0
      %4965 = vmatpush1.msra.mxu0 0.0
      %4966 = vmatprep.subr.mxu0 0.0
      %4967 = vmatpush1.msra.mxu0 0.0
      %4968 = vmatprep.subr.mxu0 0.0
      %4969 = vmatpush1.msra.mxu0 0.0
      %4970 = vmatprep.subr.mxu0 0.0
      %4971 = vmatpush1.msra.mxu0 0.0
      %4972 = vmatprep.subr.mxu0 0.0
      %4973 = vmatpush1.msra.mxu0 0.0
      %4974 = vmatprep.subr.mxu0 0.0
      %4975 = vmatpush1.msra.mxu0 0.0
      %4976 = vmatprep.subr.mxu0 0.0
      %4977 = vmatpush1.msra.mxu0 0.0
      %4978 = vmatprep.subr.mxu0 0.0
      %4979 = vmatpush1.msra.mxu0 0.0
      %4980 = vmatprep.subr.mxu0 0.0
      %4981 = vmatpush1.msra.mxu0 0.0
      %4982 = vmatprep.subr.mxu0 0.0
      %4983 = vmatpush1.msra.mxu0 0.0
      %4984 = vmatprep.mubr.f32.mxu0 %v4422
      %4985 = vmatmul.mubr.f32.gmra.mrb[0].mxu0 %v1549
      %v4986 = vpop.f32.mrb[0].mxu0
      %v4987 = vadd.f32 %v4917, %v4986
      %v4988 = vpop.f32.mrb[0].mxu0
      %4989 = vdwg.mxu0
      %v4990 = vmax.f32 %v4562, 0.0
      %v4991 = vmax.f32 %v4564, 0.0
      %v4992 = vmax.f32 %v4704, 0.0
      %v4993 = vmax.f32 %v4706, 0.0
      %v4994 = vmax.f32 %v4846, 0.0
      %v4995 = vmax.f32 %v4848, 0.0
      %v4996 = vmax.f32 %v4987, 0.0
      %v4997 = vld [vmem:[%s8] sm:$0xff]
      %v4998 = vld [vmem:[%s8 + $0x8] sm:$0xff]
      %v4999 = vld [vmem:[%s8 + $0x10] sm:$0xff]
      %v5000 = vld [vmem:[%s8 + $0x18] sm:$0x7]
      %vm5001 = vcmask 220160
      %v5003 = vsel %vm5001, %v4990, 0
      %vm5005 = vcmask 1042432
      %v5007 = vsel %vm5005, %v5000, 0
      %5009 = vmatprep.subr.mxu0 0.0
      %5010 = vmatpush1.msra.mxu0 %v4997
      %5011 = vmatprep.subr.mxu0 0.0
      %5012 = vmatpush1.msra.mxu0 %v4998
      %5013 = vmatprep.subr.mxu0 0.0
      %5014 = vmatpush1.msra.mxu0 %v4999
      %5015 = vmatprep.subr.mxu0 0.0
      %5016 = vmatpush1.msra.mxu0 %v5007
      %5017 = vmatprep.subr.mxu0 0.0
      %5018 = vmatpush1.msra.mxu0 0.0
      %5019 = vmatprep.subr.mxu0 0.0
      %5020 = vmatpush1.msra.mxu0 0.0
      %5021 = vmatprep.subr.mxu0 0.0
      %5022 = vmatpush1.msra.mxu0 0.0
      %5023 = vmatprep.subr.mxu0 0.0
      %5024 = vmatpush1.msra.mxu0 0.0
      %5025 = vmatprep.subr.mxu0 0.0
      %5026 = vmatpush1.msra.mxu0 0.0
      %5027 = vmatprep.subr.mxu0 0.0
      %5028 = vmatpush1.msra.mxu0 0.0
      %5029 = vmatprep.subr.mxu0 0.0
      %5030 = vmatpush1.msra.mxu0 0.0
      %5031 = vmatprep.subr.mxu0 0.0
      %5032 = vmatpush1.msra.mxu0 0.0
      %5033 = vmatprep.subr.mxu0 0.0
      %5034 = vmatpush1.msra.mxu0 0.0
      %5035 = vmatprep.subr.mxu0 0.0
      %5036 = vmatpush1.msra.mxu0 0.0
      %5037 = vmatprep.subr.mxu0 0.0
      %5038 = vmatpush1.msra.mxu0 0.0
      %5039 = vmatprep.subr.mxu0 0.0
      %5040 = vmatpush1.msra.mxu0 0.0
      %5041 = vmatprep.subr.mxu0 0.0
      %5042 = vmatpush1.msra.mxu0 0.0
      %5043 = vmatprep.subr.mxu0 0.0
      %5044 = vmatpush1.msra.mxu0 0.0
      %5045 = vmatprep.subr.mxu0 0.0
      %5046 = vmatpush1.msra.mxu0 0.0
      %5047 = vmatprep.subr.mxu0 0.0
      %5048 = vmatpush1.msra.mxu0 0.0
      %5049 = vmatprep.subr.mxu0 0.0
      %5050 = vmatpush1.msra.mxu0 0.0
      %5051 = vmatprep.subr.mxu0 0.0
      %5052 = vmatpush1.msra.mxu0 0.0
      %5053 = vmatprep.subr.mxu0 0.0
      %5054 = vmatpush1.msra.mxu0 0.0
      %5055 = vmatprep.subr.mxu0 0.0
      %5056 = vmatpush1.msra.mxu0 0.0
      %5057 = vmatprep.subr.mxu0 0.0
      %5058 = vmatpush1.msra.mxu0 0.0
      %5059 = vmatprep.subr.mxu0 0.0
      %5060 = vmatpush1.msra.mxu0 0.0
      %5061 = vmatprep.subr.mxu0 0.0
      %5062 = vmatpush1.msra.mxu0 0.0
      %5063 = vmatprep.subr.mxu0 0.0
      %5064 = vmatpush1.msra.mxu0 0.0
      %5065 = vmatprep.subr.mxu0 0.0
      %5066 = vmatpush1.msra.mxu0 0.0
      %5067 = vmatprep.subr.mxu0 0.0
      %5068 = vmatpush1.msra.mxu0 0.0
      %5069 = vmatprep.subr.mxu0 0.0
      %5070 = vmatpush1.msra.mxu0 0.0
      %5071 = vmatprep.subr.mxu0 0.0
      %5072 = vmatpush1.msra.mxu0 0.0
      %5073 = vmatprep.mubr.f32.mxu0 0.0
      %5074 = vmatmul.mubr.f32.gmra.mrb[0].mxu0 %v5003
      %v5075 = vpop.f32.mrb[0].mxu0
      %v5076 = vadd.f32 0.0, %v5075
      %v5077 = vpop.f32.mrb[0].mxu0
      %5078 = vdwg.mxu0
      %vm5079 = vcmask 433152
      %5080 = vst.msk [vmem:[#allocation4] sm:$0xff] %vm5079, %v5076
      %5081 = vrot.lane.b32.xlu0 %v4990, 97
      %v5082 = vpop.permute.xlu0 %5081
      %v5083 = vsel %vm5001, %v5082, 0
      %5085 = vmatprep.subr.mxu0 0.0
      %5086 = vmatpush1.msra.mxu0 %v4997
      %5087 = vmatprep.subr.mxu0 0.0
      %5088 = vmatpush1.msra.mxu0 %v4998
      %5089 = vmatprep.subr.mxu0 0.0
      %5090 = vmatpush1.msra.mxu0 %v4999
      %5091 = vmatprep.subr.mxu0 0.0
      %5092 = vmatpush1.msra.mxu0 %v5007
      %5093 = vmatprep.subr.mxu0 0.0
      %5094 = vmatpush1.msra.mxu0 0.0
      %5095 = vmatprep.subr.mxu0 0.0
      %5096 = vmatpush1.msra.mxu0 0.0
      %5097 = vmatprep.subr.mxu0 0.0
      %5098 = vmatpush1.msra.mxu0 0.0
      %5099 = vmatprep.subr.mxu0 0.0
      %5100 = vmatpush1.msra.mxu0 0.0
      %5101 = vmatprep.subr.mxu0 0.0
      %5102 = vmatpush1.msra.mxu0 0.0
      %5103 = vmatprep.subr.mxu0 0.0
      %5104 = vmatpush1.msra.mxu0 0.0
      %5105 = vmatprep.subr.mxu0 0.0
      %5106 = vmatpush1.msra.mxu0 0.0
      %5107 = vmatprep.subr.mxu0 0.0
      %5108 = vmatpush1.msra.mxu0 0.0
      %5109 = vmatprep.subr.mxu0 0.0
      %5110 = vmatpush1.msra.mxu0 0.0
      %5111 = vmatprep.subr.mxu0 0.0
      %5112 = vmatpush1.msra.mxu0 0.0
      %5113 = vmatprep.subr.mxu0 0.0
      %5114 = vmatpush1.msra.mxu0 0.0
      %5115 = vmatprep.subr.mxu0 0.0
      %5116 = vmatpush1.msra.mxu0 0.0
      %5117 = vmatprep.subr.mxu0 0.0
      %5118 = vmatpush1.msra.mxu0 0.0
      %5119 = vmatprep.subr.mxu0 0.0
      %5120 = vmatpush1.msra.mxu0 0.0
      %5121 = vmatprep.subr.mxu0 0.0
      %5122 = vmatpush1.msra.mxu0 0.0
      %5123 = vmatprep.subr.mxu0 0.0
      %5124 = vmatpush1.msra.mxu0 0.0
      %5125 = vmatprep.subr.mxu0 0.0
      %5126 = vmatpush1.msra.mxu0 0.0
      %5127 = vmatprep.subr.mxu0 0.0
      %5128 = vmatpush1.msra.mxu0 0.0
      %5129 = vmatprep.subr.mxu0 0.0
      %5130 = vmatpush1.msra.mxu0 0.0
      %5131 = vmatprep.subr.mxu0 0.0
      %5132 = vmatpush1.msra.mxu0 0.0
      %5133 = vmatprep.subr.mxu0 0.0
      %5134 = vmatpush1.msra.mxu0 0.0
      %5135 = vmatprep.subr.mxu0 0.0
      %5136 = vmatpush1.msra.mxu0 0.0
      %5137 = vmatprep.subr.mxu0 0.0
      %5138 = vmatpush1.msra.mxu0 0.0
      %5139 = vmatprep.subr.mxu0 0.0
      %5140 = vmatpush1.msra.mxu0 0.0
      %5141 = vmatprep.subr.mxu0 0.0
      %5142 = vmatpush1.msra.mxu0 0.0
      %5143 = vmatprep.subr.mxu0 0.0
      %5144 = vmatpush1.msra.mxu0 0.0
      %5145 = vmatprep.subr.mxu0 0.0
      %5146 = vmatpush1.msra.mxu0 0.0
      %5147 = vmatprep.subr.mxu0 0.0
      %5148 = vmatpush1.msra.mxu0 0.0
      %5149 = vmatprep.mubr.f32.mxu0 0.0
      %5150 = vmatmul.mubr.f32.gmra.mrb[0].mxu0 %v5083
      %v5151 = vpop.f32.mrb[0].mxu0
      %v5152 = vadd.f32 0.0, %v5151
      %v5153 = vpop.f32.mrb[0].mxu0
      %5154 = vdwg.mxu0
      %5156 = vrot.lane.b32.xlu0 %v5152, 106
      %v5157 = vpop.permute.xlu0 %5156
      %vm5159 = vcmask 1048400
      %5160 = vst.msk [vmem:[#allocation4] sm:$0xff] %vm5159, %v5157
      %5161 = vst.msk [vmem:[#allocation4 + $0x8] sm:$0xff] %vm3567, %v5157
      %5162 = vrot.lane.b32.xlu0 %v4990, 66
      %v5163 = vpop.permute.xlu0 %5162
      %v5164 = vsel %vm5001, %v5163, 0
      %5166 = vmatprep.subr.mxu0 0.0
      %5167 = vmatpush1.msra.mxu0 %v4997
      %5168 = vmatprep.subr.mxu0 0.0
      %5169 = vmatpush1.msra.mxu0 %v4998
      %5170 = vmatprep.subr.mxu0 0.0
      %5171 = vmatpush1.msra.mxu0 %v4999
      %5172 = vmatprep.subr.mxu0 0.0
      %5173 = vmatpush1.msra.mxu0 %v5007
      %5174 = vmatprep.subr.mxu0 0.0
      %5175 = vmatpush1.msra.mxu0 0.0
      %5176 = vmatprep.subr.mxu0 0.0
      %5177 = vmatpush1.msra.mxu0 0.0
      %5178 = vmatprep.subr.mxu0 0.0
      %5179 = vmatpush1.msra.mxu0 0.0
      %5180 = vmatprep.subr.mxu0 0.0
      %5181 = vmatpush1.msra.mxu0 0.0
      %5182 = vmatprep.subr.mxu0 0.0
      %5183 = vmatpush1.msra.mxu0 0.0
      %5184 = vmatprep.subr.mxu0 0.0
      %5185 = vmatpush1.msra.mxu0 0.0
      %5186 = vmatprep.subr.mxu0 0.0
      %5187 = vmatpush1.msra.mxu0 0.0
      %5188 = vmatprep.subr.mxu0 0.0
      %5189 = vmatpush1.msra.mxu0 0.0
      %5190 = vmatprep.subr.mxu0 0.0
      %5191 = vmatpush1.msra.mxu0 0.0
      %5192 = vmatprep.subr.mxu0 0.0
      %5193 = vmatpush1.msra.mxu0 0.0
      %5194 = vmatprep.subr.mxu0 0.0
      %5195 = vmatpush1.msra.mxu0 0.0
      %5196 = vmatprep.subr.mxu0 0.0
      %5197 = vmatpush1.msra.mxu0 0.0
      %5198 = vmatprep.subr.mxu0 0.0
      %5199 = vmatpush1.msra.mxu0 0.0
      %5200 = vmatprep.subr.mxu0 0.0
      %5201 = vmatpush1.msra.mxu0 0.0
      %5202 = vmatprep.subr.mxu0 0.0
      %5203 = vmatpush1.msra.mxu0 0.0
      %5204 = vmatprep.subr.mxu0 0.0
      %5205 = vmatpush1.msra.mxu0 0.0
      %5206 = vmatprep.subr.mxu0 0.0
      %5207 = vmatpush1.msra.mxu0 0.0
      %5208 = vmatprep.subr.mxu0 0.0
      %5209 = vmatpush1.msra.mxu0 0.0
      %5210 = vmatprep.subr.mxu0 0.0
      %5211 = vmatpush1.msra.mxu0 0.0
      %5212 = vmatprep.subr.mxu0 0.0
      %5213 = vmatpush1.msra.mxu0 0.0
      %5214 = vmatprep.subr.mxu0 0.0
      %5215 = vmatpush1.msra.mxu0 0.0
      %5216 = vmatprep.subr.mxu0 0.0
      %5217 = vmatpush1.msra.mxu0 0.0
      %5218 = vmatprep.subr.mxu0 0.0
      %5219 = vmatpush1.msra.mxu0 0.0
      %5220 = vmatprep.subr.mxu0 0.0
      %5221 = vmatpush1.msra.mxu0 0.0
      %5222 = vmatprep.subr.mxu0 0.0
      %5223 = vmatpush1.msra.mxu0 0.0
      %5224 = vmatprep.subr.mxu0 0.0
      %5225 = vmatpush1.msra.mxu0 0.0
      %5226 = vmatprep.subr.mxu0 0.0
      %5227 = vmatpush1.msra.mxu0 0.0
      %5228 = vmatprep.subr.mxu0 0.0
      %5229 = vmatpush1.msra.mxu0 0.0
      %5230 = vmatprep.mubr.f32.mxu0 0.0
      %5231 = vmatmul.mubr.f32.gmra.mrb[0].mxu0 %v5164
      %v5232 = vpop.f32.mrb[0].mxu0
      %v5233 = vadd.f32 0.0, %v5232
      %v5234 = vpop.f32.mrb[0].mxu0
      %5235 = vdwg.mxu0
      %5237 = vrot.lane.b32.xlu0 %v5233, 84
      %v5238 = vpop.permute.xlu0 %5237
      %vm5240 = vcmask 1048224
      %5241 = vst.msk [vmem:[#allocation4 + $0x8] sm:$0xff] %vm5240, %v5238
      %5242 = vst.msk [vmem:[#allocation4 + $0x10] sm:$0xff] %vm692, %v5238
      %5243 = vrot.lane.b32.xlu0 %v4990, 35
      %v5244 = vpop.permute.xlu0 %5243
      %v5245 = vsel %vm5001, %v5244, 0
      %5247 = vmatprep.subr.mxu0 0.0
      %5248 = vmatpush1.msra.mxu0 %v4997
      %5249 = vmatprep.subr.mxu0 0.0
      %5250 = vmatpush1.msra.mxu0 %v4998
      %5251 = vmatprep.subr.mxu0 0.0
      %5252 = vmatpush1.msra.mxu0 %v4999
      %5253 = vmatprep.subr.mxu0 0.0
      %5254 = vmatpush1.msra.mxu0 %v5007
      %5255 = vmatprep.subr.mxu0 0.0
      %5256 = vmatpush1.msra.mxu0 0.0
      %5257 = vmatprep.subr.mxu0 0.0
      %5258 = vmatpush1.msra.mxu0 0.0
      %5259 = vmatprep.subr.mxu0 0.0
      %5260 = vmatpush1.msra.mxu0 0.0
      %5261 = vmatprep.subr.mxu0 0.0
      %5262 = vmatpush1.msra.mxu0 0.0
      %5263 = vmatprep.subr.mxu0 0.0
      %5264 = vmatpush1.msra.mxu0 0.0
      %5265 = vmatprep.subr.mxu0 0.0
      %5266 = vmatpush1.msra.mxu0 0.0
      %5267 = vmatprep.subr.mxu0 0.0
      %5268 = vmatpush1.msra.mxu0 0.0
      %5269 = vmatprep.subr.mxu0 0.0
      %5270 = vmatpush1.msra.mxu0 0.0
      %5271 = vmatprep.subr.mxu0 0.0
      %5272 = vmatpush1.msra.mxu0 0.0
      %5273 = vmatprep.subr.mxu0 0.0
      %5274 = vmatpush1.msra.mxu0 0.0
      %5275 = vmatprep.subr.mxu0 0.0
      %5276 = vmatpush1.msra.mxu0 0.0
      %5277 = vmatprep.subr.mxu0 0.0
      %5278 = vmatpush1.msra.mxu0 0.0
      %5279 = vmatprep.subr.mxu0 0.0
      %5280 = vmatpush1.msra.mxu0 0.0
      %5281 = vmatprep.subr.mxu0 0.0
      %5282 = vmatpush1.msra.mxu0 0.0
      %5283 = vmatprep.subr.mxu0 0.0
      %5284 = vmatpush1.msra.mxu0 0.0
      %5285 = vmatprep.subr.mxu0 0.0
      %5286 = vmatpush1.msra.mxu0 0.0
      %5287 = vmatprep.subr.mxu0 0.0
      %5288 = vmatpush1.msra.mxu0 0.0
      %5289 = vmatprep.subr.mxu0 0.0
      %5290 = vmatpush1.msra.mxu0 0.0
      %5291 = vmatprep.subr.mxu0 0.0
      %5292 = vmatpush1.msra.mxu0 0.0
      %5293 = vmatprep.subr.mxu0 0.0
      %5294 = vmatpush1.msra.mxu0 0.0
      %5295 = vmatprep.subr.mxu0 0.0
      %5296 = vmatpush1.msra.mxu0 0.0
      %5297 = vmatprep.subr.mxu0 0.0
      %5298 = vmatpush1.msra.mxu0 0.0
      %5299 = vmatprep.subr.mxu0 0.0
      %5300 = vmatpush1.msra.mxu0 0.0
      %5301 = vmatprep.subr.mxu0 0.0
      %5302 = vmatpush1.msra.mxu0 0.0
      %5303 = vmatprep.subr.mxu0 0.0
      %5304 = vmatpush1.msra.mxu0 0.0
      %5305 = vmatprep.subr.mxu0 0.0
      %5306 = vmatpush1.msra.mxu0 0.0
      %5307 = vmatprep.subr.mxu0 0.0
      %5308 = vmatpush1.msra.mxu0 0.0
      %5309 = vmatprep.subr.mxu0 0.0
      %5310 = vmatpush1.msra.mxu0 0.0
      %5311 = vmatprep.mubr.f32.mxu0 0.0
      %5312 = vmatmul.mubr.f32.gmra.mrb[0].mxu0 %v5245
      %v5313 = vpop.f32.mrb[0].mxu0
      %v5314 = vadd.f32 0.0, %v5313
      %v5315 = vpop.f32.mrb[0].mxu0
      %5316 = vdwg.mxu0
      %5318 = vrot.lane.b32.xlu0 %v5314, 62
      %v5319 = vpop.permute.xlu0 %5318
      %vm5321 = vcmask 941552
      %5322 = vst.msk [vmem:[#allocation4 + $0x10] sm:$0xff] %vm5321, %v5319
      %5324 = vrot.lane.b32.xlu0 %v4990, 4
      %v5325 = vpop.permute.xlu0 %5324
      %5326 = vrot.lane.b32.xlu0 %v4991, 4
      %v5327 = vpop.permute.xlu0 %5326
      %v5328 = vsel %vm1449, %v5325, %v5327
      %v5329 = vsel %vm5001, %v5328, 0
      %5331 = vmatprep.subr.mxu0 0.0
      %5332 = vmatpush1.msra.mxu0 %v4997
      %5333 = vmatprep.subr.mxu0 0.0
      %5334 = vmatpush1.msra.mxu0 %v4998
      %5335 = vmatprep.subr.mxu0 0.0
      %5336 = vmatpush1.msra.mxu0 %v4999
      %5337 = vmatprep.subr.mxu0 0.0
      %5338 = vmatpush1.msra.mxu0 %v5007
      %5339 = vmatprep.subr.mxu0 0.0
      %5340 = vmatpush1.msra.mxu0 0.0
      %5341 = vmatprep.subr.mxu0 0.0
      %5342 = vmatpush1.msra.mxu0 0.0
      %5343 = vmatprep.subr.mxu0 0.0
      %5344 = vmatpush1.msra.mxu0 0.0
      %5345 = vmatprep.subr.mxu0 0.0
      %5346 = vmatpush1.msra.mxu0 0.0
      %5347 = vmatprep.subr.mxu0 0.0
      %5348 = vmatpush1.msra.mxu0 0.0
      %5349 = vmatprep.subr.mxu0 0.0
      %5350 = vmatpush1.msra.mxu0 0.0
      %5351 = vmatprep.subr.mxu0 0.0
      %5352 = vmatpush1.msra.mxu0 0.0
      %5353 = vmatprep.subr.mxu0 0.0
      %5354 = vmatpush1.msra.mxu0 0.0
      %5355 = vmatprep.subr.mxu0 0.0
      %5356 = vmatpush1.msra.mxu0 0.0
      %5357 = vmatprep.subr.mxu0 0.0
      %5358 = vmatpush1.msra.mxu0 0.0
      %5359 = vmatprep.subr.mxu0 0.0
      %5360 = vmatpush1.msra.mxu0 0.0
      %5361 = vmatprep.subr.mxu0 0.0
      %5362 = vmatpush1.msra.mxu0 0.0
      %5363 = vmatprep.subr.mxu0 0.0
      %5364 = vmatpush1.msra.mxu0 0.0
      %5365 = vmatprep.subr.mxu0 0.0
      %5366 = vmatpush1.msra.mxu0 0.0
      %5367 = vmatprep.subr.mxu0 0.0
      %5368 = vmatpush1.msra.mxu0 0.0
      %5369 = vmatprep.subr.mxu0 0.0
      %5370 = vmatpush1.msra.mxu0 0.0
      %5371 = vmatprep.subr.mxu0 0.0
      %5372 = vmatpush1.msra.mxu0 0.0
      %5373 = vmatprep.subr.mxu0 0.0
      %5374 = vmatpush1.msra.mxu0 0.0
      %5375 = vmatprep.subr.mxu0 0.0
      %5376 = vmatpush1.msra.mxu0 0.0
      %5377 = vmatprep.subr.mxu0 0.0
      %5378 = vmatpush1.msra.mxu0 0.0
      %5379 = vmatprep.subr.mxu0 0.0
      %5380 = vmatpush1.msra.mxu0 0.0
      %5381 = vmatprep.subr.mxu0 0.0
      %5382 = vmatpush1.msra.mxu0 0.0
      %5383 = vmatprep.subr.mxu0 0.0
      %5384 = vmatpush1.msra.mxu0 0.0
      %5385 = vmatprep.subr.mxu0 0.0
      %5386 = vmatpush1.msra.mxu0 0.0
      %5387 = vmatprep.subr.mxu0 0.0
      %5388 = vmatpush1.msra.mxu0 0.0
      %5389 = vmatprep.subr.mxu0 0.0
      %5390 = vmatpush1.msra.mxu0 0.0
      %5391 = vmatprep.subr.mxu0 0.0
      %5392 = vmatpush1.msra.mxu0 0.0
      %5393 = vmatprep.subr.mxu0 0.0
      %5394 = vmatpush1.msra.mxu0 0.0
      %5395 = vmatprep.mubr.f32.mxu0 0.0
      %5396 = vmatmul.mubr.f32.gmra.mrb[0].mxu0 %v5329
      %v5397 = vpop.f32.mrb[0].mxu0
      %v5398 = vadd.f32 0.0, %v5397
      %v5399 = vpop.f32.mrb[0].mxu0
      %5400 = vdwg.mxu0
      %5402 = vrot.lane.b32.xlu0 %v5398, 40
      %v5403 = vpop.permute.xlu0 %5402
      %vm5405 = vcmask 761152
      %5406 = vst.msk [vmem:[#allocation4 + $0x18] sm:$0xff] %vm5405, %v5403
      %5407 = vrot.lane.b32.xlu0 %v4991, 101
      %v5408 = vpop.permute.xlu0 %5407
      %v5409 = vsel %vm5001, %v5408, 0
      %5411 = vmatprep.subr.mxu0 0.0
      %5412 = vmatpush1.msra.mxu0 %v4997
      %5413 = vmatprep.subr.mxu0 0.0
      %5414 = vmatpush1.msra.mxu0 %v4998
      %5415 = vmatprep.subr.mxu0 0.0
      %5416 = vmatpush1.msra.mxu0 %v4999
      %5417 = vmatprep.subr.mxu0 0.0
      %5418 = vmatpush1.msra.mxu0 %v5007
      %5419 = vmatprep.subr.mxu0 0.0
      %5420 = vmatpush1.msra.mxu0 0.0
      %5421 = vmatprep.subr.mxu0 0.0
      %5422 = vmatpush1.msra.mxu0 0.0
      %5423 = vmatprep.subr.mxu0 0.0
      %5424 = vmatpush1.msra.mxu0 0.0
      %5425 = vmatprep.subr.mxu0 0.0
      %5426 = vmatpush1.msra.mxu0 0.0
      %5427 = vmatprep.subr.mxu0 0.0
      %5428 = vmatpush1.msra.mxu0 0.0
      %5429 = vmatprep.subr.mxu0 0.0
      %5430 = vmatpush1.msra.mxu0 0.0
      %5431 = vmatprep.subr.mxu0 0.0
      %5432 = vmatpush1.msra.mxu0 0.0
      %5433 = vmatprep.subr.mxu0 0.0
      %5434 = vmatpush1.msra.mxu0 0.0
      %5435 = vmatprep.subr.mxu0 0.0
      %5436 = vmatpush1.msra.mxu0 0.0
      %5437 = vmatprep.subr.mxu0 0.0
      %5438 = vmatpush1.msra.mxu0 0.0
      %5439 = vmatprep.subr.mxu0 0.0
      %5440 = vmatpush1.msra.mxu0 0.0
      %5441 = vmatprep.subr.mxu0 0.0
      %5442 = vmatpush1.msra.mxu0 0.0
      %5443 = vmatprep.subr.mxu0 0.0
      %5444 = vmatpush1.msra.mxu0 0.0
      %5445 = vmatprep.subr.mxu0 0.0
      %5446 = vmatpush1.msra.mxu0 0.0
      %5447 = vmatprep.subr.mxu0 0.0
      %5448 = vmatpush1.msra.mxu0 0.0
      %5449 = vmatprep.subr.mxu0 0.0
      %5450 = vmatpush1.msra.mxu0 0.0
      %5451 = vmatprep.subr.mxu0 0.0
      %5452 = vmatpush1.msra.mxu0 0.0
      %5453 = vmatprep.subr.mxu0 0.0
      %5454 = vmatpush1.msra.mxu0 0.0
      %5455 = vmatprep.subr.mxu0 0.0
      %5456 = vmatpush1.msra.mxu0 0.0
      %5457 = vmatprep.subr.mxu0 0.0
      %5458 = vmatpush1.msra.mxu0 0.0
      %5459 = vmatprep.subr.mxu0 0.0
      %5460 = vmatpush1.msra.mxu0 0.0
      %5461 = vmatprep.subr.mxu0 0.0
      %5462 = vmatpush1.msra.mxu0 0.0
      %5463 = vmatprep.subr.mxu0 0.0
      %5464 = vmatpush1.msra.mxu0 0.0
      %5465 = vmatprep.subr.mxu0 0.0
      %5466 = vmatpush1.msra.mxu0 0.0
      %5467 = vmatprep.subr.mxu0 0.0
      %5468 = vmatpush1.msra.mxu0 0.0
      %5469 = vmatprep.subr.mxu0 0.0
      %5470 = vmatpush1.msra.mxu0 0.0
      %5471 = vmatprep.subr.mxu0 0.0
      %5472 = vmatpush1.msra.mxu0 0.0
      %5473 = vmatprep.subr.mxu0 0.0
      %5474 = vmatpush1.msra.mxu0 0.0
      %5475 = vmatprep.mubr.f32.mxu0 0.0
      %5476 = vmatmul.mubr.f32.gmra.mrb[0].mxu0 %v5409
      %v5477 = vpop.f32.mrb[0].mxu0
      %v5478 = vadd.f32 0.0, %v5477
      %v5479 = vpop.f32.mrb[0].mxu0
      %5480 = vdwg.mxu0
      %5482 = vrot.lane.b32.xlu0 %v5478, 18
      %v5483 = vpop.permute.xlu0 %5482
      %vm5485 = vcmask 580752
      %5486 = vst.msk [vmem:[#allocation4 + $0x20] sm:$0xff] %vm5485, %v5483
      %5487 = vrot.lane.b32.xlu0 %v4991, 70
      %v5488 = vpop.permute.xlu0 %5487
      %v5489 = vsel %vm5001, %v5488, 0
      %5491 = vmatprep.subr.mxu0 0.0
      %5492 = vmatpush1.msra.mxu0 %v4997
      %5493 = vmatprep.subr.mxu0 0.0
      %5494 = vmatpush1.msra.mxu0 %v4998
      %5495 = vmatprep.subr.mxu0 0.0
      %5496 = vmatpush1.msra.mxu0 %v4999
      %5497 = vmatprep.subr.mxu0 0.0
      %5498 = vmatpush1.msra.mxu0 %v5007
      %5499 = vmatprep.subr.mxu0 0.0
      %5500 = vmatpush1.msra.mxu0 0.0
      %5501 = vmatprep.subr.mxu0 0.0
      %5502 = vmatpush1.msra.mxu0 0.0
      %5503 = vmatprep.subr.mxu0 0.0
      %5504 = vmatpush1.msra.mxu0 0.0
      %5505 = vmatprep.subr.mxu0 0.0
      %5506 = vmatpush1.msra.mxu0 0.0
      %5507 = vmatprep.subr.mxu0 0.0
      %5508 = vmatpush1.msra.mxu0 0.0
      %5509 = vmatprep.subr.mxu0 0.0
      %5510 = vmatpush1.msra.mxu0 0.0
      %5511 = vmatprep.subr.mxu0 0.0
      %5512 = vmatpush1.msra.mxu0 0.0
      %5513 = vmatprep.subr.mxu0 0.0
      %5514 = vmatpush1.msra.mxu0 0.0
      %5515 = vmatprep.subr.mxu0 0.0
      %5516 = vmatpush1.msra.mxu0 0.0
      %5517 = vmatprep.subr.mxu0 0.0
      %5518 = vmatpush1.msra.mxu0 0.0
      %5519 = vmatprep.subr.mxu0 0.0
      %5520 = vmatpush1.msra.mxu0 0.0
      %5521 = vmatprep.subr.mxu0 0.0
      %5522 = vmatpush1.msra.mxu0 0.0
      %5523 = vmatprep.subr.mxu0 0.0
      %5524 = vmatpush1.msra.mxu0 0.0
      %5525 = vmatprep.subr.mxu0 0.0
      %5526 = vmatpush1.msra.mxu0 0.0
      %5527 = vmatprep.subr.mxu0 0.0
      %5528 = vmatpush1.msra.mxu0 0.0
      %5529 = vmatprep.subr.mxu0 0.0
      %5530 = vmatpush1.msra.mxu0 0.0
      %5531 = vmatprep.subr.mxu0 0.0
      %5532 = vmatpush1.msra.mxu0 0.0
      %5533 = vmatprep.subr.mxu0 0.0
      %5534 = vmatpush1.msra.mxu0 0.0
      %5535 = vmatprep.subr.mxu0 0.0
      %5536 = vmatpush1.msra.mxu0 0.0
      %5537 = vmatprep.subr.mxu0 0.0
      %5538 = vmatpush1.msra.mxu0 0.0
      %5539 = vmatprep.subr.mxu0 0.0
      %5540 = vmatpush1.msra.mxu0 0.0
      %5541 = vmatprep.subr.mxu0 0.0
      %5542 = vmatpush1.msra.mxu0 0.0
      %5543 = vmatprep.subr.mxu0 0.0
      %5544 = vmatpush1.msra.mxu0 0.0
      %5545 = vmatprep.subr.mxu0 0.0
      %5546 = vmatpush1.msra.mxu0 0.0
      %5547 = vmatprep.subr.mxu0 0.0
      %5548 = vmatpush1.msra.mxu0 0.0
      %5549 = vmatprep.subr.mxu0 0.0
      %5550 = vmatpush1.msra.mxu0 0.0
      %5551 = vmatprep.subr.mxu0 0.0
      %5552 = vmatpush1.msra.mxu0 0.0
      %5553 = vmatprep.subr.mxu0 0.0
      %5554 = vmatpush1.msra.mxu0 0.0
      %5555 = vmatprep.mubr.f32.mxu0 0.0
      %5556 = vmatmul.mubr.f32.gmra.mrb[0].mxu0 %v5489
      %v5557 = vpop.f32.mrb[0].mxu0
      %v5558 = vadd.f32 0.0, %v5557
      %v5559 = vpop.f32.mrb[0].mxu0
      %5560 = vdwg.mxu0
      %5562 = vrot.lane.b32.xlu0 %v5558, 124
      %v5563 = vpop.permute.xlu0 %5562
      %vm5565 = vcmask 1048544
      %5566 = vst.msk [vmem:[#allocation4 + $0x20] sm:$0xff] %vm5565, %v5563
      %vm5567 = vcmask 400384
      %5568 = vst.msk [vmem:[#allocation4 + $0x28] sm:$0xff] %vm5567, %v5563
      %5569 = vrot.lane.b32.xlu0 %v4991, 39
      %v5570 = vpop.permute.xlu0 %5569
      %v5571 = vsel %vm5001, %v5570, 0
      %5573 = vmatprep.subr.mxu0 0.0
      %5574 = vmatpush1.msra.mxu0 %v4997
      %5575 = vmatprep.subr.mxu0 0.0
      %5576 = vmatpush1.msra.mxu0 %v4998
      %5577 = vmatprep.subr.mxu0 0.0
      %5578 = vmatpush1.msra.mxu0 %v4999
      %5579 = vmatprep.subr.mxu0 0.0
      %5580 = vmatpush1.msra.mxu0 %v5007
      %5581 = vmatprep.subr.mxu0 0.0
      %5582 = vmatpush1.msra.mxu0 0.0
      %5583 = vmatprep.subr.mxu0 0.0
      %5584 = vmatpush1.msra.mxu0 0.0
      %5585 = vmatprep.subr.mxu0 0.0
      %5586 = vmatpush1.msra.mxu0 0.0
      %5587 = vmatprep.subr.mxu0 0.0
      %5588 = vmatpush1.msra.mxu0 0.0
      %5589 = vmatprep.subr.mxu0 0.0
      %5590 = vmatpush1.msra.mxu0 0.0
      %5591 = vmatprep.subr.mxu0 0.0
      %5592 = vmatpush1.msra.mxu0 0.0
      %5593 = vmatprep.subr.mxu0 0.0
      %5594 = vmatpush1.msra.mxu0 0.0
      %5595 = vmatprep.subr.mxu0 0.0
      %5596 = vmatpush1.msra.mxu0 0.0
      %5597 = vmatprep.subr.mxu0 0.0
      %5598 = vmatpush1.msra.mxu0 0.0
      %5599 = vmatprep.subr.mxu0 0.0
      %5600 = vmatpush1.msra.mxu0 0.0
      %5601 = vmatprep.subr.mxu0 0.0
      %5602 = vmatpush1.msra.mxu0 0.0
      %5603 = vmatprep.subr.mxu0 0.0
      %5604 = vmatpush1.msra.mxu0 0.0
      %5605 = vmatprep.subr.mxu0 0.0
      %5606 = vmatpush1.msra.mxu0 0.0
      %5607 = vmatprep.subr.mxu0 0.0
      %5608 = vmatpush1.msra.mxu0 0.0
      %5609 = vmatprep.subr.mxu0 0.0
      %5610 = vmatpush1.msra.mxu0 0.0
      %5611 = vmatprep.subr.mxu0 0.0
      %5612 = vmatpush1.msra.mxu0 0.0
      %5613 = vmatprep.subr.mxu0 0.0
      %5614 = vmatpush1.msra.mxu0 0.0
      %5615 = vmatprep.subr.mxu0 0.0
      %5616 = vmatpush1.msra.mxu0 0.0
      %5617 = vmatprep.subr.mxu0 0.0
      %5618 = vmatpush1.msra.mxu0 0.0
      %5619 = vmatprep.subr.mxu0 0.0
      %5620 = vmatpush1.msra.mxu0 0.0
      %5621 = vmatprep.subr.mxu0 0.0
      %5622 = vmatpush1.msra.mxu0 0.0
      %5623 = vmatprep.subr.mxu0 0.0
      %5624 = vmatpush1.msra.mxu0 0.0
      %5625 = vmatprep.subr.mxu0 0.0
      %5626 = vmatpush1.msra.mxu0 0.0
      %5627 = vmatprep.subr.mxu0 0.0
      %5628 = vmatpush1.msra.mxu0 0.0
      %5629 = vmatprep.subr.mxu0 0.0
      %5630 = vmatpush1.msra.mxu0 0.0
      %5631 = vmatprep.subr.mxu0 0.0
      %5632 = vmatpush1.msra.mxu0 0.0
      %5633 = vmatprep.subr.mxu0 0.0
      %5634 = vmatpush1.msra.mxu0 0.0
      %5635 = vmatprep.subr.mxu0 0.0
      %5636 = vmatpush1.msra.mxu0 0.0
      %5637 = vmatprep.mubr.f32.mxu0 0.0
      %5638 = vmatmul.mubr.f32.gmra.mrb[0].mxu0 %v5571
      %v5639 = vpop.f32.mrb[0].mxu0
      %v5640 = vadd.f32 0.0, %v5639
      %v5641 = vpop.f32.mrb[0].mxu0
      %5642 = vdwg.mxu0
      %5644 = vrot.lane.b32.xlu0 %v5640, 102
      %v5645 = vpop.permute.xlu0 %5644
      %vm5647 = vcmask 1048368
      %5648 = vst.msk [vmem:[#allocation4 + $0x28] sm:$0xff] %vm5647, %v5645
      %5649 = vst.msk [vmem:[#allocation4 + $0x30] sm:$0xff] %vm5001, %v5645
      %5651 = vrot.lane.b32.xlu0 %v4991, 8
      %v5652 = vpop.permute.xlu0 %5651
      %5653 = vrot.lane.b32.xlu0 %v4992, 8
      %v5654 = vpop.permute.xlu0 %5653
      %vm5655 = vcmask 64512
      %v5656 = vsel %vm5655, %v5652, %v5654
      %v5657 = vsel %vm5001, %v5656, 0
      %5659 = vmatprep.subr.mxu0 0.0
      %5660 = vmatpush1.msra.mxu0 %v4997
      %5661 = vmatprep.subr.mxu0 0.0
      %5662 = vmatpush1.msra.mxu0 %v4998
      %5663 = vmatprep.subr.mxu0 0.0
      %5664 = vmatpush1.msra.mxu0 %v4999
      %5665 = vmatprep.subr.mxu0 0.0
      %5666 = vmatpush1.msra.mxu0 %v5007
      %5667 = vmatprep.subr.mxu0 0.0
      %5668 = vmatpush1.msra.mxu0 0.0
      %5669 = vmatprep.subr.mxu0 0.0
      %5670 = vmatpush1.msra.mxu0 0.0
      %5671 = vmatprep.subr.mxu0 0.0
      %5672 = vmatpush1.msra.mxu0 0.0
      %5673 = vmatprep.subr.mxu0 0.0
      %5674 = vmatpush1.msra.mxu0 0.0
      %5675 = vmatprep.subr.mxu0 0.0
      %5676 = vmatpush1.msra.mxu0 0.0
      %5677 = vmatprep.subr.mxu0 0.0
      %5678 = vmatpush1.msra.mxu0 0.0
      %5679 = vmatprep.subr.mxu0 0.0
      %5680 = vmatpush1.msra.mxu0 0.0
      %5681 = vmatprep.subr.mxu0 0.0
      %5682 = vmatpush1.msra.mxu0 0.0
      %5683 = vmatprep.subr.mxu0 0.0
      %5684 = vmatpush1.msra.mxu0 0.0
      %5685 = vmatprep.subr.mxu0 0.0
      %5686 = vmatpush1.msra.mxu0 0.0
      %5687 = vmatprep.subr.mxu0 0.0
      %5688 = vmatpush1.msra.mxu0 0.0
      %5689 = vmatprep.subr.mxu0 0.0
      %5690 = vmatpush1.msra.mxu0 0.0
      %5691 = vmatprep.subr.mxu0 0.0
      %5692 = vmatpush1.msra.mxu0 0.0
      %5693 = vmatprep.subr.mxu0 0.0
      %5694 = vmatpush1.msra.mxu0 0.0
      %5695 = vmatprep.subr.mxu0 0.0
      %5696 = vmatpush1.msra.mxu0 0.0
      %5697 = vmatprep.subr.mxu0 0.0
      %5698 = vmatpush1.msra.mxu0 0.0
      %5699 = vmatprep.subr.mxu0 0.0
      %5700 = vmatpush1.msra.mxu0 0.0
      %5701 = vmatprep.subr.mxu0 0.0
      %5702 = vmatpush1.msra.mxu0 0.0
      %5703 = vmatprep.subr.mxu0 0.0
      %5704 = vmatpush1.msra.mxu0 0.0
      %5705 = vmatprep.subr.mxu0 0.0
      %5706 = vmatpush1.msra.mxu0 0.0
      %5707 = vmatprep.subr.mxu0 0.0
      %5708 = vmatpush1.msra.mxu0 0.0
      %5709 = vmatprep.subr.mxu0 0.0
      %5710 = vmatpush1.msra.mxu0 0.0
      %5711 = vmatprep.subr.mxu0 0.0
      %5712 = vmatpush1.msra.mxu0 0.0
      %5713 = vmatprep.subr.mxu0 0.0
      %5714 = vmatpush1.msra.mxu0 0.0
      %5715 = vmatprep.subr.mxu0 0.0
      %5716 = vmatpush1.msra.mxu0 0.0
      %5717 = vmatprep.subr.mxu0 0.0
      %5718 = vmatpush1.msra.mxu0 0.0
      %5719 = vmatprep.subr.mxu0 0.0
      %5720 = vmatpush1.msra.mxu0 0.0
      %5721 = vmatprep.subr.mxu0 0.0
      %5722 = vmatpush1.msra.mxu0 0.0
      %5723 = vmatprep.mubr.f32.mxu0 0.0
      %5724 = vmatmul.mubr.f32.gmra.mrb[0].mxu0 %v5657
      %v5725 = vpop.f32.mrb[0].mxu0
      %v5726 = vadd.f32 0.0, %v5725
      %v5727 = vpop.f32.mrb[0].mxu0
      %5728 = vdwg.mxu0
      %5730 = vrot.lane.b32.xlu0 %v5726, 80
      %v5731 = vpop.permute.xlu0 %5730
      %vm5733 = vcmask 1048192
      %5734 = vst.msk [vmem:[#allocation4 + $0x30] sm:$0xff] %vm5733, %v5731
      %vm5735 = vcmask 39936
      %5736 = vst.msk [vmem:[#allocation4 + $0x38] sm:$0xff] %vm5735, %v5731
      %5737 = vrot.lane.b32.xlu0 %v4992, 105
      %v5738 = vpop.permute.xlu0 %5737
      %v5739 = vsel %vm5001, %v5738, 0
      %5741 = vmatprep.subr.mxu0 0.0
      %5742 = vmatpush1.msra.mxu0 %v4997
      %5743 = vmatprep.subr.mxu0 0.0
      %5744 = vmatpush1.msra.mxu0 %v4998
      %5745 = vmatprep.subr.mxu0 0.0
      %5746 = vmatpush1.msra.mxu0 %v4999
      %5747 = vmatprep.subr.mxu0 0.0
      %5748 = vmatpush1.msra.mxu0 %v5007
      %5749 = vmatprep.subr.mxu0 0.0
      %5750 = vmatpush1.msra.mxu0 0.0
      %5751 = vmatprep.subr.mxu0 0.0
      %5752 = vmatpush1.msra.mxu0 0.0
      %5753 = vmatprep.subr.mxu0 0.0
      %5754 = vmatpush1.msra.mxu0 0.0
      %5755 = vmatprep.subr.mxu0 0.0
      %5756 = vmatpush1.msra.mxu0 0.0
      %5757 = vmatprep.subr.mxu0 0.0
      %5758 = vmatpush1.msra.mxu0 0.0
      %5759 = vmatprep.subr.mxu0 0.0
      %5760 = vmatpush1.msra.mxu0 0.0
      %5761 = vmatprep.subr.mxu0 0.0
      %5762 = vmatpush1.msra.mxu0 0.0
      %5763 = vmatprep.subr.mxu0 0.0
      %5764 = vmatpush1.msra.mxu0 0.0
      %5765 = vmatprep.subr.mxu0 0.0
      %5766 = vmatpush1.msra.mxu0 0.0
      %5767 = vmatprep.subr.mxu0 0.0
      %5768 = vmatpush1.msra.mxu0 0.0
      %5769 = vmatprep.subr.mxu0 0.0
      %5770 = vmatpush1.msra.mxu0 0.0
      %5771 = vmatprep.subr.mxu0 0.0
      %5772 = vmatpush1.msra.mxu0 0.0
      %5773 = vmatprep.subr.mxu0 0.0
      %5774 = vmatpush1.msra.mxu0 0.0
      %5775 = vmatprep.subr.mxu0 0.0
      %5776 = vmatpush1.msra.mxu0 0.0
      %5777 = vmatprep.subr.mxu0 0.0
      %5778 = vmatpush1.msra.mxu0 0.0
      %5779 = vmatprep.subr.mxu0 0.0
      %5780 = vmatpush1.msra.mxu0 0.0
      %5781 = vmatprep.subr.mxu0 0.0
      %5782 = vmatpush1.msra.mxu0 0.0
      %5783 = vmatprep.subr.mxu0 0.0
      %5784 = vmatpush1.msra.mxu0 0.0
      %5785 = vmatprep.subr.mxu0 0.0
      %5786 = vmatpush1.msra.mxu0 0.0
      %5787 = vmatprep.subr.mxu0 0.0
      %5788 = vmatpush1.msra.mxu0 0.0
      %5789 = vmatprep.subr.mxu0 0.0
      %5790 = vmatpush1.msra.mxu0 0.0
      %5791 = vmatprep.subr.mxu0 0.0
      %5792 = vmatpush1.msra.mxu0 0.0
      %5793 = vmatprep.subr.mxu0 0.0
      %5794 = vmatpush1.msra.mxu0 0.0
      %5795 = vmatprep.subr.mxu0 0.0
      %5796 = vmatpush1.msra.mxu0 0.0
      %5797 = vmatprep.subr.mxu0 0.0
      %5798 = vmatpush1.msra.mxu0 0.0
      %5799 = vmatprep.subr.mxu0 0.0
      %5800 = vmatpush1.msra.mxu0 0.0
      %5801 = vmatprep.subr.mxu0 0.0
      %5802 = vmatpush1.msra.mxu0 0.0
      %5803 = vmatprep.subr.mxu0 0.0
      %5804 = vmatpush1.msra.mxu0 0.0
      %5805 = vmatprep.mubr.f32.mxu0 0.0
      %5806 = vmatmul.mubr.f32.gmra.mrb[0].mxu0 %v5739
      %v5807 = vpop.f32.mrb[0].mxu0
      %v5808 = vadd.f32 0.0, %v5807
      %v5809 = vpop.f32.mrb[0].mxu0
      %5810 = vdwg.mxu0
      %5812 = vrot.lane.b32.xlu0 %v5808, 58
      %v5813 = vpop.permute.xlu0 %5812
      %vm5815 = vcmask 908752
      %5816 = vst.msk [vmem:[#allocation4 + $0x38] sm:$0xff] %vm5815, %v5813
      %5817 = vrot.lane.b32.xlu0 %v4992, 74
      %v5818 = vpop.permute.xlu0 %5817
      %v5819 = vsel %vm5001, %v5818, 0
      %5821 = vmatprep.subr.mxu0 0.0
      %5822 = vmatpush1.msra.mxu0 %v4997
      %5823 = vmatprep.subr.mxu0 0.0
      %5824 = vmatpush1.msra.mxu0 %v4998
      %5825 = vmatprep.subr.mxu0 0.0
      %5826 = vmatpush1.msra.mxu0 %v4999
      %5827 = vmatprep.subr.mxu0 0.0
      %5828 = vmatpush1.msra.mxu0 %v5007
      %5829 = vmatprep.subr.mxu0 0.0
      %5830 = vmatpush1.msra.mxu0 0.0
      %5831 = vmatprep.subr.mxu0 0.0
      %5832 = vmatpush1.msra.mxu0 0.0
      %5833 = vmatprep.subr.mxu0 0.0
      %5834 = vmatpush1.msra.mxu0 0.0
      %5835 = vmatprep.subr.mxu0 0.0
      %5836 = vmatpush1.msra.mxu0 0.0
      %5837 = vmatprep.subr.mxu0 0.0
      %5838 = vmatpush1.msra.mxu0 0.0
      %5839 = vmatprep.subr.mxu0 0.0
      %5840 = vmatpush1.msra.mxu0 0.0
      %5841 = vmatprep.subr.mxu0 0.0
      %5842 = vmatpush1.msra.mxu0 0.0
      %5843 = vmatprep.subr.mxu0 0.0
      %5844 = vmatpush1.msra.mxu0 0.0
      %5845 = vmatprep.subr.mxu0 0.0
      %5846 = vmatpush1.msra.mxu0 0.0
      %5847 = vmatprep.subr.mxu0 0.0
      %5848 = vmatpush1.msra.mxu0 0.0
      %5849 = vmatprep.subr.mxu0 0.0
      %5850 = vmatpush1.msra.mxu0 0.0
      %5851 = vmatprep.subr.mxu0 0.0
      %5852 = vmatpush1.msra.mxu0 0.0
      %5853 = vmatprep.subr.mxu0 0.0
      %5854 = vmatpush1.msra.mxu0 0.0
      %5855 = vmatprep.subr.mxu0 0.0
      %5856 = vmatpush1.msra.mxu0 0.0
      %5857 = vmatprep.subr.mxu0 0.0
      %5858 = vmatpush1.msra.mxu0 0.0
      %5859 = vmatprep.subr.mxu0 0.0
      %5860 = vmatpush1.msra.mxu0 0.0
      %5861 = vmatprep.subr.mxu0 0.0
      %5862 = vmatpush1.msra.mxu0 0.0
      %5863 = vmatprep.subr.mxu0 0.0
      %5864 = vmatpush1.msra.mxu0 0.0
      %5865 = vmatprep.subr.mxu0 0.0
      %5866 = vmatpush1.msra.mxu0 0.0
      %5867 = vmatprep.subr.mxu0 0.0
      %5868 = vmatpush1.msra.mxu0 0.0
      %5869 = vmatprep.subr.mxu0 0.0
      %5870 = vmatpush1.msra.mxu0 0.0
      %5871 = vmatprep.subr.mxu0 0.0
      %5872 = vmatpush1.msra.mxu0 0.0
      %5873 = vmatprep.subr.mxu0 0.0
      %5874 = vmatpush1.msra.mxu0 0.0
      %5875 = vmatprep.subr.mxu0 0.0
      %5876 = vmatpush1.msra.mxu0 0.0
      %5877 = vmatprep.subr.mxu0 0.0
      %5878 = vmatpush1.msra.mxu0 0.0
      %5879 = vmatprep.subr.mxu0 0.0
      %5880 = vmatpush1.msra.mxu0 0.0
      %5881 = vmatprep.subr.mxu0 0.0
      %5882 = vmatpush1.msra.mxu0 0.0
      %5883 = vmatprep.subr.mxu0 0.0
      %5884 = vmatpush1.msra.mxu0 0.0
      %5885 = vmatprep.mubr.f32.mxu0 0.0
      %5886 = vmatmul.mubr.f32.gmra.mrb[0].mxu0 %v5819
      %v5887 = vpop.f32.mrb[0].mxu0
      %v5888 = vadd.f32 0.0, %v5887
      %v5889 = vpop.f32.mrb[0].mxu0
      %5890 = vdwg.mxu0
      %5892 = vrot.lane.b32.xlu0 %v5888, 36
      %v5893 = vpop.permute.xlu0 %5892
      %vm5895 = vcmask 728352
      %5896 = vst.msk [vmem:[#allocation4 + $0x40] sm:$0xff] %vm5895, %v5893
      %5897 = vrot.lane.b32.xlu0 %v4992, 43
      %v5898 = vpop.permute.xlu0 %5897
      %v5899 = vsel %vm5001, %v5898, 0
      %5901 = vmatprep.subr.mxu0 0.0
      %5902 = vmatpush1.msra.mxu0 %v4997
      %5903 = vmatprep.subr.mxu0 0.0
      %5904 = vmatpush1.msra.mxu0 %v4998
      %5905 = vmatprep.subr.mxu0 0.0
      %5906 = vmatpush1.msra.mxu0 %v4999
      %5907 = vmatprep.subr.mxu0 0.0
      %5908 = vmatpush1.msra.mxu0 %v5007
      %5909 = vmatprep.subr.mxu0 0.0
      %5910 = vmatpush1.msra.mxu0 0.0
      %5911 = vmatprep.subr.mxu0 0.0
      %5912 = vmatpush1.msra.mxu0 0.0
      %5913 = vmatprep.subr.mxu0 0.0
      %5914 = vmatpush1.msra.mxu0 0.0
      %5915 = vmatprep.subr.mxu0 0.0
      %5916 = vmatpush1.msra.mxu0 0.0
      %5917 = vmatprep.subr.mxu0 0.0
      %5918 = vmatpush1.msra.mxu0 0.0
      %5919 = vmatprep.subr.mxu0 0.0
      %5920 = vmatpush1.msra.mxu0 0.0
      %5921 = vmatprep.subr.mxu0 0.0
      %5922 = vmatpush1.msra.mxu0 0.0
      %5923 = vmatprep.subr.mxu0 0.0
      %5924 = vmatpush1.msra.mxu0 0.0
      %5925 = vmatprep.subr.mxu0 0.0
      %5926 = vmatpush1.msra.mxu0 0.0
      %5927 = vmatprep.subr.mxu0 0.0
      %5928 = vmatpush1.msra.mxu0 0.0
      %5929 = vmatprep.subr.mxu0 0.0
      %5930 = vmatpush1.msra.mxu0 0.0
      %5931 = vmatprep.subr.mxu0 0.0
      %5932 = vmatpush1.msra.mxu0 0.0
      %5933 = vmatprep.subr.mxu0 0.0
      %5934 = vmatpush1.msra.mxu0 0.0
      %5935 = vmatprep.subr.mxu0 0.0
      %5936 = vmatpush1.msra.mxu0 0.0
      %5937 = vmatprep.subr.mxu0 0.0
      %5938 = vmatpush1.msra.mxu0 0.0
      %5939 = vmatprep.subr.mxu0 0.0
      %5940 = vmatpush1.msra.mxu0 0.0
      %5941 = vmatprep.subr.mxu0 0.0
      %5942 = vmatpush1.msra.mxu0 0.0
      %5943 = vmatprep.subr.mxu0 0.0
      %5944 = vmatpush1.msra.mxu0 0.0
      %5945 = vmatprep.subr.mxu0 0.0
      %5946 = vmatpush1.msra.mxu0 0.0
      %5947 = vmatprep.subr.mxu0 0.0
      %5948 = vmatpush1.msra.mxu0 0.0
      %5949 = vmatprep.subr.mxu0 0.0
      %5950 = vmatpush1.msra.mxu0 0.0
      %5951 = vmatprep.subr.mxu0 0.0
      %5952 = vmatpush1.msra.mxu0 0.0
      %5953 = vmatprep.subr.mxu0 0.0
      %5954 = vmatpush1.msra.mxu0 0.0
      %5955 = vmatprep.subr.mxu0 0.0
      %5956 = vmatpush1.msra.mxu0 0.0
      %5957 = vmatprep.subr.mxu0 0.0
      %5958 = vmatpush1.msra.mxu0 0.0
      %5959 = vmatprep.subr.mxu0 0.0
      %5960 = vmatpush1.msra.mxu0 0.0
      %5961 = vmatprep.subr.mxu0 0.0
      %5962 = vmatpush1.msra.mxu0 0.0
      %5963 = vmatprep.subr.mxu0 0.0
      %5964 = vmatpush1.msra.mxu0 0.0
      %5965 = vmatprep.mubr.f32.mxu0 0.0
      %5966 = vmatmul.mubr.f32.gmra.mrb[0].mxu0 %v5899
      %v5967 = vpop.f32.mrb[0].mxu0
      %v5968 = vadd.f32 0.0, %v5967
      %v5969 = vpop.f32.mrb[0].mxu0
      %5970 = vdwg.mxu0
      %5972 = vrot.lane.b32.xlu0 %v5968, 14
      %v5973 = vpop.permute.xlu0 %5972
      %vm5975 = vcmask 547952
      %5976 = vst.msk [vmem:[#allocation4 + $0x48] sm:$0xff] %vm5975, %v5973
      %5978 = vrot.lane.b32.xlu0 %v4992, 12
      %v5979 = vpop.permute.xlu0 %5978
      %5980 = vrot.lane.b32.xlu0 %v4993, 12
      %v5981 = vpop.permute.xlu0 %5980
      %vm5982 = vcmask 97280
      %v5983 = vsel %vm5982, %v5979, %v5981
      %v5984 = vsel %vm5001, %v5983, 0
      %5986 = vmatprep.subr.mxu0 0.0
      %5987 = vmatpush1.msra.mxu0 %v4997
      %5988 = vmatprep.subr.mxu0 0.0
      %5989 = vmatpush1.msra.mxu0 %v4998
      %5990 = vmatprep.subr.mxu0 0.0
      %5991 = vmatpush1.msra.mxu0 %v4999
      %5992 = vmatprep.subr.mxu0 0.0
      %5993 = vmatpush1.msra.mxu0 %v5007
      %5994 = vmatprep.subr.mxu0 0.0
      %5995 = vmatpush1.msra.mxu0 0.0
      %5996 = vmatprep.subr.mxu0 0.0
      %5997 = vmatpush1.msra.mxu0 0.0
      %5998 = vmatprep.subr.mxu0 0.0
      %5999 = vmatpush1.msra.mxu0 0.0
      %6000 = vmatprep.subr.mxu0 0.0
      %6001 = vmatpush1.msra.mxu0 0.0
      %6002 = vmatprep.subr.mxu0 0.0
      %6003 = vmatpush1.msra.mxu0 0.0
      %6004 = vmatprep.subr.mxu0 0.0
      %6005 = vmatpush1.msra.mxu0 0.0
      %6006 = vmatprep.subr.mxu0 0.0
      %6007 = vmatpush1.msra.mxu0 0.0
      %6008 = vmatprep.subr.mxu0 0.0
      %6009 = vmatpush1.msra.mxu0 0.0
      %6010 = vmatprep.subr.mxu0 0.0
      %6011 = vmatpush1.msra.mxu0 0.0
      %6012 = vmatprep.subr.mxu0 0.0
      %6013 = vmatpush1.msra.mxu0 0.0
      %6014 = vmatprep.subr.mxu0 0.0
      %6015 = vmatpush1.msra.mxu0 0.0
      %6016 = vmatprep.subr.mxu0 0.0
      %6017 = vmatpush1.msra.mxu0 0.0
      %6018 = vmatprep.subr.mxu0 0.0
      %6019 = vmatpush1.msra.mxu0 0.0
      %6020 = vmatprep.subr.mxu0 0.0
      %6021 = vmatpush1.msra.mxu0 0.0
      %6022 = vmatprep.subr.mxu0 0.0
      %6023 = vmatpush1.msra.mxu0 0.0
      %6024 = vmatprep.subr.mxu0 0.0
      %6025 = vmatpush1.msra.mxu0 0.0
      %6026 = vmatprep.subr.mxu0 0.0
      %6027 = vmatpush1.msra.mxu0 0.0
      %6028 = vmatprep.subr.mxu0 0.0
      %6029 = vmatpush1.msra.mxu0 0.0
      %6030 = vmatprep.subr.mxu0 0.0
      %6031 = vmatpush1.msra.mxu0 0.0
      %6032 = vmatprep.subr.mxu0 0.0
      %6033 = vmatpush1.msra.mxu0 0.0
      %6034 = vmatprep.subr.mxu0 0.0
      %6035 = vmatpush1.msra.mxu0 0.0
      %6036 = vmatprep.subr.mxu0 0.0
      %6037 = vmatpush1.msra.mxu0 0.0
      %6038 = vmatprep.subr.mxu0 0.0
      %6039 = vmatpush1.msra.mxu0 0.0
      %6040 = vmatprep.subr.mxu0 0.0
      %6041 = vmatpush1.msra.mxu0 0.0
      %6042 = vmatprep.subr.mxu0 0.0
      %6043 = vmatpush1.msra.mxu0 0.0
      %6044 = vmatprep.subr.mxu0 0.0
      %6045 = vmatpush1.msra.mxu0 0.0
      %6046 = vmatprep.subr.mxu0 0.0
      %6047 = vmatpush1.msra.mxu0 0.0
      %6048 = vmatprep.subr.mxu0 0.0
      %6049 = vmatpush1.msra.mxu0 0.0
      %6050 = vmatprep.mubr.f32.mxu0 0.0
      %6051 = vmatmul.mubr.f32.gmra.mrb[0].mxu0 %v5984
      %v6052 = vpop.f32.mrb[0].mxu0
      %v6053 = vadd.f32 0.0, %v6052
      %v6054 = vpop.f32.mrb[0].mxu0
      %6055 = vdwg.mxu0
      %6057 = vrot.lane.b32.xlu0 %v6053, 120
      %v6058 = vpop.permute.xlu0 %6057
      %vm6060 = vcmask 1048512
      %6061 = vst.msk [vmem:[#allocation4 + $0x48] sm:$0xff] %vm6060, %v6058
      %vm6062 = vcmask 367616
      %6063 = vst.msk [vmem:[#allocation4 + $0x50] sm:$0xff] %vm6062, %v6058
      %6064 = vrot.lane.b32.xlu0 %v4993, 109
      %v6065 = vpop.permute.xlu0 %6064
      %v6066 = vsel %vm5001, %v6065, 0
      %6068 = vmatprep.subr.mxu0 0.0
      %6069 = vmatpush1.msra.mxu0 %v4997
      %6070 = vmatprep.subr.mxu0 0.0
      %6071 = vmatpush1.msra.mxu0 %v4998
      %6072 = vmatprep.subr.mxu0 0.0
      %6073 = vmatpush1.msra.mxu0 %v4999
      %6074 = vmatprep.subr.mxu0 0.0
      %6075 = vmatpush1.msra.mxu0 %v5007
      %6076 = vmatprep.subr.mxu0 0.0
      %6077 = vmatpush1.msra.mxu0 0.0
      %6078 = vmatprep.subr.mxu0 0.0
      %6079 = vmatpush1.msra.mxu0 0.0
      %6080 = vmatprep.subr.mxu0 0.0
      %6081 = vmatpush1.msra.mxu0 0.0
      %6082 = vmatprep.subr.mxu0 0.0
      %6083 = vmatpush1.msra.mxu0 0.0
      %6084 = vmatprep.subr.mxu0 0.0
      %6085 = vmatpush1.msra.mxu0 0.0
      %6086 = vmatprep.subr.mxu0 0.0
      %6087 = vmatpush1.msra.mxu0 0.0
      %6088 = vmatprep.subr.mxu0 0.0
      %6089 = vmatpush1.msra.mxu0 0.0
      %6090 = vmatprep.subr.mxu0 0.0
      %6091 = vmatpush1.msra.mxu0 0.0
      %6092 = vmatprep.subr.mxu0 0.0
      %6093 = vmatpush1.msra.mxu0 0.0
      %6094 = vmatprep.subr.mxu0 0.0
      %6095 = vmatpush1.msra.mxu0 0.0
      %6096 = vmatprep.subr.mxu0 0.0
      %6097 = vmatpush1.msra.mxu0 0.0
      %6098 = vmatprep.subr.mxu0 0.0
      %6099 = vmatpush1.msra.mxu0 0.0
      %6100 = vmatprep.subr.mxu0 0.0
      %6101 = vmatpush1.msra.mxu0 0.0
      %6102 = vmatprep.subr.mxu0 0.0
      %6103 = vmatpush1.msra.mxu0 0.0
      %6104 = vmatprep.subr.mxu0 0.0
      %6105 = vmatpush1.msra.mxu0 0.0
      %6106 = vmatprep.subr.mxu0 0.0
      %6107 = vmatpush1.msra.mxu0 0.0
      %6108 = vmatprep.subr.mxu0 0.0
      %6109 = vmatpush1.msra.mxu0 0.0
      %6110 = vmatprep.subr.mxu0 0.0
      %6111 = vmatpush1.msra.mxu0 0.0
      %6112 = vmatprep.subr.mxu0 0.0
      %6113 = vmatpush1.msra.mxu0 0.0
      %6114 = vmatprep.subr.mxu0 0.0
      %6115 = vmatpush1.msra.mxu0 0.0
      %6116 = vmatprep.subr.mxu0 0.0
      %6117 = vmatpush1.msra.mxu0 0.0
      %6118 = vmatprep.subr.mxu0 0.0
      %6119 = vmatpush1.msra.mxu0 0.0
      %6120 = vmatprep.subr.mxu0 0.0
      %6121 = vmatpush1.msra.mxu0 0.0
      %6122 = vmatprep.subr.mxu0 0.0
      %6123 = vmatpush1.msra.mxu0 0.0
      %6124 = vmatprep.subr.mxu0 0.0
      %6125 = vmatpush1.msra.mxu0 0.0
      %6126 = vmatprep.subr.mxu0 0.0
      %6127 = vmatpush1.msra.mxu0 0.0
      %6128 = vmatprep.subr.mxu0 0.0
      %6129 = vmatpush1.msra.mxu0 0.0
      %6130 = vmatprep.subr.mxu0 0.0
      %6131 = vmatpush1.msra.mxu0 0.0
      %6132 = vmatprep.mubr.f32.mxu0 0.0
      %6133 = vmatmul.mubr.f32.gmra.mrb[0].mxu0 %v6066
      %v6134 = vpop.f32.mrb[0].mxu0
      %v6135 = vadd.f32 0.0, %v6134
      %v6136 = vpop.f32.mrb[0].mxu0
      %6137 = vdwg.mxu0
      %6139 = vrot.lane.b32.xlu0 %v6135, 98
      %v6140 = vpop.permute.xlu0 %6139
      %vm6142 = vcmask 1048336
      %6143 = vst.msk [vmem:[#allocation4 + $0x50] sm:$0xff] %vm6142, %v6140
      %vm6144 = vcmask 187392
      %6145 = vst.msk [vmem:[#allocation4 + $0x58] sm:$0xff] %vm6144, %v6140
      %6146 = vrot.lane.b32.xlu0 %v4993, 78
      %v6147 = vpop.permute.xlu0 %6146
      %v6148 = vsel %vm5001, %v6147, 0
      %6150 = vmatprep.subr.mxu0 0.0
      %6151 = vmatpush1.msra.mxu0 %v4997
      %6152 = vmatprep.subr.mxu0 0.0
      %6153 = vmatpush1.msra.mxu0 %v4998
      %6154 = vmatprep.subr.mxu0 0.0
      %6155 = vmatpush1.msra.mxu0 %v4999
      %6156 = vmatprep.subr.mxu0 0.0
      %6157 = vmatpush1.msra.mxu0 %v5007
      %6158 = vmatprep.subr.mxu0 0.0
      %6159 = vmatpush1.msra.mxu0 0.0
      %6160 = vmatprep.subr.mxu0 0.0
      %6161 = vmatpush1.msra.mxu0 0.0
      %6162 = vmatprep.subr.mxu0 0.0
      %6163 = vmatpush1.msra.mxu0 0.0
      %6164 = vmatprep.subr.mxu0 0.0
      %6165 = vmatpush1.msra.mxu0 0.0
      %6166 = vmatprep.subr.mxu0 0.0
      %6167 = vmatpush1.msra.mxu0 0.0
      %6168 = vmatprep.subr.mxu0 0.0
      %6169 = vmatpush1.msra.mxu0 0.0
      %6170 = vmatprep.subr.mxu0 0.0
      %6171 = vmatpush1.msra.mxu0 0.0
      %6172 = vmatprep.subr.mxu0 0.0
      %6173 = vmatpush1.msra.mxu0 0.0
      %6174 = vmatprep.subr.mxu0 0.0
      %6175 = vmatpush1.msra.mxu0 0.0
      %6176 = vmatprep.subr.mxu0 0.0
      %6177 = vmatpush1.msra.mxu0 0.0
      %6178 = vmatprep.subr.mxu0 0.0
      %6179 = vmatpush1.msra.mxu0 0.0
      %6180 = vmatprep.subr.mxu0 0.0
      %6181 = vmatpush1.msra.mxu0 0.0
      %6182 = vmatprep.subr.mxu0 0.0
      %6183 = vmatpush1.msra.mxu0 0.0
      %6184 = vmatprep.subr.mxu0 0.0
      %6185 = vmatpush1.msra.mxu0 0.0
      %6186 = vmatprep.subr.mxu0 0.0
      %6187 = vmatpush1.msra.mxu0 0.0
      %6188 = vmatprep.subr.mxu0 0.0
      %6189 = vmatpush1.msra.mxu0 0.0
      %6190 = vmatprep.subr.mxu0 0.0
      %6191 = vmatpush1.msra.mxu0 0.0
      %6192 = vmatprep.subr.mxu0 0.0
      %6193 = vmatpush1.msra.mxu0 0.0
      %6194 = vmatprep.subr.mxu0 0.0
      %6195 = vmatpush1.msra.mxu0 0.0
      %6196 = vmatprep.subr.mxu0 0.0
      %6197 = vmatpush1.msra.mxu0 0.0
      %6198 = vmatprep.subr.mxu0 0.0
      %6199 = vmatpush1.msra.mxu0 0.0
      %6200 = vmatprep.subr.mxu0 0.0
      %6201 = vmatpush1.msra.mxu0 0.0
      %6202 = vmatprep.subr.mxu0 0.0
      %6203 = vmatpush1.msra.mxu0 0.0
      %6204 = vmatprep.subr.mxu0 0.0
      %6205 = vmatpush1.msra.mxu0 0.0
      %6206 = vmatprep.subr.mxu0 0.0
      %6207 = vmatpush1.msra.mxu0 0.0
      %6208 = vmatprep.subr.mxu0 0.0
      %6209 = vmatpush1.msra.mxu0 0.0
      %6210 = vmatprep.subr.mxu0 0.0
      %6211 = vmatpush1.msra.mxu0 0.0
      %6212 = vmatprep.subr.mxu0 0.0
      %6213 = vmatpush1.msra.mxu0 0.0
      %6214 = vmatprep.mubr.f32.mxu0 0.0
      %6215 = vmatmul.mubr.f32.gmra.mrb[0].mxu0 %v6148
      %v6216 = vpop.f32.mrb[0].mxu0
      %v6217 = vadd.f32 0.0, %v6216
      %v6218 = vpop.f32.mrb[0].mxu0
      %6219 = vdwg.mxu0
      %6221 = vrot.lane.b32.xlu0 %v6217, 76
      %v6222 = vpop.permute.xlu0 %6221
      %vm6224 = vcmask 1048160
      %6225 = vst.msk [vmem:[#allocation4 + $0x58] sm:$0xff] %vm6224, %v6222
      %6226 = vst.msk [vmem:[#allocation4 + $0x60] sm:$0xff] %vm3994, %v6222
      %6227 = vrot.lane.b32.xlu0 %v4993, 47
      %v6228 = vpop.permute.xlu0 %6227
      %v6229 = vsel %vm5001, %v6228, 0
      %6231 = vmatprep.subr.mxu0 0.0
      %6232 = vmatpush1.msra.mxu0 %v4997
      %6233 = vmatprep.subr.mxu0 0.0
      %6234 = vmatpush1.msra.mxu0 %v4998
      %6235 = vmatprep.subr.mxu0 0.0
      %6236 = vmatpush1.msra.mxu0 %v4999
      %6237 = vmatprep.subr.mxu0 0.0
      %6238 = vmatpush1.msra.mxu0 %v5007
      %6239 = vmatprep.subr.mxu0 0.0
      %6240 = vmatpush1.msra.mxu0 0.0
      %6241 = vmatprep.subr.mxu0 0.0
      %6242 = vmatpush1.msra.mxu0 0.0
      %6243 = vmatprep.subr.mxu0 0.0
      %6244 = vmatpush1.msra.mxu0 0.0
      %6245 = vmatprep.subr.mxu0 0.0
      %6246 = vmatpush1.msra.mxu0 0.0
      %6247 = vmatprep.subr.mxu0 0.0
      %6248 = vmatpush1.msra.mxu0 0.0
      %6249 = vmatprep.subr.mxu0 0.0
      %6250 = vmatpush1.msra.mxu0 0.0
      %6251 = vmatprep.subr.mxu0 0.0
      %6252 = vmatpush1.msra.mxu0 0.0
      %6253 = vmatprep.subr.mxu0 0.0
      %6254 = vmatpush1.msra.mxu0 0.0
      %6255 = vmatprep.subr.mxu0 0.0
      %6256 = vmatpush1.msra.mxu0 0.0
      %6257 = vmatprep.subr.mxu0 0.0
      %6258 = vmatpush1.msra.mxu0 0.0
      %6259 = vmatprep.subr.mxu0 0.0
      %6260 = vmatpush1.msra.mxu0 0.0
      %6261 = vmatprep.subr.mxu0 0.0
      %6262 = vmatpush1.msra.mxu0 0.0
      %6263 = vmatprep.subr.mxu0 0.0
      %6264 = vmatpush1.msra.mxu0 0.0
      %6265 = vmatprep.subr.mxu0 0.0
      %6266 = vmatpush1.msra.mxu0 0.0
      %6267 = vmatprep.subr.mxu0 0.0
      %6268 = vmatpush1.msra.mxu0 0.0
      %6269 = vmatprep.subr.mxu0 0.0
      %6270 = vmatpush1.msra.mxu0 0.0
      %6271 = vmatprep.subr.mxu0 0.0
      %6272 = vmatpush1.msra.mxu0 0.0
      %6273 = vmatprep.subr.mxu0 0.0
      %6274 = vmatpush1.msra.mxu0 0.0
      %6275 = vmatprep.subr.mxu0 0.0
      %6276 = vmatpush1.msra.mxu0 0.0
      %6277 = vmatprep.subr.mxu0 0.0
      %6278 = vmatpush1.msra.mxu0 0.0
      %6279 = vmatprep.subr.mxu0 0.0
      %6280 = vmatpush1.msra.mxu0 0.0
      %6281 = vmatprep.subr.mxu0 0.0
      %6282 = vmatpush1.msra.mxu0 0.0
      %6283 = vmatprep.subr.mxu0 0.0
      %6284 = vmatpush1.msra.mxu0 0.0
      %6285 = vmatprep.subr.mxu0 0.0
      %6286 = vmatpush1.msra.mxu0 0.0
      %6287 = vmatprep.subr.mxu0 0.0
      %6288 = vmatpush1.msra.mxu0 0.0
      %6289 = vmatprep.subr.mxu0 0.0
      %6290 = vmatpush1.msra.mxu0 0.0
      %6291 = vmatprep.subr.mxu0 0.0
      %6292 = vmatpush1.msra.mxu0 0.0
      %6293 = vmatprep.subr.mxu0 0.0
      %6294 = vmatpush1.msra.mxu0 0.0
      %6295 = vmatprep.mubr.f32.mxu0 0.0
      %6296 = vmatmul.mubr.f32.gmra.mrb[0].mxu0 %v6229
      %v6297 = vpop.f32.mrb[0].mxu0
      %v6298 = vadd.f32 0.0, %v6297
      %v6299 = vpop.f32.mrb[0].mxu0
      %6300 = vdwg.mxu0
      %6302 = vrot.lane.b32.xlu0 %v6298, 54
      %v6303 = vpop.permute.xlu0 %6302
      %vm6305 = vcmask 875952
      %6306 = vst.msk [vmem:[#allocation4 + $0x60] sm:$0xff] %vm6305, %v6303
      %6308 = vrot.lane.b32.xlu0 %v4993, 16
      %v6309 = vpop.permute.xlu0 %6308
      %6310 = vrot.lane.b32.xlu0 %v4994, 16
      %v6311 = vpop.permute.xlu0 %6310
      %v6312 = vsel %vm1070, %v6309, %v6311
      %v6313 = vsel %vm5001, %v6312, 0
      %6315 = vmatprep.subr.mxu0 0.0
      %6316 = vmatpush1.msra.mxu0 %v4997
      %6317 = vmatprep.subr.mxu0 0.0
      %6318 = vmatpush1.msra.mxu0 %v4998
      %6319 = vmatprep.subr.mxu0 0.0
      %6320 = vmatpush1.msra.mxu0 %v4999
      %6321 = vmatprep.subr.mxu0 0.0
      %6322 = vmatpush1.msra.mxu0 %v5007
      %6323 = vmatprep.subr.mxu0 0.0
      %6324 = vmatpush1.msra.mxu0 0.0
      %6325 = vmatprep.subr.mxu0 0.0
      %6326 = vmatpush1.msra.mxu0 0.0
      %6327 = vmatprep.subr.mxu0 0.0
      %6328 = vmatpush1.msra.mxu0 0.0
      %6329 = vmatprep.subr.mxu0 0.0
      %6330 = vmatpush1.msra.mxu0 0.0
      %6331 = vmatprep.subr.mxu0 0.0
      %6332 = vmatpush1.msra.mxu0 0.0
      %6333 = vmatprep.subr.mxu0 0.0
      %6334 = vmatpush1.msra.mxu0 0.0
      %6335 = vmatprep.subr.mxu0 0.0
      %6336 = vmatpush1.msra.mxu0 0.0
      %6337 = vmatprep.subr.mxu0 0.0
      %6338 = vmatpush1.msra.mxu0 0.0
      %6339 = vmatprep.subr.mxu0 0.0
      %6340 = vmatpush1.msra.mxu0 0.0
      %6341 = vmatprep.subr.mxu0 0.0
      %6342 = vmatpush1.msra.mxu0 0.0
      %6343 = vmatprep.subr.mxu0 0.0
      %6344 = vmatpush1.msra.mxu0 0.0
      %6345 = vmatprep.subr.mxu0 0.0
      %6346 = vmatpush1.msra.mxu0 0.0
      %6347 = vmatprep.subr.mxu0 0.0
      %6348 = vmatpush1.msra.mxu0 0.0
      %6349 = vmatprep.subr.mxu0 0.0
      %6350 = vmatpush1.msra.mxu0 0.0
      %6351 = vmatprep.subr.mxu0 0.0
      %6352 = vmatpush1.msra.mxu0 0.0
      %6353 = vmatprep.subr.mxu0 0.0
      %6354 = vmatpush1.msra.mxu0 0.0
      %6355 = vmatprep.subr.mxu0 0.0
      %6356 = vmatpush1.msra.mxu0 0.0
      %6357 = vmatprep.subr.mxu0 0.0
      %6358 = vmatpush1.msra.mxu0 0.0
      %6359 = vmatprep.subr.mxu0 0.0
      %6360 = vmatpush1.msra.mxu0 0.0
      %6361 = vmatprep.subr.mxu0 0.0
      %6362 = vmatpush1.msra.mxu0 0.0
      %6363 = vmatprep.subr.mxu0 0.0
      %6364 = vmatpush1.msra.mxu0 0.0
      %6365 = vmatprep.subr.mxu0 0.0
      %6366 = vmatpush1.msra.mxu0 0.0
      %6367 = vmatprep.subr.mxu0 0.0
      %6368 = vmatpush1.msra.mxu0 0.0
      %6369 = vmatprep.subr.mxu0 0.0
      %6370 = vmatpush1.msra.mxu0 0.0
      %6371 = vmatprep.subr.mxu0 0.0
      %6372 = vmatpush1.msra.mxu0 0.0
      %6373 = vmatprep.subr.mxu0 0.0
      %6374 = vmatpush1.msra.mxu0 0.0
      %6375 = vmatprep.subr.mxu0 0.0
      %6376 = vmatpush1.msra.mxu0 0.0
      %6377 = vmatprep.subr.mxu0 0.0
      %6378 = vmatpush1.msra.mxu0 0.0
      %6379 = vmatprep.mubr.f32.mxu0 0.0
      %6380 = vmatmul.mubr.f32.gmra.mrb[0].mxu0 %v6313
      %v6381 = vpop.f32.mrb[0].mxu0
      %v6382 = vadd.f32 0.0, %v6381
      %v6383 = vpop.f32.mrb[0].mxu0
      %6384 = vdwg.mxu0
      %6386 = vrot.lane.b32.xlu0 %v6382, 32
      %v6387 = vpop.permute.xlu0 %6386
      %vm6389 = vcmask 695552
      %6390 = vst.msk [vmem:[#allocation4 + $0x68] sm:$0xff] %vm6389, %v6387
      %6391 = vrot.lane.b32.xlu0 %v4994, 113
      %v6392 = vpop.permute.xlu0 %6391
      %v6393 = vsel %vm5001, %v6392, 0
      %6395 = vmatprep.subr.mxu0 0.0
      %6396 = vmatpush1.msra.mxu0 %v4997
      %6397 = vmatprep.subr.mxu0 0.0
      %6398 = vmatpush1.msra.mxu0 %v4998
      %6399 = vmatprep.subr.mxu0 0.0
      %6400 = vmatpush1.msra.mxu0 %v4999
      %6401 = vmatprep.subr.mxu0 0.0
      %6402 = vmatpush1.msra.mxu0 %v5007
      %6403 = vmatprep.subr.mxu0 0.0
      %6404 = vmatpush1.msra.mxu0 0.0
      %6405 = vmatprep.subr.mxu0 0.0
      %6406 = vmatpush1.msra.mxu0 0.0
      %6407 = vmatprep.subr.mxu0 0.0
      %6408 = vmatpush1.msra.mxu0 0.0
      %6409 = vmatprep.subr.mxu0 0.0
      %6410 = vmatpush1.msra.mxu0 0.0
      %6411 = vmatprep.subr.mxu0 0.0
      %6412 = vmatpush1.msra.mxu0 0.0
      %6413 = vmatprep.subr.mxu0 0.0
      %6414 = vmatpush1.msra.mxu0 0.0
      %6415 = vmatprep.subr.mxu0 0.0
      %6416 = vmatpush1.msra.mxu0 0.0
      %6417 = vmatprep.subr.mxu0 0.0
      %6418 = vmatpush1.msra.mxu0 0.0
      %6419 = vmatprep.subr.mxu0 0.0
      %6420 = vmatpush1.msra.mxu0 0.0
      %6421 = vmatprep.subr.mxu0 0.0
      %6422 = vmatpush1.msra.mxu0 0.0
      %6423 = vmatprep.subr.mxu0 0.0
      %6424 = vmatpush1.msra.mxu0 0.0
      %6425 = vmatprep.subr.mxu0 0.0
      %6426 = vmatpush1.msra.mxu0 0.0
      %6427 = vmatprep.subr.mxu0 0.0
      %6428 = vmatpush1.msra.mxu0 0.0
      %6429 = vmatprep.subr.mxu0 0.0
      %6430 = vmatpush1.msra.mxu0 0.0
      %6431 = vmatprep.subr.mxu0 0.0
      %6432 = vmatpush1.msra.mxu0 0.0
      %6433 = vmatprep.subr.mxu0 0.0
      %6434 = vmatpush1.msra.mxu0 0.0
      %6435 = vmatprep.subr.mxu0 0.0
      %6436 = vmatpush1.msra.mxu0 0.0
      %6437 = vmatprep.subr.mxu0 0.0
      %6438 = vmatpush1.msra.mxu0 0.0
      %6439 = vmatprep.subr.mxu0 0.0
      %6440 = vmatpush1.msra.mxu0 0.0
      %6441 = vmatprep.subr.mxu0 0.0
      %6442 = vmatpush1.msra.mxu0 0.0
      %6443 = vmatprep.subr.mxu0 0.0
      %6444 = vmatpush1.msra.mxu0 0.0
      %6445 = vmatprep.subr.mxu0 0.0
      %6446 = vmatpush1.msra.mxu0 0.0
      %6447 = vmatprep.subr.mxu0 0.0
      %6448 = vmatpush1.msra.mxu0 0.0
      %6449 = vmatprep.subr.mxu0 0.0
      %6450 = vmatpush1.msra.mxu0 0.0
      %6451 = vmatprep.subr.mxu0 0.0
      %6452 = vmatpush1.msra.mxu0 0.0
      %6453 = vmatprep.subr.mxu0 0.0
      %6454 = vmatpush1.msra.mxu0 0.0
      %6455 = vmatprep.subr.mxu0 0.0
      %6456 = vmatpush1.msra.mxu0 0.0
      %6457 = vmatprep.subr.mxu0 0.0
      %6458 = vmatpush1.msra.mxu0 0.0
      %6459 = vmatprep.mubr.f32.mxu0 0.0
      %6460 = vmatmul.mubr.f32.gmra.mrb[0].mxu0 %v6393
      %v6461 = vpop.f32.mrb[0].mxu0
      %v6462 = vadd.f32 0.0, %v6461
      %v6463 = vpop.f32.mrb[0].mxu0
      %6464 = vdwg.mxu0
      %6466 = vrot.lane.b32.xlu0 %v6462, 10
      %v6467 = vpop.permute.xlu0 %6466
      %vm6469 = vcmask 515152
      %6470 = vst.msk [vmem:[#allocation4 + $0x70] sm:$0xff] %vm6469, %v6467
      %6471 = vrot.lane.b32.xlu0 %v4994, 82
      %v6472 = vpop.permute.xlu0 %6471
      %v6473 = vsel %vm5001, %v6472, 0
      %6475 = vmatprep.subr.mxu0 0.0
      %6476 = vmatpush1.msra.mxu0 %v4997
      %6477 = vmatprep.subr.mxu0 0.0
      %6478 = vmatpush1.msra.mxu0 %v4998
      %6479 = vmatprep.subr.mxu0 0.0
      %6480 = vmatpush1.msra.mxu0 %v4999
      %6481 = vmatprep.subr.mxu0 0.0
      %6482 = vmatpush1.msra.mxu0 %v5007
      %6483 = vmatprep.subr.mxu0 0.0
      %6484 = vmatpush1.msra.mxu0 0.0
      %6485 = vmatprep.subr.mxu0 0.0
      %6486 = vmatpush1.msra.mxu0 0.0
      %6487 = vmatprep.subr.mxu0 0.0
      %6488 = vmatpush1.msra.mxu0 0.0
      %6489 = vmatprep.subr.mxu0 0.0
      %6490 = vmatpush1.msra.mxu0 0.0
      %6491 = vmatprep.subr.mxu0 0.0
      %6492 = vmatpush1.msra.mxu0 0.0
      %6493 = vmatprep.subr.mxu0 0.0
      %6494 = vmatpush1.msra.mxu0 0.0
      %6495 = vmatprep.subr.mxu0 0.0
      %6496 = vmatpush1.msra.mxu0 0.0
      %6497 = vmatprep.subr.mxu0 0.0
      %6498 = vmatpush1.msra.mxu0 0.0
      %6499 = vmatprep.subr.mxu0 0.0
      %6500 = vmatpush1.msra.mxu0 0.0
      %6501 = vmatprep.subr.mxu0 0.0
      %6502 = vmatpush1.msra.mxu0 0.0
      %6503 = vmatprep.subr.mxu0 0.0
      %6504 = vmatpush1.msra.mxu0 0.0
      %6505 = vmatprep.subr.mxu0 0.0
      %6506 = vmatpush1.msra.mxu0 0.0
      %6507 = vmatprep.subr.mxu0 0.0
      %6508 = vmatpush1.msra.mxu0 0.0
      %6509 = vmatprep.subr.mxu0 0.0
      %6510 = vmatpush1.msra.mxu0 0.0
      %6511 = vmatprep.subr.mxu0 0.0
      %6512 = vmatpush1.msra.mxu0 0.0
      %6513 = vmatprep.subr.mxu0 0.0
      %6514 = vmatpush1.msra.mxu0 0.0
      %6515 = vmatprep.subr.mxu0 0.0
      %6516 = vmatpush1.msra.mxu0 0.0
      %6517 = vmatprep.subr.mxu0 0.0
      %6518 = vmatpush1.msra.mxu0 0.0
      %6519 = vmatprep.subr.mxu0 0.0
      %6520 = vmatpush1.msra.mxu0 0.0
      %6521 = vmatprep.subr.mxu0 0.0
      %6522 = vmatpush1.msra.mxu0 0.0
      %6523 = vmatprep.subr.mxu0 0.0
      %6524 = vmatpush1.msra.mxu0 0.0
      %6525 = vmatprep.subr.mxu0 0.0
      %6526 = vmatpush1.msra.mxu0 0.0
      %6527 = vmatprep.subr.mxu0 0.0
      %6528 = vmatpush1.msra.mxu0 0.0
      %6529 = vmatprep.subr.mxu0 0.0
      %6530 = vmatpush1.msra.mxu0 0.0
      %6531 = vmatprep.subr.mxu0 0.0
      %6532 = vmatpush1.msra.mxu0 0.0
      %6533 = vmatprep.subr.mxu0 0.0
      %6534 = vmatpush1.msra.mxu0 0.0
      %6535 = vmatprep.subr.mxu0 0.0
      %6536 = vmatpush1.msra.mxu0 0.0
      %6537 = vmatprep.subr.mxu0 0.0
      %6538 = vmatpush1.msra.mxu0 0.0
      %6539 = vmatprep.mubr.f32.mxu0 0.0
      %6540 = vmatmul.mubr.f32.gmra.mrb[0].mxu0 %v6473
      %v6541 = vpop.f32.mrb[0].mxu0
      %v6542 = vadd.f32 0.0, %v6541
      %v6543 = vpop.f32.mrb[0].mxu0
      %6544 = vdwg.mxu0
      %6546 = vrot.lane.b32.xlu0 %v6542, 116
      %v6547 = vpop.permute.xlu0 %6546
      %vm6549 = vcmask 1048480
      %6550 = vst.msk [vmem:[#allocation4 + $0x70] sm:$0xff] %vm6549, %v6547
      %vm6551 = vcmask 334848
      %6552 = vst.msk [vmem:[#allocation4 + $0x78] sm:$0xff] %vm6551, %v6547
      %6553 = vrot.lane.b32.xlu0 %v4994, 51
      %v6554 = vpop.permute.xlu0 %6553
      %v6555 = vsel %vm5001, %v6554, 0
      %6557 = vmatprep.subr.mxu0 0.0
      %6558 = vmatpush1.msra.mxu0 %v4997
      %6559 = vmatprep.subr.mxu0 0.0
      %6560 = vmatpush1.msra.mxu0 %v4998
      %6561 = vmatprep.subr.mxu0 0.0
      %6562 = vmatpush1.msra.mxu0 %v4999
      %6563 = vmatprep.subr.mxu0 0.0
      %6564 = vmatpush1.msra.mxu0 %v5007
      %6565 = vmatprep.subr.mxu0 0.0
      %6566 = vmatpush1.msra.mxu0 0.0
      %6567 = vmatprep.subr.mxu0 0.0
      %6568 = vmatpush1.msra.mxu0 0.0
      %6569 = vmatprep.subr.mxu0 0.0
      %6570 = vmatpush1.msra.mxu0 0.0
      %6571 = vmatprep.subr.mxu0 0.0
      %6572 = vmatpush1.msra.mxu0 0.0
      %6573 = vmatprep.subr.mxu0 0.0
      %6574 = vmatpush1.msra.mxu0 0.0
      %6575 = vmatprep.subr.mxu0 0.0
      %6576 = vmatpush1.msra.mxu0 0.0
      %6577 = vmatprep.subr.mxu0 0.0
      %6578 = vmatpush1.msra.mxu0 0.0
      %6579 = vmatprep.subr.mxu0 0.0
      %6580 = vmatpush1.msra.mxu0 0.0
      %6581 = vmatprep.subr.mxu0 0.0
      %6582 = vmatpush1.msra.mxu0 0.0
      %6583 = vmatprep.subr.mxu0 0.0
      %6584 = vmatpush1.msra.mxu0 0.0
      %6585 = vmatprep.subr.mxu0 0.0
      %6586 = vmatpush1.msra.mxu0 0.0
      %6587 = vmatprep.subr.mxu0 0.0
      %6588 = vmatpush1.msra.mxu0 0.0
      %6589 = vmatprep.subr.mxu0 0.0
      %6590 = vmatpush1.msra.mxu0 0.0
      %6591 = vmatprep.subr.mxu0 0.0
      %6592 = vmatpush1.msra.mxu0 0.0
      %6593 = vmatprep.subr.mxu0 0.0
      %6594 = vmatpush1.msra.mxu0 0.0
      %6595 = vmatprep.subr.mxu0 0.0
      %6596 = vmatpush1.msra.mxu0 0.0
      %6597 = vmatprep.subr.mxu0 0.0
      %6598 = vmatpush1.msra.mxu0 0.0
      %6599 = vmatprep.subr.mxu0 0.0
      %6600 = vmatpush1.msra.mxu0 0.0
      %6601 = vmatprep.subr.mxu0 0.0
      %6602 = vmatpush1.msra.mxu0 0.0
      %6603 = vmatprep.subr.mxu0 0.0
      %6604 = vmatpush1.msra.mxu0 0.0
      %6605 = vmatprep.subr.mxu0 0.0
      %6606 = vmatpush1.msra.mxu0 0.0
      %6607 = vmatprep.subr.mxu0 0.0
      %6608 = vmatpush1.msra.mxu0 0.0
      %6609 = vmatprep.subr.mxu0 0.0
      %6610 = vmatpush1.msra.mxu0 0.0
      %6611 = vmatprep.subr.mxu0 0.0
      %6612 = vmatpush1.msra.mxu0 0.0
      %6613 = vmatprep.subr.mxu0 0.0
      %6614 = vmatpush1.msra.mxu0 0.0
      %6615 = vmatprep.subr.mxu0 0.0
      %6616 = vmatpush1.msra.mxu0 0.0
      %6617 = vmatprep.subr.mxu0 0.0
      %6618 = vmatpush1.msra.mxu0 0.0
      %6619 = vmatprep.subr.mxu0 0.0
      %6620 = vmatpush1.msra.mxu0 0.0
      %6621 = vmatprep.mubr.f32.mxu0 0.0
      %6622 = vmatmul.mubr.f32.gmra.mrb[0].mxu0 %v6555
      %v6623 = vpop.f32.mrb[0].mxu0
      %v6624 = vadd.f32 0.0, %v6623
      %v6625 = vpop.f32.mrb[0].mxu0
      %6626 = vdwg.mxu0
      %6628 = vrot.lane.b32.xlu0 %v6624, 94
      %v6629 = vpop.permute.xlu0 %6628
      %vm6631 = vcmask 1048304
      %6632 = vst.msk [vmem:[#allocation4 + $0x78] sm:$0xff] %vm6631, %v6629
      %vm6633 = vcmask 154624
      %6634 = vst.msk [vmem:[#allocation4 + $0x80] sm:$0xff] %vm6633, %v6629
      %6636 = vrot.lane.b32.xlu0 %v4994, 20
      %v6637 = vpop.permute.xlu0 %6636
      %6638 = vrot.lane.b32.xlu0 %v4995, 20
      %v6639 = vpop.permute.xlu0 %6638
      %vm6640 = vcmask 162816
      %v6641 = vsel %vm6640, %v6637, %v6639
      %v6642 = vsel %vm5001, %v6641, 0
      %6644 = vmatprep.subr.mxu0 0.0
      %6645 = vmatpush1.msra.mxu0 %v4997
      %6646 = vmatprep.subr.mxu0 0.0
      %6647 = vmatpush1.msra.mxu0 %v4998
      %6648 = vmatprep.subr.mxu0 0.0
      %6649 = vmatpush1.msra.mxu0 %v4999
      %6650 = vmatprep.subr.mxu0 0.0
      %6651 = vmatpush1.msra.mxu0 %v5007
      %6652 = vmatprep.subr.mxu0 0.0
      %6653 = vmatpush1.msra.mxu0 0.0
      %6654 = vmatprep.subr.mxu0 0.0
      %6655 = vmatpush1.msra.mxu0 0.0
      %6656 = vmatprep.subr.mxu0 0.0
      %6657 = vmatpush1.msra.mxu0 0.0
      %6658 = vmatprep.subr.mxu0 0.0
      %6659 = vmatpush1.msra.mxu0 0.0
      %6660 = vmatprep.subr.mxu0 0.0
      %6661 = vmatpush1.msra.mxu0 0.0
      %6662 = vmatprep.subr.mxu0 0.0
      %6663 = vmatpush1.msra.mxu0 0.0
      %6664 = vmatprep.subr.mxu0 0.0
      %6665 = vmatpush1.msra.mxu0 0.0
      %6666 = vmatprep.subr.mxu0 0.0
      %6667 = vmatpush1.msra.mxu0 0.0
      %6668 = vmatprep.subr.mxu0 0.0
      %6669 = vmatpush1.msra.mxu0 0.0
      %6670 = vmatprep.subr.mxu0 0.0
      %6671 = vmatpush1.msra.mxu0 0.0
      %6672 = vmatprep.subr.mxu0 0.0
      %6673 = vmatpush1.msra.mxu0 0.0
      %6674 = vmatprep.subr.mxu0 0.0
      %6675 = vmatpush1.msra.mxu0 0.0
      %6676 = vmatprep.subr.mxu0 0.0
      %6677 = vmatpush1.msra.mxu0 0.0
      %6678 = vmatprep.subr.mxu0 0.0
      %6679 = vmatpush1.msra.mxu0 0.0
      %6680 = vmatprep.subr.mxu0 0.0
      %6681 = vmatpush1.msra.mxu0 0.0
      %6682 = vmatprep.subr.mxu0 0.0
      %6683 = vmatpush1.msra.mxu0 0.0
      %6684 = vmatprep.subr.mxu0 0.0
      %6685 = vmatpush1.msra.mxu0 0.0
      %6686 = vmatprep.subr.mxu0 0.0
      %6687 = vmatpush1.msra.mxu0 0.0
      %6688 = vmatprep.subr.mxu0 0.0
      %6689 = vmatpush1.msra.mxu0 0.0
      %6690 = vmatprep.subr.mxu0 0.0
      %6691 = vmatpush1.msra.mxu0 0.0
      %6692 = vmatprep.subr.mxu0 0.0
      %6693 = vmatpush1.msra.mxu0 0.0
      %6694 = vmatprep.subr.mxu0 0.0
      %6695 = vmatpush1.msra.mxu0 0.0
      %6696 = vmatprep.subr.mxu0 0.0
      %6697 = vmatpush1.msra.mxu0 0.0
      %6698 = vmatprep.subr.mxu0 0.0
      %6699 = vmatpush1.msra.mxu0 0.0
      %6700 = vmatprep.subr.mxu0 0.0
      %6701 = vmatpush1.msra.mxu0 0.0
      %6702 = vmatprep.subr.mxu0 0.0
      %6703 = vmatpush1.msra.mxu0 0.0
      %6704 = vmatprep.subr.mxu0 0.0
      %6705 = vmatpush1.msra.mxu0 0.0
      %6706 = vmatprep.subr.mxu0 0.0
      %6707 = vmatpush1.msra.mxu0 0.0
      %6708 = vmatprep.mubr.f32.mxu0 0.0
      %6709 = vmatmul.mubr.f32.gmra.mrb[0].mxu0 %v6642
      %v6710 = vpop.f32.mrb[0].mxu0
      %v6711 = vadd.f32 0.0, %v6710
      %v6712 = vpop.f32.mrb[0].mxu0
      %6713 = vdwg.mxu0
      %6715 = vrot.lane.b32.xlu0 %v6711, 72
      %v6716 = vpop.permute.xlu0 %6715
      %vm6718 = vcmask 1023552
      %6719 = vst.msk [vmem:[#allocation4 + $0x80] sm:$0xff] %vm6718, %v6716
      %6720 = vrot.lane.b32.xlu0 %v4995, 117
      %v6721 = vpop.permute.xlu0 %6720
      %v6722 = vsel %vm5001, %v6721, 0
      %6724 = vmatprep.subr.mxu0 0.0
      %6725 = vmatpush1.msra.mxu0 %v4997
      %6726 = vmatprep.subr.mxu0 0.0
      %6727 = vmatpush1.msra.mxu0 %v4998
      %6728 = vmatprep.subr.mxu0 0.0
      %6729 = vmatpush1.msra.mxu0 %v4999
      %6730 = vmatprep.subr.mxu0 0.0
      %6731 = vmatpush1.msra.mxu0 %v5007
      %6732 = vmatprep.subr.mxu0 0.0
      %6733 = vmatpush1.msra.mxu0 0.0
      %6734 = vmatprep.subr.mxu0 0.0
      %6735 = vmatpush1.msra.mxu0 0.0
      %6736 = vmatprep.subr.mxu0 0.0
      %6737 = vmatpush1.msra.mxu0 0.0
      %6738 = vmatprep.subr.mxu0 0.0
      %6739 = vmatpush1.msra.mxu0 0.0
      %6740 = vmatprep.subr.mxu0 0.0
      %6741 = vmatpush1.msra.mxu0 0.0
      %6742 = vmatprep.subr.mxu0 0.0
      %6743 = vmatpush1.msra.mxu0 0.0
      %6744 = vmatprep.subr.mxu0 0.0
      %6745 = vmatpush1.msra.mxu0 0.0
      %6746 = vmatprep.subr.mxu0 0.0
      %6747 = vmatpush1.msra.mxu0 0.0
      %6748 = vmatprep.subr.mxu0 0.0
      %6749 = vmatpush1.msra.mxu0 0.0
      %6750 = vmatprep.subr.mxu0 0.0
      %6751 = vmatpush1.msra.mxu0 0.0
      %6752 = vmatprep.subr.mxu0 0.0
      %6753 = vmatpush1.msra.mxu0 0.0
      %6754 = vmatprep.subr.mxu0 0.0
      %6755 = vmatpush1.msra.mxu0 0.0
      %6756 = vmatprep.subr.mxu0 0.0
      %6757 = vmatpush1.msra.mxu0 0.0
      %6758 = vmatprep.subr.mxu0 0.0
      %6759 = vmatpush1.msra.mxu0 0.0
      %6760 = vmatprep.subr.mxu0 0.0
      %6761 = vmatpush1.msra.mxu0 0.0
      %6762 = vmatprep.subr.mxu0 0.0
      %6763 = vmatpush1.msra.mxu0 0.0
      %6764 = vmatprep.subr.mxu0 0.0
      %6765 = vmatpush1.msra.mxu0 0.0
      %6766 = vmatprep.subr.mxu0 0.0
      %6767 = vmatpush1.msra.mxu0 0.0
      %6768 = vmatprep.subr.mxu0 0.0
      %6769 = vmatpush1.msra.mxu0 0.0
      %6770 = vmatprep.subr.mxu0 0.0
      %6771 = vmatpush1.msra.mxu0 0.0
      %6772 = vmatprep.subr.mxu0 0.0
      %6773 = vmatpush1.msra.mxu0 0.0
      %6774 = vmatprep.subr.mxu0 0.0
      %6775 = vmatpush1.msra.mxu0 0.0
      %6776 = vmatprep.subr.mxu0 0.0
      %6777 = vmatpush1.msra.mxu0 0.0
      %6778 = vmatprep.subr.mxu0 0.0
      %6779 = vmatpush1.msra.mxu0 0.0
      %6780 = vmatprep.subr.mxu0 0.0
      %6781 = vmatpush1.msra.mxu0 0.0
      %6782 = vmatprep.subr.mxu0 0.0
      %6783 = vmatpush1.msra.mxu0 0.0
      %6784 = vmatprep.subr.mxu0 0.0
      %6785 = vmatpush1.msra.mxu0 0.0
      %6786 = vmatprep.subr.mxu0 0.0
      %6787 = vmatpush1.msra.mxu0 0.0
      %6788 = vmatprep.mubr.f32.mxu0 0.0
      %6789 = vmatmul.mubr.f32.gmra.mrb[0].mxu0 %v6722
      %v6790 = vpop.f32.mrb[0].mxu0
      %v6791 = vadd.f32 0.0, %v6790
      %v6792 = vpop.f32.mrb[0].mxu0
      %6793 = vdwg.mxu0
      %6795 = vrot.lane.b32.xlu0 %v6791, 50
      %v6796 = vpop.permute.xlu0 %6795
      %vm6798 = vcmask 843152
      %6799 = vst.msk [vmem:[#allocation4 + $0x88] sm:$0xff] %vm6798, %v6796
      %6800 = vrot.lane.b32.xlu0 %v4995, 86
      %v6801 = vpop.permute.xlu0 %6800
      %v6802 = vsel %vm5001, %v6801, 0
      %6804 = vmatprep.subr.mxu0 0.0
      %6805 = vmatpush1.msra.mxu0 %v4997
      %6806 = vmatprep.subr.mxu0 0.0
      %6807 = vmatpush1.msra.mxu0 %v4998
      %6808 = vmatprep.subr.mxu0 0.0
      %6809 = vmatpush1.msra.mxu0 %v4999
      %6810 = vmatprep.subr.mxu0 0.0
      %6811 = vmatpush1.msra.mxu0 %v5007
      %6812 = vmatprep.subr.mxu0 0.0
      %6813 = vmatpush1.msra.mxu0 0.0
      %6814 = vmatprep.subr.mxu0 0.0
      %6815 = vmatpush1.msra.mxu0 0.0
      %6816 = vmatprep.subr.mxu0 0.0
      %6817 = vmatpush1.msra.mxu0 0.0
      %6818 = vmatprep.subr.mxu0 0.0
      %6819 = vmatpush1.msra.mxu0 0.0
      %6820 = vmatprep.subr.mxu0 0.0
      %6821 = vmatpush1.msra.mxu0 0.0
      %6822 = vmatprep.subr.mxu0 0.0
      %6823 = vmatpush1.msra.mxu0 0.0
      %6824 = vmatprep.subr.mxu0 0.0
      %6825 = vmatpush1.msra.mxu0 0.0
      %6826 = vmatprep.subr.mxu0 0.0
      %6827 = vmatpush1.msra.mxu0 0.0
      %6828 = vmatprep.subr.mxu0 0.0
      %6829 = vmatpush1.msra.mxu0 0.0
      %6830 = vmatprep.subr.mxu0 0.0
      %6831 = vmatpush1.msra.mxu0 0.0
      %6832 = vmatprep.subr.mxu0 0.0
      %6833 = vmatpush1.msra.mxu0 0.0
      %6834 = vmatprep.subr.mxu0 0.0
      %6835 = vmatpush1.msra.mxu0 0.0
      %6836 = vmatprep.subr.mxu0 0.0
      %6837 = vmatpush1.msra.mxu0 0.0
      %6838 = vmatprep.subr.mxu0 0.0
      %6839 = vmatpush1.msra.mxu0 0.0
      %6840 = vmatprep.subr.mxu0 0.0
      %6841 = vmatpush1.msra.mxu0 0.0
      %6842 = vmatprep.subr.mxu0 0.0
      %6843 = vmatpush1.msra.mxu0 0.0
      %6844 = vmatprep.subr.mxu0 0.0
      %6845 = vmatpush1.msra.mxu0 0.0
      %6846 = vmatprep.subr.mxu0 0.0
      %6847 = vmatpush1.msra.mxu0 0.0
      %6848 = vmatprep.subr.mxu0 0.0
      %6849 = vmatpush1.msra.mxu0 0.0
      %6850 = vmatprep.subr.mxu0 0.0
      %6851 = vmatpush1.msra.mxu0 0.0
      %6852 = vmatprep.subr.mxu0 0.0
      %6853 = vmatpush1.msra.mxu0 0.0
      %6854 = vmatprep.subr.mxu0 0.0
      %6855 = vmatpush1.msra.mxu0 0.0
      %6856 = vmatprep.subr.mxu0 0.0
      %6857 = vmatpush1.msra.mxu0 0.0
      %6858 = vmatprep.subr.mxu0 0.0
      %6859 = vmatpush1.msra.mxu0 0.0
      %6860 = vmatprep.subr.mxu0 0.0
      %6861 = vmatpush1.msra.mxu0 0.0
      %6862 = vmatprep.subr.mxu0 0.0
      %6863 = vmatpush1.msra.mxu0 0.0
      %6864 = vmatprep.subr.mxu0 0.0
      %6865 = vmatpush1.msra.mxu0 0.0
      %6866 = vmatprep.subr.mxu0 0.0
      %6867 = vmatpush1.msra.mxu0 0.0
      %6868 = vmatprep.mubr.f32.mxu0 0.0
      %6869 = vmatmul.mubr.f32.gmra.mrb[0].mxu0 %v6802
      %v6870 = vpop.f32.mrb[0].mxu0
      %v6871 = vadd.f32 0.0, %v6870
      %v6872 = vpop.f32.mrb[0].mxu0
      %6873 = vdwg.mxu0
      %6875 = vrot.lane.b32.xlu0 %v6871, 28
      %v6876 = vpop.permute.xlu0 %6875
      %vm6878 = vcmask 662752
      %6879 = vst.msk [vmem:[#allocation4 + $0x90] sm:$0xff] %vm6878, %v6876
      %6880 = vrot.lane.b32.xlu0 %v4995, 55
      %v6881 = vpop.permute.xlu0 %6880
      %v6882 = vsel %vm5001, %v6881, 0
      %6884 = vmatprep.subr.mxu0 0.0
      %6885 = vmatpush1.msra.mxu0 %v4997
      %6886 = vmatprep.subr.mxu0 0.0
      %6887 = vmatpush1.msra.mxu0 %v4998
      %6888 = vmatprep.subr.mxu0 0.0
      %6889 = vmatpush1.msra.mxu0 %v4999
      %6890 = vmatprep.subr.mxu0 0.0
      %6891 = vmatpush1.msra.mxu0 %v5007
      %6892 = vmatprep.subr.mxu0 0.0
      %6893 = vmatpush1.msra.mxu0 0.0
      %6894 = vmatprep.subr.mxu0 0.0
      %6895 = vmatpush1.msra.mxu0 0.0
      %6896 = vmatprep.subr.mxu0 0.0
      %6897 = vmatpush1.msra.mxu0 0.0
      %6898 = vmatprep.subr.mxu0 0.0
      %6899 = vmatpush1.msra.mxu0 0.0
      %6900 = vmatprep.subr.mxu0 0.0
      %6901 = vmatpush1.msra.mxu0 0.0
      %6902 = vmatprep.subr.mxu0 0.0
      %6903 = vmatpush1.msra.mxu0 0.0
      %6904 = vmatprep.subr.mxu0 0.0
      %6905 = vmatpush1.msra.mxu0 0.0
      %6906 = vmatprep.subr.mxu0 0.0
      %6907 = vmatpush1.msra.mxu0 0.0
      %6908 = vmatprep.subr.mxu0 0.0
      %6909 = vmatpush1.msra.mxu0 0.0
      %6910 = vmatprep.subr.mxu0 0.0
      %6911 = vmatpush1.msra.mxu0 0.0
      %6912 = vmatprep.subr.mxu0 0.0
      %6913 = vmatpush1.msra.mxu0 0.0
      %6914 = vmatprep.subr.mxu0 0.0
      %6915 = vmatpush1.msra.mxu0 0.0
      %6916 = vmatprep.subr.mxu0 0.0
      %6917 = vmatpush1.msra.mxu0 0.0
      %6918 = vmatprep.subr.mxu0 0.0
      %6919 = vmatpush1.msra.mxu0 0.0
      %6920 = vmatprep.subr.mxu0 0.0
      %6921 = vmatpush1.msra.mxu0 0.0
      %6922 = vmatprep.subr.mxu0 0.0
      %6923 = vmatpush1.msra.mxu0 0.0
      %6924 = vmatprep.subr.mxu0 0.0
      %6925 = vmatpush1.msra.mxu0 0.0
      %6926 = vmatprep.subr.mxu0 0.0
      %6927 = vmatpush1.msra.mxu0 0.0
      %6928 = vmatprep.subr.mxu0 0.0
      %6929 = vmatpush1.msra.mxu0 0.0
      %6930 = vmatprep.subr.mxu0 0.0
      %6931 = vmatpush1.msra.mxu0 0.0
      %6932 = vmatprep.subr.mxu0 0.0
      %6933 = vmatpush1.msra.mxu0 0.0
      %6934 = vmatprep.subr.mxu0 0.0
      %6935 = vmatpush1.msra.mxu0 0.0
      %6936 = vmatprep.subr.mxu0 0.0
      %6937 = vmatpush1.msra.mxu0 0.0
      %6938 = vmatprep.subr.mxu0 0.0
      %6939 = vmatpush1.msra.mxu0 0.0
      %6940 = vmatprep.subr.mxu0 0.0
      %6941 = vmatpush1.msra.mxu0 0.0
      %6942 = vmatprep.subr.mxu0 0.0
      %6943 = vmatpush1.msra.mxu0 0.0
      %6944 = vmatprep.subr.mxu0 0.0
      %6945 = vmatpush1.msra.mxu0 0.0
      %6946 = vmatprep.subr.mxu0 0.0
      %6947 = vmatpush1.msra.mxu0 0.0
      %6948 = vmatprep.mubr.f32.mxu0 0.0
      %6949 = vmatmul.mubr.f32.gmra.mrb[0].mxu0 %v6882
      %v6950 = vpop.f32.mrb[0].mxu0
      %v6951 = vadd.f32 0.0, %v6950
      %v6952 = vpop.f32.mrb[0].mxu0
      %6953 = vdwg.mxu0
      %6955 = vrot.lane.b32.xlu0 %v6951, 6
      %v6956 = vpop.permute.xlu0 %6955
      %vm6958 = vcmask 482352
      %6959 = vst.msk [vmem:[#allocation4 + $0x98] sm:$0xff] %vm6958, %v6956
      %6961 = vrot.lane.b32.xlu0 %v4995, 24
      %v6962 = vpop.permute.xlu0 %6961
      %6963 = vrot.lane.b32.xlu0 %v4996, 24
      %v6964 = vpop.permute.xlu0 %6963
      %v6965 = vsel %vm331, %v6962, %v6964
      %v6966 = vsel %vm5001, %v6965, 0
      %6968 = vmatprep.subr.mxu0 0.0
      %6969 = vmatpush1.msra.mxu0 %v4997
      %6970 = vmatprep.subr.mxu0 0.0
      %6971 = vmatpush1.msra.mxu0 %v4998
      %6972 = vmatprep.subr.mxu0 0.0
      %6973 = vmatpush1.msra.mxu0 %v4999
      %6974 = vmatprep.subr.mxu0 0.0
      %6975 = vmatpush1.msra.mxu0 %v5007
      %6976 = vmatprep.subr.mxu0 0.0
      %6977 = vmatpush1.msra.mxu0 0.0
      %6978 = vmatprep.subr.mxu0 0.0
      %6979 = vmatpush1.msra.mxu0 0.0
      %6980 = vmatprep.subr.mxu0 0.0
      %6981 = vmatpush1.msra.mxu0 0.0
      %6982 = vmatprep.subr.mxu0 0.0
      %6983 = vmatpush1.msra.mxu0 0.0
      %6984 = vmatprep.subr.mxu0 0.0
      %6985 = vmatpush1.msra.mxu0 0.0
      %6986 = vmatprep.subr.mxu0 0.0
      %6987 = vmatpush1.msra.mxu0 0.0
      %6988 = vmatprep.subr.mxu0 0.0
      %6989 = vmatpush1.msra.mxu0 0.0
      %6990 = vmatprep.subr.mxu0 0.0
      %6991 = vmatpush1.msra.mxu0 0.0
      %6992 = vmatprep.subr.mxu0 0.0
      %6993 = vmatpush1.msra.mxu0 0.0
      %6994 = vmatprep.subr.mxu0 0.0
      %6995 = vmatpush1.msra.mxu0 0.0
      %6996 = vmatprep.subr.mxu0 0.0
      %6997 = vmatpush1.msra.mxu0 0.0
      %6998 = vmatprep.subr.mxu0 0.0
      %6999 = vmatpush1.msra.mxu0 0.0
      %7000 = vmatprep.subr.mxu0 0.0
      %7001 = vmatpush1.msra.mxu0 0.0
      %7002 = vmatprep.subr.mxu0 0.0
      %7003 = vmatpush1.msra.mxu0 0.0
      %7004 = vmatprep.subr.mxu0 0.0
      %7005 = vmatpush1.msra.mxu0 0.0
      %7006 = vmatprep.subr.mxu0 0.0
      %7007 = vmatpush1.msra.mxu0 0.0
      %7008 = vmatprep.subr.mxu0 0.0
      %7009 = vmatpush1.msra.mxu0 0.0
      %7010 = vmatprep.subr.mxu0 0.0
      %7011 = vmatpush1.msra.mxu0 0.0
      %7012 = vmatprep.subr.mxu0 0.0
      %7013 = vmatpush1.msra.mxu0 0.0
      %7014 = vmatprep.subr.mxu0 0.0
      %7015 = vmatpush1.msra.mxu0 0.0
      %7016 = vmatprep.subr.mxu0 0.0
      %7017 = vmatpush1.msra.mxu0 0.0
      %7018 = vmatprep.subr.mxu0 0.0
      %7019 = vmatpush1.msra.mxu0 0.0
      %7020 = vmatprep.subr.mxu0 0.0
      %7021 = vmatpush1.msra.mxu0 0.0
      %7022 = vmatprep.subr.mxu0 0.0
      %7023 = vmatpush1.msra.mxu0 0.0
      %7024 = vmatprep.subr.mxu0 0.0
      %7025 = vmatpush1.msra.mxu0 0.0
      %7026 = vmatprep.subr.mxu0 0.0
      %7027 = vmatpush1.msra.mxu0 0.0
      %7028 = vmatprep.subr.mxu0 0.0
      %7029 = vmatpush1.msra.mxu0 0.0
      %7030 = vmatprep.subr.mxu0 0.0
      %7031 = vmatpush1.msra.mxu0 0.0
      %7032 = vmatprep.mubr.f32.mxu0 0.0
      %7033 = vmatmul.mubr.f32.gmra.mrb[0].mxu0 %v6966
      %v7034 = vpop.f32.mrb[0].mxu0
      %v7035 = vadd.f32 0.0, %v7034
      %v7036 = vpop.f32.mrb[0].mxu0
      %7037 = vdwg.mxu0
      %7039 = vrot.lane.b32.xlu0 %v7035, 112
      %v7040 = vpop.permute.xlu0 %7039
      %vm7042 = vcmask 1048448
      %7043 = vst.msk [vmem:[#allocation4 + $0x98] sm:$0xff] %vm7042, %v7040
      %vm7044 = vcmask 302080
      %7045 = vst.msk [vmem:[#allocation4 + $0xa0] sm:$0xff] %vm7044, %v7040
      %7046 = vrot.lane.b32.xlu0 %v4996, 121
      %v7047 = vpop.permute.xlu0 %7046
      %v7048 = vsel %vm5001, %v7047, 0
      %7050 = vmatprep.subr.mxu0 0.0
      %7051 = vmatpush1.msra.mxu0 %v4997
      %7052 = vmatprep.subr.mxu0 0.0
      %7053 = vmatpush1.msra.mxu0 %v4998
      %7054 = vmatprep.subr.mxu0 0.0
      %7055 = vmatpush1.msra.mxu0 %v4999
      %7056 = vmatprep.subr.mxu0 0.0
      %7057 = vmatpush1.msra.mxu0 %v5007
      %7058 = vmatprep.subr.mxu0 0.0
      %7059 = vmatpush1.msra.mxu0 0.0
      %7060 = vmatprep.subr.mxu0 0.0
      %7061 = vmatpush1.msra.mxu0 0.0
      %7062 = vmatprep.subr.mxu0 0.0
      %7063 = vmatpush1.msra.mxu0 0.0
      %7064 = vmatprep.subr.mxu0 0.0
      %7065 = vmatpush1.msra.mxu0 0.0
      %7066 = vmatprep.subr.mxu0 0.0
      %7067 = vmatpush1.msra.mxu0 0.0
      %7068 = vmatprep.subr.mxu0 0.0
      %7069 = vmatpush1.msra.mxu0 0.0
      %7070 = vmatprep.subr.mxu0 0.0
      %7071 = vmatpush1.msra.mxu0 0.0
      %7072 = vmatprep.subr.mxu0 0.0
      %7073 = vmatpush1.msra.mxu0 0.0
      %7074 = vmatprep.subr.mxu0 0.0
      %7075 = vmatpush1.msra.mxu0 0.0
      %7076 = vmatprep.subr.mxu0 0.0
      %7077 = vmatpush1.msra.mxu0 0.0
      %7078 = vmatprep.subr.mxu0 0.0
      %7079 = vmatpush1.msra.mxu0 0.0
      %7080 = vmatprep.subr.mxu0 0.0
      %7081 = vmatpush1.msra.mxu0 0.0
      %7082 = vmatprep.subr.mxu0 0.0
      %7083 = vmatpush1.msra.mxu0 0.0
      %7084 = vmatprep.subr.mxu0 0.0
      %7085 = vmatpush1.msra.mxu0 0.0
      %7086 = vmatprep.subr.mxu0 0.0
      %7087 = vmatpush1.msra.mxu0 0.0
      %7088 = vmatprep.subr.mxu0 0.0
      %7089 = vmatpush1.msra.mxu0 0.0
      %7090 = vmatprep.subr.mxu0 0.0
      %7091 = vmatpush1.msra.mxu0 0.0
      %7092 = vmatprep.subr.mxu0 0.0
      %7093 = vmatpush1.msra.mxu0 0.0
      %7094 = vmatprep.subr.mxu0 0.0
      %7095 = vmatpush1.msra.mxu0 0.0
      %7096 = vmatprep.subr.mxu0 0.0
      %7097 = vmatpush1.msra.mxu0 0.0
      %7098 = vmatprep.subr.mxu0 0.0
      %7099 = vmatpush1.msra.mxu0 0.0
      %7100 = vmatprep.subr.mxu0 0.0
      %7101 = vmatpush1.msra.mxu0 0.0
      %7102 = vmatprep.subr.mxu0 0.0
      %7103 = vmatpush1.msra.mxu0 0.0
      %7104 = vmatprep.subr.mxu0 0.0
      %7105 = vmatpush1.msra.mxu0 0.0
      %7106 = vmatprep.subr.mxu0 0.0
      %7107 = vmatpush1.msra.mxu0 0.0
      %7108 = vmatprep.subr.mxu0 0.0
      %7109 = vmatpush1.msra.mxu0 0.0
      %7110 = vmatprep.subr.mxu0 0.0
      %7111 = vmatpush1.msra.mxu0 0.0
      %7112 = vmatprep.subr.mxu0 0.0
      %7113 = vmatpush1.msra.mxu0 0.0
      %7114 = vmatprep.mubr.f32.mxu0 0.0
      %7115 = vmatmul.mubr.f32.gmra.mrb[0].mxu0 %v7048
      %v7116 = vpop.f32.mrb[0].mxu0
      %v7117 = vadd.f32 0.0, %v7116
      %v7118 = vpop.f32.mrb[0].mxu0
      %7119 = vdwg.mxu0
      %7121 = vrot.lane.b32.xlu0 %v7117, 90
      %v7122 = vpop.permute.xlu0 %7121
      %vm7124 = vcmask 1048272
      %7125 = vst.msk [vmem:[#allocation4 + $0xa0] sm:$0xff] %vm7124, %v7122
      %vm7126 = vcmask 121856
      %7127 = vst.msk [vmem:[#allocation4 + $0xa8] sm:$0xff] %vm7126, %v7122
      %7128 = vrot.lane.b32.xlu0 %v4996, 90
      %v7129 = vpop.permute.xlu0 %7128
      %v7130 = vsel %vm5001, %v7129, 0
      %7132 = vmatprep.subr.mxu0 0.0
      %7133 = vmatpush1.msra.mxu0 %v4997
      %7134 = vmatprep.subr.mxu0 0.0
      %7135 = vmatpush1.msra.mxu0 %v4998
      %7136 = vmatprep.subr.mxu0 0.0
      %7137 = vmatpush1.msra.mxu0 %v4999
      %7138 = vmatprep.subr.mxu0 0.0
      %7139 = vmatpush1.msra.mxu0 %v5007
      %7140 = vmatprep.subr.mxu0 0.0
      %7141 = vmatpush1.msra.mxu0 0.0
      %7142 = vmatprep.subr.mxu0 0.0
      %7143 = vmatpush1.msra.mxu0 0.0
      %7144 = vmatprep.subr.mxu0 0.0
      %7145 = vmatpush1.msra.mxu0 0.0
      %7146 = vmatprep.subr.mxu0 0.0
      %7147 = vmatpush1.msra.mxu0 0.0
      %7148 = vmatprep.subr.mxu0 0.0
      %7149 = vmatpush1.msra.mxu0 0.0
      %7150 = vmatprep.subr.mxu0 0.0
      %7151 = vmatpush1.msra.mxu0 0.0
      %7152 = vmatprep.subr.mxu0 0.0
      %7153 = vmatpush1.msra.mxu0 0.0
      %7154 = vmatprep.subr.mxu0 0.0
      %7155 = vmatpush1.msra.mxu0 0.0
      %7156 = vmatprep.subr.mxu0 0.0
      %7157 = vmatpush1.msra.mxu0 0.0
      %7158 = vmatprep.subr.mxu0 0.0
      %7159 = vmatpush1.msra.mxu0 0.0
      %7160 = vmatprep.subr.mxu0 0.0
      %7161 = vmatpush1.msra.mxu0 0.0
      %7162 = vmatprep.subr.mxu0 0.0
      %7163 = vmatpush1.msra.mxu0 0.0
      %7164 = vmatprep.subr.mxu0 0.0
      %7165 = vmatpush1.msra.mxu0 0.0
      %7166 = vmatprep.subr.mxu0 0.0
      %7167 = vmatpush1.msra.mxu0 0.0
      %7168 = vmatprep.subr.mxu0 0.0
      %7169 = vmatpush1.msra.mxu0 0.0
      %7170 = vmatprep.subr.mxu0 0.0
      %7171 = vmatpush1.msra.mxu0 0.0
      %7172 = vmatprep.subr.mxu0 0.0
      %7173 = vmatpush1.msra.mxu0 0.0
      %7174 = vmatprep.subr.mxu0 0.0
      %7175 = vmatpush1.msra.mxu0 0.0
      %7176 = vmatprep.subr.mxu0 0.0
      %7177 = vmatpush1.msra.mxu0 0.0
      %7178 = vmatprep.subr.mxu0 0.0
      %7179 = vmatpush1.msra.mxu0 0.0
      %7180 = vmatprep.subr.mxu0 0.0
      %7181 = vmatpush1.msra.mxu0 0.0
      %7182 = vmatprep.subr.mxu0 0.0
      %7183 = vmatpush1.msra.mxu0 0.0
      %7184 = vmatprep.subr.mxu0 0.0
      %7185 = vmatpush1.msra.mxu0 0.0
      %7186 = vmatprep.subr.mxu0 0.0
      %7187 = vmatpush1.msra.mxu0 0.0
      %7188 = vmatprep.subr.mxu0 0.0
      %7189 = vmatpush1.msra.mxu0 0.0
      %7190 = vmatprep.subr.mxu0 0.0
      %7191 = vmatpush1.msra.mxu0 0.0
      %7192 = vmatprep.subr.mxu0 0.0
      %7193 = vmatpush1.msra.mxu0 0.0
      %7194 = vmatprep.subr.mxu0 0.0
      %7195 = vmatpush1.msra.mxu0 0.0
      %7196 = vmatprep.mubr.f32.mxu0 0.0
      %7197 = vmatmul.mubr.f32.gmra.mrb[0].mxu0 %v7130
      %v7198 = vpop.f32.mrb[0].mxu0
      %v7199 = vadd.f32 0.0, %v7198
      %v7200 = vpop.f32.mrb[0].mxu0
      %7201 = vdwg.mxu0
      %7203 = vrot.lane.b32.xlu0 %v7199, 68
      %v7204 = vpop.permute.xlu0 %7203
      %vm7206 = vcmask 990752
      %7207 = vst.msk [vmem:[#allocation4 + $0xa8] sm:$0xff] %vm7206, %v7204
      %v7208 = vld [vmem:[%s6] sm:$0xff]
      %v7209 = vld [vmem:[#allocation8] sm:$0x1]
      %v7210 = vld [vmem:[#allocation4] sm:$0xff]
      %v7211 = vld [vmem:[#allocation4 + $0x8] sm:$0xff]
      %v7212 = vld [vmem:[#allocation4 + $0x10] sm:$0xff]
      %v7213 = vld [vmem:[#allocation4 + $0x18] sm:$0xff]
      %v7214 = vld [vmem:[#allocation4 + $0x20] sm:$0xff]
      %v7215 = vld [vmem:[#allocation4 + $0x28] sm:$0xff]
      %v7216 = vld [vmem:[#allocation4 + $0x30] sm:$0xff]
      %v7217 = vld [vmem:[#allocation4 + $0x38] sm:$0xff]
      %v7218 = vld [vmem:[#allocation4 + $0x40] sm:$0xff]
      %v7219 = vld [vmem:[#allocation4 + $0x48] sm:$0xff]
      %v7220 = vld [vmem:[#allocation4 + $0x50] sm:$0xff]
      %7221 = vst [vmem:[#allocation7] sm:$0xff] %v7210
      %7222 = vst [vmem:[#allocation7 + $0x8] sm:$0xff] %v7211
      %7223 = vst [vmem:[#allocation7 + $0x10] sm:$0xff] %v7212
      %7224 = vst [vmem:[#allocation7 + $0x18] sm:$0xff] %v7213
      %7225 = vst [vmem:[#allocation7 + $0x20] sm:$0xff] %v7214
      %7226 = vst [vmem:[#allocation7 + $0x28] sm:$0xff] %v7215
      %7227 = vst [vmem:[#allocation7 + $0x30] sm:$0xff] %v7216
      %7228 = vst [vmem:[#allocation7 + $0x38] sm:$0xff] %v7217
      %7229 = vst [vmem:[#allocation7 + $0x40] sm:$0xff] %v7218
      %7230 = vst [vmem:[#allocation7 + $0x48] sm:$0xff] %v7219
      %7231 = vst [vmem:[#allocation7 + $0x50] sm:$0xff] %v7220
      %v7232 = vld [vmem:[#allocation4] sm:$0xff]
      %v7233 = vld [vmem:[#allocation4 + $0x8] sm:$0xff]
      %v7234 = vld [vmem:[#allocation4 + $0x10] sm:$0xff]
      %v7235 = vld [vmem:[#allocation4 + $0x18] sm:$0xff]
      %v7236 = vld [vmem:[#allocation4 + $0x20] sm:$0xff]
      %v7237 = vld [vmem:[#allocation4 + $0x28] sm:$0xff]
      %v7238 = vld [vmem:[#allocation4 + $0x30] sm:$0xff]
      %v7239 = vld [vmem:[#allocation4 + $0x38] sm:$0xff]
      %v7240 = vld [vmem:[#allocation4 + $0x40] sm:$0xff]
      %v7241 = vld [vmem:[#allocation4 + $0x48] sm:$0xff]
      %v7242 = vld [vmem:[#allocation4 + $0x50] sm:$0xff]
      %v7243 = vld [vmem:[#allocation4 + $0x58] sm:$0xff]
      %7256 = vrot.lane.b32.xlu0 %v7232, 127
      %v7257 = vpop.permute.xlu0 %7256
      %7258 = vrot.lane.b32.xlu0 %v7233, 127
      %v7259 = vpop.permute.xlu0 %7258
      %7260 = vrot.lane.b32.xlu0 %v7234, 127
      %v7261 = vpop.permute.xlu0 %7260
      %7262 = vrot.lane.b32.xlu0 %v7235, 127
      %v7263 = vpop.permute.xlu0 %7262
      %7264 = vrot.lane.b32.xlu0 %v7236, 127
      %v7265 = vpop.permute.xlu0 %7264
      %7266 = vrot.lane.b32.xlu0 %v7237, 127
      %v7267 = vpop.permute.xlu0 %7266
      %7268 = vrot.lane.b32.xlu0 %v7238, 127
      %v7269 = vpop.permute.xlu0 %7268
      %7270 = vrot.lane.b32.xlu0 %v7239, 127
      %v7271 = vpop.permute.xlu0 %7270
      %7272 = vrot.lane.b32.xlu0 %v7240, 127
      %v7273 = vpop.permute.xlu0 %7272
      %7274 = vrot.lane.b32.xlu0 %v7241, 127
      %v7275 = vpop.permute.xlu0 %7274
      %7276 = vrot.lane.b32.xlu0 %v7242, 127
      %v7277 = vpop.permute.xlu0 %7276
      %7278 = vrot.lane.b32.xlu0 %v7243, 127
      %v7279 = vpop.permute.xlu0 %7278
      %v7280 = vsel %vm497, %v7257, %v7259
      %v7281 = vsel %vm497, %v7259, %v7261
      %v7282 = vsel %vm497, %v7261, %v7263
      %v7283 = vsel %vm497, %v7263, %v7265
      %v7284 = vsel %vm497, %v7265, %v7267
      %v7285 = vsel %vm497, %v7267, %v7269
      %v7286 = vsel %vm497, %v7269, %v7271
      %v7287 = vsel %vm497, %v7271, %v7273
      %v7288 = vsel %vm497, %v7273, %v7275
      %v7289 = vsel %vm497, %v7275, %v7277
      %v7290 = vsel %vm497, %v7277, %v7279
      %7302 = vst [vmem:[#allocation7 + $0x58] sm:$0xff] %v7280
      %7303 = vst [vmem:[#allocation7 + $0x60] sm:$0xff] %v7281
      %7304 = vst [vmem:[#allocation7 + $0x68] sm:$0xff] %v7282
      %7305 = vst [vmem:[#allocation7 + $0x70] sm:$0xff] %v7283
      %7306 = vst [vmem:[#allocation7 + $0x78] sm:$0xff] %v7284
      %7307 = vst [vmem:[#allocation7 + $0x80] sm:$0xff] %v7285
      %7308 = vst [vmem:[#allocation7 + $0x88] sm:$0xff] %v7286
      %7309 = vst [vmem:[#allocation7 + $0x90] sm:$0xff] %v7287
      %7310 = vst [vmem:[#allocation7 + $0x98] sm:$0xff] %v7288
      %7311 = vst [vmem:[#allocation7 + $0xa0] sm:$0xff] %v7289
      %7312 = vst [vmem:[#allocation7 + $0xa8] sm:$0xff] %v7290
      %v7313 = vld [vmem:[#allocation4] sm:$0xff]
      %v7314 = vld [vmem:[#allocation4 + $0x8] sm:$0xff]
      %v7315 = vld [vmem:[#allocation4 + $0x10] sm:$0xff]
      %v7316 = vld [vmem:[#allocation4 + $0x18] sm:$0xff]
      %v7317 = vld [vmem:[#allocation4 + $0x20] sm:$0xff]
      %v7318 = vld [vmem:[#allocation4 + $0x28] sm:$0xff]
      %v7319 = vld [vmem:[#allocation4 + $0x30] sm:$0xff]
      %v7320 = vld [vmem:[#allocation4 + $0x38] sm:$0xff]
      %v7321 = vld [vmem:[#allocation4 + $0x40] sm:$0xff]
      %v7322 = vld [vmem:[#allocation4 + $0x48] sm:$0xff]
      %v7323 = vld [vmem:[#allocation4 + $0x50] sm:$0xff]
      %v7324 = vld [vmem:[#allocation4 + $0x58] sm:$0xff]
      %7337 = vrot.lane.b32.xlu0 %v7313, 75
      %v7338 = vpop.permute.xlu0 %7337
      %7339 = vrot.lane.b32.xlu0 %v7314, 75
      %v7340 = vpop.permute.xlu0 %7339
      %7341 = vrot.lane.b32.xlu0 %v7315, 75
      %v7342 = vpop.permute.xlu0 %7341
      %7343 = vrot.lane.b32.xlu0 %v7316, 75
      %v7344 = vpop.permute.xlu0 %7343
      %7345 = vrot.lane.b32.xlu0 %v7317, 75
      %v7346 = vpop.permute.xlu0 %7345
      %7347 = vrot.lane.b32.xlu0 %v7318, 75
      %v7348 = vpop.permute.xlu0 %7347
      %7349 = vrot.lane.b32.xlu0 %v7319, 75
      %v7350 = vpop.permute.xlu0 %7349
      %7351 = vrot.lane.b32.xlu0 %v7320, 75
      %v7352 = vpop.permute.xlu0 %7351
      %7353 = vrot.lane.b32.xlu0 %v7321, 75
      %v7354 = vpop.permute.xlu0 %7353
      %7355 = vrot.lane.b32.xlu0 %v7322, 75
      %v7356 = vpop.permute.xlu0 %7355
      %7357 = vrot.lane.b32.xlu0 %v7323, 75
      %v7358 = vpop.permute.xlu0 %7357
      %7359 = vrot.lane.b32.xlu0 %v7324, 75
      %v7360 = vpop.permute.xlu0 %7359
      %vm7361 = vcmask 613376
      %v7362 = vsel %vm7361, %v7338, %v7340
      %v7363 = vsel %vm7361, %v7340, %v7342
      %v7364 = vsel %vm7361, %v7342, %v7344
      %v7365 = vsel %vm7361, %v7344, %v7346
      %v7366 = vsel %vm7361, %v7346, %v7348
      %v7367 = vsel %vm7361, %v7348, %v7350
      %v7368 = vsel %vm7361, %v7350, %v7352
      %v7369 = vsel %vm7361, %v7352, %v7354
      %v7370 = vsel %vm7361, %v7354, %v7356
      %v7371 = vsel %vm7361, %v7356, %v7358
      %v7372 = vsel %vm7361, %v7358, %v7360
      %7384 = vst [vmem:[#allocation7 + $0xb0] sm:$0xff] %v7362
      %7385 = vst [vmem:[#allocation7 + $0xb8] sm:$0xff] %v7363
      %7386 = vst [vmem:[#allocation7 + $0xc0] sm:$0xff] %v7364
      %7387 = vst [vmem:[#allocation7 + $0xc8] sm:$0xff] %v7365
      %7388 = vst [vmem:[#allocation7 + $0xd0] sm:$0xff] %v7366
      %7389 = vst [vmem:[#allocation7 + $0xd8] sm:$0xff] %v7367
      %7390 = vst [vmem:[#allocation7 + $0xe0] sm:$0xff] %v7368
      %7391 = vst [vmem:[#allocation7 + $0xe8] sm:$0xff] %v7369
      %7392 = vst [vmem:[#allocation7 + $0xf0] sm:$0xff] %v7370
      %7393 = vst [vmem:[#allocation7 + $0xf8] sm:$0xff] %v7371
      %7394 = vst [vmem:[#allocation7 + $0x100] sm:$0xff] %v7372
      %v7395 = vld [vmem:[#allocation4] sm:$0xff]
      %v7396 = vld [vmem:[#allocation4 + $0x8] sm:$0xff]
      %v7397 = vld [vmem:[#allocation4 + $0x10] sm:$0xff]
      %v7398 = vld [vmem:[#allocation4 + $0x18] sm:$0xff]
      %v7399 = vld [vmem:[#allocation4 + $0x20] sm:$0xff]
      %v7400 = vld [vmem:[#allocation4 + $0x28] sm:$0xff]
      %v7401 = vld [vmem:[#allocation4 + $0x30] sm:$0xff]
      %v7402 = vld [vmem:[#allocation4 + $0x38] sm:$0xff]
      %v7403 = vld [vmem:[#allocation4 + $0x40] sm:$0xff]
      %v7404 = vld [vmem:[#allocation4 + $0x48] sm:$0xff]
      %v7405 = vld [vmem:[#allocation4 + $0x50] sm:$0xff]
      %v7406 = vld [vmem:[#allocation4 + $0x58] sm:$0xff]
      %7419 = vrot.lane.b32.xlu0 %v7395, 74
      %v7420 = vpop.permute.xlu0 %7419
      %7421 = vrot.lane.b32.xlu0 %v7396, 74
      %v7422 = vpop.permute.xlu0 %7421
      %7423 = vrot.lane.b32.xlu0 %v7397, 74
      %v7424 = vpop.permute.xlu0 %7423
      %7425 = vrot.lane.b32.xlu0 %v7398, 74
      %v7426 = vpop.permute.xlu0 %7425
      %7427 = vrot.lane.b32.xlu0 %v7399, 74
      %v7428 = vpop.permute.xlu0 %7427
      %7429 = vrot.lane.b32.xlu0 %v7400, 74
      %v7430 = vpop.permute.xlu0 %7429
      %7431 = vrot.lane.b32.xlu0 %v7401, 74
      %v7432 = vpop.permute.xlu0 %7431
      %7433 = vrot.lane.b32.xlu0 %v7402, 74
      %v7434 = vpop.permute.xlu0 %7433
      %7435 = vrot.lane.b32.xlu0 %v7403, 74
      %v7436 = vpop.permute.xlu0 %7435
      %7437 = vrot.lane.b32.xlu0 %v7404, 74
      %v7438 = vpop.permute.xlu0 %7437
      %7439 = vrot.lane.b32.xlu0 %v7405, 74
      %v7440 = vpop.permute.xlu0 %7439
      %7441 = vrot.lane.b32.xlu0 %v7406, 74
      %v7442 = vpop.permute.xlu0 %7441
      %vm7443 = vcmask 605184
      %v7444 = vsel %vm7443, %v7420, %v7422
      %v7445 = vsel %vm7443, %v7422, %v7424
      %v7446 = vsel %vm7443, %v7424, %v7426
      %v7447 = vsel %vm7443, %v7426, %v7428
      %v7448 = vsel %vm7443, %v7428, %v7430
      %v7449 = vsel %vm7443, %v7430, %v7432
      %v7450 = vsel %vm7443, %v7432, %v7434
      %v7451 = vsel %vm7443, %v7434, %v7436
      %v7452 = vsel %vm7443, %v7436, %v7438
      %v7453 = vsel %vm7443, %v7438, %v7440
      %v7454 = vsel %vm7443, %v7440, %v7442
      %7466 = vst [vmem:[#allocation7 + $0x108] sm:$0xff] %v7444
      %7467 = vst [vmem:[#allocation7 + $0x110] sm:$0xff] %v7445
      %7468 = vst [vmem:[#allocation7 + $0x118] sm:$0xff] %v7446
      %7469 = vst [vmem:[#allocation7 + $0x120] sm:$0xff] %v7447
      %7470 = vst [vmem:[#allocation7 + $0x128] sm:$0xff] %v7448
      %7471 = vst [vmem:[#allocation7 + $0x130] sm:$0xff] %v7449
      %7472 = vst [vmem:[#allocation7 + $0x138] sm:$0xff] %v7450
      %7473 = vst [vmem:[#allocation7 + $0x140] sm:$0xff] %v7451
      %7474 = vst [vmem:[#allocation7 + $0x148] sm:$0xff] %v7452
      %7475 = vst [vmem:[#allocation7 + $0x150] sm:$0xff] %v7453
      %7476 = vst [vmem:[#allocation7 + $0x158] sm:$0xff] %v7454
      %v7477 = vld [vmem:[#allocation7] sm:$0xff]
      %v7478 = vld [vmem:[#allocation7 + $0x8] sm:$0xff]
      %v7479 = vld [vmem:[#allocation7 + $0x10] sm:$0xff]
      %v7480 = vld [vmem:[#allocation7 + $0x18] sm:$0xff]
      %v7481 = vld [vmem:[#allocation7 + $0x20] sm:$0xff]
      %v7482 = vld [vmem:[#allocation7 + $0x28] sm:$0xff]
      %v7483 = vld [vmem:[#allocation7 + $0x30] sm:$0xff]
      %v7484 = vld [vmem:[#allocation7 + $0x38] sm:$0xff]
      %v7485 = vld [vmem:[#allocation7 + $0x40] sm:$0xff]
      %v7486 = vld [vmem:[#allocation7 + $0x48] sm:$0xff]
      %v7487 = vld [vmem:[#allocation7 + $0x50] sm:$0xff]
      %v7488 = vld [vmem:[#allocation7 + $0x58] sm:$0xff]
      %v7489 = vld [vmem:[#allocation7 + $0x60] sm:$0xff]
      %v7490 = vld [vmem:[#allocation7 + $0x68] sm:$0xff]
      %v7491 = vld [vmem:[#allocation7 + $0x70] sm:$0xff]
      %v7492 = vld [vmem:[#allocation7 + $0x78] sm:$0xff]
      %v7493 = vld [vmem:[#allocation7 + $0x80] sm:$0xff]
      %v7494 = vld [vmem:[#allocation7 + $0x88] sm:$0xff]
      %v7495 = vld [vmem:[#allocation7 + $0x90] sm:$0xff]
      %v7496 = vld [vmem:[#allocation7 + $0x98] sm:$0xff]
      %v7497 = vld [vmem:[#allocation7 + $0xa0] sm:$0xff]
      %v7498 = vld [vmem:[#allocation7 + $0xa8] sm:$0xff]
      %v7499 = vld [vmem:[#allocation7 + $0xb0] sm:$0xff]
      %v7500 = vld [vmem:[#allocation7 + $0xb8] sm:$0xff]
      %v7501 = vld [vmem:[#allocation7 + $0xc0] sm:$0xff]
      %v7502 = vld [vmem:[#allocation7 + $0xc8] sm:$0xff]
      %v7503 = vld [vmem:[#allocation7 + $0xd0] sm:$0xff]
      %v7504 = vld [vmem:[#allocation7 + $0xd8] sm:$0xff]
      %v7505 = vld [vmem:[#allocation7 + $0xe0] sm:$0xff]
      %v7506 = vld [vmem:[#allocation7 + $0xe8] sm:$0xff]
      %v7507 = vld [vmem:[#allocation7 + $0xf0] sm:$0xff]
      %v7508 = vld [vmem:[#allocation7 + $0xf8] sm:$0xff]
      %v7509 = vld [vmem:[#allocation7 + $0x100] sm:$0xff]
      %v7510 = vld [vmem:[#allocation7 + $0x108] sm:$0xff]
      %v7511 = vld [vmem:[#allocation7 + $0x110] sm:$0xff]
      %v7512 = vld [vmem:[#allocation7 + $0x118] sm:$0xff]
      %v7513 = vld [vmem:[#allocation7 + $0x120] sm:$0xff]
      %v7514 = vld [vmem:[#allocation7 + $0x128] sm:$0xff]
      %v7515 = vld [vmem:[#allocation7 + $0x130] sm:$0xff]
      %v7516 = vld [vmem:[#allocation7 + $0x138] sm:$0xff]
      %v7517 = vld [vmem:[#allocation7 + $0x140] sm:$0xff]
      %v7518 = vld [vmem:[#allocation7 + $0x148] sm:$0xff]
      %v7519 = vld [vmem:[#allocation7 + $0x150] sm:$0xff]
      %v7520 = vld [vmem:[#allocation7 + $0x158] sm:$0xff]
      %v7522 = vsel %vm3460, %v7208, 0
      %7524 = vmatprep.subr.mxu0 %v7478
      %7525 = vmatpush1.msra.mxu0 %v7477
      %7526 = vmatprep.subr.mxu0 %v7489
      %7527 = vmatpush1.msra.mxu0 %v7488
      %7528 = vmatprep.subr.mxu0 %v7500
      %7529 = vmatpush1.msra.mxu0 %v7499
      %7530 = vmatprep.subr.mxu0 %v7511
      %7531 = vmatpush1.msra.mxu0 %v7510
      %7532 = vmatprep.subr.mxu0 0.0
      %7533 = vmatpush1.msra.mxu0 0.0
      %7534 = vmatprep.subr.mxu0 0.0
      %7535 = vmatpush1.msra.mxu0 0.0
      %7536 = vmatprep.subr.mxu0 0.0
      %7537 = vmatpush1.msra.mxu0 0.0
      %7538 = vmatprep.subr.mxu0 0.0
      %7539 = vmatpush1.msra.mxu0 0.0
      %7540 = vmatprep.subr.mxu0 0.0
      %7541 = vmatpush1.msra.mxu0 0.0
      %7542 = vmatprep.subr.mxu0 0.0
      %7543 = vmatpush1.msra.mxu0 0.0
      %7544 = vmatprep.subr.mxu0 0.0
      %7545 = vmatpush1.msra.mxu0 0.0
      %7546 = vmatprep.subr.mxu0 0.0
      %7547 = vmatpush1.msra.mxu0 0.0
      %7548 = vmatprep.subr.mxu0 0.0
      %7549 = vmatpush1.msra.mxu0 0.0
      %7550 = vmatprep.subr.mxu0 0.0
      %7551 = vmatpush1.msra.mxu0 0.0
      %7552 = vmatprep.subr.mxu0 0.0
      %7553 = vmatpush1.msra.mxu0 0.0
      %7554 = vmatprep.subr.mxu0 0.0
      %7555 = vmatpush1.msra.mxu0 0.0
      %7556 = vmatprep.subr.mxu0 0.0
      %7557 = vmatpush1.msra.mxu0 0.0
      %7558 = vmatprep.subr.mxu0 0.0
      %7559 = vmatpush1.msra.mxu0 0.0
      %7560 = vmatprep.subr.mxu0 0.0
      %7561 = vmatpush1.msra.mxu0 0.0
      %7562 = vmatprep.subr.mxu0 0.0
      %7563 = vmatpush1.msra.mxu0 0.0
      %7564 = vmatprep.subr.mxu0 0.0
      %7565 = vmatpush1.msra.mxu0 0.0
      %7566 = vmatprep.subr.mxu0 0.0
      %7567 = vmatpush1.msra.mxu0 0.0
      %7568 = vmatprep.subr.mxu0 0.0
      %7569 = vmatpush1.msra.mxu0 0.0
      %7570 = vmatprep.subr.mxu0 0.0
      %7571 = vmatpush1.msra.mxu0 0.0
      %7572 = vmatprep.subr.mxu0 0.0
      %7573 = vmatpush1.msra.mxu0 0.0
      %7574 = vmatprep.subr.mxu0 0.0
      %7575 = vmatpush1.msra.mxu0 0.0
      %7576 = vmatprep.subr.mxu0 0.0
      %7577 = vmatpush1.msra.mxu0 0.0
      %7578 = vmatprep.subr.mxu0 0.0
      %7579 = vmatpush1.msra.mxu0 0.0
      %7580 = vmatprep.subr.mxu0 0.0
      %7581 = vmatpush1.msra.mxu0 0.0
      %7582 = vmatprep.subr.mxu0 0.0
      %7583 = vmatpush1.msra.mxu0 0.0
      %7584 = vmatprep.subr.mxu0 0.0
      %7585 = vmatpush1.msra.mxu0 0.0
      %7586 = vmatprep.subr.mxu0 0.0
      %7587 = vmatpush1.msra.mxu0 0.0
      %7588 = vmatprep.mubr.f32.mxu0 0.0
      %7589 = vmatmul.mubr.f32.gmra.mrb[0].mxu0 %v7522
      %v7590 = vpop.f32.mrb[0].mxu0
      %v7591 = vadd.f32 0.0, %v7590
      %v7592 = vpop.f32.mrb[0].mxu0
      %v7593 = vadd.f32 0.0, %v7592
      %7594 = vdwg.mxu0
      %7595 = vmatprep.subr.mxu0 %v7480
      %7596 = vmatpush1.msra.mxu0 %v7479
      %7597 = vmatprep.subr.mxu0 %v7491
      %7598 = vmatpush1.msra.mxu0 %v7490
      %7599 = vmatprep.subr.mxu0 %v7502
      %7600 = vmatpush1.msra.mxu0 %v7501
      %7601 = vmatprep.subr.mxu0 %v7513
      %7602 = vmatpush1.msra.mxu0 %v7512
      %7603 = vmatprep.subr.mxu0 0.0
      %7604 = vmatpush1.msra.mxu0 0.0
      %7605 = vmatprep.subr.mxu0 0.0
      %7606 = vmatpush1.msra.mxu0 0.0
      %7607 = vmatprep.subr.mxu0 0.0
      %7608 = vmatpush1.msra.mxu0 0.0
      %7609 = vmatprep.subr.mxu0 0.0
      %7610 = vmatpush1.msra.mxu0 0.0
      %7611 = vmatprep.subr.mxu0 0.0
      %7612 = vmatpush1.msra.mxu0 0.0
      %7613 = vmatprep.subr.mxu0 0.0
      %7614 = vmatpush1.msra.mxu0 0.0
      %7615 = vmatprep.subr.mxu0 0.0
      %7616 = vmatpush1.msra.mxu0 0.0
      %7617 = vmatprep.subr.mxu0 0.0
      %7618 = vmatpush1.msra.mxu0 0.0
      %7619 = vmatprep.subr.mxu0 0.0
      %7620 = vmatpush1.msra.mxu0 0.0
      %7621 = vmatprep.subr.mxu0 0.0
      %7622 = vmatpush1.msra.mxu0 0.0
      %7623 = vmatprep.subr.mxu0 0.0
      %7624 = vmatpush1.msra.mxu0 0.0
      %7625 = vmatprep.subr.mxu0 0.0
      %7626 = vmatpush1.msra.mxu0 0.0
      %7627 = vmatprep.subr.mxu0 0.0
      %7628 = vmatpush1.msra.mxu0 0.0
      %7629 = vmatprep.subr.mxu0 0.0
      %7630 = vmatpush1.msra.mxu0 0.0
      %7631 = vmatprep.subr.mxu0 0.0
      %7632 = vmatpush1.msra.mxu0 0.0
      %7633 = vmatprep.subr.mxu0 0.0
      %7634 = vmatpush1.msra.mxu0 0.0
      %7635 = vmatprep.subr.mxu0 0.0
      %7636 = vmatpush1.msra.mxu0 0.0
      %7637 = vmatprep.subr.mxu0 0.0
      %7638 = vmatpush1.msra.mxu0 0.0
      %7639 = vmatprep.subr.mxu0 0.0
      %7640 = vmatpush1.msra.mxu0 0.0
      %7641 = vmatprep.subr.mxu0 0.0
      %7642 = vmatpush1.msra.mxu0 0.0
      %7643 = vmatprep.subr.mxu0 0.0
      %7644 = vmatpush1.msra.mxu0 0.0
      %7645 = vmatprep.subr.mxu0 0.0
      %7646 = vmatpush1.msra.mxu0 0.0
      %7647 = vmatprep.subr.mxu0 0.0
      %7648 = vmatpush1.msra.mxu0 0.0
      %7649 = vmatprep.subr.mxu0 0.0
      %7650 = vmatpush1.msra.mxu0 0.0
      %7651 = vmatprep.subr.mxu0 0.0
      %7652 = vmatpush1.msra.mxu0 0.0
      %7653 = vmatprep.subr.mxu0 0.0
      %7654 = vmatpush1.msra.mxu0 0.0
      %7655 = vmatprep.subr.mxu0 0.0
      %7656 = vmatpush1.msra.mxu0 0.0
      %7657 = vmatprep.subr.mxu0 0.0
      %7658 = vmatpush1.msra.mxu0 0.0
      %7659 = vmatprep.mubr.f32.mxu0 0.0
      %7660 = vmatmul.mubr.f32.gmra.mrb[0].mxu0 %v7522
      %v7661 = vpop.f32.mrb[0].mxu0
      %v7662 = vadd.f32 0.0, %v7661
      %v7663 = vpop.f32.mrb[0].mxu0
      %v7664 = vadd.f32 0.0, %v7663
      %7665 = vdwg.mxu0
      %7666 = vmatprep.subr.mxu0 %v7482
      %7667 = vmatpush1.msra.mxu0 %v7481
      %7668 = vmatprep.subr.mxu0 %v7493
      %7669 = vmatpush1.msra.mxu0 %v7492
      %7670 = vmatprep.subr.mxu0 %v7504
      %7671 = vmatpush1.msra.mxu0 %v7503
      %7672 = vmatprep.subr.mxu0 %v7515
      %7673 = vmatpush1.msra.mxu0 %v7514
      %7674 = vmatprep.subr.mxu0 0.0
      %7675 = vmatpush1.msra.mxu0 0.0
      %7676 = vmatprep.subr.mxu0 0.0
      %7677 = vmatpush1.msra.mxu0 0.0
      %7678 = vmatprep.subr.mxu0 0.0
      %7679 = vmatpush1.msra.mxu0 0.0
      %7680 = vmatprep.subr.mxu0 0.0
      %7681 = vmatpush1.msra.mxu0 0.0
      %7682 = vmatprep.subr.mxu0 0.0
      %7683 = vmatpush1.msra.mxu0 0.0
      %7684 = vmatprep.subr.mxu0 0.0
      %7685 = vmatpush1.msra.mxu0 0.0
      %7686 = vmatprep.subr.mxu0 0.0
      %7687 = vmatpush1.msra.mxu0 0.0
      %7688 = vmatprep.subr.mxu0 0.0
      %7689 = vmatpush1.msra.mxu0 0.0
      %7690 = vmatprep.subr.mxu0 0.0
      %7691 = vmatpush1.msra.mxu0 0.0
      %7692 = vmatprep.subr.mxu0 0.0
      %7693 = vmatpush1.msra.mxu0 0.0
      %7694 = vmatprep.subr.mxu0 0.0
      %7695 = vmatpush1.msra.mxu0 0.0
      %7696 = vmatprep.subr.mxu0 0.0
      %7697 = vmatpush1.msra.mxu0 0.0
      %7698 = vmatprep.subr.mxu0 0.0
      %7699 = vmatpush1.msra.mxu0 0.0
      %7700 = vmatprep.subr.mxu0 0.0
      %7701 = vmatpush1.msra.mxu0 0.0
      %7702 = vmatprep.subr.mxu0 0.0
      %7703 = vmatpush1.msra.mxu0 0.0
      %7704 = vmatprep.subr.mxu0 0.0
      %7705 = vmatpush1.msra.mxu0 0.0
      %7706 = vmatprep.subr.mxu0 0.0
      %7707 = vmatpush1.msra.mxu0 0.0
      %7708 = vmatprep.subr.mxu0 0.0
      %7709 = vmatpush1.msra.mxu0 0.0
      %7710 = vmatprep.subr.mxu0 0.0
      %7711 = vmatpush1.msra.mxu0 0.0
      %7712 = vmatprep.subr.mxu0 0.0
      %7713 = vmatpush1.msra.mxu0 0.0
      %7714 = vmatprep.subr.mxu0 0.0
      %7715 = vmatpush1.msra.mxu0 0.0
      %7716 = vmatprep.subr.mxu0 0.0
      %7717 = vmatpush1.msra.mxu0 0.0
      %7718 = vmatprep.subr.mxu0 0.0
      %7719 = vmatpush1.msra.mxu0 0.0
      %7720 = vmatprep.subr.mxu0 0.0
      %7721 = vmatpush1.msra.mxu0 0.0
      %7722 = vmatprep.subr.mxu0 0.0
      %7723 = vmatpush1.msra.mxu0 0.0
      %7724 = vmatprep.subr.mxu0 0.0
      %7725 = vmatpush1.msra.mxu0 0.0
      %7726 = vmatprep.subr.mxu0 0.0
      %7727 = vmatpush1.msra.mxu0 0.0
      %7728 = vmatprep.subr.mxu0 0.0
      %7729 = vmatpush1.msra.mxu0 0.0
      %7730 = vmatprep.mubr.f32.mxu0 0.0
      %7731 = vmatmul.mubr.f32.gmra.mrb[0].mxu0 %v7522
      %v7732 = vpop.f32.mrb[0].mxu0
      %v7733 = vadd.f32 0.0, %v7732
      %v7734 = vpop.f32.mrb[0].mxu0
      %v7735 = vadd.f32 0.0, %v7734
      %7736 = vdwg.mxu0
      %7737 = vmatprep.subr.mxu0 %v7484
      %7738 = vmatpush1.msra.mxu0 %v7483
      %7739 = vmatprep.subr.mxu0 %v7495
      %7740 = vmatpush1.msra.mxu0 %v7494
      %7741 = vmatprep.subr.mxu0 %v7506
      %7742 = vmatpush1.msra.mxu0 %v7505
      %7743 = vmatprep.subr.mxu0 %v7517
      %7744 = vmatpush1.msra.mxu0 %v7516
      %7745 = vmatprep.subr.mxu0 0.0
      %7746 = vmatpush1.msra.mxu0 0.0
      %7747 = vmatprep.subr.mxu0 0.0
      %7748 = vmatpush1.msra.mxu0 0.0
      %7749 = vmatprep.subr.mxu0 0.0
      %7750 = vmatpush1.msra.mxu0 0.0
      %7751 = vmatprep.subr.mxu0 0.0
      %7752 = vmatpush1.msra.mxu0 0.0
      %7753 = vmatprep.subr.mxu0 0.0
      %7754 = vmatpush1.msra.mxu0 0.0
      %7755 = vmatprep.subr.mxu0 0.0
      %7756 = vmatpush1.msra.mxu0 0.0
      %7757 = vmatprep.subr.mxu0 0.0
      %7758 = vmatpush1.msra.mxu0 0.0
      %7759 = vmatprep.subr.mxu0 0.0
      %7760 = vmatpush1.msra.mxu0 0.0
      %7761 = vmatprep.subr.mxu0 0.0
      %7762 = vmatpush1.msra.mxu0 0.0
      %7763 = vmatprep.subr.mxu0 0.0
      %7764 = vmatpush1.msra.mxu0 0.0
      %7765 = vmatprep.subr.mxu0 0.0
      %7766 = vmatpush1.msra.mxu0 0.0
      %7767 = vmatprep.subr.mxu0 0.0
      %7768 = vmatpush1.msra.mxu0 0.0
      %7769 = vmatprep.subr.mxu0 0.0
      %7770 = vmatpush1.msra.mxu0 0.0
      %7771 = vmatprep.subr.mxu0 0.0
      %7772 = vmatpush1.msra.mxu0 0.0
      %7773 = vmatprep.subr.mxu0 0.0
      %7774 = vmatpush1.msra.mxu0 0.0
      %7775 = vmatprep.subr.mxu0 0.0
      %7776 = vmatpush1.msra.mxu0 0.0
      %7777 = vmatprep.subr.mxu0 0.0
      %7778 = vmatpush1.msra.mxu0 0.0
      %7779 = vmatprep.subr.mxu0 0.0
      %7780 = vmatpush1.msra.mxu0 0.0
      %7781 = vmatprep.subr.mxu0 0.0
      %7782 = vmatpush1.msra.mxu0 0.0
      %7783 = vmatprep.subr.mxu0 0.0
      %7784 = vmatpush1.msra.mxu0 0.0
      %7785 = vmatprep.subr.mxu0 0.0
      %7786 = vmatpush1.msra.mxu0 0.0
      %7787 = vmatprep.subr.mxu0 0.0
      %7788 = vmatpush1.msra.mxu0 0.0
      %7789 = vmatprep.subr.mxu0 0.0
      %7790 = vmatpush1.msra.mxu0 0.0
      %7791 = vmatprep.subr.mxu0 0.0
      %7792 = vmatpush1.msra.mxu0 0.0
      %7793 = vmatprep.subr.mxu0 0.0
      %7794 = vmatpush1.msra.mxu0 0.0
      %7795 = vmatprep.subr.mxu0 0.0
      %7796 = vmatpush1.msra.mxu0 0.0
      %7797 = vmatprep.subr.mxu0 0.0
      %7798 = vmatpush1.msra.mxu0 0.0
      %7799 = vmatprep.subr.mxu0 0.0
      %7800 = vmatpush1.msra.mxu0 0.0
      %7801 = vmatprep.mubr.f32.mxu0 0.0
      %7802 = vmatmul.mubr.f32.gmra.mrb[0].mxu0 %v7522
      %v7803 = vpop.f32.mrb[0].mxu0
      %v7804 = vadd.f32 0.0, %v7803
      %v7805 = vpop.f32.mrb[0].mxu0
      %v7806 = vadd.f32 0.0, %v7805
      %7807 = vdwg.mxu0
      %7808 = vmatprep.subr.mxu0 %v7486
      %7809 = vmatpush1.msra.mxu0 %v7485
      %7810 = vmatprep.subr.mxu0 %v7497
      %7811 = vmatpush1.msra.mxu0 %v7496
      %7812 = vmatprep.subr.mxu0 %v7508
      %7813 = vmatpush1.msra.mxu0 %v7507
      %7814 = vmatprep.subr.mxu0 %v7519
      %7815 = vmatpush1.msra.mxu0 %v7518
      %7816 = vmatprep.subr.mxu0 0.0
      %7817 = vmatpush1.msra.mxu0 0.0
      %7818 = vmatprep.subr.mxu0 0.0
      %7819 = vmatpush1.msra.mxu0 0.0
      %7820 = vmatprep.subr.mxu0 0.0
      %7821 = vmatpush1.msra.mxu0 0.0
      %7822 = vmatprep.subr.mxu0 0.0
      %7823 = vmatpush1.msra.mxu0 0.0
      %7824 = vmatprep.subr.mxu0 0.0
      %7825 = vmatpush1.msra.mxu0 0.0
      %7826 = vmatprep.subr.mxu0 0.0
      %7827 = vmatpush1.msra.mxu0 0.0
      %7828 = vmatprep.subr.mxu0 0.0
      %7829 = vmatpush1.msra.mxu0 0.0
      %7830 = vmatprep.subr.mxu0 0.0
      %7831 = vmatpush1.msra.mxu0 0.0
      %7832 = vmatprep.subr.mxu0 0.0
      %7833 = vmatpush1.msra.mxu0 0.0
      %7834 = vmatprep.subr.mxu0 0.0
      %7835 = vmatpush1.msra.mxu0 0.0
      %7836 = vmatprep.subr.mxu0 0.0
      %7837 = vmatpush1.msra.mxu0 0.0
      %7838 = vmatprep.subr.mxu0 0.0
      %7839 = vmatpush1.msra.mxu0 0.0
      %7840 = vmatprep.subr.mxu0 0.0
      %7841 = vmatpush1.msra.mxu0 0.0
      %7842 = vmatprep.subr.mxu0 0.0
      %7843 = vmatpush1.msra.mxu0 0.0
      %7844 = vmatprep.subr.mxu0 0.0
      %7845 = vmatpush1.msra.mxu0 0.0
      %7846 = vmatprep.subr.mxu0 0.0
      %7847 = vmatpush1.msra.mxu0 0.0
      %7848 = vmatprep.subr.mxu0 0.0
      %7849 = vmatpush1.msra.mxu0 0.0
      %7850 = vmatprep.subr.mxu0 0.0
      %7851 = vmatpush1.msra.mxu0 0.0
      %7852 = vmatprep.subr.mxu0 0.0
      %7853 = vmatpush1.msra.mxu0 0.0
      %7854 = vmatprep.subr.mxu0 0.0
      %7855 = vmatpush1.msra.mxu0 0.0
      %7856 = vmatprep.subr.mxu0 0.0
      %7857 = vmatpush1.msra.mxu0 0.0
      %7858 = vmatprep.subr.mxu0 0.0
      %7859 = vmatpush1.msra.mxu0 0.0
      %7860 = vmatprep.subr.mxu0 0.0
      %7861 = vmatpush1.msra.mxu0 0.0
      %7862 = vmatprep.subr.mxu0 0.0
      %7863 = vmatpush1.msra.mxu0 0.0
      %7864 = vmatprep.subr.mxu0 0.0
      %7865 = vmatpush1.msra.mxu0 0.0
      %7866 = vmatprep.subr.mxu0 0.0
      %7867 = vmatpush1.msra.mxu0 0.0
      %7868 = vmatprep.subr.mxu0 0.0
      %7869 = vmatpush1.msra.mxu0 0.0
      %7870 = vmatprep.subr.mxu0 0.0
      %7871 = vmatpush1.msra.mxu0 0.0
      %7872 = vmatprep.mubr.f32.mxu0 0.0
      %7873 = vmatmul.mubr.f32.gmra.mrb[0].mxu0 %v7522
      %v7874 = vpop.f32.mrb[0].mxu0
      %v7875 = vadd.f32 0.0, %v7874
      %v7876 = vpop.f32.mrb[0].mxu0
      %v7877 = vadd.f32 0.0, %v7876
      %7878 = vdwg.mxu0
      %7879 = vmatprep.subr.mxu0 0.0
      %7880 = vmatpush1.msra.mxu0 %v7487
      %7881 = vmatprep.subr.mxu0 0.0
      %7882 = vmatpush1.msra.mxu0 %v7498
      %7883 = vmatprep.subr.mxu0 0.0
      %7884 = vmatpush1.msra.mxu0 %v7509
      %7885 = vmatprep.subr.mxu0 0.0
      %7886 = vmatpush1.msra.mxu0 %v7520
      %7887 = vmatprep.subr.mxu0 0.0
      %7888 = vmatpush1.msra.mxu0 0.0
      %7889 = vmatprep.subr.mxu0 0.0
      %7890 = vmatpush1.msra.mxu0 0.0
      %7891 = vmatprep.subr.mxu0 0.0
      %7892 = vmatpush1.msra.mxu0 0.0
      %7893 = vmatprep.subr.mxu0 0.0
      %7894 = vmatpush1.msra.mxu0 0.0
      %7895 = vmatprep.subr.mxu0 0.0
      %7896 = vmatpush1.msra.mxu0 0.0
      %7897 = vmatprep.subr.mxu0 0.0
      %7898 = vmatpush1.msra.mxu0 0.0
      %7899 = vmatprep.subr.mxu0 0.0
      %7900 = vmatpush1.msra.mxu0 0.0
      %7901 = vmatprep.subr.mxu0 0.0
      %7902 = vmatpush1.msra.mxu0 0.0
      %7903 = vmatprep.subr.mxu0 0.0
      %7904 = vmatpush1.msra.mxu0 0.0
      %7905 = vmatprep.subr.mxu0 0.0
      %7906 = vmatpush1.msra.mxu0 0.0
      %7907 = vmatprep.subr.mxu0 0.0
      %7908 = vmatpush1.msra.mxu0 0.0
      %7909 = vmatprep.subr.mxu0 0.0
      %7910 = vmatpush1.msra.mxu0 0.0
      %7911 = vmatprep.subr.mxu0 0.0
      %7912 = vmatpush1.msra.mxu0 0.0
      %7913 = vmatprep.subr.mxu0 0.0
      %7914 = vmatpush1.msra.mxu0 0.0
      %7915 = vmatprep.subr.mxu0 0.0
      %7916 = vmatpush1.msra.mxu0 0.0
      %7917 = vmatprep.subr.mxu0 0.0
      %7918 = vmatpush1.msra.mxu0 0.0
      %7919 = vmatprep.subr.mxu0 0.0
      %7920 = vmatpush1.msra.mxu0 0.0
      %7921 = vmatprep.subr.mxu0 0.0
      %7922 = vmatpush1.msra.mxu0 0.0
      %7923 = vmatprep.subr.mxu0 0.0
      %7924 = vmatpush1.msra.mxu0 0.0
      %7925 = vmatprep.subr.mxu0 0.0
      %7926 = vmatpush1.msra.mxu0 0.0
      %7927 = vmatprep.subr.mxu0 0.0
      %7928 = vmatpush1.msra.mxu0 0.0
      %7929 = vmatprep.subr.mxu0 0.0
      %7930 = vmatpush1.msra.mxu0 0.0
      %7931 = vmatprep.subr.mxu0 0.0
      %7932 = vmatpush1.msra.mxu0 0.0
      %7933 = vmatprep.subr.mxu0 0.0
      %7934 = vmatpush1.msra.mxu0 0.0
      %7935 = vmatprep.subr.mxu0 0.0
      %7936 = vmatpush1.msra.mxu0 0.0
      %7937 = vmatprep.subr.mxu0 0.0
      %7938 = vmatpush1.msra.mxu0 0.0
      %7939 = vmatprep.subr.mxu0 0.0
      %7940 = vmatpush1.msra.mxu0 0.0
      %7941 = vmatprep.subr.mxu0 0.0
      %7942 = vmatpush1.msra.mxu0 0.0
      %7943 = vmatprep.mubr.f32.mxu0 0.0
      %7944 = vmatmul.mubr.f32.gmra.mrb[0].mxu0 %v7522
      %v7945 = vpop.f32.mrb[0].mxu0
      %v7946 = vadd.f32 0.0, %v7945
      %v7947 = vpop.f32.mrb[0].mxu0
      %7948 = vdwg.mxu0
      %7950 = vset.pattern.permute.xlu0 0
      %7951 = vperm.xlu0 %7950, %v7209
      %v7952 = vpop.permute.xlu0 %7951
      %v7954 = vlaneseq
      %v7955 = vshrl.u32 %v7954, 7
      %v7956 = vsub.s32 0, %v7955
      %v7957 = vrot.slane %v7952, %v7956
      %v7958 = vadd.f32 %v7591, %v7957
      %v7959 = vadd.f32 %v7593, %v7957
      %v7960 = vadd.f32 %v7662, %v7957
      %v7961 = vadd.f32 %v7664, %v7957
      %v7962 = vadd.f32 %v7733, %v7957
      %v7963 = vadd.f32 %v7735, %v7957
      %v7964 = vadd.f32 %v7804, %v7957
      %v7965 = vadd.f32 %v7806, %v7957
      %v7966 = vadd.f32 %v7875, %v7957
      %v7967 = vadd.f32 %v7877, %v7957
      %v7968 = vadd.f32 %v7946, %v7957
      %v7969 = vtanh.pop %v7958
      %v7970 = vtanh.pop %v7959
      %v7971 = vtanh.pop %v7960
      %v7972 = vtanh.pop %v7961
      %v7973 = vtanh.pop %v7962
      %v7974 = vtanh.pop %v7963
      %v7975 = vtanh.pop %v7964
      %v7976 = vtanh.pop %v7965
      %v7977 = vtanh.pop %v7966
      %v7978 = vtanh.pop %v7967
      %v7979 = vtanh.pop %v7968
      %v7991 = vcombine.low %v7969, %v7970
      %v7992 = vcombine.low %v7971, %v7972
      %v7993 = vcombine.low %v7973, %v7974
      %v7994 = vcombine.low %v7975, %v7976
      %v7996 = vunpack.c.l.s4 1966171168
      %v7997 = vunpack.c.0.s8 %v7996
      %v7998 = vlaneseq
      %v7999 = vshrl.u32 %v7998, 7
      %v8000 = vsub.s32 %v7997, %v7999
      %v8001 = vrot.slane %v7991, %v8000
      %v8003 = vunpack.c.l.s4 1966171168
      %v8004 = vunpack.c.0.s8 %v8003
      %v8005 = vlaneseq
      %v8006 = vshrl.u32 %v8005, 7
      %v8007 = vsub.s32 %v8004, %v8006
      %v8008 = vrot.slane %v7992, %v8007
      %v8010 = vunpack.c.l.s4 1966171168
      %v8011 = vunpack.c.0.s8 %v8010
      %v8012 = vlaneseq
      %v8013 = vshrl.u32 %v8012, 7
      %v8014 = vsub.s32 %v8011, %v8013
      %v8015 = vrot.slane %v7993, %v8014
      %v8017 = vunpack.c.l.s4 1966171168
      %v8018 = vunpack.c.0.s8 %v8017
      %v8019 = vlaneseq
      %v8020 = vshrl.u32 %v8019, 7
      %v8021 = vsub.s32 %v8018, %v8020
      %v8022 = vrot.slane %v7994, %v8021
      %v8023 = vcombine.low %v8001, %v8008
      %v8024 = vcombine.low %v8015, %v8022
      %v8026 = vunpack.c.l.s4 1966171168
      %v8027 = vunpack.c.0.s8 %v8026
      %v8028 = vlaneseq
      %v8029 = vshrl.u32 %v8028, 7
      %v8030 = vsub.s32 %v8027, %v8029
      %v8031 = vrot.slane %v8023, %v8030
      %v8033 = vunpack.c.l.s4 1966171168
      %v8034 = vunpack.c.0.s8 %v8033
      %v8035 = vlaneseq
      %v8036 = vshrl.u32 %v8035, 7
      %v8037 = vsub.s32 %v8034, %v8036
      %v8038 = vrot.slane %v8024, %v8037
      %v8039 = vcombine.low %v8031, %v8038
      %v8040 = vcombine.low %v7977, %v7978
      %v8042 = vunpack.c.l.s4 1966171168
      %v8043 = vunpack.c.0.s8 %v8042
      %v8044 = vlaneseq
      %v8045 = vshrl.u32 %v8044, 7
      %v8046 = vsub.s32 %v8043, %v8045
      %v8047 = vrot.slane %v8040, %v8046
      %v8049 = vunpack.c.l.s4 1966171168
      %v8050 = vunpack.c.0.s8 %v8049
      %v8051 = vlaneseq
      %v8052 = vshrl.u32 %v8051, 7
      %v8053 = vsub.s32 %v8050, %v8052
      %v8054 = vrot.slane %v7979, %v8053
      %v8055 = vcombine.low %v8047, %v8054
      %v8057 = vunpack.c.l.s4 1966171168
      %v8058 = vunpack.c.0.s8 %v8057
      %v8059 = vlaneseq
      %v8060 = vshrl.u32 %v8059, 7
      %v8061 = vsub.s32 %v8058, %v8060
      %v8062 = vrot.slane %v8055, %v8061
      %8065 = vst [vmem:[%s329] sm:$0xff] %v8039
      %v8066 = vlaneseq
      %vm8067 = vcmp.ge.s32.totalorder %v8066, 0
      %vm8068 = vcmp.lt.s32.totalorder %v8066, 384
      %vm8069 = vmand %vm8067, %vm8068
      %8070 = vst.msk [vmem:[%s329 + $0x8] sm:$0x7] %vm8069, %v8062
      %v8071 = vld [vmem:[#allocation4 + $0x58] sm:$0xff]
      %v8072 = vld [vmem:[#allocation4 + $0x60] sm:$0xff]
      %v8073 = vld [vmem:[#allocation4 + $0x68] sm:$0xff]
      %v8074 = vld [vmem:[#allocation4 + $0x70] sm:$0xff]
      %v8075 = vld [vmem:[#allocation4 + $0x78] sm:$0xff]
      %v8076 = vld [vmem:[#allocation4 + $0x80] sm:$0xff]
      %v8077 = vld [vmem:[#allocation4 + $0x88] sm:$0xff]
      %v8078 = vld [vmem:[#allocation4 + $0x90] sm:$0xff]
      %v8079 = vld [vmem:[#allocation4 + $0x98] sm:$0xff]
      %v8080 = vld [vmem:[#allocation4 + $0xa0] sm:$0xff]
      %v8081 = vld [vmem:[#allocation4 + $0xa8] sm:$0xff]
      %8082 = vst [vmem:[#allocation7] sm:$0xff] %v8071
      %8083 = vst [vmem:[#allocation7 + $0x8] sm:$0xff] %v8072
      %8084 = vst [vmem:[#allocation7 + $0x10] sm:$0xff] %v8073
      %8085 = vst [vmem:[#allocation7 + $0x18] sm:$0xff] %v8074
      %8086 = vst [vmem:[#allocation7 + $0x20] sm:$0xff] %v8075
      %8087 = vst [vmem:[#allocation7 + $0x28] sm:$0xff] %v8076
      %8088 = vst [vmem:[#allocation7 + $0x30] sm:$0xff] %v8077
      %8089 = vst [vmem:[#allocation7 + $0x38] sm:$0xff] %v8078
      %8090 = vst [vmem:[#allocation7 + $0x40] sm:$0xff] %v8079
      %8091 = vst [vmem:[#allocation7 + $0x48] sm:$0xff] %v8080
      %8092 = vst [vmem:[#allocation7 + $0x50] sm:$0xff] %v8081
      %v8093 = vld [vmem:[#allocation4 + $0x58] sm:$0xff]
      %v8094 = vld [vmem:[#allocation4 + $0x60] sm:$0xff]
      %v8095 = vld [vmem:[#allocation4 + $0x68] sm:$0xff]
      %v8096 = vld [vmem:[#allocation4 + $0x70] sm:$0xff]
      %v8097 = vld [vmem:[#allocation4 + $0x78] sm:$0xff]
      %v8098 = vld [vmem:[#allocation4 + $0x80] sm:$0xff]
      %v8099 = vld [vmem:[#allocation4 + $0x88] sm:$0xff]
      %v8100 = vld [vmem:[#allocation4 + $0x90] sm:$0xff]
      %v8101 = vld [vmem:[#allocation4 + $0x98] sm:$0xff]
      %v8102 = vld [vmem:[#allocation4 + $0xa0] sm:$0xff]
      %v8103 = vld [vmem:[#allocation4 + $0xa8] sm:$0xff]
      %v8104 = vld [vmem:[#allocation4 + $0xb0] sm:$0xff]
      %8117 = vrot.lane.b32.xlu0 %v8093, 127
      %v8118 = vpop.permute.xlu0 %8117
      %8119 = vrot.lane.b32.xlu0 %v8094, 127
      %v8120 = vpop.permute.xlu0 %8119
      %8121 = vrot.lane.b32.xlu0 %v8095, 127
      %v8122 = vpop.permute.xlu0 %8121
      %8123 = vrot.lane.b32.xlu0 %v8096, 127
      %v8124 = vpop.permute.xlu0 %8123
      %8125 = vrot.lane.b32.xlu0 %v8097, 127
      %v8126 = vpop.permute.xlu0 %8125
      %8127 = vrot.lane.b32.xlu0 %v8098, 127
      %v8128 = vpop.permute.xlu0 %8127
      %8129 = vrot.lane.b32.xlu0 %v8099, 127
      %v8130 = vpop.permute.xlu0 %8129
      %8131 = vrot.lane.b32.xlu0 %v8100, 127
      %v8132 = vpop.permute.xlu0 %8131
      %8133 = vrot.lane.b32.xlu0 %v8101, 127
      %v8134 = vpop.permute.xlu0 %8133
      %8135 = vrot.lane.b32.xlu0 %v8102, 127
      %v8136 = vpop.permute.xlu0 %8135
      %8137 = vrot.lane.b32.xlu0 %v8103, 127
      %v8138 = vpop.permute.xlu0 %8137
      %8139 = vrot.lane.b32.xlu0 %v8104, 127
      %v8140 = vpop.permute.xlu0 %8139
      %v8141 = vsel %vm497, %v8118, %v8120
      %v8142 = vsel %vm497, %v8120, %v8122
      %v8143 = vsel %vm497, %v8122, %v8124
      %v8144 = vsel %vm497, %v8124, %v8126
      %v8145 = vsel %vm497, %v8126, %v8128
      %v8146 = vsel %vm497, %v8128, %v8130
      %v8147 = vsel %vm497, %v8130, %v8132
      %v8148 = vsel %vm497, %v8132, %v8134
      %v8149 = vsel %vm497, %v8134, %v8136
      %v8150 = vsel %vm497, %v8136, %v8138
      %v8151 = vsel %vm497, %v8138, %v8140
      %8163 = vst [vmem:[#allocation7 + $0x58] sm:$0xff] %v8141
      %8164 = vst [vmem:[#allocation7 + $0x60] sm:$0xff] %v8142
      %8165 = vst [vmem:[#allocation7 + $0x68] sm:$0xff] %v8143
      %8166 = vst [vmem:[#allocation7 + $0x70] sm:$0xff] %v8144
      %8167 = vst [vmem:[#allocation7 + $0x78] sm:$0xff] %v8145
      %8168 = vst [vmem:[#allocation7 + $0x80] sm:$0xff] %v8146
      %8169 = vst [vmem:[#allocation7 + $0x88] sm:$0xff] %v8147
      %8170 = vst [vmem:[#allocation7 + $0x90] sm:$0xff] %v8148
      %8171 = vst [vmem:[#allocation7 + $0x98] sm:$0xff] %v8149
      %8172 = vst [vmem:[#allocation7 + $0xa0] sm:$0xff] %v8150
      %8173 = vst [vmem:[#allocation7 + $0xa8] sm:$0xff] %v8151
      %v8174 = vld [vmem:[#allocation4 + $0x58] sm:$0xff]
      %v8175 = vld [vmem:[#allocation4 + $0x60] sm:$0xff]
      %v8176 = vld [vmem:[#allocation4 + $0x68] sm:$0xff]
      %v8177 = vld [vmem:[#allocation4 + $0x70] sm:$0xff]
      %v8178 = vld [vmem:[#allocation4 + $0x78] sm:$0xff]
      %v8179 = vld [vmem:[#allocation4 + $0x80] sm:$0xff]
      %v8180 = vld [vmem:[#allocation4 + $0x88] sm:$0xff]
      %v8181 = vld [vmem:[#allocation4 + $0x90] sm:$0xff]
      %v8182 = vld [vmem:[#allocation4 + $0x98] sm:$0xff]
      %v8183 = vld [vmem:[#allocation4 + $0xa0] sm:$0xff]
      %v8184 = vld [vmem:[#allocation4 + $0xa8] sm:$0xff]
      %v8185 = vld [vmem:[#allocation4 + $0xb0] sm:$0xff]
      %8198 = vrot.lane.b32.xlu0 %v8174, 75
      %v8199 = vpop.permute.xlu0 %8198
      %8200 = vrot.lane.b32.xlu0 %v8175, 75
      %v8201 = vpop.permute.xlu0 %8200
      %8202 = vrot.lane.b32.xlu0 %v8176, 75
      %v8203 = vpop.permute.xlu0 %8202
      %8204 = vrot.lane.b32.xlu0 %v8177, 75
      %v8205 = vpop.permute.xlu0 %8204
      %8206 = vrot.lane.b32.xlu0 %v8178, 75
      %v8207 = vpop.permute.xlu0 %8206
      %8208 = vrot.lane.b32.xlu0 %v8179, 75
      %v8209 = vpop.permute.xlu0 %8208
      %8210 = vrot.lane.b32.xlu0 %v8180, 75
      %v8211 = vpop.permute.xlu0 %8210
      %8212 = vrot.lane.b32.xlu0 %v8181, 75
      %v8213 = vpop.permute.xlu0 %8212
      %8214 = vrot.lane.b32.xlu0 %v8182, 75
      %v8215 = vpop.permute.xlu0 %8214
      %8216 = vrot.lane.b32.xlu0 %v8183, 75
      %v8217 = vpop.permute.xlu0 %8216
      %8218 = vrot.lane.b32.xlu0 %v8184, 75
      %v8219 = vpop.permute.xlu0 %8218
      %8220 = vrot.lane.b32.xlu0 %v8185, 75
      %v8221 = vpop.permute.xlu0 %8220
      %v8222 = vsel %vm7361, %v8199, %v8201
      %v8223 = vsel %vm7361, %v8201, %v8203
      %v8224 = vsel %vm7361, %v8203, %v8205
      %v8225 = vsel %vm7361, %v8205, %v8207
      %v8226 = vsel %vm7361, %v8207, %v8209
      %v8227 = vsel %vm7361, %v8209, %v8211
      %v8228 = vsel %vm7361, %v8211, %v8213
      %v8229 = vsel %vm7361, %v8213, %v8215
      %v8230 = vsel %vm7361, %v8215, %v8217
      %v8231 = vsel %vm7361, %v8217, %v8219
      %v8232 = vsel %vm7361, %v8219, %v8221
      %8244 = vst [vmem:[#allocation7 + $0xb0] sm:$0xff] %v8222
      %8245 = vst [vmem:[#allocation7 + $0xb8] sm:$0xff] %v8223
      %8246 = vst [vmem:[#allocation7 + $0xc0] sm:$0xff] %v8224
      %8247 = vst [vmem:[#allocation7 + $0xc8] sm:$0xff] %v8225
      %8248 = vst [vmem:[#allocation7 + $0xd0] sm:$0xff] %v8226
      %8249 = vst [vmem:[#allocation7 + $0xd8] sm:$0xff] %v8227
      %8250 = vst [vmem:[#allocation7 + $0xe0] sm:$0xff] %v8228
      %8251 = vst [vmem:[#allocation7 + $0xe8] sm:$0xff] %v8229
      %8252 = vst [vmem:[#allocation7 + $0xf0] sm:$0xff] %v8230
      %8253 = vst [vmem:[#allocation7 + $0xf8] sm:$0xff] %v8231
      %8254 = vst [vmem:[#allocation7 + $0x100] sm:$0xff] %v8232
      %v8255 = vld [vmem:[#allocation4 + $0x58] sm:$0xff]
      %v8256 = vld [vmem:[#allocation4 + $0x60] sm:$0xff]
      %v8257 = vld [vmem:[#allocation4 + $0x68] sm:$0xff]
      %v8258 = vld [vmem:[#allocation4 + $0x70] sm:$0xff]
      %v8259 = vld [vmem:[#allocation4 + $0x78] sm:$0xff]
      %v8260 = vld [vmem:[#allocation4 + $0x80] sm:$0xff]
      %v8261 = vld [vmem:[#allocation4 + $0x88] sm:$0xff]
      %v8262 = vld [vmem:[#allocation4 + $0x90] sm:$0xff]
      %v8263 = vld [vmem:[#allocation4 + $0x98] sm:$0xff]
      %v8264 = vld [vmem:[#allocation4 + $0xa0] sm:$0xff]
      %v8265 = vld [vmem:[#allocation4 + $0xa8] sm:$0xff]
      %v8266 = vld [vmem:[#allocation4 + $0xb0] sm:$0xff]
      %8279 = vrot.lane.b32.xlu0 %v8255, 74
      %v8280 = vpop.permute.xlu0 %8279
      %8281 = vrot.lane.b32.xlu0 %v8256, 74
      %v8282 = vpop.permute.xlu0 %8281
      %8283 = vrot.lane.b32.xlu0 %v8257, 74
      %v8284 = vpop.permute.xlu0 %8283
      %8285 = vrot.lane.b32.xlu0 %v8258, 74
      %v8286 = vpop.permute.xlu0 %8285
      %8287 = vrot.lane.b32.xlu0 %v8259, 74
      %v8288 = vpop.permute.xlu0 %8287
      %8289 = vrot.lane.b32.xlu0 %v8260, 74
      %v8290 = vpop.permute.xlu0 %8289
      %8291 = vrot.lane.b32.xlu0 %v8261, 74
      %v8292 = vpop.permute.xlu0 %8291
      %8293 = vrot.lane.b32.xlu0 %v8262, 74
      %v8294 = vpop.permute.xlu0 %8293
      %8295 = vrot.lane.b32.xlu0 %v8263, 74
      %v8296 = vpop.permute.xlu0 %8295
      %8297 = vrot.lane.b32.xlu0 %v8264, 74
      %v8298 = vpop.permute.xlu0 %8297
      %8299 = vrot.lane.b32.xlu0 %v8265, 74
      %v8300 = vpop.permute.xlu0 %8299
      %8301 = vrot.lane.b32.xlu0 %v8266, 74
      %v8302 = vpop.permute.xlu0 %8301
      %v8303 = vsel %vm7443, %v8280, %v8282
      %v8304 = vsel %vm7443, %v8282, %v8284
      %v8305 = vsel %vm7443, %v8284, %v8286
      %v8306 = vsel %vm7443, %v8286, %v8288
      %v8307 = vsel %vm7443, %v8288, %v8290
      %v8308 = vsel %vm7443, %v8290, %v8292
      %v8309 = vsel %vm7443, %v8292, %v8294
      %v8310 = vsel %vm7443, %v8294, %v8296
      %v8311 = vsel %vm7443, %v8296, %v8298
      %v8312 = vsel %vm7443, %v8298, %v8300
      %v8313 = vsel %vm7443, %v8300, %v8302
      %8325 = vst [vmem:[#allocation7 + $0x108] sm:$0xff] %v8303
      %8326 = vst [vmem:[#allocation7 + $0x110] sm:$0xff] %v8304
      %8327 = vst [vmem:[#allocation7 + $0x118] sm:$0xff] %v8305
      %8328 = vst [vmem:[#allocation7 + $0x120] sm:$0xff] %v8306
      %8329 = vst [vmem:[#allocation7 + $0x128] sm:$0xff] %v8307
      %8330 = vst [vmem:[#allocation7 + $0x130] sm:$0xff] %v8308
      %8331 = vst [vmem:[#allocation7 + $0x138] sm:$0xff] %v8309
      %8332 = vst [vmem:[#allocation7 + $0x140] sm:$0xff] %v8310
      %8333 = vst [vmem:[#allocation7 + $0x148] sm:$0xff] %v8311
      %8334 = vst [vmem:[#allocation7 + $0x150] sm:$0xff] %v8312
      %8335 = vst [vmem:[#allocation7 + $0x158] sm:$0xff] %v8313
      %v8336 = vld [vmem:[#allocation7] sm:$0xff]
      %v8337 = vld [vmem:[#allocation7 + $0x8] sm:$0xff]
      %v8338 = vld [vmem:[#allocation7 + $0x10] sm:$0xff]
      %v8339 = vld [vmem:[#allocation7 + $0x18] sm:$0xff]
      %v8340 = vld [vmem:[#allocation7 + $0x20] sm:$0xff]
      %v8341 = vld [vmem:[#allocation7 + $0x28] sm:$0xff]
      %v8342 = vld [vmem:[#allocation7 + $0x30] sm:$0xff]
      %v8343 = vld [vmem:[#allocation7 + $0x38] sm:$0xff]
      %v8344 = vld [vmem:[#allocation7 + $0x40] sm:$0xff]
      %v8345 = vld [vmem:[#allocation7 + $0x48] sm:$0xff]
      %v8346 = vld [vmem:[#allocation7 + $0x50] sm:$0xff]
      %v8347 = vld [vmem:[#allocation7 + $0x58] sm:$0xff]
      %v8348 = vld [vmem:[#allocation7 + $0x60] sm:$0xff]
      %v8349 = vld [vmem:[#allocation7 + $0x68] sm:$0xff]
      %v8350 = vld [vmem:[#allocation7 + $0x70] sm:$0xff]
      %v8351 = vld [vmem:[#allocation7 + $0x78] sm:$0xff]
      %v8352 = vld [vmem:[#allocation7 + $0x80] sm:$0xff]
      %v8353 = vld [vmem:[#allocation7 + $0x88] sm:$0xff]
      %v8354 = vld [vmem:[#allocation7 + $0x90] sm:$0xff]
      %v8355 = vld [vmem:[#allocation7 + $0x98] sm:$0xff]
      %v8356 = vld [vmem:[#allocation7 + $0xa0] sm:$0xff]
      %v8357 = vld [vmem:[#allocation7 + $0xa8] sm:$0xff]
      %v8358 = vld [vmem:[#allocation7 + $0xb0] sm:$0xff]
      %v8359 = vld [vmem:[#allocation7 + $0xb8] sm:$0xff]
      %v8360 = vld [vmem:[#allocation7 + $0xc0] sm:$0xff]
      %v8361 = vld [vmem:[#allocation7 + $0xc8] sm:$0xff]
      %v8362 = vld [vmem:[#allocation7 + $0xd0] sm:$0xff]
      %v8363 = vld [vmem:[#allocation7 + $0xd8] sm:$0xff]
      %v8364 = vld [vmem:[#allocation7 + $0xe0] sm:$0xff]
      %v8365 = vld [vmem:[#allocation7 + $0xe8] sm:$0xff]
      %v8366 = vld [vmem:[#allocation7 + $0xf0] sm:$0xff]
      %v8367 = vld [vmem:[#allocation7 + $0xf8] sm:$0xff]
      %v8368 = vld [vmem:[#allocation7 + $0x100] sm:$0xff]
      %v8369 = vld [vmem:[#allocation7 + $0x108] sm:$0xff]
      %v8370 = vld [vmem:[#allocation7 + $0x110] sm:$0xff]
      %v8371 = vld [vmem:[#allocation7 + $0x118] sm:$0xff]
      %v8372 = vld [vmem:[#allocation7 + $0x120] sm:$0xff]
      %v8373 = vld [vmem:[#allocation7 + $0x128] sm:$0xff]
      %v8374 = vld [vmem:[#allocation7 + $0x130] sm:$0xff]
      %v8375 = vld [vmem:[#allocation7 + $0x138] sm:$0xff]
      %v8376 = vld [vmem:[#allocation7 + $0x140] sm:$0xff]
      %v8377 = vld [vmem:[#allocation7 + $0x148] sm:$0xff]
      %v8378 = vld [vmem:[#allocation7 + $0x150] sm:$0xff]
      %v8379 = vld [vmem:[#allocation7 + $0x158] sm:$0xff]
      %8380 = vmatprep.subr.mxu0 %v8337
      %8381 = vmatpush1.msra.mxu0 %v8336
      %8382 = vmatprep.subr.mxu0 %v8348
      %8383 = vmatpush1.msra.mxu0 %v8347
      %8384 = vmatprep.subr.mxu0 %v8359
      %8385 = vmatpush1.msra.mxu0 %v8358
      %8386 = vmatprep.subr.mxu0 %v8370
      %8387 = vmatpush1.msra.mxu0 %v8369
      %8388 = vmatprep.subr.mxu0 0.0
      %8389 = vmatpush1.msra.mxu0 0.0
      %8390 = vmatprep.subr.mxu0 0.0
      %8391 = vmatpush1.msra.mxu0 0.0
      %8392 = vmatprep.subr.mxu0 0.0
      %8393 = vmatpush1.msra.mxu0 0.0
      %8394 = vmatprep.subr.mxu0 0.0
      %8395 = vmatpush1.msra.mxu0 0.0
      %8396 = vmatprep.subr.mxu0 0.0
      %8397 = vmatpush1.msra.mxu0 0.0
      %8398 = vmatprep.subr.mxu0 0.0
      %8399 = vmatpush1.msra.mxu0 0.0
      %8400 = vmatprep.subr.mxu0 0.0
      %8401 = vmatpush1.msra.mxu0 0.0
      %8402 = vmatprep.subr.mxu0 0.0
      %8403 = vmatpush1.msra.mxu0 0.0
      %8404 = vmatprep.subr.mxu0 0.0
      %8405 = vmatpush1.msra.mxu0 0.0
      %8406 = vmatprep.subr.mxu0 0.0
      %8407 = vmatpush1.msra.mxu0 0.0
      %8408 = vmatprep.subr.mxu0 0.0
      %8409 = vmatpush1.msra.mxu0 0.0
      %8410 = vmatprep.subr.mxu0 0.0
      %8411 = vmatpush1.msra.mxu0 0.0
      %8412 = vmatprep.subr.mxu0 0.0
      %8413 = vmatpush1.msra.mxu0 0.0
      %8414 = vmatprep.subr.mxu0 0.0
      %8415 = vmatpush1.msra.mxu0 0.0
      %8416 = vmatprep.subr.mxu0 0.0
      %8417 = vmatpush1.msra.mxu0 0.0
      %8418 = vmatprep.subr.mxu0 0.0
      %8419 = vmatpush1.msra.mxu0 0.0
      %8420 = vmatprep.subr.mxu0 0.0
      %8421 = vmatpush1.msra.mxu0 0.0
      %8422 = vmatprep.subr.mxu0 0.0
      %8423 = vmatpush1.msra.mxu0 0.0
      %8424 = vmatprep.subr.mxu0 0.0
      %8425 = vmatpush1.msra.mxu0 0.0
      %8426 = vmatprep.subr.mxu0 0.0
      %8427 = vmatpush1.msra.mxu0 0.0
      %8428 = vmatprep.subr.mxu0 0.0
      %8429 = vmatpush1.msra.mxu0 0.0
      %8430 = vmatprep.subr.mxu0 0.0
      %8431 = vmatpush1.msra.mxu0 0.0
      %8432 = vmatprep.subr.mxu0 0.0
      %8433 = vmatpush1.msra.mxu0 0.0
      %8434 = vmatprep.subr.mxu0 0.0
      %8435 = vmatpush1.msra.mxu0 0.0
      %8436 = vmatprep.subr.mxu0 0.0
      %8437 = vmatpush1.msra.mxu0 0.0
      %8438 = vmatprep.subr.mxu0 0.0
      %8439 = vmatpush1.msra.mxu0 0.0
      %8440 = vmatprep.subr.mxu0 0.0
      %8441 = vmatpush1.msra.mxu0 0.0
      %8442 = vmatprep.subr.mxu0 0.0
      %8443 = vmatpush1.msra.mxu0 0.0
      %8444 = vmatprep.mubr.f32.mxu0 0.0
      %8445 = vmatmul.mubr.f32.gmra.mrb[0].mxu0 %v7522
      %v8446 = vpop.f32.mrb[0].mxu0
      %v8447 = vadd.f32 0.0, %v8446
      %v8448 = vpop.f32.mrb[0].mxu0
      %v8449 = vadd.f32 0.0, %v8448
      %8450 = vdwg.mxu0
      %8451 = vmatprep.subr.mxu0 %v8339
      %8452 = vmatpush1.msra.mxu0 %v8338
      %8453 = vmatprep.subr.mxu0 %v8350
      %8454 = vmatpush1.msra.mxu0 %v8349
      %8455 = vmatprep.subr.mxu0 %v8361
      %8456 = vmatpush1.msra.mxu0 %v8360
      %8457 = vmatprep.subr.mxu0 %v8372
      %8458 = vmatpush1.msra.mxu0 %v8371
      %8459 = vmatprep.subr.mxu0 0.0
      %8460 = vmatpush1.msra.mxu0 0.0
      %8461 = vmatprep.subr.mxu0 0.0
      %8462 = vmatpush1.msra.mxu0 0.0
      %8463 = vmatprep.subr.mxu0 0.0
      %8464 = vmatpush1.msra.mxu0 0.0
      %8465 = vmatprep.subr.mxu0 0.0
      %8466 = vmatpush1.msra.mxu0 0.0
      %8467 = vmatprep.subr.mxu0 0.0
      %8468 = vmatpush1.msra.mxu0 0.0
      %8469 = vmatprep.subr.mxu0 0.0
      %8470 = vmatpush1.msra.mxu0 0.0
      %8471 = vmatprep.subr.mxu0 0.0
      %8472 = vmatpush1.msra.mxu0 0.0
      %8473 = vmatprep.subr.mxu0 0.0
      %8474 = vmatpush1.msra.mxu0 0.0
      %8475 = vmatprep.subr.mxu0 0.0
      %8476 = vmatpush1.msra.mxu0 0.0
      %8477 = vmatprep.subr.mxu0 0.0
      %8478 = vmatpush1.msra.mxu0 0.0
      %8479 = vmatprep.subr.mxu0 0.0
      %8480 = vmatpush1.msra.mxu0 0.0
      %8481 = vmatprep.subr.mxu0 0.0
      %8482 = vmatpush1.msra.mxu0 0.0
      %8483 = vmatprep.subr.mxu0 0.0
      %8484 = vmatpush1.msra.mxu0 0.0
      %8485 = vmatprep.subr.mxu0 0.0
      %8486 = vmatpush1.msra.mxu0 0.0
      %8487 = vmatprep.subr.mxu0 0.0
      %8488 = vmatpush1.msra.mxu0 0.0
      %8489 = vmatprep.subr.mxu0 0.0
      %8490 = vmatpush1.msra.mxu0 0.0
      %8491 = vmatprep.subr.mxu0 0.0
      %8492 = vmatpush1.msra.mxu0 0.0
      %8493 = vmatprep.subr.mxu0 0.0
      %8494 = vmatpush1.msra.mxu0 0.0
      %8495 = vmatprep.subr.mxu0 0.0
      %8496 = vmatpush1.msra.mxu0 0.0
      %8497 = vmatprep.subr.mxu0 0.0
      %8498 = vmatpush1.msra.mxu0 0.0
      %8499 = vmatprep.subr.mxu0 0.0
      %8500 = vmatpush1.msra.mxu0 0.0
      %8501 = vmatprep.subr.mxu0 0.0
      %8502 = vmatpush1.msra.mxu0 0.0
      %8503 = vmatprep.subr.mxu0 0.0
      %8504 = vmatpush1.msra.mxu0 0.0
      %8505 = vmatprep.subr.mxu0 0.0
      %8506 = vmatpush1.msra.mxu0 0.0
      %8507 = vmatprep.subr.mxu0 0.0
      %8508 = vmatpush1.msra.mxu0 0.0
      %8509 = vmatprep.subr.mxu0 0.0
      %8510 = vmatpush1.msra.mxu0 0.0
      %8511 = vmatprep.subr.mxu0 0.0
      %8512 = vmatpush1.msra.mxu0 0.0
      %8513 = vmatprep.subr.mxu0 0.0
      %8514 = vmatpush1.msra.mxu0 0.0
      %8515 = vmatprep.mubr.f32.mxu0 0.0
      %8516 = vmatmul.mubr.f32.gmra.mrb[0].mxu0 %v7522
      %v8517 = vpop.f32.mrb[0].mxu0
      %v8518 = vadd.f32 0.0, %v8517
      %v8519 = vpop.f32.mrb[0].mxu0
      %v8520 = vadd.f32 0.0, %v8519
      %8521 = vdwg.mxu0
      %8522 = vmatprep.subr.mxu0 %v8341
      %8523 = vmatpush1.msra.mxu0 %v8340
      %8524 = vmatprep.subr.mxu0 %v8352
      %8525 = vmatpush1.msra.mxu0 %v8351
      %8526 = vmatprep.subr.mxu0 %v8363
      %8527 = vmatpush1.msra.mxu0 %v8362
      %8528 = vmatprep.subr.mxu0 %v8374
      %8529 = vmatpush1.msra.mxu0 %v8373
      %8530 = vmatprep.subr.mxu0 0.0
      %8531 = vmatpush1.msra.mxu0 0.0
      %8532 = vmatprep.subr.mxu0 0.0
      %8533 = vmatpush1.msra.mxu0 0.0
      %8534 = vmatprep.subr.mxu0 0.0
      %8535 = vmatpush1.msra.mxu0 0.0
      %8536 = vmatprep.subr.mxu0 0.0
      %8537 = vmatpush1.msra.mxu0 0.0
      %8538 = vmatprep.subr.mxu0 0.0
      %8539 = vmatpush1.msra.mxu0 0.0
      %8540 = vmatprep.subr.mxu0 0.0
      %8541 = vmatpush1.msra.mxu0 0.0
      %8542 = vmatprep.subr.mxu0 0.0
      %8543 = vmatpush1.msra.mxu0 0.0
      %8544 = vmatprep.subr.mxu0 0.0
      %8545 = vmatpush1.msra.mxu0 0.0
      %8546 = vmatprep.subr.mxu0 0.0
      %8547 = vmatpush1.msra.mxu0 0.0
      %8548 = vmatprep.subr.mxu0 0.0
      %8549 = vmatpush1.msra.mxu0 0.0
      %8550 = vmatprep.subr.mxu0 0.0
      %8551 = vmatpush1.msra.mxu0 0.0
      %8552 = vmatprep.subr.mxu0 0.0
      %8553 = vmatpush1.msra.mxu0 0.0
      %8554 = vmatprep.subr.mxu0 0.0
      %8555 = vmatpush1.msra.mxu0 0.0
      %8556 = vmatprep.subr.mxu0 0.0
      %8557 = vmatpush1.msra.mxu0 0.0
      %8558 = vmatprep.subr.mxu0 0.0
      %8559 = vmatpush1.msra.mxu0 0.0
      %8560 = vmatprep.subr.mxu0 0.0
      %8561 = vmatpush1.msra.mxu0 0.0
      %8562 = vmatprep.subr.mxu0 0.0
      %8563 = vmatpush1.msra.mxu0 0.0
      %8564 = vmatprep.subr.mxu0 0.0
      %8565 = vmatpush1.msra.mxu0 0.0
      %8566 = vmatprep.subr.mxu0 0.0
      %8567 = vmatpush1.msra.mxu0 0.0
      %8568 = vmatprep.subr.mxu0 0.0
      %8569 = vmatpush1.msra.mxu0 0.0
      %8570 = vmatprep.subr.mxu0 0.0
      %8571 = vmatpush1.msra.mxu0 0.0
      %8572 = vmatprep.subr.mxu0 0.0
      %8573 = vmatpush1.msra.mxu0 0.0
      %8574 = vmatprep.subr.mxu0 0.0
      %8575 = vmatpush1.msra.mxu0 0.0
      %8576 = vmatprep.subr.mxu0 0.0
      %8577 = vmatpush1.msra.mxu0 0.0
      %8578 = vmatprep.subr.mxu0 0.0
      %8579 = vmatpush1.msra.mxu0 0.0
      %8580 = vmatprep.subr.mxu0 0.0
      %8581 = vmatpush1.msra.mxu0 0.0
      %8582 = vmatprep.subr.mxu0 0.0
      %8583 = vmatpush1.msra.mxu0 0.0
      %8584 = vmatprep.subr.mxu0 0.0
      %8585 = vmatpush1.msra.mxu0 0.0
      %8586 = vmatprep.mubr.f32.mxu0 0.0
      %8587 = vmatmul.mubr.f32.gmra.mrb[0].mxu0 %v7522
      %v8588 = vpop.f32.mrb[0].mxu0
      %v8589 = vadd.f32 0.0, %v8588
      %v8590 = vpop.f32.mrb[0].mxu0
      %v8591 = vadd.f32 0.0, %v8590
      %8592 = vdwg.mxu0
      %8593 = vmatprep.subr.mxu0 %v8343
      %8594 = vmatpush1.msra.mxu0 %v8342
      %8595 = vmatprep.subr.mxu0 %v8354
      %8596 = vmatpush1.msra.mxu0 %v8353
      %8597 = vmatprep.subr.mxu0 %v8365
      %8598 = vmatpush1.msra.mxu0 %v8364
      %8599 = vmatprep.subr.mxu0 %v8376
      %8600 = vmatpush1.msra.mxu0 %v8375
      %8601 = vmatprep.subr.mxu0 0.0
      %8602 = vmatpush1.msra.mxu0 0.0
      %8603 = vmatprep.subr.mxu0 0.0
      %8604 = vmatpush1.msra.mxu0 0.0
      %8605 = vmatprep.subr.mxu0 0.0
      %8606 = vmatpush1.msra.mxu0 0.0
      %8607 = vmatprep.subr.mxu0 0.0
      %8608 = vmatpush1.msra.mxu0 0.0
      %8609 = vmatprep.subr.mxu0 0.0
      %8610 = vmatpush1.msra.mxu0 0.0
      %8611 = vmatprep.subr.mxu0 0.0
      %8612 = vmatpush1.msra.mxu0 0.0
      %8613 = vmatprep.subr.mxu0 0.0
      %8614 = vmatpush1.msra.mxu0 0.0
      %8615 = vmatprep.subr.mxu0 0.0
      %8616 = vmatpush1.msra.mxu0 0.0
      %8617 = vmatprep.subr.mxu0 0.0
      %8618 = vmatpush1.msra.mxu0 0.0
      %8619 = vmatprep.subr.mxu0 0.0
      %8620 = vmatpush1.msra.mxu0 0.0
      %8621 = vmatprep.subr.mxu0 0.0
      %8622 = vmatpush1.msra.mxu0 0.0
      %8623 = vmatprep.subr.mxu0 0.0
      %8624 = vmatpush1.msra.mxu0 0.0
      %8625 = vmatprep.subr.mxu0 0.0
      %8626 = vmatpush1.msra.mxu0 0.0
      %8627 = vmatprep.subr.mxu0 0.0
      %8628 = vmatpush1.msra.mxu0 0.0
      %8629 = vmatprep.subr.mxu0 0.0
      %8630 = vmatpush1.msra.mxu0 0.0
      %8631 = vmatprep.subr.mxu0 0.0
      %8632 = vmatpush1.msra.mxu0 0.0
      %8633 = vmatprep.subr.mxu0 0.0
      %8634 = vmatpush1.msra.mxu0 0.0
      %8635 = vmatprep.subr.mxu0 0.0
      %8636 = vmatpush1.msra.mxu0 0.0
      %8637 = vmatprep.subr.mxu0 0.0
      %8638 = vmatpush1.msra.mxu0 0.0
      %8639 = vmatprep.subr.mxu0 0.0
      %8640 = vmatpush1.msra.mxu0 0.0
      %8641 = vmatprep.subr.mxu0 0.0
      %8642 = vmatpush1.msra.mxu0 0.0
      %8643 = vmatprep.subr.mxu0 0.0
      %8644 = vmatpush1.msra.mxu0 0.0
      %8645 = vmatprep.subr.mxu0 0.0
      %8646 = vmatpush1.msra.mxu0 0.0
      %8647 = vmatprep.subr.mxu0 0.0
      %8648 = vmatpush1.msra.mxu0 0.0
      %8649 = vmatprep.subr.mxu0 0.0
      %8650 = vmatpush1.msra.mxu0 0.0
      %8651 = vmatprep.subr.mxu0 0.0
      %8652 = vmatpush1.msra.mxu0 0.0
      %8653 = vmatprep.subr.mxu0 0.0
      %8654 = vmatpush1.msra.mxu0 0.0
      %8655 = vmatprep.subr.mxu0 0.0
      %8656 = vmatpush1.msra.mxu0 0.0
      %8657 = vmatprep.mubr.f32.mxu0 0.0
      %8658 = vmatmul.mubr.f32.gmra.mrb[0].mxu0 %v7522
      %v8659 = vpop.f32.mrb[0].mxu0
      %v8660 = vadd.f32 0.0, %v8659
      %v8661 = vpop.f32.mrb[0].mxu0
      %v8662 = vadd.f32 0.0, %v8661
      %8663 = vdwg.mxu0
      %8664 = vmatprep.subr.mxu0 %v8345
      %8665 = vmatpush1.msra.mxu0 %v8344
      %8666 = vmatprep.subr.mxu0 %v8356
      %8667 = vmatpush1.msra.mxu0 %v8355
      %8668 = vmatprep.subr.mxu0 %v8367
      %8669 = vmatpush1.msra.mxu0 %v8366
      %8670 = vmatprep.subr.mxu0 %v8378
      %8671 = vmatpush1.msra.mxu0 %v8377
      %8672 = vmatprep.subr.mxu0 0.0
      %8673 = vmatpush1.msra.mxu0 0.0
      %8674 = vmatprep.subr.mxu0 0.0
      %8675 = vmatpush1.msra.mxu0 0.0
      %8676 = vmatprep.subr.mxu0 0.0
      %8677 = vmatpush1.msra.mxu0 0.0
      %8678 = vmatprep.subr.mxu0 0.0
      %8679 = vmatpush1.msra.mxu0 0.0
      %8680 = vmatprep.subr.mxu0 0.0
      %8681 = vmatpush1.msra.mxu0 0.0
      %8682 = vmatprep.subr.mxu0 0.0
      %8683 = vmatpush1.msra.mxu0 0.0
      %8684 = vmatprep.subr.mxu0 0.0
      %8685 = vmatpush1.msra.mxu0 0.0
      %8686 = vmatprep.subr.mxu0 0.0
      %8687 = vmatpush1.msra.mxu0 0.0
      %8688 = vmatprep.subr.mxu0 0.0
      %8689 = vmatpush1.msra.mxu0 0.0
      %8690 = vmatprep.subr.mxu0 0.0
      %8691 = vmatpush1.msra.mxu0 0.0
      %8692 = vmatprep.subr.mxu0 0.0
      %8693 = vmatpush1.msra.mxu0 0.0
      %8694 = vmatprep.subr.mxu0 0.0
      %8695 = vmatpush1.msra.mxu0 0.0
      %8696 = vmatprep.subr.mxu0 0.0
      %8697 = vmatpush1.msra.mxu0 0.0
      %8698 = vmatprep.subr.mxu0 0.0
      %8699 = vmatpush1.msra.mxu0 0.0
      %8700 = vmatprep.subr.mxu0 0.0
      %8701 = vmatpush1.msra.mxu0 0.0
      %8702 = vmatprep.subr.mxu0 0.0
      %8703 = vmatpush1.msra.mxu0 0.0
      %8704 = vmatprep.subr.mxu0 0.0
      %8705 = vmatpush1.msra.mxu0 0.0
      %8706 = vmatprep.subr.mxu0 0.0
      %8707 = vmatpush1.msra.mxu0 0.0
      %8708 = vmatprep.subr.mxu0 0.0
      %8709 = vmatpush1.msra.mxu0 0.0
      %8710 = vmatprep.subr.mxu0 0.0
      %8711 = vmatpush1.msra.mxu0 0.0
      %8712 = vmatprep.subr.mxu0 0.0
      %8713 = vmatpush1.msra.mxu0 0.0
      %8714 = vmatprep.subr.mxu0 0.0
      %8715 = vmatpush1.msra.mxu0 0.0
      %8716 = vmatprep.subr.mxu0 0.0
      %8717 = vmatpush1.msra.mxu0 0.0
      %8718 = vmatprep.subr.mxu0 0.0
      %8719 = vmatpush1.msra.mxu0 0.0
      %8720 = vmatprep.subr.mxu0 0.0
      %8721 = vmatpush1.msra.mxu0 0.0
      %8722 = vmatprep.subr.mxu0 0.0
      %8723 = vmatpush1.msra.mxu0 0.0
      %8724 = vmatprep.subr.mxu0 0.0
      %8725 = vmatpush1.msra.mxu0 0.0
      %8726 = vmatprep.subr.mxu0 0.0
      %8727 = vmatpush1.msra.mxu0 0.0
      %8728 = vmatprep.mubr.f32.mxu0 0.0
      %8729 = vmatmul.mubr.f32.gmra.mrb[0].mxu0 %v7522
      %v8730 = vpop.f32.mrb[0].mxu0
      %v8731 = vadd.f32 0.0, %v8730
      %v8732 = vpop.f32.mrb[0].mxu0
      %v8733 = vadd.f32 0.0, %v8732
      %8734 = vdwg.mxu0
      %8735 = vmatprep.subr.mxu0 0.0
      %8736 = vmatpush1.msra.mxu0 %v8346
      %8737 = vmatprep.subr.mxu0 0.0
      %8738 = vmatpush1.msra.mxu0 %v8357
      %8739 = vmatprep.subr.mxu0 0.0
      %8740 = vmatpush1.msra.mxu0 %v8368
      %8741 = vmatprep.subr.mxu0 0.0
      %8742 = vmatpush1.msra.mxu0 %v8379
      %8743 = vmatprep.subr.mxu0 0.0
      %8744 = vmatpush1.msra.mxu0 0.0
      %8745 = vmatprep.subr.mxu0 0.0
      %8746 = vmatpush1.msra.mxu0 0.0
      %8747 = vmatprep.subr.mxu0 0.0
      %8748 = vmatpush1.msra.mxu0 0.0
      %8749 = vmatprep.subr.mxu0 0.0
      %8750 = vmatpush1.msra.mxu0 0.0
      %8751 = vmatprep.subr.mxu0 0.0
      %8752 = vmatpush1.msra.mxu0 0.0
      %8753 = vmatprep.subr.mxu0 0.0
      %8754 = vmatpush1.msra.mxu0 0.0
      %8755 = vmatprep.subr.mxu0 0.0
      %8756 = vmatpush1.msra.mxu0 0.0
      %8757 = vmatprep.subr.mxu0 0.0
      %8758 = vmatpush1.msra.mxu0 0.0
      %8759 = vmatprep.subr.mxu0 0.0
      %8760 = vmatpush1.msra.mxu0 0.0
      %8761 = vmatprep.subr.mxu0 0.0
      %8762 = vmatpush1.msra.mxu0 0.0
      %8763 = vmatprep.subr.mxu0 0.0
      %8764 = vmatpush1.msra.mxu0 0.0
      %8765 = vmatprep.subr.mxu0 0.0
      %8766 = vmatpush1.msra.mxu0 0.0
      %8767 = vmatprep.subr.mxu0 0.0
      %8768 = vmatpush1.msra.mxu0 0.0
      %8769 = vmatprep.subr.mxu0 0.0
      %8770 = vmatpush1.msra.mxu0 0.0
      %8771 = vmatprep.subr.mxu0 0.0
      %8772 = vmatpush1.msra.mxu0 0.0
      %8773 = vmatprep.subr.mxu0 0.0
      %8774 = vmatpush1.msra.mxu0 0.0
      %8775 = vmatprep.subr.mxu0 0.0
      %8776 = vmatpush1.msra.mxu0 0.0
      %8777 = vmatprep.subr.mxu0 0.0
      %8778 = vmatpush1.msra.mxu0 0.0
      %8779 = vmatprep.subr.mxu0 0.0
      %8780 = vmatpush1.msra.mxu0 0.0
      %8781 = vmatprep.subr.mxu0 0.0
      %8782 = vmatpush1.msra.mxu0 0.0
      %8783 = vmatprep.subr.mxu0 0.0
      %8784 = vmatpush1.msra.mxu0 0.0
      %8785 = vmatprep.subr.mxu0 0.0
      %8786 = vmatpush1.msra.mxu0 0.0
      %8787 = vmatprep.subr.mxu0 0.0
      %8788 = vmatpush1.msra.mxu0 0.0
      %8789 = vmatprep.subr.mxu0 0.0
      %8790 = vmatpush1.msra.mxu0 0.0
      %8791 = vmatprep.subr.mxu0 0.0
      %8792 = vmatpush1.msra.mxu0 0.0
      %8793 = vmatprep.subr.mxu0 0.0
      %8794 = vmatpush1.msra.mxu0 0.0
      %8795 = vmatprep.subr.mxu0 0.0
      %8796 = vmatpush1.msra.mxu0 0.0
      %8797 = vmatprep.subr.mxu0 0.0
      %8798 = vmatpush1.msra.mxu0 0.0
      %8799 = vmatprep.mubr.f32.mxu0 0.0
      %8800 = vmatmul.mubr.f32.gmra.mrb[0].mxu0 %v7522
      %v8801 = vpop.f32.mrb[0].mxu0
      %v8802 = vadd.f32 0.0, %v8801
      %v8803 = vpop.f32.mrb[0].mxu0
      %8804 = vdwg.mxu0
      %v8805 = vadd.f32 %v8447, %v7957
      %v8806 = vadd.f32 %v8449, %v7957
      %v8807 = vadd.f32 %v8518, %v7957
      %v8808 = vadd.f32 %v8520, %v7957
      %v8809 = vadd.f32 %v8589, %v7957
      %v8810 = vadd.f32 %v8591, %v7957
      %v8811 = vadd.f32 %v8660, %v7957
      %v8812 = vadd.f32 %v8662, %v7957
      %v8813 = vadd.f32 %v8731, %v7957
      %v8814 = vadd.f32 %v8733, %v7957
      %v8815 = vadd.f32 %v8802, %v7957
      %v8816 = vtanh.pop %v8805
      %v8817 = vtanh.pop %v8806
      %v8818 = vtanh.pop %v8807
      %v8819 = vtanh.pop %v8808
      %v8820 = vtanh.pop %v8809
      %v8821 = vtanh.pop %v8810
      %v8822 = vtanh.pop %v8811
      %v8823 = vtanh.pop %v8812
      %v8824 = vtanh.pop %v8813
      %v8825 = vtanh.pop %v8814
      %v8826 = vtanh.pop %v8815
      %v8838 = vcombine.low %v8816, %v8817
      %v8839 = vcombine.low %v8818, %v8819
      %v8840 = vcombine.low %v8820, %v8821
      %v8841 = vcombine.low %v8822, %v8823
      %v8843 = vunpack.c.l.s4 1966171168
      %v8844 = vunpack.c.0.s8 %v8843
      %v8845 = vlaneseq
      %v8846 = vshrl.u32 %v8845, 7
      %v8847 = vsub.s32 %v8844, %v8846
      %v8848 = vrot.slane %v8838, %v8847
      %v8850 = vunpack.c.l.s4 1966171168
      %v8851 = vunpack.c.0.s8 %v8850
      %v8852 = vlaneseq
      %v8853 = vshrl.u32 %v8852, 7
      %v8854 = vsub.s32 %v8851, %v8853
      %v8855 = vrot.slane %v8839, %v8854
      %v8857 = vunpack.c.l.s4 1966171168
      %v8858 = vunpack.c.0.s8 %v8857
      %v8859 = vlaneseq
      %v8860 = vshrl.u32 %v8859, 7
      %v8861 = vsub.s32 %v8858, %v8860
      %v8862 = vrot.slane %v8840, %v8861
      %v8864 = vunpack.c.l.s4 1966171168
      %v8865 = vunpack.c.0.s8 %v8864
      %v8866 = vlaneseq
      %v8867 = vshrl.u32 %v8866, 7
      %v8868 = vsub.s32 %v8865, %v8867
      %v8869 = vrot.slane %v8841, %v8868
      %v8870 = vcombine.low %v8848, %v8855
      %v8871 = vcombine.low %v8862, %v8869
      %v8873 = vunpack.c.l.s4 1966171168
      %v8874 = vunpack.c.0.s8 %v8873
      %v8875 = vlaneseq
      %v8876 = vshrl.u32 %v8875, 7
      %v8877 = vsub.s32 %v8874, %v8876
      %v8878 = vrot.slane %v8870, %v8877
      %v8880 = vunpack.c.l.s4 1966171168
      %v8881 = vunpack.c.0.s8 %v8880
      %v8882 = vlaneseq
      %v8883 = vshrl.u32 %v8882, 7
      %v8884 = vsub.s32 %v8881, %v8883
      %v8885 = vrot.slane %v8871, %v8884
      %v8886 = vcombine.low %v8878, %v8885
      %v8887 = vcombine.low %v8824, %v8825
      %v8889 = vunpack.c.l.s4 1966171168
      %v8890 = vunpack.c.0.s8 %v8889
      %v8891 = vlaneseq
      %v8892 = vshrl.u32 %v8891, 7
      %v8893 = vsub.s32 %v8890, %v8892
      %v8894 = vrot.slane %v8887, %v8893
      %v8896 = vunpack.c.l.s4 1966171168
      %v8897 = vunpack.c.0.s8 %v8896
      %v8898 = vlaneseq
      %v8899 = vshrl.u32 %v8898, 7
      %v8900 = vsub.s32 %v8897, %v8899
      %v8901 = vrot.slane %v8826, %v8900
      %v8902 = vcombine.low %v8894, %v8901
      %v8904 = vunpack.c.l.s4 1966171168
      %v8905 = vunpack.c.0.s8 %v8904
      %v8906 = vlaneseq
      %v8907 = vshrl.u32 %v8906, 7
      %v8908 = vsub.s32 %v8905, %v8907
      %v8909 = vrot.slane %v8902, %v8908
      %8912 = vst [vmem:[%s329 + $0xb] sm:$0xff] %v8886
      %8913 = vst.msk [vmem:[%s329 + $0x13] sm:$0x7] %vm8069, %v8909
      %p8914 = scmp.lt.s32.totalorder %s22, 1
      %s8915 = scalar_select %p8914, %s22, 1
      %s8916 = smul.addr %s8915, 22
      %s8917 = scalar_lea.vmem %s9, %s8916
      // Predicated region
      $region57: #{decoder1_forward.1} parent=55 // pred_check
        %p8918 = pneg %p234
      $region58: #{decoder1_forward.1} parent=55 // pred_check_branch
        %8920 = sbr.rel (%p8918) target = $region60
      $region59: #{decoder1_forward.1} parent=55 // pred_region
        _
      $region60: #{decoder1_forward.1} parent=55 // pred_fallthru
        _
    $region56: #{decoder1_forward.1} parent=5 // pred_fallthru
      _
    %p8921 = scmp.le.s32.totalorder 2, %s17
    // Predicated region
    $region61: #{decoder1_forward.1} parent=5 // pred_check
      %p8922 = pneg %p8921
    $region62: #{decoder1_forward.1} parent=5 // pred_check_branch
      %8924 = sbr.rel (%p8922) target = $region64
    $region63: #{decoder1_forward.1} parent=5 // pred_region
      %s8925 = ssub.s32 %s17, 2
      // Predicated region
      $region65: #{decoder1_forward.1} parent=63 // pred_check
        %p8926 = pneg %p240
      $region66: #{decoder1_forward.1} parent=63 // pred_check_branch
        %8928 = sbr.rel (%p8926) target = $region68
      $region67: #{decoder1_forward.1} parent=63 // pred_region
        %p8929 = scmp.lt.s32.totalorder %s23, 1
        %s8930 = scalar_select %p8929, %s23, 1
        %s8931 = smul.addr %s8930, 22
        %s8932 = scalar_lea.vmem %s9, %s8931
      $region68: #{decoder1_forward.1} parent=63 // pred_fallthru
        _
    $region64: #{decoder1_forward.1} parent=5 // pred_fallthru
      _
  $region6: #{decoder1_forward.1} parent=0 // loop_footer
    %s21 = sadd.s32 1, %s17
  $region7: #{decoder1_forward.1} parent=0 // loop_footer_branch
    %16 = sbr.rel target = $region3
  $region8: #{decoder1_forward.1} parent=0 // loop_exit
    _

</llo_original>
